<compile_context>
chip_gen: v7x
topology: tpu7x:2x2x1
jax: 0.10.0
libtpu: 0.0.40
codegen_flags: <defaults>
</compile_context>

<pallas_src>
import math
import functools

import numpy as np
import jax
import jax.numpy as jnp
from jax import lax
from jax.experimental import pallas as pl
from jax.experimental.pallas import tpu as pltpu


# ----------------------------- in-kernel helpers -----------------------------

def _rowsum(x):
    """Channel (sublane) sum as a ones-row MXU matmul.  x: (C, M) f32 -> (1, M)."""
    ones = jnp.ones((1, x.shape[0]), jnp.float32)
    return jnp.dot(ones, x, preferred_element_type=jnp.float32)


def _posnorm(x, g):
    """NoBias(DetachablePositionNorm2d): LayerNorm over channels per position,
    affine weight only, eps=1e-5.  x: (C, M) f32, g: (C, 1).  All-zero (halo)
    columns map to exactly zero."""
    c = x.shape[0]
    mean = _rowsum(x) * (1.0 / c)
    msq = _rowsum(x * x) * (1.0 / c)
    var = jnp.maximum(msq - mean * mean, 0.0)
    return (x - mean) * lax.rsqrt(var + 1e-5) * g


def _bcos1x1(x, w_ref):
    """B-cos (b=2) 1x1 conv.  x: (Cin, M) f32, w_ref: (Cout, Cin) f32 unit-norm."""
    lin = jnp.dot(w_ref[...], x, preferred_element_type=jnp.float32)
    ssq = _rowsum(x * x)
    return lin * (jnp.abs(lin) * lax.rsqrt(ssq + 1e-6))


def _bcos3x3(src_ref, st_ref, w_ref, Wp, P, L, cin, cin_pad):
    """B-cos (b=2) 3x3 conv (stride 1, zero pad 1) from a per-image padded slab.

    src_ref: (cin, Hp*Wp) f32, zero halos.   st_ref: (9*cin_pad, L) f32 scratch.
    w_ref:   (Cout, 9*cin_pad) bf16, unit-L2 per out channel, (dh,dw,c) order.
    Output positions are the contiguous span [P, P+L) of the padded grid
    (covers every interior pixel); halo outputs within the span are junk and
    must be masked / ignored by the caller.
    """
    for dh in range(3):
        for dw in range(3):
            t = dh * 3 + dw
            s = (dh - 1) * Wp + (dw - 1)
            st_ref[t * cin_pad:t * cin_pad + cin, :] = src_ref[:, P + s:P + s + L]
    lin = jnp.dot(w_ref[...], st_ref[...].astype(jnp.bfloat16),
                  preferred_element_type=jnp.float32)          # (Cout, L)
    # patch sum-of-squares: one MXU channel reduction + 9 one-row shifted adds
    xs = src_ref[...]
    q = _rowsum(xs * xs)                                       # (1, Hp*Wp)
    ssq = None
    for dh in range(3):
        for dw in range(3):
            s = (dh - 1) * Wp + (dw - 1)
            term = q[:, P + s:P + s + L]
            ssq = term if ssq is None else ssq + term
    return lin * (jnp.abs(lin) * lax.rsqrt(ssq + 1e-6))


# --------------------------------- the kernel --------------------------------

def _fused_kernel(x_ref,
                  ws_ref, gs_ref,
                  w11_ref, g11_ref, w12_ref, g12_ref,
                  w21_ref, wd2_ref, g21_ref, w22_ref, g22_ref, gd2_ref,
                  w31_ref, wd3_ref, g31_ref, w32_ref, g32_ref, gd3_ref,
                  wfc_ref,
                  b1_ref, b2_ref, avg_ref, m1_ref, m2_ref,
                  o_ref,
                  sx, s0, s1, s2, st1, t0, t1, st2, u0, st3,
                  *, H, W, logit_bias):
    c_in = sx.shape[0]
    c1 = gs_ref.shape[0]
    c2 = g21_ref.shape[0]
    c3 = g31_ref.shape[0]
    cp1 = st1.shape[0] // 9
    cp2 = st2.shape[0] // 9
    cp3 = st3.shape[0] // 9

    H2, W2 = H // 2, W // 2
    H3, W3 = H2 // 2, W2 // 2
    Wp1 = W + 2; P1 = Wp1 + 1; Mp1 = (H + 2) * Wp1; L1 = Mp1 - 2 * P1
    Wp2 = W2 + 2; P2 = Wp2 + 1; Mp2 = (H2 + 2) * Wp2; L2 = Mp2 - 2 * P2
    Wp3 = W3 + 2; P3 = Wp3 + 1; Mp3 = (H3 + 2) * Wp3; L3 = Mp3 - 2 * P3

    # Zero-init scratch whose halo edges / channel-padding rows are never
    # rewritten (done once per step; everything else is fully overwritten).
    s0[...] = jnp.zeros_like(s0)
    s1[...] = jnp.zeros_like(s1)
    s2[...] = jnp.zeros_like(s2)
    st1[...] = jnp.zeros_like(st1)
    if cp2 > c2:
        st2[...] = jnp.zeros_like(st2)
    if cp3 > c3:
        st3[...] = jnp.zeros_like(st3)

    sx[...] = x_ref[0]                                   # (c_in, Mp1), zero halos
    m1 = m1_ref[...]                                     # (1, L1) interior mask
    m2 = m2_ref[...]                                     # (1, L2)

    # ---- stem: B-cos 3x3 + position norm (small_inputs -> no stem pool) ----
    h = _bcos3x3(sx, st1, ws_ref, Wp1, P1, L1, c_in, cp1) * m1
    s0[:, P1:P1 + L1] = _posnorm(h, gs_ref[...])

    # ---- layer1 BasicBlock (stride 1, no downsample) ----
    h = _bcos3x3(s0, st1, w11_ref, Wp1, P1, L1, c1, cp1) * m1
    s1[:, P1:P1 + L1] = _posnorm(h, g11_ref[...])
    h = _bcos3x3(s1, st1, w12_ref, Wp1, P1, L1, c1, cp1) * m1
    x1 = _posnorm(h, g12_ref[...]) + s0[:, P1:P1 + L1]
    s2[:, P1:P1 + L1] = x1

    # ---- layer2 front: conv1 3x3 + BlurPool, downsample 1x1 + BlurPool ----
    c21 = _bcos3x3(s2, st1, w21_ref, Wp1, P1, L1, c1, cp1)            # (c2, L1)
    mm2 = jnp.dot(c21, b1_ref[...], preferred_element_type=jnp.float32)  # (c2, Mp2)
    d2 = _bcos1x1(x1, wd2_ref)                                        # (c2, L1)
    ii2 = jnp.dot(d2, b1_ref[...], preferred_element_type=jnp.float32)

    # ---- layer2 back: bn1 -> conv2 -> bn2, ds-norm, residual add ----
    t0[...] = _posnorm(mm2, g21_ref[...])
    h = _bcos3x3(t0, st2, w22_ref, Wp2, P2, L2, c2, cp2) * m2
    idn = _posnorm(ii2, gd2_ref[...])                                 # (c2, Mp2)
    x2 = idn[:, P2:P2 + L2] + _posnorm(h, g22_ref[...])
    t1[...] = idn
    t1[:, P2:P2 + L2] = x2

    # ---- layer3 front ----
    c31 = _bcos3x3(t1, st2, w31_ref, Wp2, P2, L2, c2, cp2)            # (c3, L2)
    mm3 = jnp.dot(c31, b2_ref[...], preferred_element_type=jnp.float32)  # (c3, Mp3)
    d3 = _bcos1x1(x2, wd3_ref)
    ii3 = jnp.dot(d3, b2_ref[...], preferred_element_type=jnp.float32)

    # ---- layer3 back ----
    u0[...] = _posnorm(mm3, g31_ref[...])
    h = _bcos3x3(u0, st3, w32_ref, Wp3, P3, L3, c3, cp3)              # (c3, L3)
    feat = _posnorm(h, g32_ref[...]) + _posnorm(ii3[:, P3:P3 + L3], gd3_ref[...])

    # ---- fc (1x1 B-cos) + global average pool + LogitLayer bias ----
    logits = _bcos1x1(feat, wfc_ref)                                  # (ncls, L3)
    pooled = jnp.dot(logits, avg_ref[...], preferred_element_type=jnp.float32)
    o_ref[0] = pooled + logit_bias                                    # (ncls, 1)


# ------------------------------- host-side prep ------------------------------

def _pad8(c):
    return ((c + 7) // 8) * 8


def _prep_w3(w, cin_pad):
    """(Cout,Cin,3,3) -> unit-L2 per out channel -> (Cout, 9*cin_pad) bf16,
    column order (dh, dw, cin) matching the stacked-tap scratch layout."""
    cout, cin = w.shape[0], w.shape[1]
    wn = w / jnp.sqrt(jnp.sum(w * w, axis=(1, 2, 3), keepdims=True))
    wt = jnp.transpose(wn, (0, 2, 3, 1))
    wt = jnp.pad(wt, ((0, 0), (0, 0), (0, 0), (0, cin_pad - cin)))
    return wt.reshape(cout, 9 * cin_pad).astype(jnp.bfloat16)


def _prep_w1(w):
    wn = w / jnp.sqrt(jnp.sum(w * w, axis=(1, 2, 3), keepdims=True))
    return wn[:, :, 0, 0].astype(jnp.float32)


def _gamma(g):
    return g.reshape(-1, 1).astype(jnp.float32)


def _interior_mask(H, W):
    """(1, L) mask: 1 at interior positions of the per-image padded grid,
    restricted to the conv-output span [P, Hp*Wp - P)."""
    Hp, Wp = H + 2, W + 2
    P = Wp + 1
    L = Hp * Wp - 2 * P
    m = np.zeros((1, L), np.float32)
    for j in range(L):
        p = j + P
        hp, wp = p // Wp, p % Wp
        if 1 <= hp <= Hp - 2 and 1 <= wp <= Wp - 2:
            m[0, j] = 1.0
    return m


def _blur_ds_matrix(H, W):
    """(L_fine, Hp_coarse*Wp_coarse) matrix: BlurPool(filt=3, reflect pad 1,
    stride 2) + stride-2 subsample + re-layout into the coarse padded grid
    (zero columns at coarse halo positions)."""
    Hp, Wp = H + 2, W + 2
    P = Wp + 1
    L = Hp * Wp - 2 * P
    Ho, Wo = H // 2, W // 2
    Hpo, Wpo = Ho + 2, Wo + 2
    B = np.zeros((L, Hpo * Wpo), np.float32)
    w1 = np.array([0.25, 0.5, 0.25], np.float32)
    for ho in range(Ho):
        for wo in range(Wo):
            k = (ho + 1) * Wpo + (wo + 1)
            for dr in (-1, 0, 1):
                for dc in (-1, 0, 1):
                    hi, wi = 2 * ho + dr, 2 * wo + dc
                    if hi < 0:
                        hi = -hi
                    if hi >= H:
                        hi = 2 * (H - 1) - hi
                    if wi < 0:
                        wi = -wi
                    if wi >= W:
                        wi = 2 * (W - 1) - wi
                    j = (hi + 1) * Wp + (wi + 1) - P
                    B[j, k] += w1[dr + 1] * w1[dc + 1]
    return B


def prepare_forward(params, H, W):
    """One-time weight normalization/layout + geometry matrices (off the hot path)."""
    c_in = params["stem_w"].shape[1]
    c1 = params["stem_w"].shape[0]
    c2 = params["l2_w1"].shape[0]
    c3 = params["l3_w1"].shape[0]
    cp1 = max(_pad8(c_in), _pad8(c1))
    consts = {
        "ws": _prep_w3(params["stem_w"], cp1), "gs": _gamma(params["stem_g"]),
        "w11": _prep_w3(params["l1_w1"], cp1), "g11": _gamma(params["l1_g1"]),
        "w12": _prep_w3(params["l1_w2"], cp1), "g12": _gamma(params["l1_g2"]),
        "w21": _prep_w3(params["l2_w1"], cp1),
        "wd2": _prep_w1(params["l2_dw"]), "g21": _gamma(params["l2_g1"]),
        "w22": _prep_w3(params["l2_w2"], _pad8(c2)), "g22": _gamma(params["l2_g2"]),
        "gd2": _gamma(params["l2_dg"]),
        "w31": _prep_w3(params["l3_w1"], _pad8(c2)),
        "wd3": _prep_w1(params["l3_dw"]), "g31": _gamma(params["l3_g1"]),
        "w32": _prep_w3(params["l3_w2"], _pad8(c3)), "g32": _gamma(params["l3_g2"]),
        "gd3": _gamma(params["l3_dg"]),
        "wfc": _prep_w1(params["fc_w"]),
        "b1": jnp.asarray(_blur_ds_matrix(H, W)),
        "b2": jnp.asarray(_blur_ds_matrix(H // 2, W // 2)),
        "avg": jnp.asarray(
            (_interior_mask(H // 4, W // 4) / float((H // 4) * (W // 4))).T),
        "m1": jnp.asarray(_interior_mask(H, W)),
        "m2": jnp.asarray(_interior_mask(H // 2, W // 2)),
    }
    return consts


def _rep_spec(shape):
    nd = len(shape)
    return pl.BlockSpec(shape, lambda i, _nd=nd: (0,) * _nd)


def bcos_resnet_forward(consts, x_nchw):
    x = x_nchw.astype(jnp.float32)
    N, c_in, H, W = x.shape
    c1 = consts["gs"].shape[0]
    c2 = consts["g21"].shape[0]
    c3 = consts["g31"].shape[0]
    ncls = consts["wfc"].shape[0]

    Wp1 = W + 2; Mp1 = (H + 2) * Wp1; L1 = Mp1 - 2 * (Wp1 + 1)
    H2, W2 = H // 2, W // 2
    Wp2 = W2 + 2; Mp2 = (H2 + 2) * Wp2; L2 = Mp2 - 2 * (Wp2 + 1)
    H3, W3 = H2 // 2, W2 // 2
    Wp3 = W3 + 2; Mp3 = (H3 + 2) * Wp3; L3 = Mp3 - 2 * (Wp3 + 1)

    # input in per-image padded-grid layout (true zero halos)
    xp = jnp.pad(x, ((0, 0), (0, 0), (1, 1), (1, 1))).reshape(N, c_in, Mp1)

    ins = (xp,
           consts["ws"], consts["gs"],
           consts["w11"], consts["g11"], consts["w12"], consts["g12"],
           consts["w21"], consts["wd2"], consts["g21"], consts["w22"],
           consts["g22"], consts["gd2"],
           consts["w31"], consts["wd3"], consts["g31"], consts["w32"],
           consts["g32"], consts["gd3"],
           consts["wfc"],
           consts["b1"], consts["b2"], consts["avg"], consts["m1"], consts["m2"])

    in_specs = ([pl.BlockSpec((1, c_in, Mp1), lambda i: (i, 0, 0))]
                + [_rep_spec(a.shape) for a in ins[1:]])

    st1_rows = consts["w11"].shape[1]
    st2_rows = consts["w22"].shape[1]
    st3_rows = consts["w32"].shape[1]

    out = pl.pallas_call(
        functools.partial(_fused_kernel, H=H, W=W,
                          logit_bias=-math.log(ncls - 1)),
        grid=(N,),
        in_specs=in_specs,
        out_specs=pl.BlockSpec((1, ncls, 1), lambda i: (i, 0, 0)),
        out_shape=jax.ShapeDtypeStruct((N, ncls, 1), jnp.float32),
        scratch_shapes=[
            pltpu.VMEM((c_in, Mp1), jnp.float32),      # sx  : padded input slab
            pltpu.VMEM((c1, Mp1), jnp.float32),        # s0  : stem / layer1 in
            pltpu.VMEM((c1, Mp1), jnp.float32),        # s1
            pltpu.VMEM((c1, Mp1), jnp.float32),        # s2  : layer1 out
            pltpu.VMEM((st1_rows, L1), jnp.float32),   # st1 : stacked taps @16x16
            pltpu.VMEM((c2, Mp2), jnp.float32),        # t0
            pltpu.VMEM((c2, Mp2), jnp.float32),        # t1  : layer2 out
            pltpu.VMEM((st2_rows, L2), jnp.float32),   # st2 : stacked taps @8x8
            pltpu.VMEM((c3, Mp3), jnp.float32),        # u0
            pltpu.VMEM((st3_rows, L3), jnp.float32),   # st3 : stacked taps @4x4
        ],
        compiler_params=pltpu.CompilerParams(
            dimension_semantics=("parallel",)),
    )(*ins)
    return out.reshape(N, ncls)


# ---------------------------------- params -----------------------------------

def init_params(key, in_chans=6, inplanes=8, num_classes=4):
    ks = jax.random.split(key, 10)

    def conv_w(k, cout, cin, kh, kw):
        # kaiming_normal_(fan_out, relu) -- scale is irrelevant post unit-norm.
        std = math.sqrt(2.0 / (cout * kh * kw))
        return std * jax.random.normal(k, (cout, cin, kh, kw), jnp.float32)

    c1, c2, c3 = inplanes, inplanes * 2, inplanes * 4
    p = {}
    p["stem_w"] = conv_w(ks[0], c1, in_chans, 3, 3)
    p["stem_g"] = jnp.ones((c1,), jnp.float32)
    p["l1_w1"] = conv_w(ks[1], c1, c1, 3, 3); p["l1_g1"] = jnp.ones((c1,), jnp.float32)
    p["l1_w2"] = conv_w(ks[2], c1, c1, 3, 3); p["l1_g2"] = jnp.ones((c1,), jnp.float32)
    p["l2_w1"] = conv_w(ks[3], c2, c1, 3, 3); p["l2_g1"] = jnp.ones((c2,), jnp.float32)
    p["l2_w2"] = conv_w(ks[4], c2, c2, 3, 3); p["l2_g2"] = jnp.ones((c2,), jnp.float32)
    p["l2_dw"] = conv_w(ks[5], c2, c1, 1, 1); p["l2_dg"] = jnp.ones((c2,), jnp.float32)
    p["l3_w1"] = conv_w(ks[6], c3, c2, 3, 3); p["l3_g1"] = jnp.ones((c3,), jnp.float32)
    p["l3_w2"] = conv_w(ks[7], c3, c3, 3, 3); p["l3_g2"] = jnp.ones((c3,), jnp.float32)
    p["l3_dw"] = conv_w(ks[8], c3, c2, 1, 1); p["l3_dg"] = jnp.ones((c3,), jnp.float32)
    p["fc_w"] = conv_w(ks[9], num_classes, c3, 1, 1)
    return p


if __name__ == "__main__":
    key = jax.random.PRNGKey(0)
    kp, kx = jax.random.split(key)
    params = init_params(kp, in_chans=6, inplanes=8, num_classes=4)
    consts = prepare_forward(params, H=16, W=16)       # one-time weight/geometry prep
    x = jax.random.uniform(kx, (2, 6, 16, 16), dtype=jnp.float32)

    fwd = jax.jit(bcos_resnet_forward)
    out = jax.block_until_ready(fwd(consts, x))
    assert out.shape == (2, 4), out.shape
    assert bool(jnp.all(jnp.isfinite(out)))
    print("KERNEL_OK")
</pallas_src>

<mosaic_0001>
module attributes {stable_mosaic.version = 11 : i64} {
  func.func @_fused_kernel(%arg0: i32, %arg1: memref<1x6x324xf32, #tpu.memory_space<vmem>>, %arg2: memref<8x72xbf16, #tpu.memory_space<vmem>>, %arg3: memref<8x1xf32, #tpu.memory_space<vmem>>, %arg4: memref<8x72xbf16, #tpu.memory_space<vmem>>, %arg5: memref<8x1xf32, #tpu.memory_space<vmem>>, %arg6: memref<8x72xbf16, #tpu.memory_space<vmem>>, %arg7: memref<8x1xf32, #tpu.memory_space<vmem>>, %arg8: memref<16x72xbf16, #tpu.memory_space<vmem>>, %arg9: memref<16x8xf32, #tpu.memory_space<vmem>>, %arg10: memref<16x1xf32, #tpu.memory_space<vmem>>, %arg11: memref<16x144xbf16, #tpu.memory_space<vmem>>, %arg12: memref<16x1xf32, #tpu.memory_space<vmem>>, %arg13: memref<16x1xf32, #tpu.memory_space<vmem>>, %arg14: memref<32x144xbf16, #tpu.memory_space<vmem>>, %arg15: memref<32x16xf32, #tpu.memory_space<vmem>>, %arg16: memref<32x1xf32, #tpu.memory_space<vmem>>, %arg17: memref<32x288xbf16, #tpu.memory_space<vmem>>, %arg18: memref<32x1xf32, #tpu.memory_space<vmem>>, %arg19: memref<32x1xf32, #tpu.memory_space<vmem>>, %arg20: memref<4x32xf32, #tpu.memory_space<vmem>>, %arg21: memref<286x100xf32, #tpu.memory_space<vmem>>, %arg22: memref<78x36xf32, #tpu.memory_space<vmem>>, %arg23: memref<22x1xf32, #tpu.memory_space<vmem>>, %arg24: memref<1x286xf32, #tpu.memory_space<vmem>>, %arg25: memref<1x78xf32, #tpu.memory_space<vmem>>, %arg26: memref<1x4x1xf32, #tpu.memory_space<vmem>>, %arg27: memref<6x324xf32, #tpu.memory_space<vmem>>, %arg28: memref<8x324xf32, #tpu.memory_space<vmem>>, %arg29: memref<8x324xf32, #tpu.memory_space<vmem>>, %arg30: memref<8x324xf32, #tpu.memory_space<vmem>>, %arg31: memref<72x286xf32, #tpu.memory_space<vmem>>, %arg32: memref<16x100xf32, #tpu.memory_space<vmem>>, %arg33: memref<16x100xf32, #tpu.memory_space<vmem>>, %arg34: memref<144x78xf32, #tpu.memory_space<vmem>>, %arg35: memref<32x36xf32, #tpu.memory_space<vmem>>, %arg36: memref<288x22xf32, #tpu.memory_space<vmem>>) attributes {dimension_semantics = [#tpu.dimension_semantics<parallel>], iteration_bounds = array<i64: 2>, scalar_prefetch = 0 : i64, scratch_operands = 10 : i64, tpu.core_type = #tpu.core_type<tc>, window_params = [{transform_indices = @transform_0, window_bounds = array<i64: 1, 6, 324>}, {pipeline_mode = #tpu.pipeline_mode<synchronous>, transform_indices = @transform_1, window_bounds = array<i64: 8, 72>}, {pipeline_mode = #tpu.pipeline_mode<synchronous>, transform_indices = @transform_2, window_bounds = array<i64: 8, 1>}, {pipeline_mode = #tpu.pipeline_mode<synchronous>, transform_indices = @transform_3, window_bounds = array<i64: 8, 72>}, {pipeline_mode = #tpu.pipeline_mode<synchronous>, transform_indices = @transform_4, window_bounds = array<i64: 8, 1>}, {pipeline_mode = #tpu.pipeline_mode<synchronous>, transform_indices = @transform_5, window_bounds = array<i64: 8, 72>}, {pipeline_mode = #tpu.pipeline_mode<synchronous>, transform_indices = @transform_6, window_bounds = array<i64: 8, 1>}, {pipeline_mode = #tpu.pipeline_mode<synchronous>, transform_indices = @transform_7, window_bounds = array<i64: 16, 72>}, {pipeline_mode = #tpu.pipeline_mode<synchronous>, transform_indices = @transform_8, window_bounds = array<i64: 16, 8>}, {pipeline_mode = #tpu.pipeline_mode<synchronous>, transform_indices = @transform_9, window_bounds = array<i64: 16, 1>}, {pipeline_mode = #tpu.pipeline_mode<synchronous>, transform_indices = @transform_10, window_bounds = array<i64: 16, 144>}, {pipeline_mode = #tpu.pipeline_mode<synchronous>, transform_indices = @transform_11, window_bounds = array<i64: 16, 1>}, {pipeline_mode = #tpu.pipeline_mode<synchronous>, transform_indices = @transform_12, window_bounds = array<i64: 16, 1>}, {pipeline_mode = #tpu.pipeline_mode<synchronous>, transform_indices = @transform_13, window_bounds = array<i64: 32, 144>}, {pipeline_mode = #tpu.pipeline_mode<synchronous>, transform_indices = @transform_14, window_bounds = array<i64: 32, 16>}, {pipeline_mode = #tpu.pipeline_mode<synchronous>, transform_indices = @transform_15, window_bounds = array<i64: 32, 1>}, {pipeline_mode = #tpu.pipeline_mode<synchronous>, transform_indices = @transform_16, window_bounds = array<i64: 32, 288>}, {pipeline_mode = #tpu.pipeline_mode<synchronous>, transform_indices = @transform_17, window_bounds = array<i64: 32, 1>}, {pipeline_mode = #tpu.pipeline_mode<synchronous>, transform_indices = @transform_18, window_bounds = array<i64: 32, 1>}, {pipeline_mode = #tpu.pipeline_mode<synchronous>, transform_indices = @transform_19, window_bounds = array<i64: 4, 32>}, {pipeline_mode = #tpu.pipeline_mode<synchronous>, transform_indices = @transform_20, window_bounds = array<i64: 286, 100>}, {pipeline_mode = #tpu.pipeline_mode<synchronous>, transform_indices = @transform_21, window_bounds = array<i64: 78, 36>}, {pipeline_mode = #tpu.pipeline_mode<synchronous>, transform_indices = @transform_22, window_bounds = array<i64: 22, 1>}, {pipeline_mode = #tpu.pipeline_mode<synchronous>, transform_indices = @transform_23, window_bounds = array<i64: 1, 286>}, {pipeline_mode = #tpu.pipeline_mode<synchronous>, transform_indices = @transform_24, window_bounds = array<i64: 1, 78>}, {transform_indices = @transform_25, window_bounds = array<i64: 1, 4, 1>}]} {
    %cst = arith.constant 0.000000e+00 : f32
    %0 = vector.broadcast %cst : f32 to vector<8x324xf32>
    %c0 = arith.constant 0 : index
    %c0_0 = arith.constant 0 : index
    %1 = vector.load %arg28[%c0, %c0_0] : memref<8x324xf32, #tpu.memory_space<vmem>>, vector<8x324xf32>
    tpu.vector_store %arg28[%c0, %c0_0], %0 {strides = array<i32>} : memref<8x324xf32, #tpu.memory_space<vmem>>, vector<8x324xf32>,
    %cst_1 = arith.constant 0.000000e+00 : f32
    %2 = vector.broadcast %cst_1 : f32 to vector<8x324xf32>
    %c0_2 = arith.constant 0 : index
    %c0_3 = arith.constant 0 : index
    %3 = vector.load %arg29[%c0_2, %c0_3] : memref<8x324xf32, #tpu.memory_space<vmem>>, vector<8x324xf32>
    tpu.vector_store %arg29[%c0_2, %c0_3], %2 {strides = array<i32>} : memref<8x324xf32, #tpu.memory_space<vmem>>, vector<8x324xf32>,
    %cst_4 = arith.constant 0.000000e+00 : f32
    %4 = vector.broadcast %cst_4 : f32 to vector<8x324xf32>
    %c0_5 = arith.constant 0 : index
    %c0_6 = arith.constant 0 : index
    %5 = vector.load %arg30[%c0_5, %c0_6] : memref<8x324xf32, #tpu.memory_space<vmem>>, vector<8x324xf32>
    tpu.vector_store %arg30[%c0_5, %c0_6], %4 {strides = array<i32>} : memref<8x324xf32, #tpu.memory_space<vmem>>, vector<8x324xf32>,
    %cst_7 = arith.constant 0.000000e+00 : f32
    %6 = vector.broadcast %cst_7 : f32 to vector<72x286xf32>
    %c0_8 = arith.constant 0 : index
    %c0_9 = arith.constant 0 : index
    %7 = vector.load %arg31[%c0_8, %c0_9] : memref<72x286xf32, #tpu.memory_space<vmem>>, vector<72x286xf32>
    tpu.vector_store %arg31[%c0_8, %c0_9], %6 {strides = array<i32>} : memref<72x286xf32, #tpu.memory_space<vmem>>, vector<72x286xf32>,
    %c0_10 = arith.constant 0 : index
    %c0_11 = arith.constant 0 : index
    %c0_12 = arith.constant 0 : index
    %8 = vector.load %arg1[%c0_10, %c0_11, %c0_12] : memref<1x6x324xf32, #tpu.memory_space<vmem>>, vector<1x6x324xf32>
    %9 = vector.shape_cast %8 : vector<1x6x324xf32> to vector<6x324xf32>
    %c0_13 = arith.constant 0 : index
    %c0_14 = arith.constant 0 : index
    %10 = vector.load %arg27[%c0_13, %c0_14] : memref<6x324xf32, #tpu.memory_space<vmem>>, vector<6x324xf32>
    tpu.vector_store %arg27[%c0_13, %c0_14], %9 {strides = array<i32>} : memref<6x324xf32, #tpu.memory_space<vmem>>, vector<6x324xf32>,
    %c0_15 = arith.constant 0 : index
    %c0_16 = arith.constant 0 : index
    %11 = vector.load %arg24[%c0_15, %c0_16] : memref<1x286xf32, #tpu.memory_space<vmem>>, vector<1x286xf32>
    %c0_17 = arith.constant 0 : index
    %c0_18 = arith.constant 0 : index
    %12 = vector.load %arg25[%c0_17, %c0_18] : memref<1x78xf32, #tpu.memory_space<vmem>>, vector<1x78xf32>
    %c0_19 = arith.constant 0 : index
    %c0_20 = arith.constant 0 : index
    %13 = vector.load %arg27[%c0_19, %c0_20] : memref<6x324xf32, #tpu.memory_space<vmem>>, vector<6x286xf32>
    %c0_21 = arith.constant 0 : index
    %c0_22 = arith.constant 0 : index
    %14 = vector.load %arg31[%c0_21, %c0_22] : memref<72x286xf32, #tpu.memory_space<vmem>>, vector<6x286xf32>
    tpu.vector_store %arg31[%c0_21, %c0_22], %13 {strides = array<i32>} : memref<72x286xf32, #tpu.memory_space<vmem>>, vector<6x286xf32>,
    %c0_23 = arith.constant 0 : index
    %c1 = arith.constant 1 : index
    %15 = vector.load %arg27[%c0_23, %c1] : memref<6x324xf32, #tpu.memory_space<vmem>>, vector<6x286xf32>
    %c8 = arith.constant 8 : index
    %c0_24 = arith.constant 0 : index
    %16 = vector.load %arg31[%c8, %c0_24] : memref<72x286xf32, #tpu.memory_space<vmem>>, vector<6x286xf32>
    tpu.vector_store %arg31[%c8, %c0_24], %15 {strides = array<i32>} : memref<72x286xf32, #tpu.memory_space<vmem>>, vector<6x286xf32>,
    %c0_25 = arith.constant 0 : index
    %c2 = arith.constant 2 : index
    %17 = vector.load %arg27[%c0_25, %c2] : memref<6x324xf32, #tpu.memory_space<vmem>>, vector<6x286xf32>
    %c16 = arith.constant 16 : index
    %c0_26 = arith.constant 0 : index
    %18 = vector.load %arg31[%c16, %c0_26] : memref<72x286xf32, #tpu.memory_space<vmem>>, vector<6x286xf32>
    tpu.vector_store %arg31[%c16, %c0_26], %17 {strides = array<i32>} : memref<72x286xf32, #tpu.memory_space<vmem>>, vector<6x286xf32>,
    %c0_27 = arith.constant 0 : index
    %c18 = arith.constant 18 : index
    %19 = vector.load %arg27[%c0_27, %c18] : memref<6x324xf32, #tpu.memory_space<vmem>>, vector<6x286xf32>
    %c24 = arith.constant 24 : index
    %c0_28 = arith.constant 0 : index
    %20 = vector.load %arg31[%c24, %c0_28] : memref<72x286xf32, #tpu.memory_space<vmem>>, vector<6x286xf32>
    tpu.vector_store %arg31[%c24, %c0_28], %19 {strides = array<i32>} : memref<72x286xf32, #tpu.memory_space<vmem>>, vector<6x286xf32>,
    %c0_29 = arith.constant 0 : index
    %c19 = arith.constant 19 : index
    %21 = vector.load %arg27[%c0_29, %c19] : memref<6x324xf32, #tpu.memory_space<vmem>>, vector<6x286xf32>
    %c32 = arith.constant 32 : index
    %c0_30 = arith.constant 0 : index
    %22 = vector.load %arg31[%c32, %c0_30] : memref<72x286xf32, #tpu.memory_space<vmem>>, vector<6x286xf32>
    tpu.vector_store %arg31[%c32, %c0_30], %21 {strides = array<i32>} : memref<72x286xf32, #tpu.memory_space<vmem>>, vector<6x286xf32>,
    %c0_31 = arith.constant 0 : index
    %c20 = arith.constant 20 : index
    %23 = vector.load %arg27[%c0_31, %c20] : memref<6x324xf32, #tpu.memory_space<vmem>>, vector<6x286xf32>
    %c40 = arith.constant 40 : index
    %c0_32 = arith.constant 0 : index
    %24 = vector.load %arg31[%c40, %c0_32] : memref<72x286xf32, #tpu.memory_space<vmem>>, vector<6x286xf32>
    tpu.vector_store %arg31[%c40, %c0_32], %23 {strides = array<i32>} : memref<72x286xf32, #tpu.memory_space<vmem>>, vector<6x286xf32>,
    %c0_33 = arith.constant 0 : index
    %c36 = arith.constant 36 : index
    %25 = vector.load %arg27[%c0_33, %c36] : memref<6x324xf32, #tpu.memory_space<vmem>>, vector<6x286xf32>
    %c48 = arith.constant 48 : index
    %c0_34 = arith.constant 0 : index
    %26 = vector.load %arg31[%c48, %c0_34] : memref<72x286xf32, #tpu.memory_space<vmem>>, vector<6x286xf32>
    tpu.vector_store %arg31[%c48, %c0_34], %25 {strides = array<i32>} : memref<72x286xf32, #tpu.memory_space<vmem>>, vector<6x286xf32>,
    %c0_35 = arith.constant 0 : index
    %c37 = arith.constant 37 : index
    %27 = vector.load %arg27[%c0_35, %c37] : memref<6x324xf32, #tpu.memory_space<vmem>>, vector<6x286xf32>
    %c56 = arith.constant 56 : index
    %c0_36 = arith.constant 0 : index
    %28 = vector.load %arg31[%c56, %c0_36] : memref<72x286xf32, #tpu.memory_space<vmem>>, vector<6x286xf32>
    tpu.vector_store %arg31[%c56, %c0_36], %27 {strides = array<i32>} : memref<72x286xf32, #tpu.memory_space<vmem>>, vector<6x286xf32>,
    %c0_37 = arith.constant 0 : index
    %c38 = arith.constant 38 : index
    %29 = vector.load %arg27[%c0_37, %c38] : memref<6x324xf32, #tpu.memory_space<vmem>>, vector<6x286xf32>
    %c64 = arith.constant 64 : index
    %c0_38 = arith.constant 0 : index
    %30 = vector.load %arg31[%c64, %c0_38] : memref<72x286xf32, #tpu.memory_space<vmem>>, vector<6x286xf32>
    tpu.vector_store %arg31[%c64, %c0_38], %29 {strides = array<i32>} : memref<72x286xf32, #tpu.memory_space<vmem>>, vector<6x286xf32>,
    %c0_39 = arith.constant 0 : index
    %c0_40 = arith.constant 0 : index
    %31 = vector.load %arg2[%c0_39, %c0_40] : memref<8x72xbf16, #tpu.memory_space<vmem>>, vector<8x72xbf16>
    %c0_41 = arith.constant 0 : index
    %c0_42 = arith.constant 0 : index
    %32 = vector.load %arg31[%c0_41, %c0_42] : memref<72x286xf32, #tpu.memory_space<vmem>>, vector<72x286xf32>
    %33 = arith.truncf %32 : vector<72x286xf32> to vector<72x286xbf16>
    %cst_43 = arith.constant dense<0.000000e+00> : vector<8x286xf32>
    %34 = tpu.matmul %31, %33, %cst_43 {dimension_numbers = #tpu.dot_dimension_numbers<[1], [0], [0], [1], [0, 0, 1, 1], [], []>} : vector<8x72xbf16>, vector<72x286xbf16>, vector<8x286xf32> -> vector<8x286xf32>
    %c0_44 = arith.constant 0 : index
    %c0_45 = arith.constant 0 : index
    %35 = vector.load %arg27[%c0_44, %c0_45] : memref<6x324xf32, #tpu.memory_space<vmem>>, vector<6x324xf32>
    %36 = arith.mulf %35, %35 : vector<6x324xf32>
    %cst_46 = arith.constant 1.000000e+00 : f32
    %37 = vector.broadcast %cst_46 : f32 to vector<1x6xf32>
    %cst_47 = arith.constant dense<0.000000e+00> : vector<1x324xf32>
    %38 = tpu.matmul %37, %36, %cst_47 {dimension_numbers = #tpu.dot_dimension_numbers<[1], [0], [0], [1], [0, 0, 1, 1], [], []>} : vector<1x6xf32>, vector<6x324xf32>, vector<1x324xf32> -> vector<1x324xf32>
    %39 = vector.extract_strided_slice %38 {offsets = [0, 0], sizes = [1, 286], strides = [1, 1]} : vector<1x324xf32> to vector<1x286xf32>
    %40 = vector.extract_strided_slice %38 {offsets = [0, 1], sizes = [1, 286], strides = [1, 1]} : vector<1x324xf32> to vector<1x286xf32>
    %41 = arith.addf %39, %40 : vector<1x286xf32>
    %42 = vector.extract_strided_slice %38 {offsets = [0, 2], sizes = [1, 286], strides = [1, 1]} : vector<1x324xf32> to vector<1x286xf32>
    %43 = arith.addf %41, %42 : vector<1x286xf32>
    %44 = vector.extract_strided_slice %38 {offsets = [0, 18], sizes = [1, 286], strides = [1, 1]} : vector<1x324xf32> to vector<1x286xf32>
    %45 = arith.addf %43, %44 : vector<1x286xf32>
    %46 = vector.extract_strided_slice %38 {offsets = [0, 19], sizes = [1, 286], strides = [1, 1]} : vector<1x324xf32> to vector<1x286xf32>
    %47 = arith.addf %45, %46 : vector<1x286xf32>
    %48 = vector.extract_strided_slice %38 {offsets = [0, 20], sizes = [1, 286], strides = [1, 1]} : vector<1x324xf32> to vector<1x286xf32>
    %49 = arith.addf %47, %48 : vector<1x286xf32>
    %50 = vector.extract_strided_slice %38 {offsets = [0, 36], sizes = [1, 286], strides = [1, 1]} : vector<1x324xf32> to vector<1x286xf32>
    %51 = arith.addf %49, %50 : vector<1x286xf32>
    %52 = vector.extract_strided_slice %38 {offsets = [0, 37], sizes = [1, 286], strides = [1, 1]} : vector<1x324xf32> to vector<1x286xf32>
    %53 = arith.addf %51, %52 : vector<1x286xf32>
    %54 = vector.extract_strided_slice %38 {offsets = [0, 38], sizes = [1, 286], strides = [1, 1]} : vector<1x324xf32> to vector<1x286xf32>
    %55 = arith.addf %53, %54 : vector<1x286xf32>
    %56 = math.absf %34 : vector<8x286xf32>
    %cst_48 = arith.constant 9.99999997E-7 : f32
    %57 = vector.broadcast %cst_48 : f32 to vector<1x286xf32>
    %58 = arith.addf %55, %57 : vector<1x286xf32>
    %59 = math.rsqrt %58 : vector<1x286xf32>
    %60 = vector.broadcast %59 : vector<1x286xf32> to vector<8x286xf32>
    %61 = arith.mulf %56, %60 : vector<8x286xf32>
    %62 = arith.mulf %34, %61 : vector<8x286xf32>
    %63 = vector.broadcast %11 : vector<1x286xf32> to vector<8x286xf32>
    %64 = arith.mulf %62, %63 : vector<8x286xf32>
    %c0_49 = arith.constant 0 : index
    %c0_50 = arith.constant 0 : index
    %65 = vector.load %arg3[%c0_49, %c0_50] : memref<8x1xf32, #tpu.memory_space<vmem>>, vector<8x1xf32>
    %cst_51 = arith.constant 1.000000e+00 : f32
    %66 = vector.broadcast %cst_51 : f32 to vector<1x8xf32>
    %cst_52 = arith.constant dense<0.000000e+00> : vector<1x286xf32>
    %67 = tpu.matmul %66, %64, %cst_52 {dimension_numbers = #tpu.dot_dimension_numbers<[1], [0], [0], [1], [0, 0, 1, 1], [], []>} : vector<1x8xf32>, vector<8x286xf32>, vector<1x286xf32> -> vector<1x286xf32>
    %cst_53 = arith.constant 1.250000e-01 : f32
    %68 = vector.broadcast %cst_53 : f32 to vector<1x286xf32>
    %69 = arith.mulf %67, %68 : vector<1x286xf32>
    %70 = arith.mulf %64, %64 : vector<8x286xf32>
    %cst_54 = arith.constant 1.000000e+00 : f32
    %71 = vector.broadcast %cst_54 : f32 to vector<1x8xf32>
    %cst_55 = arith.constant dense<0.000000e+00> : vector<1x286xf32>
    %72 = tpu.matmul %71, %70, %cst_55 {dimension_numbers = #tpu.dot_dimension_numbers<[1], [0], [0], [1], [0, 0, 1, 1], [], []>} : vector<1x8xf32>, vector<8x286xf32>, vector<1x286xf32> -> vector<1x286xf32>
    %cst_56 = arith.constant 1.250000e-01 : f32
    %73 = vector.broadcast %cst_56 : f32 to vector<1x286xf32>
    %74 = arith.mulf %72, %73 : vector<1x286xf32>
    %75 = arith.mulf %69, %69 : vector<1x286xf32>
    %76 = arith.subf %74, %75 : vector<1x286xf32>
    %cst_57 = arith.constant 0.000000e+00 : f32
    %77 = vector.broadcast %cst_57 : f32 to vector<1x286xf32>
    %78 = arith.maximumf %76, %77 : vector<1x286xf32>
    %79 = vector.broadcast %69 : vector<1x286xf32> to vector<8x286xf32>
    %80 = arith.subf %64, %79 : vector<8x286xf32>
    %cst_58 = arith.constant 9.99999974E-6 : f32
    %81 = vector.broadcast %cst_58 : f32 to vector<1x286xf32>
    %82 = arith.addf %78, %81 : vector<1x286xf32>
    %83 = math.rsqrt %82 : vector<1x286xf32>
    %84 = vector.broadcast %83 : vector<1x286xf32> to vector<8x286xf32>
    %85 = arith.mulf %80, %84 : vector<8x286xf32>
    %86 = vector.broadcast %65 : vector<8x1xf32> to vector<8x286xf32>
    %87 = arith.mulf %85, %86 : vector<8x286xf32>
    %c0_59 = arith.constant 0 : index
    %c19_60 = arith.constant 19 : index
    %88 = vector.load %arg28[%c0_59, %c19_60] : memref<8x324xf32, #tpu.memory_space<vmem>>, vector<8x286xf32>
    tpu.vector_store %arg28[%c0_59, %c19_60], %87 {strides = array<i32>} : memref<8x324xf32, #tpu.memory_space<vmem>>, vector<8x286xf32>,
    %c0_61 = arith.constant 0 : index
    %c0_62 = arith.constant 0 : index
    %89 = vector.load %arg28[%c0_61, %c0_62] : memref<8x324xf32, #tpu.memory_space<vmem>>, vector<8x286xf32>
    %c0_63 = arith.constant 0 : index
    %c0_64 = arith.constant 0 : index
    %90 = vector.load %arg31[%c0_63, %c0_64] : memref<72x286xf32, #tpu.memory_space<vmem>>, vector<8x286xf32>
    tpu.vector_store %arg31[%c0_63, %c0_64], %89 {strides = array<i32>} : memref<72x286xf32, #tpu.memory_space<vmem>>, vector<8x286xf32>,
    %c0_65 = arith.constant 0 : index
    %c1_66 = arith.constant 1 : index
    %91 = vector.load %arg28[%c0_65, %c1_66] : memref<8x324xf32, #tpu.memory_space<vmem>>, vector<8x286xf32>
    %c8_67 = arith.constant 8 : index
    %c0_68 = arith.constant 0 : index
    %92 = vector.load %arg31[%c8_67, %c0_68] : memref<72x286xf32, #tpu.memory_space<vmem>>, vector<8x286xf32>
    tpu.vector_store %arg31[%c8_67, %c0_68], %91 {strides = array<i32>} : memref<72x286xf32, #tpu.memory_space<vmem>>, vector<8x286xf32>,
    %c0_69 = arith.constant 0 : index
    %c2_70 = arith.constant 2 : index
    %93 = vector.load %arg28[%c0_69, %c2_70] : memref<8x324xf32, #tpu.memory_space<vmem>>, vector<8x286xf32>
    %c16_71 = arith.constant 16 : index
    %c0_72 = arith.constant 0 : index
    %94 = vector.load %arg31[%c16_71, %c0_72] : memref<72x286xf32, #tpu.memory_space<vmem>>, vector<8x286xf32>
    tpu.vector_store %arg31[%c16_71, %c0_72], %93 {strides = array<i32>} : memref<72x286xf32, #tpu.memory_space<vmem>>, vector<8x286xf32>,
    %c0_73 = arith.constant 0 : index
    %c18_74 = arith.constant 18 : index
    %95 = vector.load %arg28[%c0_73, %c18_74] : memref<8x324xf32, #tpu.memory_space<vmem>>, vector<8x286xf32>
    %c24_75 = arith.constant 24 : index
    %c0_76 = arith.constant 0 : index
    %96 = vector.load %arg31[%c24_75, %c0_76] : memref<72x286xf32, #tpu.memory_space<vmem>>, vector<8x286xf32>
    tpu.vector_store %arg31[%c24_75, %c0_76], %95 {strides = array<i32>} : memref<72x286xf32, #tpu.memory_space<vmem>>, vector<8x286xf32>,
    %c0_77 = arith.constant 0 : index
    %c19_78 = arith.constant 19 : index
    %97 = vector.load %arg28[%c0_77, %c19_78] : memref<8x324xf32, #tpu.memory_space<vmem>>, vector<8x286xf32>
    %c32_79 = arith.constant 32 : index
    %c0_80 = arith.constant 0 : index
    %98 = vector.load %arg31[%c32_79, %c0_80] : memref<72x286xf32, #tpu.memory_space<vmem>>, vector<8x286xf32>
    tpu.vector_store %arg31[%c32_79, %c0_80], %97 {strides = array<i32>} : memref<72x286xf32, #tpu.memory_space<vmem>>, vector<8x286xf32>,
    %c0_81 = arith.constant 0 : index
    %c20_82 = arith.constant 20 : index
    %99 = vector.load %arg28[%c0_81, %c20_82] : memref<8x324xf32, #tpu.memory_space<vmem>>, vector<8x286xf32>
    %c40_83 = arith.constant 40 : index
    %c0_84 = arith.constant 0 : index
    %100 = vector.load %arg31[%c40_83, %c0_84] : memref<72x286xf32, #tpu.memory_space<vmem>>, vector<8x286xf32>
    tpu.vector_store %arg31[%c40_83, %c0_84], %99 {strides = array<i32>} : memref<72x286xf32, #tpu.memory_space<vmem>>, vector<8x286xf32>,
    %c0_85 = arith.constant 0 : index
    %c36_86 = arith.constant 36 : index
    %101 = vector.load %arg28[%c0_85, %c36_86] : memref<8x324xf32, #tpu.memory_space<vmem>>, vector<8x286xf32>
    %c48_87 = arith.constant 48 : index
    %c0_88 = arith.constant 0 : index
    %102 = vector.load %arg31[%c48_87, %c0_88] : memref<72x286xf32, #tpu.memory_space<vmem>>, vector<8x286xf32>
    tpu.vector_store %arg31[%c48_87, %c0_88], %101 {strides = array<i32>} : memref<72x286xf32, #tpu.memory_space<vmem>>, vector<8x286xf32>,
    %c0_89 = arith.constant 0 : index
    %c37_90 = arith.constant 37 : index
    %103 = vector.load %arg28[%c0_89, %c37_90] : memref<8x324xf32, #tpu.memory_space<vmem>>, vector<8x286xf32>
    %c56_91 = arith.constant 56 : index
    %c0_92 = arith.constant 0 : index
    %104 = vector.load %arg31[%c56_91, %c0_92] : memref<72x286xf32, #tpu.memory_space<vmem>>, vector<8x286xf32>
    tpu.vector_store %arg31[%c56_91, %c0_92], %103 {strides = array<i32>} : memref<72x286xf32, #tpu.memory_space<vmem>>, vector<8x286xf32>,
    %c0_93 = arith.constant 0 : index
    %c38_94 = arith.constant 38 : index
    %105 = vector.load %arg28[%c0_93, %c38_94] : memref<8x324xf32, #tpu.memory_space<vmem>>, vector<8x286xf32>
    %c64_95 = arith.constant 64 : index
    %c0_96 = arith.constant 0 : index
    %106 = vector.load %arg31[%c64_95, %c0_96] : memref<72x286xf32, #tpu.memory_space<vmem>>, vector<8x286xf32>
    tpu.vector_store %arg31[%c64_95, %c0_96], %105 {strides = array<i32>} : memref<72x286xf32, #tpu.memory_space<vmem>>, vector<8x286xf32>,
    %c0_97 = arith.constant 0 : index
    %c0_98 = arith.constant 0 : index
    %107 = vector.load %arg4[%c0_97, %c0_98] : memref<8x72xbf16, #tpu.memory_space<vmem>>, vector<8x72xbf16>
    %c0_99 = arith.constant 0 : index
    %c0_100 = arith.constant 0 : index
    %108 = vector.load %arg31[%c0_99, %c0_100] : memref<72x286xf32, #tpu.memory_space<vmem>>, vector<72x286xf32>
    %109 = arith.truncf %108 : vector<72x286xf32> to vector<72x286xbf16>
    %cst_101 = arith.constant dense<0.000000e+00> : vector<8x286xf32>
    %110 = tpu.matmul %107, %109, %cst_101 {dimension_numbers = #tpu.dot_dimension_numbers<[1], [0], [0], [1], [0, 0, 1, 1], [], []>} : vector<8x72xbf16>, vector<72x286xbf16>, vector<8x286xf32> -> vector<8x286xf32>
    %c0_102 = arith.constant 0 : index
    %c0_103 = arith.constant 0 : index
    %111 = vector.load %arg28[%c0_102, %c0_103] : memref<8x324xf32, #tpu.memory_space<vmem>>, vector<8x324xf32>
    %112 = arith.mulf %111, %111 : vector<8x324xf32>
    %cst_104 = arith.constant 1.000000e+00 : f32
    %113 = vector.broadcast %cst_104 : f32 to vector<1x8xf32>
    %cst_105 = arith.constant dense<0.000000e+00> : vector<1x324xf32>
    %114 = tpu.matmul %113, %112, %cst_105 {dimension_numbers = #tpu.dot_dimension_numbers<[1], [0], [0], [1], [0, 0, 1, 1], [], []>} : vector<1x8xf32>, vector<8x324xf32>, vector<1x324xf32> -> vector<1x324xf32>
    %115 = vector.extract_strided_slice %114 {offsets = [0, 0], sizes = [1, 286], strides = [1, 1]} : vector<1x324xf32> to vector<1x286xf32>
    %116 = vector.extract_strided_slice %114 {offsets = [0, 1], sizes = [1, 286], strides = [1, 1]} : vector<1x324xf32> to vector<1x286xf32>
    %117 = arith.addf %115, %116 : vector<1x286xf32>
    %118 = vector.extract_strided_slice %114 {offsets = [0, 2], sizes = [1, 286], strides = [1, 1]} : vector<1x324xf32> to vector<1x286xf32>
    %119 = arith.addf %117, %118 : vector<1x286xf32>
    %120 = vector.extract_strided_slice %114 {offsets = [0, 18], sizes = [1, 286], strides = [1, 1]} : vector<1x324xf32> to vector<1x286xf32>
    %121 = arith.addf %119, %120 : vector<1x286xf32>
    %122 = vector.extract_strided_slice %114 {offsets = [0, 19], sizes = [1, 286], strides = [1, 1]} : vector<1x324xf32> to vector<1x286xf32>
    %123 = arith.addf %121, %122 : vector<1x286xf32>
    %124 = vector.extract_strided_slice %114 {offsets = [0, 20], sizes = [1, 286], strides = [1, 1]} : vector<1x324xf32> to vector<1x286xf32>
    %125 = arith.addf %123, %124 : vector<1x286xf32>
    %126 = vector.extract_strided_slice %114 {offsets = [0, 36], sizes = [1, 286], strides = [1, 1]} : vector<1x324xf32> to vector<1x286xf32>
    %127 = arith.addf %125, %126 : vector<1x286xf32>
    %128 = vector.extract_strided_slice %114 {offsets = [0, 37], sizes = [1, 286], strides = [1, 1]} : vector<1x324xf32> to vector<1x286xf32>
    %129 = arith.addf %127, %128 : vector<1x286xf32>
    %130 = vector.extract_strided_slice %114 {offsets = [0, 38], sizes = [1, 286], strides = [1, 1]} : vector<1x324xf32> to vector<1x286xf32>
    %131 = arith.addf %129, %130 : vector<1x286xf32>
    %132 = math.absf %110 : vector<8x286xf32>
    %cst_106 = arith.constant 9.99999997E-7 : f32
    %133 = vector.broadcast %cst_106 : f32 to vector<1x286xf32>
    %134 = arith.addf %131, %133 : vector<1x286xf32>
    %135 = math.rsqrt %134 : vector<1x286xf32>
    %136 = vector.broadcast %135 : vector<1x286xf32> to vector<8x286xf32>
    %137 = arith.mulf %132, %136 : vector<8x286xf32>
    %138 = arith.mulf %110, %137 : vector<8x286xf32>
    %139 = vector.broadcast %11 : vector<1x286xf32> to vector<8x286xf32>
    %140 = arith.mulf %138, %139 : vector<8x286xf32>
    %c0_107 = arith.constant 0 : index
    %c0_108 = arith.constant 0 : index
    %141 = vector.load %arg5[%c0_107, %c0_108] : memref<8x1xf32, #tpu.memory_space<vmem>>, vector<8x1xf32>
    %cst_109 = arith.constant 1.000000e+00 : f32
    %142 = vector.broadcast %cst_109 : f32 to vector<1x8xf32>
    %cst_110 = arith.constant dense<0.000000e+00> : vector<1x286xf32>
    %143 = tpu.matmul %142, %140, %cst_110 {dimension_numbers = #tpu.dot_dimension_numbers<[1], [0], [0], [1], [0, 0, 1, 1], [], []>} : vector<1x8xf32>, vector<8x286xf32>, vector<1x286xf32> -> vector<1x286xf32>
    %cst_111 = arith.constant 1.250000e-01 : f32
    %144 = vector.broadcast %cst_111 : f32 to vector<1x286xf32>
    %145 = arith.mulf %143, %144 : vector<1x286xf32>
    %146 = arith.mulf %140, %140 : vector<8x286xf32>
    %cst_112 = arith.constant 1.000000e+00 : f32
    %147 = vector.broadcast %cst_112 : f32 to vector<1x8xf32>
    %cst_113 = arith.constant dense<0.000000e+00> : vector<1x286xf32>
    %148 = tpu.matmul %147, %146, %cst_113 {dimension_numbers = #tpu.dot_dimension_numbers<[1], [0], [0], [1], [0, 0, 1, 1], [], []>} : vector<1x8xf32>, vector<8x286xf32>, vector<1x286xf32> -> vector<1x286xf32>
    %cst_114 = arith.constant 1.250000e-01 : f32
    %149 = vector.broadcast %cst_114 : f32 to vector<1x286xf32>
    %150 = arith.mulf %148, %149 : vector<1x286xf32>
    %151 = arith.mulf %145, %145 : vector<1x286xf32>
    %152 = arith.subf %150, %151 : vector<1x286xf32>
    %cst_115 = arith.constant 0.000000e+00 : f32
    %153 = vector.broadcast %cst_115 : f32 to vector<1x286xf32>
    %154 = arith.maximumf %152, %153 : vector<1x286xf32>
    %155 = vector.broadcast %145 : vector<1x286xf32> to vector<8x286xf32>
    %156 = arith.subf %140, %155 : vector<8x286xf32>
    %cst_116 = arith.constant 9.99999974E-6 : f32
    %157 = vector.broadcast %cst_116 : f32 to vector<1x286xf32>
    %158 = arith.addf %154, %157 : vector<1x286xf32>
    %159 = math.rsqrt %158 : vector<1x286xf32>
    %160 = vector.broadcast %159 : vector<1x286xf32> to vector<8x286xf32>
    %161 = arith.mulf %156, %160 : vector<8x286xf32>
    %162 = vector.broadcast %141 : vector<8x1xf32> to vector<8x286xf32>
    %163 = arith.mulf %161, %162 : vector<8x286xf32>
    %c0_117 = arith.constant 0 : index
    %c19_118 = arith.constant 19 : index
    %164 = vector.load %arg29[%c0_117, %c19_118] : memref<8x324xf32, #tpu.memory_space<vmem>>, vector<8x286xf32>
    tpu.vector_store %arg29[%c0_117, %c19_118], %163 {strides = array<i32>} : memref<8x324xf32, #tpu.memory_space<vmem>>, vector<8x286xf32>,
    %c0_119 = arith.constant 0 : index
    %c0_120 = arith.constant 0 : index
    %165 = vector.load %arg29[%c0_119, %c0_120] : memref<8x324xf32, #tpu.memory_space<vmem>>, vector<8x286xf32>
    %c0_121 = arith.constant 0 : index
    %c0_122 = arith.constant 0 : index
    %166 = vector.load %arg31[%c0_121, %c0_122] : memref<72x286xf32, #tpu.memory_space<vmem>>, vector<8x286xf32>
    tpu.vector_store %arg31[%c0_121, %c0_122], %165 {strides = array<i32>} : memref<72x286xf32, #tpu.memory_space<vmem>>, vector<8x286xf32>,
    %c0_123 = arith.constant 0 : index
    %c1_124 = arith.constant 1 : index
    %167 = vector.load %arg29[%c0_123, %c1_124] : memref<8x324xf32, #tpu.memory_space<vmem>>, vector<8x286xf32>
    %c8_125 = arith.constant 8 : index
    %c0_126 = arith.constant 0 : index
    %168 = vector.load %arg31[%c8_125, %c0_126] : memref<72x286xf32, #tpu.memory_space<vmem>>, vector<8x286xf32>
    tpu.vector_store %arg31[%c8_125, %c0_126], %167 {strides = array<i32>} : memref<72x286xf32, #tpu.memory_space<vmem>>, vector<8x286xf32>,
    %c0_127 = arith.constant 0 : index
    %c2_128 = arith.constant 2 : index
    %169 = vector.load %arg29[%c0_127, %c2_128] : memref<8x324xf32, #tpu.memory_space<vmem>>, vector<8x286xf32>
    %c16_129 = arith.constant 16 : index
    %c0_130 = arith.constant 0 : index
    %170 = vector.load %arg31[%c16_129, %c0_130] : memref<72x286xf32, #tpu.memory_space<vmem>>, vector<8x286xf32>
    tpu.vector_store %arg31[%c16_129, %c0_130], %169 {strides = array<i32>} : memref<72x286xf32, #tpu.memory_space<vmem>>, vector<8x286xf32>,
    %c0_131 = arith.constant 0 : index
    %c18_132 = arith.constant 18 : index
    %171 = vector.load %arg29[%c0_131, %c18_132] : memref<8x324xf32, #tpu.memory_space<vmem>>, vector<8x286xf32>
    %c24_133 = arith.constant 24 : index
    %c0_134 = arith.constant 0 : index
    %172 = vector.load %arg31[%c24_133, %c0_134] : memref<72x286xf32, #tpu.memory_space<vmem>>, vector<8x286xf32>
    tpu.vector_store %arg31[%c24_133, %c0_134], %171 {strides = array<i32>} : memref<72x286xf32, #tpu.memory_space<vmem>>, vector<8x286xf32>,
    %c0_135 = arith.constant 0 : index
    %c19_136 = arith.constant 19 : index
    %173 = vector.load %arg29[%c0_135, %c19_136] : memref<8x324xf32, #tpu.memory_space<vmem>>, vector<8x286xf32>
    %c32_137 = arith.constant 32 : index
    %c0_138 = arith.constant 0 : index
    %174 = vector.load %arg31[%c32_137, %c0_138] : memref<72x286xf32, #tpu.memory_space<vmem>>, vector<8x286xf32>
    tpu.vector_store %arg31[%c32_137, %c0_138], %173 {strides = array<i32>} : memref<72x286xf32, #tpu.memory_space<vmem>>, vector<8x286xf32>,
    %c0_139 = arith.constant 0 : index
    %c20_140 = arith.constant 20 : index
    %175 = vector.load %arg29[%c0_139, %c20_140] : memref<8x324xf32, #tpu.memory_space<vmem>>, vector<8x286xf32>
    %c40_141 = arith.constant 40 : index
    %c0_142 = arith.constant 0 : index
    %176 = vector.load %arg31[%c40_141, %c0_142] : memref<72x286xf32, #tpu.memory_space<vmem>>, vector<8x286xf32>
    tpu.vector_store %arg31[%c40_141, %c0_142], %175 {strides = array<i32>} : memref<72x286xf32, #tpu.memory_space<vmem>>, vector<8x286xf32>,
    %c0_143 = arith.constant 0 : index
    %c36_144 = arith.constant 36 : index
    %177 = vector.load %arg29[%c0_143, %c36_144] : memref<8x324xf32, #tpu.memory_space<vmem>>, vector<8x286xf32>
    %c48_145 = arith.constant 48 : index
    %c0_146 = arith.constant 0 : index
    %178 = vector.load %arg31[%c48_145, %c0_146] : memref<72x286xf32, #tpu.memory_space<vmem>>, vector<8x286xf32>
    tpu.vector_store %arg31[%c48_145, %c0_146], %177 {strides = array<i32>} : memref<72x286xf32, #tpu.memory_space<vmem>>, vector<8x286xf32>,
    %c0_147 = arith.constant 0 : index
    %c37_148 = arith.constant 37 : index
    %179 = vector.load %arg29[%c0_147, %c37_148] : memref<8x324xf32, #tpu.memory_space<vmem>>, vector<8x286xf32>
    %c56_149 = arith.constant 56 : index
    %c0_150 = arith.constant 0 : index
    %180 = vector.load %arg31[%c56_149, %c0_150] : memref<72x286xf32, #tpu.memory_space<vmem>>, vector<8x286xf32>
    tpu.vector_store %arg31[%c56_149, %c0_150], %179 {strides = array<i32>} : memref<72x286xf32, #tpu.memory_space<vmem>>, vector<8x286xf32>,
    %c0_151 = arith.constant 0 : index
    %c38_152 = arith.constant 38 : index
    %181 = vector.load %arg29[%c0_151, %c38_152] : memref<8x324xf32, #tpu.memory_space<vmem>>, vector<8x286xf32>
    %c64_153 = arith.constant 64 : index
    %c0_154 = arith.constant 0 : index
    %182 = vector.load %arg31[%c64_153, %c0_154] : memref<72x286xf32, #tpu.memory_space<vmem>>, vector<8x286xf32>
    tpu.vector_store %arg31[%c64_153, %c0_154], %181 {strides = array<i32>} : memref<72x286xf32, #tpu.memory_space<vmem>>, vector<8x286xf32>,
    %c0_155 = arith.constant 0 : index
    %c0_156 = arith.constant 0 : index
    %183 = vector.load %arg6[%c0_155, %c0_156] : memref<8x72xbf16, #tpu.memory_space<vmem>>, vector<8x72xbf16>
    %c0_157 = arith.constant 0 : index
    %c0_158 = arith.constant 0 : index
    %184 = vector.load %arg31[%c0_157, %c0_158] : memref<72x286xf32, #tpu.memory_space<vmem>>, vector<72x286xf32>
    %185 = arith.truncf %184 : vector<72x286xf32> to vector<72x286xbf16>
    %cst_159 = arith.constant dense<0.000000e+00> : vector<8x286xf32>
    %186 = tpu.matmul %183, %185, %cst_159 {dimension_numbers = #tpu.dot_dimension_numbers<[1], [0], [0], [1], [0, 0, 1, 1], [], []>} : vector<8x72xbf16>, vector<72x286xbf16>, vector<8x286xf32> -> vector<8x286xf32>
    %c0_160 = arith.constant 0 : index
    %c0_161 = arith.constant 0 : index
    %187 = vector.load %arg29[%c0_160, %c0_161] : memref<8x324xf32, #tpu.memory_space<vmem>>, vector<8x324xf32>
    %188 = arith.mulf %187, %187 : vector<8x324xf32>
    %cst_162 = arith.constant 1.000000e+00 : f32
    %189 = vector.broadcast %cst_162 : f32 to vector<1x8xf32>
    %cst_163 = arith.constant dense<0.000000e+00> : vector<1x324xf32>
    %190 = tpu.matmul %189, %188, %cst_163 {dimension_numbers = #tpu.dot_dimension_numbers<[1], [0], [0], [1], [0, 0, 1, 1], [], []>} : vector<1x8xf32>, vector<8x324xf32>, vector<1x324xf32> -> vector<1x324xf32>
    %191 = vector.extract_strided_slice %190 {offsets = [0, 0], sizes = [1, 286], strides = [1, 1]} : vector<1x324xf32> to vector<1x286xf32>
    %192 = vector.extract_strided_slice %190 {offsets = [0, 1], sizes = [1, 286], strides = [1, 1]} : vector<1x324xf32> to vector<1x286xf32>
    %193 = arith.addf %191, %192 : vector<1x286xf32>
    %194 = vector.extract_strided_slice %190 {offsets = [0, 2], sizes = [1, 286], strides = [1, 1]} : vector<1x324xf32> to vector<1x286xf32>
    %195 = arith.addf %193, %194 : vector<1x286xf32>
    %196 = vector.extract_strided_slice %190 {offsets = [0, 18], sizes = [1, 286], strides = [1, 1]} : vector<1x324xf32> to vector<1x286xf32>
    %197 = arith.addf %195, %196 : vector<1x286xf32>
    %198 = vector.extract_strided_slice %190 {offsets = [0, 19], sizes = [1, 286], strides = [1, 1]} : vector<1x324xf32> to vector<1x286xf32>
    %199 = arith.addf %197, %198 : vector<1x286xf32>
    %200 = vector.extract_strided_slice %190 {offsets = [0, 20], sizes = [1, 286], strides = [1, 1]} : vector<1x324xf32> to vector<1x286xf32>
    %201 = arith.addf %199, %200 : vector<1x286xf32>
    %202 = vector.extract_strided_slice %190 {offsets = [0, 36], sizes = [1, 286], strides = [1, 1]} : vector<1x324xf32> to vector<1x286xf32>
    %203 = arith.addf %201, %202 : vector<1x286xf32>
    %204 = vector.extract_strided_slice %190 {offsets = [0, 37], sizes = [1, 286], strides = [1, 1]} : vector<1x324xf32> to vector<1x286xf32>
    %205 = arith.addf %203, %204 : vector<1x286xf32>
    %206 = vector.extract_strided_slice %190 {offsets = [0, 38], sizes = [1, 286], strides = [1, 1]} : vector<1x324xf32> to vector<1x286xf32>
    %207 = arith.addf %205, %206 : vector<1x286xf32>
    %208 = math.absf %186 : vector<8x286xf32>
    %cst_164 = arith.constant 9.99999997E-7 : f32
    %209 = vector.broadcast %cst_164 : f32 to vector<1x286xf32>
    %210 = arith.addf %207, %209 : vector<1x286xf32>
    %211 = math.rsqrt %210 : vector<1x286xf32>
    %212 = vector.broadcast %211 : vector<1x286xf32> to vector<8x286xf32>
    %213 = arith.mulf %208, %212 : vector<8x286xf32>
    %214 = arith.mulf %186, %213 : vector<8x286xf32>
    %215 = vector.broadcast %11 : vector<1x286xf32> to vector<8x286xf32>
    %216 = arith.mulf %214, %215 : vector<8x286xf32>
    %c0_165 = arith.constant 0 : index
    %c0_166 = arith.constant 0 : index
    %217 = vector.load %arg7[%c0_165, %c0_166] : memref<8x1xf32, #tpu.memory_space<vmem>>, vector<8x1xf32>
    %cst_167 = arith.constant 1.000000e+00 : f32
    %218 = vector.broadcast %cst_167 : f32 to vector<1x8xf32>
    %cst_168 = arith.constant dense<0.000000e+00> : vector<1x286xf32>
    %219 = tpu.matmul %218, %216, %cst_168 {dimension_numbers = #tpu.dot_dimension_numbers<[1], [0], [0], [1], [0, 0, 1, 1], [], []>} : vector<1x8xf32>, vector<8x286xf32>, vector<1x286xf32> -> vector<1x286xf32>
    %cst_169 = arith.constant 1.250000e-01 : f32
    %220 = vector.broadcast %cst_169 : f32 to vector<1x286xf32>
    %221 = arith.mulf %219, %220 : vector<1x286xf32>
    %222 = arith.mulf %216, %216 : vector<8x286xf32>
    %cst_170 = arith.constant 1.000000e+00 : f32
    %223 = vector.broadcast %cst_170 : f32 to vector<1x8xf32>
    %cst_171 = arith.constant dense<0.000000e+00> : vector<1x286xf32>
    %224 = tpu.matmul %223, %222, %cst_171 {dimension_numbers = #tpu.dot_dimension_numbers<[1], [0], [0], [1], [0, 0, 1, 1], [], []>} : vector<1x8xf32>, vector<8x286xf32>, vector<1x286xf32> -> vector<1x286xf32>
    %cst_172 = arith.constant 1.250000e-01 : f32
    %225 = vector.broadcast %cst_172 : f32 to vector<1x286xf32>
    %226 = arith.mulf %224, %225 : vector<1x286xf32>
    %227 = arith.mulf %221, %221 : vector<1x286xf32>
    %228 = arith.subf %226, %227 : vector<1x286xf32>
    %cst_173 = arith.constant 0.000000e+00 : f32
    %229 = vector.broadcast %cst_173 : f32 to vector<1x286xf32>
    %230 = arith.maximumf %228, %229 : vector<1x286xf32>
    %231 = vector.broadcast %221 : vector<1x286xf32> to vector<8x286xf32>
    %232 = arith.subf %216, %231 : vector<8x286xf32>
    %cst_174 = arith.constant 9.99999974E-6 : f32
    %233 = vector.broadcast %cst_174 : f32 to vector<1x286xf32>
    %234 = arith.addf %230, %233 : vector<1x286xf32>
    %235 = math.rsqrt %234 : vector<1x286xf32>
    %236 = vector.broadcast %235 : vector<1x286xf32> to vector<8x286xf32>
    %237 = arith.mulf %232, %236 : vector<8x286xf32>
    %238 = vector.broadcast %217 : vector<8x1xf32> to vector<8x286xf32>
    %239 = arith.mulf %237, %238 : vector<8x286xf32>
    %c0_175 = arith.constant 0 : index
    %c19_176 = arith.constant 19 : index
    %240 = vector.load %arg28[%c0_175, %c19_176] : memref<8x324xf32, #tpu.memory_space<vmem>>, vector<8x286xf32>
    %241 = arith.addf %239, %240 : vector<8x286xf32>
    %c0_177 = arith.constant 0 : index
    %c19_178 = arith.constant 19 : index
    %242 = vector.load %arg30[%c0_177, %c19_178] : memref<8x324xf32, #tpu.memory_space<vmem>>, vector<8x286xf32>
    tpu.vector_store %arg30[%c0_177, %c19_178], %241 {strides = array<i32>} : memref<8x324xf32, #tpu.memory_space<vmem>>, vector<8x286xf32>,
    %c0_179 = arith.constant 0 : index
    %c0_180 = arith.constant 0 : index
    %243 = vector.load %arg30[%c0_179, %c0_180] : memref<8x324xf32, #tpu.memory_space<vmem>>, vector<8x286xf32>
    %c0_181 = arith.constant 0 : index
    %c0_182 = arith.constant 0 : index
    %244 = vector.load %arg31[%c0_181, %c0_182] : memref<72x286xf32, #tpu.memory_space<vmem>>, vector<8x286xf32>
    tpu.vector_store %arg31[%c0_181, %c0_182], %243 {strides = array<i32>} : memref<72x286xf32, #tpu.memory_space<vmem>>, vector<8x286xf32>,
    %c0_183 = arith.constant 0 : index
    %c1_184 = arith.constant 1 : index
    %245 = vector.load %arg30[%c0_183, %c1_184] : memref<8x324xf32, #tpu.memory_space<vmem>>, vector<8x286xf32>
    %c8_185 = arith.constant 8 : index
    %c0_186 = arith.constant 0 : index
    %246 = vector.load %arg31[%c8_185, %c0_186] : memref<72x286xf32, #tpu.memory_space<vmem>>, vector<8x286xf32>
    tpu.vector_store %arg31[%c8_185, %c0_186], %245 {strides = array<i32>} : memref<72x286xf32, #tpu.memory_space<vmem>>, vector<8x286xf32>,
    %c0_187 = arith.constant 0 : index
    %c2_188 = arith.constant 2 : index
    %247 = vector.load %arg30[%c0_187, %c2_188] : memref<8x324xf32, #tpu.memory_space<vmem>>, vector<8x286xf32>
    %c16_189 = arith.constant 16 : index
    %c0_190 = arith.constant 0 : index
    %248 = vector.load %arg31[%c16_189, %c0_190] : memref<72x286xf32, #tpu.memory_space<vmem>>, vector<8x286xf32>
    tpu.vector_store %arg31[%c16_189, %c0_190], %247 {strides = array<i32>} : memref<72x286xf32, #tpu.memory_space<vmem>>, vector<8x286xf32>,
    %c0_191 = arith.constant 0 : index
    %c18_192 = arith.constant 18 : index
    %249 = vector.load %arg30[%c0_191, %c18_192] : memref<8x324xf32, #tpu.memory_space<vmem>>, vector<8x286xf32>
    %c24_193 = arith.constant 24 : index
    %c0_194 = arith.constant 0 : index
    %250 = vector.load %arg31[%c24_193, %c0_194] : memref<72x286xf32, #tpu.memory_space<vmem>>, vector<8x286xf32>
    tpu.vector_store %arg31[%c24_193, %c0_194], %249 {strides = array<i32>} : memref<72x286xf32, #tpu.memory_space<vmem>>, vector<8x286xf32>,
    %c0_195 = arith.constant 0 : index
    %c19_196 = arith.constant 19 : index
    %251 = vector.load %arg30[%c0_195, %c19_196] : memref<8x324xf32, #tpu.memory_space<vmem>>, vector<8x286xf32>
    %c32_197 = arith.constant 32 : index
    %c0_198 = arith.constant 0 : index
    %252 = vector.load %arg31[%c32_197, %c0_198] : memref<72x286xf32, #tpu.memory_space<vmem>>, vector<8x286xf32>
    tpu.vector_store %arg31[%c32_197, %c0_198], %251 {strides = array<i32>} : memref<72x286xf32, #tpu.memory_space<vmem>>, vector<8x286xf32>,
    %c0_199 = arith.constant 0 : index
    %c20_200 = arith.constant 20 : index
    %253 = vector.load %arg30[%c0_199, %c20_200] : memref<8x324xf32, #tpu.memory_space<vmem>>, vector<8x286xf32>
    %c40_201 = arith.constant 40 : index
    %c0_202 = arith.constant 0 : index
    %254 = vector.load %arg31[%c40_201, %c0_202] : memref<72x286xf32, #tpu.memory_space<vmem>>, vector<8x286xf32>
    tpu.vector_store %arg31[%c40_201, %c0_202], %253 {strides = array<i32>} : memref<72x286xf32, #tpu.memory_space<vmem>>, vector<8x286xf32>,
    %c0_203 = arith.constant 0 : index
    %c36_204 = arith.constant 36 : index
    %255 = vector.load %arg30[%c0_203, %c36_204] : memref<8x324xf32, #tpu.memory_space<vmem>>, vector<8x286xf32>
    %c48_205 = arith.constant 48 : index
    %c0_206 = arith.constant 0 : index
    %256 = vector.load %arg31[%c48_205, %c0_206] : memref<72x286xf32, #tpu.memory_space<vmem>>, vector<8x286xf32>
    tpu.vector_store %arg31[%c48_205, %c0_206], %255 {strides = array<i32>} : memref<72x286xf32, #tpu.memory_space<vmem>>, vector<8x286xf32>,
    %c0_207 = arith.constant 0 : index
    %c37_208 = arith.constant 37 : index
    %257 = vector.load %arg30[%c0_207, %c37_208] : memref<8x324xf32, #tpu.memory_space<vmem>>, vector<8x286xf32>
    %c56_209 = arith.constant 56 : index
    %c0_210 = arith.constant 0 : index
    %258 = vector.load %arg31[%c56_209, %c0_210] : memref<72x286xf32, #tpu.memory_space<vmem>>, vector<8x286xf32>
    tpu.vector_store %arg31[%c56_209, %c0_210], %257 {strides = array<i32>} : memref<72x286xf32, #tpu.memory_space<vmem>>, vector<8x286xf32>,
    %c0_211 = arith.constant 0 : index
    %c38_212 = arith.constant 38 : index
    %259 = vector.load %arg30[%c0_211, %c38_212] : memref<8x324xf32, #tpu.memory_space<vmem>>, vector<8x286xf32>
    %c64_213 = arith.constant 64 : index
    %c0_214 = arith.constant 0 : index
    %260 = vector.load %arg31[%c64_213, %c0_214] : memref<72x286xf32, #tpu.memory_space<vmem>>, vector<8x286xf32>
    tpu.vector_store %arg31[%c64_213, %c0_214], %259 {strides = array<i32>} : memref<72x286xf32, #tpu.memory_space<vmem>>, vector<8x286xf32>,
    %c0_215 = arith.constant 0 : index
    %c0_216 = arith.constant 0 : index
    %261 = vector.load %arg8[%c0_215, %c0_216] : memref<16x72xbf16, #tpu.memory_space<vmem>>, vector<16x72xbf16>
    %c0_217 = arith.constant 0 : index
    %c0_218 = arith.constant 0 : index
    %262 = vector.load %arg31[%c0_217, %c0_218] : memref<72x286xf32, #tpu.memory_space<vmem>>, vector<72x286xf32>
    %263 = arith.truncf %262 : vector<72x286xf32> to vector<72x286xbf16>
    %cst_219 = arith.constant dense<0.000000e+00> : vector<16x286xf32>
    %264 = tpu.matmul %261, %263, %cst_219 {dimension_numbers = #tpu.dot_dimension_numbers<[1], [0], [0], [1], [0, 0, 1, 1], [], []>} : vector<16x72xbf16>, vector<72x286xbf16>, vector<16x286xf32> -> vector<16x286xf32>
    %c0_220 = arith.constant 0 : index
    %c0_221 = arith.constant 0 : index
    %265 = vector.load %arg30[%c0_220, %c0_221] : memref<8x324xf32, #tpu.memory_space<vmem>>, vector<8x324xf32>
    %266 = arith.mulf %265, %265 : vector<8x324xf32>
    %cst_222 = arith.constant 1.000000e+00 : f32
    %267 = vector.broadcast %cst_222 : f32 to vector<1x8xf32>
    %cst_223 = arith.constant dense<0.000000e+00> : vector<1x324xf32>
    %268 = tpu.matmul %267, %266, %cst_223 {dimension_numbers = #tpu.dot_dimension_numbers<[1], [0], [0], [1], [0, 0, 1, 1], [], []>} : vector<1x8xf32>, vector<8x324xf32>, vector<1x324xf32> -> vector<1x324xf32>
    %269 = vector.extract_strided_slice %268 {offsets = [0, 0], sizes = [1, 286], strides = [1, 1]} : vector<1x324xf32> to vector<1x286xf32>
    %270 = vector.extract_strided_slice %268 {offsets = [0, 1], sizes = [1, 286], strides = [1, 1]} : vector<1x324xf32> to vector<1x286xf32>
    %271 = arith.addf %269, %270 : vector<1x286xf32>
    %272 = vector.extract_strided_slice %268 {offsets = [0, 2], sizes = [1, 286], strides = [1, 1]} : vector<1x324xf32> to vector<1x286xf32>
    %273 = arith.addf %271, %272 : vector<1x286xf32>
    %274 = vector.extract_strided_slice %268 {offsets = [0, 18], sizes = [1, 286], strides = [1, 1]} : vector<1x324xf32> to vector<1x286xf32>
    %275 = arith.addf %273, %274 : vector<1x286xf32>
    %276 = vector.extract_strided_slice %268 {offsets = [0, 19], sizes = [1, 286], strides = [1, 1]} : vector<1x324xf32> to vector<1x286xf32>
    %277 = arith.addf %275, %276 : vector<1x286xf32>
    %278 = vector.extract_strided_slice %268 {offsets = [0, 20], sizes = [1, 286], strides = [1, 1]} : vector<1x324xf32> to vector<1x286xf32>
    %279 = arith.addf %277, %278 : vector<1x286xf32>
    %280 = vector.extract_strided_slice %268 {offsets = [0, 36], sizes = [1, 286], strides = [1, 1]} : vector<1x324xf32> to vector<1x286xf32>
    %281 = arith.addf %279, %280 : vector<1x286xf32>
    %282 = vector.extract_strided_slice %268 {offsets = [0, 37], sizes = [1, 286], strides = [1, 1]} : vector<1x324xf32> to vector<1x286xf32>
    %283 = arith.addf %281, %282 : vector<1x286xf32>
    %284 = vector.extract_strided_slice %268 {offsets = [0, 38], sizes = [1, 286], strides = [1, 1]} : vector<1x324xf32> to vector<1x286xf32>
    %285 = arith.addf %283, %284 : vector<1x286xf32>
    %286 = math.absf %264 : vector<16x286xf32>
    %cst_224 = arith.constant 9.99999997E-7 : f32
    %287 = vector.broadcast %cst_224 : f32 to vector<1x286xf32>
    %288 = arith.addf %285, %287 : vector<1x286xf32>
    %289 = math.rsqrt %288 : vector<1x286xf32>
    %290 = vector.broadcast %289 : vector<1x286xf32> to vector<16x286xf32>
    %291 = arith.mulf %286, %290 : vector<16x286xf32>
    %292 = arith.mulf %264, %291 : vector<16x286xf32>
    %c0_225 = arith.constant 0 : index
    %c0_226 = arith.constant 0 : index
    %293 = vector.load %arg21[%c0_225, %c0_226] : memref<286x100xf32, #tpu.memory_space<vmem>>, vector<286x100xf32>
    %cst_227 = arith.constant dense<0.000000e+00> : vector<16x100xf32>
    %294 = tpu.matmul %292, %293, %cst_227 {dimension_numbers = #tpu.dot_dimension_numbers<[1], [0], [0], [1], [0, 0, 1, 1], [], []>} : vector<16x286xf32>, vector<286x100xf32>, vector<16x100xf32> -> vector<16x100xf32>
    %c0_228 = arith.constant 0 : index
    %c0_229 = arith.constant 0 : index
    %295 = vector.load %arg9[%c0_228, %c0_229] : memref<16x8xf32, #tpu.memory_space<vmem>>, vector<16x8xf32>
    %cst_230 = arith.constant dense<0.000000e+00> : vector<16x286xf32>
    %296 = tpu.matmul %295, %241, %cst_230 {dimension_numbers = #tpu.dot_dimension_numbers<[1], [0], [0], [1], [0, 0, 1, 1], [], []>} : vector<16x8xf32>, vector<8x286xf32>, vector<16x286xf32> -> vector<16x286xf32>
    %297 = arith.mulf %241, %241 : vector<8x286xf32>
    %cst_231 = arith.constant 1.000000e+00 : f32
    %298 = vector.broadcast %cst_231 : f32 to vector<1x8xf32>
    %cst_232 = arith.constant dense<0.000000e+00> : vector<1x286xf32>
    %299 = tpu.matmul %298, %297, %cst_232 {dimension_numbers = #tpu.dot_dimension_numbers<[1], [0], [0], [1], [0, 0, 1, 1], [], []>} : vector<1x8xf32>, vector<8x286xf32>, vector<1x286xf32> -> vector<1x286xf32>
    %300 = math.absf %296 : vector<16x286xf32>
    %cst_233 = arith.constant 9.99999997E-7 : f32
    %301 = vector.broadcast %cst_233 : f32 to vector<1x286xf32>
    %302 = arith.addf %299, %301 : vector<1x286xf32>
    %303 = math.rsqrt %302 : vector<1x286xf32>
    %304 = vector.broadcast %303 : vector<1x286xf32> to vector<16x286xf32>
    %305 = arith.mulf %300, %304 : vector<16x286xf32>
    %306 = arith.mulf %296, %305 : vector<16x286xf32>
    %c0_234 = arith.constant 0 : index
    %c0_235 = arith.constant 0 : index
    %307 = vector.load %arg21[%c0_234, %c0_235] : memref<286x100xf32, #tpu.memory_space<vmem>>, vector<286x100xf32>
    %cst_236 = arith.constant dense<0.000000e+00> : vector<16x100xf32>
    %308 = tpu.matmul %306, %307, %cst_236 {dimension_numbers = #tpu.dot_dimension_numbers<[1], [0], [0], [1], [0, 0, 1, 1], [], []>} : vector<16x286xf32>, vector<286x100xf32>, vector<16x100xf32> -> vector<16x100xf32>
    %c0_237 = arith.constant 0 : index
    %c0_238 = arith.constant 0 : index
    %309 = vector.load %arg10[%c0_237, %c0_238] : memref<16x1xf32, #tpu.memory_space<vmem>>, vector<16x1xf32>
    %cst_239 = arith.constant 1.000000e+00 : f32
    %310 = vector.broadcast %cst_239 : f32 to vector<1x16xf32>
    %cst_240 = arith.constant dense<0.000000e+00> : vector<1x100xf32>
    %311 = tpu.matmul %310, %294, %cst_240 {dimension_numbers = #tpu.dot_dimension_numbers<[1], [0], [0], [1], [0, 0, 1, 1], [], []>} : vector<1x16xf32>, vector<16x100xf32>, vector<1x100xf32> -> vector<1x100xf32>
    %cst_241 = arith.constant 6.250000e-02 : f32
    %312 = vector.broadcast %cst_241 : f32 to vector<1x100xf32>
    %313 = arith.mulf %311, %312 : vector<1x100xf32>
    %314 = arith.mulf %294, %294 : vector<16x100xf32>
    %cst_242 = arith.constant 1.000000e+00 : f32
    %315 = vector.broadcast %cst_242 : f32 to vector<1x16xf32>
    %cst_243 = arith.constant dense<0.000000e+00> : vector<1x100xf32>
    %316 = tpu.matmul %315, %314, %cst_243 {dimension_numbers = #tpu.dot_dimension_numbers<[1], [0], [0], [1], [0, 0, 1, 1], [], []>} : vector<1x16xf32>, vector<16x100xf32>, vector<1x100xf32> -> vector<1x100xf32>
    %cst_244 = arith.constant 6.250000e-02 : f32
    %317 = vector.broadcast %cst_244 : f32 to vector<1x100xf32>
    %318 = arith.mulf %316, %317 : vector<1x100xf32>
    %319 = arith.mulf %313, %313 : vector<1x100xf32>
    %320 = arith.subf %318, %319 : vector<1x100xf32>
    %cst_245 = arith.constant 0.000000e+00 : f32
    %321 = vector.broadcast %cst_245 : f32 to vector<1x100xf32>
    %322 = arith.maximumf %320, %321 : vector<1x100xf32>
    %323 = vector.broadcast %313 : vector<1x100xf32> to vector<16x100xf32>
    %324 = arith.subf %294, %323 : vector<16x100xf32>
    %cst_246 = arith.constant 9.99999974E-6 : f32
    %325 = vector.broadcast %cst_246 : f32 to vector<1x100xf32>
    %326 = arith.addf %322, %325 : vector<1x100xf32>
    %327 = math.rsqrt %326 : vector<1x100xf32>
    %328 = vector.broadcast %327 : vector<1x100xf32> to vector<16x100xf32>
    %329 = arith.mulf %324, %328 : vector<16x100xf32>
    %330 = vector.broadcast %309 : vector<16x1xf32> to vector<16x100xf32>
    %331 = arith.mulf %329, %330 : vector<16x100xf32>
    %c0_247 = arith.constant 0 : index
    %c0_248 = arith.constant 0 : index
    %332 = vector.load %arg32[%c0_247, %c0_248] : memref<16x100xf32, #tpu.memory_space<vmem>>, vector<16x100xf32>
    tpu.vector_store %arg32[%c0_247, %c0_248], %331 {strides = array<i32>} : memref<16x100xf32, #tpu.memory_space<vmem>>, vector<16x100xf32>,
    %c0_249 = arith.constant 0 : index
    %c0_250 = arith.constant 0 : index
    %333 = vector.load %arg32[%c0_249, %c0_250] : memref<16x100xf32, #tpu.memory_space<vmem>>, vector<16x78xf32>
    %c0_251 = arith.constant 0 : index
    %c0_252 = arith.constant 0 : index
    %334 = vector.load %arg34[%c0_251, %c0_252] : memref<144x78xf32, #tpu.memory_space<vmem>>, vector<16x78xf32>
    tpu.vector_store %arg34[%c0_251, %c0_252], %333 {strides = array<i32>} : memref<144x78xf32, #tpu.memory_space<vmem>>, vector<16x78xf32>,
    %c0_253 = arith.constant 0 : index
    %c1_254 = arith.constant 1 : index
    %335 = vector.load %arg32[%c0_253, %c1_254] : memref<16x100xf32, #tpu.memory_space<vmem>>, vector<16x78xf32>
    %c16_255 = arith.constant 16 : index
    %c0_256 = arith.constant 0 : index
    %336 = vector.load %arg34[%c16_255, %c0_256] : memref<144x78xf32, #tpu.memory_space<vmem>>, vector<16x78xf32>
    tpu.vector_store %arg34[%c16_255, %c0_256], %335 {strides = array<i32>} : memref<144x78xf32, #tpu.memory_space<vmem>>, vector<16x78xf32>,
    %c0_257 = arith.constant 0 : index
    %c2_258 = arith.constant 2 : index
    %337 = vector.load %arg32[%c0_257, %c2_258] : memref<16x100xf32, #tpu.memory_space<vmem>>, vector<16x78xf32>
    %c32_259 = arith.constant 32 : index
    %c0_260 = arith.constant 0 : index
    %338 = vector.load %arg34[%c32_259, %c0_260] : memref<144x78xf32, #tpu.memory_space<vmem>>, vector<16x78xf32>
    tpu.vector_store %arg34[%c32_259, %c0_260], %337 {strides = array<i32>} : memref<144x78xf32, #tpu.memory_space<vmem>>, vector<16x78xf32>,
    %c0_261 = arith.constant 0 : index
    %c10 = arith.constant 10 : index
    %339 = vector.load %arg32[%c0_261, %c10] : memref<16x100xf32, #tpu.memory_space<vmem>>, vector<16x78xf32>
    %c48_262 = arith.constant 48 : index
    %c0_263 = arith.constant 0 : index
    %340 = vector.load %arg34[%c48_262, %c0_263] : memref<144x78xf32, #tpu.memory_space<vmem>>, vector<16x78xf32>
    tpu.vector_store %arg34[%c48_262, %c0_263], %339 {strides = array<i32>} : memref<144x78xf32, #tpu.memory_space<vmem>>, vector<16x78xf32>,
    %c0_264 = arith.constant 0 : index
    %c11 = arith.constant 11 : index
    %341 = vector.load %arg32[%c0_264, %c11] : memref<16x100xf32, #tpu.memory_space<vmem>>, vector<16x78xf32>
    %c64_265 = arith.constant 64 : index
    %c0_266 = arith.constant 0 : index
    %342 = vector.load %arg34[%c64_265, %c0_266] : memref<144x78xf32, #tpu.memory_space<vmem>>, vector<16x78xf32>
    tpu.vector_store %arg34[%c64_265, %c0_266], %341 {strides = array<i32>} : memref<144x78xf32, #tpu.memory_space<vmem>>, vector<16x78xf32>,
    %c0_267 = arith.constant 0 : index
    %c12 = arith.constant 12 : index
    %343 = vector.load %arg32[%c0_267, %c12] : memref<16x100xf32, #tpu.memory_space<vmem>>, vector<16x78xf32>
    %c80 = arith.constant 80 : index
    %c0_268 = arith.constant 0 : index
    %344 = vector.load %arg34[%c80, %c0_268] : memref<144x78xf32, #tpu.memory_space<vmem>>, vector<16x78xf32>
    tpu.vector_store %arg34[%c80, %c0_268], %343 {strides = array<i32>} : memref<144x78xf32, #tpu.memory_space<vmem>>, vector<16x78xf32>,
    %c0_269 = arith.constant 0 : index
    %c20_270 = arith.constant 20 : index
    %345 = vector.load %arg32[%c0_269, %c20_270] : memref<16x100xf32, #tpu.memory_space<vmem>>, vector<16x78xf32>
    %c96 = arith.constant 96 : index
    %c0_271 = arith.constant 0 : index
    %346 = vector.load %arg34[%c96, %c0_271] : memref<144x78xf32, #tpu.memory_space<vmem>>, vector<16x78xf32>
    tpu.vector_store %arg34[%c96, %c0_271], %345 {strides = array<i32>} : memref<144x78xf32, #tpu.memory_space<vmem>>, vector<16x78xf32>,
    %c0_272 = arith.constant 0 : index
    %c21 = arith.constant 21 : index
    %347 = vector.load %arg32[%c0_272, %c21] : memref<16x100xf32, #tpu.memory_space<vmem>>, vector<16x78xf32>
    %c112 = arith.constant 112 : index
    %c0_273 = arith.constant 0 : index
    %348 = vector.load %arg34[%c112, %c0_273] : memref<144x78xf32, #tpu.memory_space<vmem>>, vector<16x78xf32>
    tpu.vector_store %arg34[%c112, %c0_273], %347 {strides = array<i32>} : memref<144x78xf32, #tpu.memory_space<vmem>>, vector<16x78xf32>,
    %c0_274 = arith.constant 0 : index
    %c22 = arith.constant 22 : index
    %349 = vector.load %arg32[%c0_274, %c22] : memref<16x100xf32, #tpu.memory_space<vmem>>, vector<16x78xf32>
    %c128 = arith.constant 128 : index
    %c0_275 = arith.constant 0 : index
    %350 = vector.load %arg34[%c128, %c0_275] : memref<144x78xf32, #tpu.memory_space<vmem>>, vector<16x78xf32>
    tpu.vector_store %arg34[%c128, %c0_275], %349 {strides = array<i32>} : memref<144x78xf32, #tpu.memory_space<vmem>>, vector<16x78xf32>,
    %c0_276 = arith.constant 0 : index
    %c0_277 = arith.constant 0 : index
    %351 = vector.load %arg11[%c0_276, %c0_277] : memref<16x144xbf16, #tpu.memory_space<vmem>>, vector<16x144xbf16>
    %c0_278 = arith.constant 0 : index
    %c0_279 = arith.constant 0 : index
    %352 = vector.load %arg34[%c0_278, %c0_279] : memref<144x78xf32, #tpu.memory_space<vmem>>, vector<144x78xf32>
    %353 = arith.truncf %352 : vector<144x78xf32> to vector<144x78xbf16>
    %cst_280 = arith.constant dense<0.000000e+00> : vector<16x78xf32>
    %354 = tpu.matmul %351, %353, %cst_280 {dimension_numbers = #tpu.dot_dimension_numbers<[1], [0], [0], [1], [0, 0, 1, 1], [], []>} : vector<16x144xbf16>, vector<144x78xbf16>, vector<16x78xf32> -> vector<16x78xf32>
    %c0_281 = arith.constant 0 : index
    %c0_282 = arith.constant 0 : index
    %355 = vector.load %arg32[%c0_281, %c0_282] : memref<16x100xf32, #tpu.memory_space<vmem>>, vector<16x100xf32>
    %356 = arith.mulf %355, %355 : vector<16x100xf32>
    %cst_283 = arith.constant 1.000000e+00 : f32
    %357 = vector.broadcast %cst_283 : f32 to vector<1x16xf32>
    %cst_284 = arith.constant dense<0.000000e+00> : vector<1x100xf32>
    %358 = tpu.matmul %357, %356, %cst_284 {dimension_numbers = #tpu.dot_dimension_numbers<[1], [0], [0], [1], [0, 0, 1, 1], [], []>} : vector<1x16xf32>, vector<16x100xf32>, vector<1x100xf32> -> vector<1x100xf32>
    %359 = vector.extract_strided_slice %358 {offsets = [0, 0], sizes = [1, 78], strides = [1, 1]} : vector<1x100xf32> to vector<1x78xf32>
    %360 = vector.extract_strided_slice %358 {offsets = [0, 1], sizes = [1, 78], strides = [1, 1]} : vector<1x100xf32> to vector<1x78xf32>
    %361 = arith.addf %359, %360 : vector<1x78xf32>
    %362 = vector.extract_strided_slice %358 {offsets = [0, 2], sizes = [1, 78], strides = [1, 1]} : vector<1x100xf32> to vector<1x78xf32>
    %363 = arith.addf %361, %362 : vector<1x78xf32>
    %364 = vector.extract_strided_slice %358 {offsets = [0, 10], sizes = [1, 78], strides = [1, 1]} : vector<1x100xf32> to vector<1x78xf32>
    %365 = arith.addf %363, %364 : vector<1x78xf32>
    %366 = vector.extract_strided_slice %358 {offsets = [0, 11], sizes = [1, 78], strides = [1, 1]} : vector<1x100xf32> to vector<1x78xf32>
    %367 = arith.addf %365, %366 : vector<1x78xf32>
    %368 = vector.extract_strided_slice %358 {offsets = [0, 12], sizes = [1, 78], strides = [1, 1]} : vector<1x100xf32> to vector<1x78xf32>
    %369 = arith.addf %367, %368 : vector<1x78xf32>
    %370 = vector.extract_strided_slice %358 {offsets = [0, 20], sizes = [1, 78], strides = [1, 1]} : vector<1x100xf32> to vector<1x78xf32>
    %371 = arith.addf %369, %370 : vector<1x78xf32>
    %372 = vector.extract_strided_slice %358 {offsets = [0, 21], sizes = [1, 78], strides = [1, 1]} : vector<1x100xf32> to vector<1x78xf32>
    %373 = arith.addf %371, %372 : vector<1x78xf32>
    %374 = vector.extract_strided_slice %358 {offsets = [0, 22], sizes = [1, 78], strides = [1, 1]} : vector<1x100xf32> to vector<1x78xf32>
    %375 = arith.addf %373, %374 : vector<1x78xf32>
    %376 = math.absf %354 : vector<16x78xf32>
    %cst_285 = arith.constant 9.99999997E-7 : f32
    %377 = vector.broadcast %cst_285 : f32 to vector<1x78xf32>
    %378 = arith.addf %375, %377 : vector<1x78xf32>
    %379 = math.rsqrt %378 : vector<1x78xf32>
    %380 = vector.broadcast %379 : vector<1x78xf32> to vector<16x78xf32>
    %381 = arith.mulf %376, %380 : vector<16x78xf32>
    %382 = arith.mulf %354, %381 : vector<16x78xf32>
    %383 = vector.broadcast %12 : vector<1x78xf32> to vector<16x78xf32>
    %384 = arith.mulf %382, %383 : vector<16x78xf32>
    %c0_286 = arith.constant 0 : index
    %c0_287 = arith.constant 0 : index
    %385 = vector.load %arg13[%c0_286, %c0_287] : memref<16x1xf32, #tpu.memory_space<vmem>>, vector<16x1xf32>
    %cst_288 = arith.constant 1.000000e+00 : f32
    %386 = vector.broadcast %cst_288 : f32 to vector<1x16xf32>
    %cst_289 = arith.constant dense<0.000000e+00> : vector<1x100xf32>
    %387 = tpu.matmul %386, %308, %cst_289 {dimension_numbers = #tpu.dot_dimension_numbers<[1], [0], [0], [1], [0, 0, 1, 1], [], []>} : vector<1x16xf32>, vector<16x100xf32>, vector<1x100xf32> -> vector<1x100xf32>
    %cst_290 = arith.constant 6.250000e-02 : f32
    %388 = vector.broadcast %cst_290 : f32 to vector<1x100xf32>
    %389 = arith.mulf %387, %388 : vector<1x100xf32>
    %390 = arith.mulf %308, %308 : vector<16x100xf32>
    %cst_291 = arith.constant 1.000000e+00 : f32
    %391 = vector.broadcast %cst_291 : f32 to vector<1x16xf32>
    %cst_292 = arith.constant dense<0.000000e+00> : vector<1x100xf32>
    %392 = tpu.matmul %391, %390, %cst_292 {dimension_numbers = #tpu.dot_dimension_numbers<[1], [0], [0], [1], [0, 0, 1, 1], [], []>} : vector<1x16xf32>, vector<16x100xf32>, vector<1x100xf32> -> vector<1x100xf32>
    %cst_293 = arith.constant 6.250000e-02 : f32
    %393 = vector.broadcast %cst_293 : f32 to vector<1x100xf32>
    %394 = arith.mulf %392, %393 : vector<1x100xf32>
    %395 = arith.mulf %389, %389 : vector<1x100xf32>
    %396 = arith.subf %394, %395 : vector<1x100xf32>
    %cst_294 = arith.constant 0.000000e+00 : f32
    %397 = vector.broadcast %cst_294 : f32 to vector<1x100xf32>
    %398 = arith.maximumf %396, %397 : vector<1x100xf32>
    %399 = vector.broadcast %389 : vector<1x100xf32> to vector<16x100xf32>
    %400 = arith.subf %308, %399 : vector<16x100xf32>
    %cst_295 = arith.constant 9.99999974E-6 : f32
    %401 = vector.broadcast %cst_295 : f32 to vector<1x100xf32>
    %402 = arith.addf %398, %401 : vector<1x100xf32>
    %403 = math.rsqrt %402 : vector<1x100xf32>
    %404 = vector.broadcast %403 : vector<1x100xf32> to vector<16x100xf32>
    %405 = arith.mulf %400, %404 : vector<16x100xf32>
    %406 = vector.broadcast %385 : vector<16x1xf32> to vector<16x100xf32>
    %407 = arith.mulf %405, %406 : vector<16x100xf32>
    %408 = vector.extract_strided_slice %407 {offsets = [0, 11], sizes = [16, 78], strides = [1, 1]} : vector<16x100xf32> to vector<16x78xf32>
    %c0_296 = arith.constant 0 : index
    %c0_297 = arith.constant 0 : index
    %409 = vector.load %arg12[%c0_296, %c0_297] : memref<16x1xf32, #tpu.memory_space<vmem>>, vector<16x1xf32>
    %cst_298 = arith.constant 1.000000e+00 : f32
    %410 = vector.broadcast %cst_298 : f32 to vector<1x16xf32>
    %cst_299 = arith.constant dense<0.000000e+00> : vector<1x78xf32>
    %411 = tpu.matmul %410, %384, %cst_299 {dimension_numbers = #tpu.dot_dimension_numbers<[1], [0], [0], [1], [0, 0, 1, 1], [], []>} : vector<1x16xf32>, vector<16x78xf32>, vector<1x78xf32> -> vector<1x78xf32>
    %cst_300 = arith.constant 6.250000e-02 : f32
    %412 = vector.broadcast %cst_300 : f32 to vector<1x78xf32>
    %413 = arith.mulf %411, %412 : vector<1x78xf32>
    %414 = arith.mulf %384, %384 : vector<16x78xf32>
    %cst_301 = arith.constant 1.000000e+00 : f32
    %415 = vector.broadcast %cst_301 : f32 to vector<1x16xf32>
    %cst_302 = arith.constant dense<0.000000e+00> : vector<1x78xf32>
    %416 = tpu.matmul %415, %414, %cst_302 {dimension_numbers = #tpu.dot_dimension_numbers<[1], [0], [0], [1], [0, 0, 1, 1], [], []>} : vector<1x16xf32>, vector<16x78xf32>, vector<1x78xf32> -> vector<1x78xf32>
    %cst_303 = arith.constant 6.250000e-02 : f32
    %417 = vector.broadcast %cst_303 : f32 to vector<1x78xf32>
    %418 = arith.mulf %416, %417 : vector<1x78xf32>
    %419 = arith.mulf %413, %413 : vector<1x78xf32>
    %420 = arith.subf %418, %419 : vector<1x78xf32>
    %cst_304 = arith.constant 0.000000e+00 : f32
    %421 = vector.broadcast %cst_304 : f32 to vector<1x78xf32>
    %422 = arith.maximumf %420, %421 : vector<1x78xf32>
    %423 = vector.broadcast %413 : vector<1x78xf32> to vector<16x78xf32>
    %424 = arith.subf %384, %423 : vector<16x78xf32>
    %cst_305 = arith.constant 9.99999974E-6 : f32
    %425 = vector.broadcast %cst_305 : f32 to vector<1x78xf32>
    %426 = arith.addf %422, %425 : vector<1x78xf32>
    %427 = math.rsqrt %426 : vector<1x78xf32>
    %428 = vector.broadcast %427 : vector<1x78xf32> to vector<16x78xf32>
    %429 = arith.mulf %424, %428 : vector<16x78xf32>
    %430 = vector.broadcast %409 : vector<16x1xf32> to vector<16x78xf32>
    %431 = arith.mulf %429, %430 : vector<16x78xf32>
    %432 = arith.addf %408, %431 : vector<16x78xf32>
    %c0_306 = arith.constant 0 : index
    %c0_307 = arith.constant 0 : index
    %433 = vector.load %arg33[%c0_306, %c0_307] : memref<16x100xf32, #tpu.memory_space<vmem>>, vector<16x100xf32>
    tpu.vector_store %arg33[%c0_306, %c0_307], %407 {strides = array<i32>} : memref<16x100xf32, #tpu.memory_space<vmem>>, vector<16x100xf32>,
    %c0_308 = arith.constant 0 : index
    %c11_309 = arith.constant 11 : index
    %434 = vector.load %arg33[%c0_308, %c11_309] : memref<16x100xf32, #tpu.memory_space<vmem>>, vector<16x78xf32>
    tpu.vector_store %arg33[%c0_308, %c11_309], %432 {strides = array<i32>} : memref<16x100xf32, #tpu.memory_space<vmem>>, vector<16x78xf32>,
    %c0_310 = arith.constant 0 : index
    %c0_311 = arith.constant 0 : index
    %435 = vector.load %arg33[%c0_310, %c0_311] : memref<16x100xf32, #tpu.memory_space<vmem>>, vector<16x78xf32>
    %c0_312 = arith.constant 0 : index
    %c0_313 = arith.constant 0 : index
    %436 = vector.load %arg34[%c0_312, %c0_313] : memref<144x78xf32, #tpu.memory_space<vmem>>, vector<16x78xf32>
    tpu.vector_store %arg34[%c0_312, %c0_313], %435 {strides = array<i32>} : memref<144x78xf32, #tpu.memory_space<vmem>>, vector<16x78xf32>,
    %c0_314 = arith.constant 0 : index
    %c1_315 = arith.constant 1 : index
    %437 = vector.load %arg33[%c0_314, %c1_315] : memref<16x100xf32, #tpu.memory_space<vmem>>, vector<16x78xf32>
    %c16_316 = arith.constant 16 : index
    %c0_317 = arith.constant 0 : index
    %438 = vector.load %arg34[%c16_316, %c0_317] : memref<144x78xf32, #tpu.memory_space<vmem>>, vector<16x78xf32>
    tpu.vector_store %arg34[%c16_316, %c0_317], %437 {strides = array<i32>} : memref<144x78xf32, #tpu.memory_space<vmem>>, vector<16x78xf32>,
    %c0_318 = arith.constant 0 : index
    %c2_319 = arith.constant 2 : index
    %439 = vector.load %arg33[%c0_318, %c2_319] : memref<16x100xf32, #tpu.memory_space<vmem>>, vector<16x78xf32>
    %c32_320 = arith.constant 32 : index
    %c0_321 = arith.constant 0 : index
    %440 = vector.load %arg34[%c32_320, %c0_321] : memref<144x78xf32, #tpu.memory_space<vmem>>, vector<16x78xf32>
    tpu.vector_store %arg34[%c32_320, %c0_321], %439 {strides = array<i32>} : memref<144x78xf32, #tpu.memory_space<vmem>>, vector<16x78xf32>,
    %c0_322 = arith.constant 0 : index
    %c10_323 = arith.constant 10 : index
    %441 = vector.load %arg33[%c0_322, %c10_323] : memref<16x100xf32, #tpu.memory_space<vmem>>, vector<16x78xf32>
    %c48_324 = arith.constant 48 : index
    %c0_325 = arith.constant 0 : index
    %442 = vector.load %arg34[%c48_324, %c0_325] : memref<144x78xf32, #tpu.memory_space<vmem>>, vector<16x78xf32>
    tpu.vector_store %arg34[%c48_324, %c0_325], %441 {strides = array<i32>} : memref<144x78xf32, #tpu.memory_space<vmem>>, vector<16x78xf32>,
    %c0_326 = arith.constant 0 : index
    %c11_327 = arith.constant 11 : index
    %443 = vector.load %arg33[%c0_326, %c11_327] : memref<16x100xf32, #tpu.memory_space<vmem>>, vector<16x78xf32>
    %c64_328 = arith.constant 64 : index
    %c0_329 = arith.constant 0 : index
    %444 = vector.load %arg34[%c64_328, %c0_329] : memref<144x78xf32, #tpu.memory_space<vmem>>, vector<16x78xf32>
    tpu.vector_store %arg34[%c64_328, %c0_329], %443 {strides = array<i32>} : memref<144x78xf32, #tpu.memory_space<vmem>>, vector<16x78xf32>,
    %c0_330 = arith.constant 0 : index
    %c12_331 = arith.constant 12 : index
    %445 = vector.load %arg33[%c0_330, %c12_331] : memref<16x100xf32, #tpu.memory_space<vmem>>, vector<16x78xf32>
    %c80_332 = arith.constant 80 : index
    %c0_333 = arith.constant 0 : index
    %446 = vector.load %arg34[%c80_332, %c0_333] : memref<144x78xf32, #tpu.memory_space<vmem>>, vector<16x78xf32>
    tpu.vector_store %arg34[%c80_332, %c0_333], %445 {strides = array<i32>} : memref<144x78xf32, #tpu.memory_space<vmem>>, vector<16x78xf32>,
    %c0_334 = arith.constant 0 : index
    %c20_335 = arith.constant 20 : index
    %447 = vector.load %arg33[%c0_334, %c20_335] : memref<16x100xf32, #tpu.memory_space<vmem>>, vector<16x78xf32>
    %c96_336 = arith.constant 96 : index
    %c0_337 = arith.constant 0 : index
    %448 = vector.load %arg34[%c96_336, %c0_337] : memref<144x78xf32, #tpu.memory_space<vmem>>, vector<16x78xf32>
    tpu.vector_store %arg34[%c96_336, %c0_337], %447 {strides = array<i32>} : memref<144x78xf32, #tpu.memory_space<vmem>>, vector<16x78xf32>,
    %c0_338 = arith.constant 0 : index
    %c21_339 = arith.constant 21 : index
    %449 = vector.load %arg33[%c0_338, %c21_339] : memref<16x100xf32, #tpu.memory_space<vmem>>, vector<16x78xf32>
    %c112_340 = arith.constant 112 : index
    %c0_341 = arith.constant 0 : index
    %450 = vector.load %arg34[%c112_340, %c0_341] : memref<144x78xf32, #tpu.memory_space<vmem>>, vector<16x78xf32>
    tpu.vector_store %arg34[%c112_340, %c0_341], %449 {strides = array<i32>} : memref<144x78xf32, #tpu.memory_space<vmem>>, vector<16x78xf32>,
    %c0_342 = arith.constant 0 : index
    %c22_343 = arith.constant 22 : index
    %451 = vector.load %arg33[%c0_342, %c22_343] : memref<16x100xf32, #tpu.memory_space<vmem>>, vector<16x78xf32>
    %c128_344 = arith.constant 128 : index
    %c0_345 = arith.constant 0 : index
    %452 = vector.load %arg34[%c128_344, %c0_345] : memref<144x78xf32, #tpu.memory_space<vmem>>, vector<16x78xf32>
    tpu.vector_store %arg34[%c128_344, %c0_345], %451 {strides = array<i32>} : memref<144x78xf32, #tpu.memory_space<vmem>>, vector<16x78xf32>,
    %c0_346 = arith.constant 0 : index
    %c0_347 = arith.constant 0 : index
    %453 = vector.load %arg14[%c0_346, %c0_347] : memref<32x144xbf16, #tpu.memory_space<vmem>>, vector<32x144xbf16>
    %c0_348 = arith.constant 0 : index
    %c0_349 = arith.constant 0 : index
    %454 = vector.load %arg34[%c0_348, %c0_349] : memref<144x78xf32, #tpu.memory_space<vmem>>, vector<144x78xf32>
    %455 = arith.truncf %454 : vector<144x78xf32> to vector<144x78xbf16>
    %cst_350 = arith.constant dense<0.000000e+00> : vector<32x78xf32>
    %456 = tpu.matmul %453, %455, %cst_350 {dimension_numbers = #tpu.dot_dimension_numbers<[1], [0], [0], [1], [0, 0, 1, 1], [], []>} : vector<32x144xbf16>, vector<144x78xbf16>, vector<32x78xf32> -> vector<32x78xf32>
    %c0_351 = arith.constant 0 : index
    %c0_352 = arith.constant 0 : index
    %457 = vector.load %arg33[%c0_351, %c0_352] : memref<16x100xf32, #tpu.memory_space<vmem>>, vector<16x100xf32>
    %458 = arith.mulf %457, %457 : vector<16x100xf32>
    %cst_353 = arith.constant 1.000000e+00 : f32
    %459 = vector.broadcast %cst_353 : f32 to vector<1x16xf32>
    %cst_354 = arith.constant dense<0.000000e+00> : vector<1x100xf32>
    %460 = tpu.matmul %459, %458, %cst_354 {dimension_numbers = #tpu.dot_dimension_numbers<[1], [0], [0], [1], [0, 0, 1, 1], [], []>} : vector<1x16xf32>, vector<16x100xf32>, vector<1x100xf32> -> vector<1x100xf32>
    %461 = vector.extract_strided_slice %460 {offsets = [0, 0], sizes = [1, 78], strides = [1, 1]} : vector<1x100xf32> to vector<1x78xf32>
    %462 = vector.extract_strided_slice %460 {offsets = [0, 1], sizes = [1, 78], strides = [1, 1]} : vector<1x100xf32> to vector<1x78xf32>
    %463 = arith.addf %461, %462 : vector<1x78xf32>
    %464 = vector.extract_strided_slice %460 {offsets = [0, 2], sizes = [1, 78], strides = [1, 1]} : vector<1x100xf32> to vector<1x78xf32>
    %465 = arith.addf %463, %464 : vector<1x78xf32>
    %466 = vector.extract_strided_slice %460 {offsets = [0, 10], sizes = [1, 78], strides = [1, 1]} : vector<1x100xf32> to vector<1x78xf32>
    %467 = arith.addf %465, %466 : vector<1x78xf32>
    %468 = vector.extract_strided_slice %460 {offsets = [0, 11], sizes = [1, 78], strides = [1, 1]} : vector<1x100xf32> to vector<1x78xf32>
    %469 = arith.addf %467, %468 : vector<1x78xf32>
    %470 = vector.extract_strided_slice %460 {offsets = [0, 12], sizes = [1, 78], strides = [1, 1]} : vector<1x100xf32> to vector<1x78xf32>
    %471 = arith.addf %469, %470 : vector<1x78xf32>
    %472 = vector.extract_strided_slice %460 {offsets = [0, 20], sizes = [1, 78], strides = [1, 1]} : vector<1x100xf32> to vector<1x78xf32>
    %473 = arith.addf %471, %472 : vector<1x78xf32>
    %474 = vector.extract_strided_slice %460 {offsets = [0, 21], sizes = [1, 78], strides = [1, 1]} : vector<1x100xf32> to vector<1x78xf32>
    %475 = arith.addf %473, %474 : vector<1x78xf32>
    %476 = vector.extract_strided_slice %460 {offsets = [0, 22], sizes = [1, 78], strides = [1, 1]} : vector<1x100xf32> to vector<1x78xf32>
    %477 = arith.addf %475, %476 : vector<1x78xf32>
    %478 = math.absf %456 : vector<32x78xf32>
    %cst_355 = arith.constant 9.99999997E-7 : f32
    %479 = vector.broadcast %cst_355 : f32 to vector<1x78xf32>
    %480 = arith.addf %477, %479 : vector<1x78xf32>
    %481 = math.rsqrt %480 : vector<1x78xf32>
    %482 = vector.broadcast %481 : vector<1x78xf32> to vector<32x78xf32>
    %483 = arith.mulf %478, %482 : vector<32x78xf32>
    %484 = arith.mulf %456, %483 : vector<32x78xf32>
    %c0_356 = arith.constant 0 : index
    %c0_357 = arith.constant 0 : index
    %485 = vector.load %arg22[%c0_356, %c0_357] : memref<78x36xf32, #tpu.memory_space<vmem>>, vector<78x36xf32>
    %cst_358 = arith.constant dense<0.000000e+00> : vector<32x36xf32>
    %486 = tpu.matmul %484, %485, %cst_358 {dimension_numbers = #tpu.dot_dimension_numbers<[1], [0], [0], [1], [0, 0, 1, 1], [], []>} : vector<32x78xf32>, vector<78x36xf32>, vector<32x36xf32> -> vector<32x36xf32>
    %c0_359 = arith.constant 0 : index
    %c0_360 = arith.constant 0 : index
    %487 = vector.load %arg15[%c0_359, %c0_360] : memref<32x16xf32, #tpu.memory_space<vmem>>, vector<32x16xf32>
    %cst_361 = arith.constant dense<0.000000e+00> : vector<32x78xf32>
    %488 = tpu.matmul %487, %432, %cst_361 {dimension_numbers = #tpu.dot_dimension_numbers<[1], [0], [0], [1], [0, 0, 1, 1], [], []>} : vector<32x16xf32>, vector<16x78xf32>, vector<32x78xf32> -> vector<32x78xf32>
    %489 = arith.mulf %432, %432 : vector<16x78xf32>
    %cst_362 = arith.constant 1.000000e+00 : f32
    %490 = vector.broadcast %cst_362 : f32 to vector<1x16xf32>
    %cst_363 = arith.constant dense<0.000000e+00> : vector<1x78xf32>
    %491 = tpu.matmul %490, %489, %cst_363 {dimension_numbers = #tpu.dot_dimension_numbers<[1], [0], [0], [1], [0, 0, 1, 1], [], []>} : vector<1x16xf32>, vector<16x78xf32>, vector<1x78xf32> -> vector<1x78xf32>
    %492 = math.absf %488 : vector<32x78xf32>
    %cst_364 = arith.constant 9.99999997E-7 : f32
    %493 = vector.broadcast %cst_364 : f32 to vector<1x78xf32>
    %494 = arith.addf %491, %493 : vector<1x78xf32>
    %495 = math.rsqrt %494 : vector<1x78xf32>
    %496 = vector.broadcast %495 : vector<1x78xf32> to vector<32x78xf32>
    %497 = arith.mulf %492, %496 : vector<32x78xf32>
    %498 = arith.mulf %488, %497 : vector<32x78xf32>
    %c0_365 = arith.constant 0 : index
    %c0_366 = arith.constant 0 : index
    %499 = vector.load %arg22[%c0_365, %c0_366] : memref<78x36xf32, #tpu.memory_space<vmem>>, vector<78x36xf32>
    %cst_367 = arith.constant dense<0.000000e+00> : vector<32x36xf32>
    %500 = tpu.matmul %498, %499, %cst_367 {dimension_numbers = #tpu.dot_dimension_numbers<[1], [0], [0], [1], [0, 0, 1, 1], [], []>} : vector<32x78xf32>, vector<78x36xf32>, vector<32x36xf32> -> vector<32x36xf32>
    %c0_368 = arith.constant 0 : index
    %c0_369 = arith.constant 0 : index
    %501 = vector.load %arg16[%c0_368, %c0_369] : memref<32x1xf32, #tpu.memory_space<vmem>>, vector<32x1xf32>
    %cst_370 = arith.constant 1.000000e+00 : f32
    %502 = vector.broadcast %cst_370 : f32 to vector<1x32xf32>
    %cst_371 = arith.constant dense<0.000000e+00> : vector<1x36xf32>
    %503 = tpu.matmul %502, %486, %cst_371 {dimension_numbers = #tpu.dot_dimension_numbers<[1], [0], [0], [1], [0, 0, 1, 1], [], []>} : vector<1x32xf32>, vector<32x36xf32>, vector<1x36xf32> -> vector<1x36xf32>
    %cst_372 = arith.constant 3.125000e-02 : f32
    %504 = vector.broadcast %cst_372 : f32 to vector<1x36xf32>
    %505 = arith.mulf %503, %504 : vector<1x36xf32>
    %506 = arith.mulf %486, %486 : vector<32x36xf32>
    %cst_373 = arith.constant 1.000000e+00 : f32
    %507 = vector.broadcast %cst_373 : f32 to vector<1x32xf32>
    %cst_374 = arith.constant dense<0.000000e+00> : vector<1x36xf32>
    %508 = tpu.matmul %507, %506, %cst_374 {dimension_numbers = #tpu.dot_dimension_numbers<[1], [0], [0], [1], [0, 0, 1, 1], [], []>} : vector<1x32xf32>, vector<32x36xf32>, vector<1x36xf32> -> vector<1x36xf32>
    %cst_375 = arith.constant 3.125000e-02 : f32
    %509 = vector.broadcast %cst_375 : f32 to vector<1x36xf32>
    %510 = arith.mulf %508, %509 : vector<1x36xf32>
    %511 = arith.mulf %505, %505 : vector<1x36xf32>
    %512 = arith.subf %510, %511 : vector<1x36xf32>
    %cst_376 = arith.constant 0.000000e+00 : f32
    %513 = vector.broadcast %cst_376 : f32 to vector<1x36xf32>
    %514 = arith.maximumf %512, %513 : vector<1x36xf32>
    %515 = vector.broadcast %505 : vector<1x36xf32> to vector<32x36xf32>
    %516 = arith.subf %486, %515 : vector<32x36xf32>
    %cst_377 = arith.constant 9.99999974E-6 : f32
    %517 = vector.broadcast %cst_377 : f32 to vector<1x36xf32>
    %518 = arith.addf %514, %517 : vector<1x36xf32>
    %519 = math.rsqrt %518 : vector<1x36xf32>
    %520 = vector.broadcast %519 : vector<1x36xf32> to vector<32x36xf32>
    %521 = arith.mulf %516, %520 : vector<32x36xf32>
    %522 = vector.broadcast %501 : vector<32x1xf32> to vector<32x36xf32>
    %523 = arith.mulf %521, %522 : vector<32x36xf32>
    %c0_378 = arith.constant 0 : index
    %c0_379 = arith.constant 0 : index
    %524 = vector.load %arg35[%c0_378, %c0_379] : memref<32x36xf32, #tpu.memory_space<vmem>>, vector<32x36xf32>
    tpu.vector_store %arg35[%c0_378, %c0_379], %523 {strides = array<i32>} : memref<32x36xf32, #tpu.memory_space<vmem>>, vector<32x36xf32>,
    %c0_380 = arith.constant 0 : index
    %c0_381 = arith.constant 0 : index
    %525 = vector.load %arg35[%c0_380, %c0_381] : memref<32x36xf32, #tpu.memory_space<vmem>>, vector<32x22xf32>
    %c0_382 = arith.constant 0 : index
    %c0_383 = arith.constant 0 : index
    %526 = vector.load %arg36[%c0_382, %c0_383] : memref<288x22xf32, #tpu.memory_space<vmem>>, vector<32x22xf32>
    tpu.vector_store %arg36[%c0_382, %c0_383], %525 {strides = array<i32>} : memref<288x22xf32, #tpu.memory_space<vmem>>, vector<32x22xf32>,
    %c0_384 = arith.constant 0 : index
    %c1_385 = arith.constant 1 : index
    %527 = vector.load %arg35[%c0_384, %c1_385] : memref<32x36xf32, #tpu.memory_space<vmem>>, vector<32x22xf32>
    %c32_386 = arith.constant 32 : index
    %c0_387 = arith.constant 0 : index
    %528 = vector.load %arg36[%c32_386, %c0_387] : memref<288x22xf32, #tpu.memory_space<vmem>>, vector<32x22xf32>
    tpu.vector_store %arg36[%c32_386, %c0_387], %527 {strides = array<i32>} : memref<288x22xf32, #tpu.memory_space<vmem>>, vector<32x22xf32>,
    %c0_388 = arith.constant 0 : index
    %c2_389 = arith.constant 2 : index
    %529 = vector.load %arg35[%c0_388, %c2_389] : memref<32x36xf32, #tpu.memory_space<vmem>>, vector<32x22xf32>
    %c64_390 = arith.constant 64 : index
    %c0_391 = arith.constant 0 : index
    %530 = vector.load %arg36[%c64_390, %c0_391] : memref<288x22xf32, #tpu.memory_space<vmem>>, vector<32x22xf32>
    tpu.vector_store %arg36[%c64_390, %c0_391], %529 {strides = array<i32>} : memref<288x22xf32, #tpu.memory_space<vmem>>, vector<32x22xf32>,
    %c0_392 = arith.constant 0 : index
    %c6 = arith.constant 6 : index
    %531 = vector.load %arg35[%c0_392, %c6] : memref<32x36xf32, #tpu.memory_space<vmem>>, vector<32x22xf32>
    %c96_393 = arith.constant 96 : index
    %c0_394 = arith.constant 0 : index
    %532 = vector.load %arg36[%c96_393, %c0_394] : memref<288x22xf32, #tpu.memory_space<vmem>>, vector<32x22xf32>
    tpu.vector_store %arg36[%c96_393, %c0_394], %531 {strides = array<i32>} : memref<288x22xf32, #tpu.memory_space<vmem>>, vector<32x22xf32>,
    %c0_395 = arith.constant 0 : index
    %c7 = arith.constant 7 : index
    %533 = vector.load %arg35[%c0_395, %c7] : memref<32x36xf32, #tpu.memory_space<vmem>>, vector<32x22xf32>
    %c128_396 = arith.constant 128 : index
    %c0_397 = arith.constant 0 : index
    %534 = vector.load %arg36[%c128_396, %c0_397] : memref<288x22xf32, #tpu.memory_space<vmem>>, vector<32x22xf32>
    tpu.vector_store %arg36[%c128_396, %c0_397], %533 {strides = array<i32>} : memref<288x22xf32, #tpu.memory_space<vmem>>, vector<32x22xf32>,
    %c0_398 = arith.constant 0 : index
    %c8_399 = arith.constant 8 : index
    %535 = vector.load %arg35[%c0_398, %c8_399] : memref<32x36xf32, #tpu.memory_space<vmem>>, vector<32x22xf32>
    %c160 = arith.constant 160 : index
    %c0_400 = arith.constant 0 : index
    %536 = vector.load %arg36[%c160, %c0_400] : memref<288x22xf32, #tpu.memory_space<vmem>>, vector<32x22xf32>
    tpu.vector_store %arg36[%c160, %c0_400], %535 {strides = array<i32>} : memref<288x22xf32, #tpu.memory_space<vmem>>, vector<32x22xf32>,
    %c0_401 = arith.constant 0 : index
    %c12_402 = arith.constant 12 : index
    %537 = vector.load %arg35[%c0_401, %c12_402] : memref<32x36xf32, #tpu.memory_space<vmem>>, vector<32x22xf32>
    %c192 = arith.constant 192 : index
    %c0_403 = arith.constant 0 : index
    %538 = vector.load %arg36[%c192, %c0_403] : memref<288x22xf32, #tpu.memory_space<vmem>>, vector<32x22xf32>
    tpu.vector_store %arg36[%c192, %c0_403], %537 {strides = array<i32>} : memref<288x22xf32, #tpu.memory_space<vmem>>, vector<32x22xf32>,
    %c0_404 = arith.constant 0 : index
    %c13 = arith.constant 13 : index
    %539 = vector.load %arg35[%c0_404, %c13] : memref<32x36xf32, #tpu.memory_space<vmem>>, vector<32x22xf32>
    %c224 = arith.constant 224 : index
    %c0_405 = arith.constant 0 : index
    %540 = vector.load %arg36[%c224, %c0_405] : memref<288x22xf32, #tpu.memory_space<vmem>>, vector<32x22xf32>
    tpu.vector_store %arg36[%c224, %c0_405], %539 {strides = array<i32>} : memref<288x22xf32, #tpu.memory_space<vmem>>, vector<32x22xf32>,
    %c0_406 = arith.constant 0 : index
    %c14 = arith.constant 14 : index
    %541 = vector.load %arg35[%c0_406, %c14] : memref<32x36xf32, #tpu.memory_space<vmem>>, vector<32x22xf32>
    %c256 = arith.constant 256 : index
    %c0_407 = arith.constant 0 : index
    %542 = vector.load %arg36[%c256, %c0_407] : memref<288x22xf32, #tpu.memory_space<vmem>>, vector<32x22xf32>
    tpu.vector_store %arg36[%c256, %c0_407], %541 {strides = array<i32>} : memref<288x22xf32, #tpu.memory_space<vmem>>, vector<32x22xf32>,
    %c0_408 = arith.constant 0 : index
    %c0_409 = arith.constant 0 : index
    %543 = vector.load %arg17[%c0_408, %c0_409] : memref<32x288xbf16, #tpu.memory_space<vmem>>, vector<32x288xbf16>
    %c0_410 = arith.constant 0 : index
    %c0_411 = arith.constant 0 : index
    %544 = vector.load %arg36[%c0_410, %c0_411] : memref<288x22xf32, #tpu.memory_space<vmem>>, vector<288x22xf32>
    %545 = arith.truncf %544 : vector<288x22xf32> to vector<288x22xbf16>
    %cst_412 = arith.constant dense<0.000000e+00> : vector<32x22xf32>
    %546 = tpu.matmul %543, %545, %cst_412 {dimension_numbers = #tpu.dot_dimension_numbers<[1], [0], [0], [1], [0, 0, 1, 1], [], []>} : vector<32x288xbf16>, vector<288x22xbf16>, vector<32x22xf32> -> vector<32x22xf32>
    %c0_413 = arith.constant 0 : index
    %c0_414 = arith.constant 0 : index
    %547 = vector.load %arg35[%c0_413, %c0_414] : memref<32x36xf32, #tpu.memory_space<vmem>>, vector<32x36xf32>
    %548 = arith.mulf %547, %547 : vector<32x36xf32>
    %cst_415 = arith.constant 1.000000e+00 : f32
    %549 = vector.broadcast %cst_415 : f32 to vector<1x32xf32>
    %cst_416 = arith.constant dense<0.000000e+00> : vector<1x36xf32>
    %550 = tpu.matmul %549, %548, %cst_416 {dimension_numbers = #tpu.dot_dimension_numbers<[1], [0], [0], [1], [0, 0, 1, 1], [], []>} : vector<1x32xf32>, vector<32x36xf32>, vector<1x36xf32> -> vector<1x36xf32>
    %551 = vector.extract_strided_slice %550 {offsets = [0, 0], sizes = [1, 22], strides = [1, 1]} : vector<1x36xf32> to vector<1x22xf32>
    %552 = vector.extract_strided_slice %550 {offsets = [0, 1], sizes = [1, 22], strides = [1, 1]} : vector<1x36xf32> to vector<1x22xf32>
    %553 = arith.addf %551, %552 : vector<1x22xf32>
    %554 = vector.extract_strided_slice %550 {offsets = [0, 2], sizes = [1, 22], strides = [1, 1]} : vector<1x36xf32> to vector<1x22xf32>
    %555 = arith.addf %553, %554 : vector<1x22xf32>
    %556 = vector.extract_strided_slice %550 {offsets = [0, 6], sizes = [1, 22], strides = [1, 1]} : vector<1x36xf32> to vector<1x22xf32>
    %557 = arith.addf %555, %556 : vector<1x22xf32>
    %558 = vector.extract_strided_slice %550 {offsets = [0, 7], sizes = [1, 22], strides = [1, 1]} : vector<1x36xf32> to vector<1x22xf32>
    %559 = arith.addf %557, %558 : vector<1x22xf32>
    %560 = vector.extract_strided_slice %550 {offsets = [0, 8], sizes = [1, 22], strides = [1, 1]} : vector<1x36xf32> to vector<1x22xf32>
    %561 = arith.addf %559, %560 : vector<1x22xf32>
    %562 = vector.extract_strided_slice %550 {offsets = [0, 12], sizes = [1, 22], strides = [1, 1]} : vector<1x36xf32> to vector<1x22xf32>
    %563 = arith.addf %561, %562 : vector<1x22xf32>
    %564 = vector.extract_strided_slice %550 {offsets = [0, 13], sizes = [1, 22], strides = [1, 1]} : vector<1x36xf32> to vector<1x22xf32>
    %565 = arith.addf %563, %564 : vector<1x22xf32>
    %566 = vector.extract_strided_slice %550 {offsets = [0, 14], sizes = [1, 22], strides = [1, 1]} : vector<1x36xf32> to vector<1x22xf32>
    %567 = arith.addf %565, %566 : vector<1x22xf32>
    %568 = math.absf %546 : vector<32x22xf32>
    %cst_417 = arith.constant 9.99999997E-7 : f32
    %569 = vector.broadcast %cst_417 : f32 to vector<1x22xf32>
    %570 = arith.addf %567, %569 : vector<1x22xf32>
    %571 = math.rsqrt %570 : vector<1x22xf32>
    %572 = vector.broadcast %571 : vector<1x22xf32> to vector<32x22xf32>
    %573 = arith.mulf %568, %572 : vector<32x22xf32>
    %574 = arith.mulf %546, %573 : vector<32x22xf32>
    %c0_418 = arith.constant 0 : index
    %c0_419 = arith.constant 0 : index
    %575 = vector.load %arg18[%c0_418, %c0_419] : memref<32x1xf32, #tpu.memory_space<vmem>>, vector<32x1xf32>
    %cst_420 = arith.constant 1.000000e+00 : f32
    %576 = vector.broadcast %cst_420 : f32 to vector<1x32xf32>
    %cst_421 = arith.constant dense<0.000000e+00> : vector<1x22xf32>
    %577 = tpu.matmul %576, %574, %cst_421 {dimension_numbers = #tpu.dot_dimension_numbers<[1], [0], [0], [1], [0, 0, 1, 1], [], []>} : vector<1x32xf32>, vector<32x22xf32>, vector<1x22xf32> -> vector<1x22xf32>
    %cst_422 = arith.constant 3.125000e-02 : f32
    %578 = vector.broadcast %cst_422 : f32 to vector<1x22xf32>
    %579 = arith.mulf %577, %578 : vector<1x22xf32>
    %580 = arith.mulf %574, %574 : vector<32x22xf32>
    %cst_423 = arith.constant 1.000000e+00 : f32
    %581 = vector.broadcast %cst_423 : f32 to vector<1x32xf32>
    %cst_424 = arith.constant dense<0.000000e+00> : vector<1x22xf32>
    %582 = tpu.matmul %581, %580, %cst_424 {dimension_numbers = #tpu.dot_dimension_numbers<[1], [0], [0], [1], [0, 0, 1, 1], [], []>} : vector<1x32xf32>, vector<32x22xf32>, vector<1x22xf32> -> vector<1x22xf32>
    %cst_425 = arith.constant 3.125000e-02 : f32
    %583 = vector.broadcast %cst_425 : f32 to vector<1x22xf32>
    %584 = arith.mulf %582, %583 : vector<1x22xf32>
    %585 = arith.mulf %579, %579 : vector<1x22xf32>
    %586 = arith.subf %584, %585 : vector<1x22xf32>
    %cst_426 = arith.constant 0.000000e+00 : f32
    %587 = vector.broadcast %cst_426 : f32 to vector<1x22xf32>
    %588 = arith.maximumf %586, %587 : vector<1x22xf32>
    %589 = vector.broadcast %579 : vector<1x22xf32> to vector<32x22xf32>
    %590 = arith.subf %574, %589 : vector<32x22xf32>
    %cst_427 = arith.constant 9.99999974E-6 : f32
    %591 = vector.broadcast %cst_427 : f32 to vector<1x22xf32>
    %592 = arith.addf %588, %591 : vector<1x22xf32>
    %593 = math.rsqrt %592 : vector<1x22xf32>
    %594 = vector.broadcast %593 : vector<1x22xf32> to vector<32x22xf32>
    %595 = arith.mulf %590, %594 : vector<32x22xf32>
    %596 = vector.broadcast %575 : vector<32x1xf32> to vector<32x22xf32>
    %597 = arith.mulf %595, %596 : vector<32x22xf32>
    %598 = vector.extract_strided_slice %500 {offsets = [0, 7], sizes = [32, 22], strides = [1, 1]} : vector<32x36xf32> to vector<32x22xf32>
    %c0_428 = arith.constant 0 : index
    %c0_429 = arith.constant 0 : index
    %599 = vector.load %arg19[%c0_428, %c0_429] : memref<32x1xf32, #tpu.memory_space<vmem>>, vector<32x1xf32>
    %cst_430 = arith.constant 1.000000e+00 : f32
    %600 = vector.broadcast %cst_430 : f32 to vector<1x32xf32>
    %cst_431 = arith.constant dense<0.000000e+00> : vector<1x22xf32>
    %601 = tpu.matmul %600, %598, %cst_431 {dimension_numbers = #tpu.dot_dimension_numbers<[1], [0], [0], [1], [0, 0, 1, 1], [], []>} : vector<1x32xf32>, vector<32x22xf32>, vector<1x22xf32> -> vector<1x22xf32>
    %cst_432 = arith.constant 3.125000e-02 : f32
    %602 = vector.broadcast %cst_432 : f32 to vector<1x22xf32>
    %603 = arith.mulf %601, %602 : vector<1x22xf32>
    %604 = arith.mulf %598, %598 : vector<32x22xf32>
    %cst_433 = arith.constant 1.000000e+00 : f32
    %605 = vector.broadcast %cst_433 : f32 to vector<1x32xf32>
    %cst_434 = arith.constant dense<0.000000e+00> : vector<1x22xf32>
    %606 = tpu.matmul %605, %604, %cst_434 {dimension_numbers = #tpu.dot_dimension_numbers<[1], [0], [0], [1], [0, 0, 1, 1], [], []>} : vector<1x32xf32>, vector<32x22xf32>, vector<1x22xf32> -> vector<1x22xf32>
    %cst_435 = arith.constant 3.125000e-02 : f32
    %607 = vector.broadcast %cst_435 : f32 to vector<1x22xf32>
    %608 = arith.mulf %606, %607 : vector<1x22xf32>
    %609 = arith.mulf %603, %603 : vector<1x22xf32>
    %610 = arith.subf %608, %609 : vector<1x22xf32>
    %cst_436 = arith.constant 0.000000e+00 : f32
    %611 = vector.broadcast %cst_436 : f32 to vector<1x22xf32>
    %612 = arith.maximumf %610, %611 : vector<1x22xf32>
    %613 = vector.broadcast %603 : vector<1x22xf32> to vector<32x22xf32>
    %614 = arith.subf %598, %613 : vector<32x22xf32>
    %cst_437 = arith.constant 9.99999974E-6 : f32
    %615 = vector.broadcast %cst_437 : f32 to vector<1x22xf32>
    %616 = arith.addf %612, %615 : vector<1x22xf32>
    %617 = math.rsqrt %616 : vector<1x22xf32>
    %618 = vector.broadcast %617 : vector<1x22xf32> to vector<32x22xf32>
    %619 = arith.mulf %614, %618 : vector<32x22xf32>
    %620 = vector.broadcast %599 : vector<32x1xf32> to vector<32x22xf32>
    %621 = arith.mulf %619, %620 : vector<32x22xf32>
    %622 = arith.addf %597, %621 : vector<32x22xf32>
    %c0_438 = arith.constant 0 : index
    %c0_439 = arith.constant 0 : index
    %623 = vector.load %arg20[%c0_438, %c0_439] : memref<4x32xf32, #tpu.memory_space<vmem>>, vector<4x32xf32>
    %cst_440 = arith.constant dense<0.000000e+00> : vector<4x22xf32>
    %624 = tpu.matmul %623, %622, %cst_440 {dimension_numbers = #tpu.dot_dimension_numbers<[1], [0], [0], [1], [0, 0, 1, 1], [], []>} : vector<4x32xf32>, vector<32x22xf32>, vector<4x22xf32> -> vector<4x22xf32>
    %625 = arith.mulf %622, %622 : vector<32x22xf32>
    %cst_441 = arith.constant 1.000000e+00 : f32
    %626 = vector.broadcast %cst_441 : f32 to vector<1x32xf32>
    %cst_442 = arith.constant dense<0.000000e+00> : vector<1x22xf32>
    %627 = tpu.matmul %626, %625, %cst_442 {dimension_numbers = #tpu.dot_dimension_numbers<[1], [0], [0], [1], [0, 0, 1, 1], [], []>} : vector<1x32xf32>, vector<32x22xf32>, vector<1x22xf32> -> vector<1x22xf32>
    %628 = math.absf %624 : vector<4x22xf32>
    %cst_443 = arith.constant 9.99999997E-7 : f32
    %629 = vector.broadcast %cst_443 : f32 to vector<1x22xf32>
    %630 = arith.addf %627, %629 : vector<1x22xf32>
    %631 = math.rsqrt %630 : vector<1x22xf32>
    %632 = vector.broadcast %631 : vector<1x22xf32> to vector<4x22xf32>
    %633 = arith.mulf %628, %632 : vector<4x22xf32>
    %634 = arith.mulf %624, %633 : vector<4x22xf32>
    %c0_444 = arith.constant 0 : index
    %c0_445 = arith.constant 0 : index
    %635 = vector.load %arg23[%c0_444, %c0_445] : memref<22x1xf32, #tpu.memory_space<vmem>>, vector<22x1xf32>
    %cst_446 = arith.constant dense<0.000000e+00> : vector<4x1xf32>
    %636 = tpu.matmul %634, %635, %cst_446 {dimension_numbers = #tpu.dot_dimension_numbers<[1], [0], [0], [1], [0, 0, 1, 1], [], []>} : vector<4x22xf32>, vector<22x1xf32>, vector<4x1xf32> -> vector<4x1xf32>
    %cst_447 = arith.constant -1.09861231 : f32
    %637 = vector.broadcast %cst_447 : f32 to vector<4x1xf32>
    %638 = arith.addf %636, %637 : vector<4x1xf32>
    %c0_448 = arith.constant 0 : index
    %c0_449 = arith.constant 0 : index
    %c0_450 = arith.constant 0 : index
    %639 = vector.load %arg26[%c0_448, %c0_449, %c0_450] : memref<1x4x1xf32, #tpu.memory_space<vmem>>, vector<1x4x1xf32>
    %640 = vector.shape_cast %639 : vector<1x4x1xf32> to vector<4x1xf32>
    %641 = vector.shape_cast %638 : vector<4x1xf32> to vector<1x4x1xf32>
    tpu.vector_store %arg26[%c0_448, %c0_449, %c0_450], %641 {strides = array<i32>} : memref<1x4x1xf32, #tpu.memory_space<vmem>>, vector<1x4x1xf32>,
    return
  }
  func.func @transform_0(%arg0: i32) -> (i32, i32, i32) {
    %c0_i32 = arith.constant 0 : i32
    %c0_i32_0 = arith.constant 0 : i32
    %c0_i32_1 = arith.constant 0 : i32
    return %arg0, %c0_i32, %c0_i32_0 : i32, i32, i32
  }
  func.func @transform_1(%arg0: i32) -> (i32, i32) {
    %c0_i32 = arith.constant 0 : i32
    %c0_i32_0 = arith.constant 0 : i32
    %c0_i32_1 = arith.constant 0 : i32
    return %c0_i32, %c0_i32_0 : i32, i32
  }
  func.func @transform_2(%arg0: i32) -> (i32, i32) {
    %c0_i32 = arith.constant 0 : i32
    %c0_i32_0 = arith.constant 0 : i32
    %c0_i32_1 = arith.constant 0 : i32
    return %c0_i32, %c0_i32_0 : i32, i32
  }
  func.func @transform_3(%arg0: i32) -> (i32, i32) {
    %c0_i32 = arith.constant 0 : i32
    %c0_i32_0 = arith.constant 0 : i32
    %c0_i32_1 = arith.constant 0 : i32
    return %c0_i32, %c0_i32_0 : i32, i32
  }
  func.func @transform_4(%arg0: i32) -> (i32, i32) {
    %c0_i32 = arith.constant 0 : i32
    %c0_i32_0 = arith.constant 0 : i32
    %c0_i32_1 = arith.constant 0 : i32
    return %c0_i32, %c0_i32_0 : i32, i32
  }
  func.func @transform_5(%arg0: i32) -> (i32, i32) {
    %c0_i32 = arith.constant 0 : i32
    %c0_i32_0 = arith.constant 0 : i32
    %c0_i32_1 = arith.constant 0 : i32
    return %c0_i32, %c0_i32_0 : i32, i32
  }
  func.func @transform_6(%arg0: i32) -> (i32, i32) {
    %c0_i32 = arith.constant 0 : i32
    %c0_i32_0 = arith.constant 0 : i32
    %c0_i32_1 = arith.constant 0 : i32
    return %c0_i32, %c0_i32_0 : i32, i32
  }
  func.func @transform_7(%arg0: i32) -> (i32, i32) {
    %c0_i32 = arith.constant 0 : i32
    %c0_i32_0 = arith.constant 0 : i32
    %c0_i32_1 = arith.constant 0 : i32
    return %c0_i32, %c0_i32_0 : i32, i32
  }
  func.func @transform_8(%arg0: i32) -> (i32, i32) {
    %c0_i32 = arith.constant 0 : i32
    %c0_i32_0 = arith.constant 0 : i32
    %c0_i32_1 = arith.constant 0 : i32
    return %c0_i32, %c0_i32_0 : i32, i32
  }
  func.func @transform_9(%arg0: i32) -> (i32, i32) {
    %c0_i32 = arith.constant 0 : i32
    %c0_i32_0 = arith.constant 0 : i32
    %c0_i32_1 = arith.constant 0 : i32
    return %c0_i32, %c0_i32_0 : i32, i32
  }
  func.func @transform_10(%arg0: i32) -> (i32, i32) {
    %c0_i32 = arith.constant 0 : i32
    %c0_i32_0 = arith.constant 0 : i32
    %c0_i32_1 = arith.constant 0 : i32
    return %c0_i32, %c0_i32_0 : i32, i32
  }
  func.func @transform_11(%arg0: i32) -> (i32, i32) {
    %c0_i32 = arith.constant 0 : i32
    %c0_i32_0 = arith.constant 0 : i32
    %c0_i32_1 = arith.constant 0 : i32
    return %c0_i32, %c0_i32_0 : i32, i32
  }
  func.func @transform_12(%arg0: i32) -> (i32, i32) {
    %c0_i32 = arith.constant 0 : i32
    %c0_i32_0 = arith.constant 0 : i32
    %c0_i32_1 = arith.constant 0 : i32
    return %c0_i32, %c0_i32_0 : i32, i32
  }
  func.func @transform_13(%arg0: i32) -> (i32, i32) {
    %c0_i32 = arith.constant 0 : i32
    %c0_i32_0 = arith.constant 0 : i32
    %c0_i32_1 = arith.constant 0 : i32
    return %c0_i32, %c0_i32_0 : i32, i32
  }
  func.func @transform_14(%arg0: i32) -> (i32, i32) {
    %c0_i32 = arith.constant 0 : i32
    %c0_i32_0 = arith.constant 0 : i32
    %c0_i32_1 = arith.constant 0 : i32
    return %c0_i32, %c0_i32_0 : i32, i32
  }
  func.func @transform_15(%arg0: i32) -> (i32, i32) {
    %c0_i32 = arith.constant 0 : i32
    %c0_i32_0 = arith.constant 0 : i32
    %c0_i32_1 = arith.constant 0 : i32
    return %c0_i32, %c0_i32_0 : i32, i32
  }
  func.func @transform_16(%arg0: i32) -> (i32, i32) {
    %c0_i32 = arith.constant 0 : i32
    %c0_i32_0 = arith.constant 0 : i32
    %c0_i32_1 = arith.constant 0 : i32
    return %c0_i32, %c0_i32_0 : i32, i32
  }
  func.func @transform_17(%arg0: i32) -> (i32, i32) {
    %c0_i32 = arith.constant 0 : i32
    %c0_i32_0 = arith.constant 0 : i32
    %c0_i32_1 = arith.constant 0 : i32
    return %c0_i32, %c0_i32_0 : i32, i32
  }
  func.func @transform_18(%arg0: i32) -> (i32, i32) {
    %c0_i32 = arith.constant 0 : i32
    %c0_i32_0 = arith.constant 0 : i32
    %c0_i32_1 = arith.constant 0 : i32
    return %c0_i32, %c0_i32_0 : i32, i32
  }
  func.func @transform_19(%arg0: i32) -> (i32, i32) {
    %c0_i32 = arith.constant 0 : i32
    %c0_i32_0 = arith.constant 0 : i32
    %c0_i32_1 = arith.constant 0 : i32
    return %c0_i32, %c0_i32_0 : i32, i32
  }
  func.func @transform_20(%arg0: i32) -> (i32, i32) {
    %c0_i32 = arith.constant 0 : i32
    %c0_i32_0 = arith.constant 0 : i32
    %c0_i32_1 = arith.constant 0 : i32
    return %c0_i32, %c0_i32_0 : i32, i32
  }
  func.func @transform_21(%arg0: i32) -> (i32, i32) {
    %c0_i32 = arith.constant 0 : i32
    %c0_i32_0 = arith.constant 0 : i32
    %c0_i32_1 = arith.constant 0 : i32
    return %c0_i32, %c0_i32_0 : i32, i32
  }
  func.func @transform_22(%arg0: i32) -> (i32, i32) {
    %c0_i32 = arith.constant 0 : i32
    %c0_i32_0 = arith.constant 0 : i32
    %c0_i32_1 = arith.constant 0 : i32
    return %c0_i32, %c0_i32_0 : i32, i32
  }
  func.func @transform_23(%arg0: i32) -> (i32, i32) {
    %c0_i32 = arith.constant 0 : i32
    %c0_i32_0 = arith.constant 0 : i32
    %c0_i32_1 = arith.constant 0 : i32
    return %c0_i32, %c0_i32_0 : i32, i32
  }
  func.func @transform_24(%arg0: i32) -> (i32, i32) {
    %c0_i32 = arith.constant 0 : i32
    %c0_i32_0 = arith.constant 0 : i32
    %c0_i32_1 = arith.constant 0 : i32
    return %c0_i32, %c0_i32_0 : i32, i32
  }
  func.func @transform_25(%arg0: i32) -> (i32, i32, i32) {
    %c0_i32 = arith.constant 0 : i32
    %c0_i32_0 = arith.constant 0 : i32
    %c0_i32_1 = arith.constant 0 : i32
    return %arg0, %c0_i32, %c0_i32_0 : i32, i32, i32
  }
}

</mosaic_0001>

<llo_original>
// kernel: bcos_resnet_forward.1
$region0: #{bcos_resnet_forward.1}
  #allocation0 [shape = 'u32[]', space=smem, size = 0x4, offset = 0x4, fixed_abs, tag = 'smem constant byte address 0x4 - core index']
  #allocation1 [shape = 'u32[144,128]{1,0:T(1,128)}', space=vmem, size = 0x12000, scoped, tag = 'internal scratch']
  #allocation2 [shape = 'f32[6,324]{1,0:T(8,128)}', space=vmem, size = 0x3000, scoped, tag = 'scratch operand']
  #allocation3 [shape = 'f32[8,324]{1,0:T(8,128)}', space=vmem, size = 0x3000, scoped, tag = 'scratch operand']
  #allocation4 [shape = 'f32[8,324]{1,0:T(8,128)}', space=vmem, size = 0x3000, scoped, tag = 'scratch operand']
  #allocation5 [shape = 'f32[8,324]{1,0:T(8,128)}', space=vmem, size = 0x3000, scoped, tag = 'scratch operand']
  #allocation6 [shape = 'f32[72,286]{1,0:T(8,128)}', space=vmem, size = 0x1b000, scoped, tag = 'scratch operand']
  #allocation7 [shape = 'f32[16,100]{1,0:T(8,128)}', space=vmem, size = 0x2000, scoped, tag = 'scratch operand']
  #allocation8 [shape = 'f32[16,100]{1,0:T(8,128)}', space=vmem, size = 0x2000, scoped, tag = 'scratch operand']
  #allocation9 [shape = 'f32[144,78]{1,0:T(8,128)}', space=vmem, size = 0x12000, scoped, tag = 'scratch operand']
  #allocation10 [shape = 'f32[32,36]{1,0:T(8,128)}', space=vmem, size = 0x4000, scoped, tag = 'scratch operand']
  #allocation11 [shape = 'f32[288,22]{1,0:T(8,128)}', space=vmem, size = 0x24000, scoped, tag = 'scratch operand']
  %s0 = inlined_call_operand.vmem [shape: f32[2,6,324], index: 0, kind: input, shape index: {}]
  %s1 = inlined_call_operand.vmem [shape: bf16[8,72], index: 1, kind: input, shape index: {}]
  %s2 = inlined_call_operand.vmem [shape: f32[8,1], index: 2, kind: input, shape index: {}]
  %s3 = inlined_call_operand.vmem [shape: bf16[8,72], index: 3, kind: input, shape index: {}]
  %s4 = inlined_call_operand.vmem [shape: f32[8,1], index: 4, kind: input, shape index: {}]
  %s5 = inlined_call_operand.vmem [shape: bf16[8,72], index: 5, kind: input, shape index: {}]
  %s6 = inlined_call_operand.vmem [shape: f32[8,1], index: 6, kind: input, shape index: {}]
  %s7 = inlined_call_operand.vmem [shape: bf16[16,72], index: 7, kind: input, shape index: {}]
  %s8 = inlined_call_operand.vmem [shape: f32[16,8], index: 8, kind: input, shape index: {}]
  %s9 = inlined_call_operand.vmem [shape: f32[16,1], index: 9, kind: input, shape index: {}]
  %s10 = inlined_call_operand.vmem [shape: bf16[16,144], index: 10, kind: input, shape index: {}]
  %s11 = inlined_call_operand.vmem [shape: f32[16,1], index: 11, kind: input, shape index: {}]
  %s12 = inlined_call_operand.vmem [shape: f32[16,1], index: 12, kind: input, shape index: {}]
  %s13 = inlined_call_operand.vmem [shape: bf16[32,144], index: 13, kind: input, shape index: {}]
  %s14 = inlined_call_operand.vmem [shape: f32[32,16], index: 14, kind: input, shape index: {}]
  %s15 = inlined_call_operand.vmem [shape: f32[32,1], index: 15, kind: input, shape index: {}]
  %s16 = inlined_call_operand.vmem [shape: bf16[32,288], index: 16, kind: input, shape index: {}]
  %s17 = inlined_call_operand.vmem [shape: f32[32,1], index: 17, kind: input, shape index: {}]
  %s18 = inlined_call_operand.vmem [shape: f32[32,1], index: 18, kind: input, shape index: {}]
  %s19 = inlined_call_operand.vmem [shape: f32[4,32], index: 19, kind: input, shape index: {}]
  %s20 = inlined_call_operand.vmem [shape: f32[286,100], index: 20, kind: input, shape index: {}]
  %s21 = inlined_call_operand.vmem [shape: f32[78,36], index: 21, kind: input, shape index: {}]
  %s22 = inlined_call_operand.vmem [shape: f32[22,1], index: 22, kind: input, shape index: {}]
  %s23 = inlined_call_operand.vmem [shape: f32[1,286], index: 23, kind: input, shape index: {}]
  %s24 = inlined_call_operand.vmem [shape: f32[1,78], index: 24, kind: input, shape index: {}]
  %s25 = inlined_call_operand.vmem [shape: f32[2,4,1], index: 25, kind: output, shape index: {}]
  %s26 = sld [smem:[#allocation0]]
  $region133: #{bcos_resnet_forward.1} parent=0
    _
  %s28 = ssub.s32 1, %s26
  %s29 = scalar_select 0, %s28, %s26
  loop: start=0, step=1, limit=4
  $region2: #{bcos_resnet_forward.1} parent=0 // loop_pre_header
    _
  $region3: #{bcos_resnet_forward.1} parent=0 // loop_header
    %s31 = sphi 0, %s35
    %p32 = scmp.ge.s32.totalorder %s31, 4
    %s41 = sphi 0, %s43
    %s44 = sphi 0, %s41
    %s45 = sphi 0, %s44
    %s61 = sphi 0, %s45
    %s65 = sphi 0, %s65
    %s67 = sphi 0, %s65
    %s68 = sphi 0, %s67
    %s82 = sphi 0, %s68
    %s86 = sphi 0, %s86
    %s88 = sphi 0, %s86
    %s89 = sphi 0, %s88
    %s103 = sphi 0, %s89
    %s107 = sphi 0, %s107
    %s109 = sphi 0, %s107
    %s110 = sphi 0, %s109
    %s124 = sphi 0, %s110
    %s128 = sphi 0, %s128
    %s130 = sphi 0, %s128
    %s131 = sphi 0, %s130
    %s145 = sphi 0, %s131
    %s149 = sphi 0, %s149
    %s151 = sphi 0, %s149
    %s152 = sphi 0, %s151
    %s166 = sphi 0, %s152
    %s170 = sphi 0, %s170
    %s172 = sphi 0, %s170
    %s173 = sphi 0, %s172
    %s187 = sphi 0, %s173
    %s191 = sphi 0, %s191
    %s193 = sphi 0, %s191
    %s194 = sphi 0, %s193
    %s208 = sphi 0, %s194
    %s212 = sphi 0, %s212
    %s214 = sphi 0, %s212
    %s215 = sphi 0, %s214
    %s229 = sphi 0, %s215
    %s233 = sphi 0, %s233
    %s235 = sphi 0, %s233
    %s236 = sphi 0, %s235
    %s250 = sphi 0, %s236
    %s254 = sphi 0, %s254
    %s256 = sphi 0, %s254
    %s257 = sphi 0, %s256
    %s271 = sphi 0, %s257
    %s275 = sphi 0, %s275
    %s277 = sphi 0, %s275
    %s278 = sphi 0, %s277
    %s292 = sphi 0, %s278
    %s296 = sphi 0, %s296
    %s298 = sphi 0, %s296
    %s299 = sphi 0, %s298
    %s313 = sphi 0, %s299
    %s317 = sphi 0, %s317
    %s319 = sphi 0, %s317
    %s320 = sphi 0, %s319
    %s334 = sphi 0, %s320
    %s338 = sphi 0, %s338
    %s340 = sphi 0, %s338
    %s341 = sphi 0, %s340
    %s355 = sphi 0, %s341
    %s359 = sphi 0, %s359
    %s361 = sphi 0, %s359
    %s362 = sphi 0, %s361
    %s376 = sphi 0, %s362
    %s380 = sphi 0, %s380
    %s382 = sphi 0, %s380
    %s383 = sphi 0, %s382
    %s397 = sphi 0, %s383
    %s401 = sphi 0, %s401
    %s403 = sphi 0, %s401
    %s404 = sphi 0, %s403
    %s418 = sphi 0, %s404
    %s422 = sphi 0, %s422
    %s424 = sphi 0, %s422
    %s425 = sphi 0, %s424
    %s439 = sphi 0, %s425
    %s443 = sphi 0, %s443
    %s445 = sphi 0, %s443
    %s446 = sphi 0, %s445
    %s460 = sphi 0, %s446
    %s464 = sphi 0, %s464
    %s466 = sphi 0, %s464
    %s467 = sphi 0, %s466
    %s481 = sphi 0, %s467
    %s485 = sphi 0, %s485
    %s487 = sphi 0, %s485
    %s488 = sphi 0, %s487
    %s502 = sphi 0, %s488
    %s506 = sphi 0, %s506
    %s508 = sphi 0, %s506
    %s509 = sphi 0, %s508
    %s523 = sphi 0, %s509
    %s527 = sphi 0, %s527
    %s529 = sphi 0, %s527
    %s530 = sphi 0, %s529
    %s544 = sphi 0, %s530
    %s548 = sphi 0, %s548
    %s550 = sphi 0, %s548
    %s551 = sphi 0, %s550
    %s565 = sphi 0, %s551
    %s571 = sphi 0, %s573
    %s574 = sphi 0, %s571
    %s575 = sphi 0, %s574
    %s591 = sphi 0, %s575
  $region4: #{bcos_resnet_forward.1} parent=0 // loop_header_branch
    %34 = sbr.rel (%p32) target = $region8
  $region5: #{bcos_resnet_forward.1} parent=0 // loop_body
    %s36 = ssub.s32 %s31, 1
    %s37 = ssub.s32 %s31, 2
    %s38 = sadd.s32 %s31, 1
    %s39 = ssub.s32 %s31, %s38
    %p40 = scmp.eq.s32.totalorder %s39, 0
    %s42 = sadd.s32 %s41, 1
    %s43 = scalar_select %p40, %s41, %s42
    %p46 = pneg %p40
    %p47 = scmp.eq.s32.totalorder %s31, 1
    %p48 = por %p46, %p47
    %p49 = scmp.ne.s32.totalorder %s41, %s44
    %p50 = scmp.eq.s32.totalorder %s31, 0
    %p51 = por %p49, %p50
    %p52 = scmp.ne.s32.totalorder %s41, %s44
    %p53 = scmp.eq.s32.totalorder %s36, 1
    %p54 = por %p52, %p53
    %p55 = scmp.ne.s32.totalorder %s44, %s45
    %p56 = scmp.eq.s32.totalorder %s36, 0
    %p57 = por %p55, %p56
    %p58 = scmp.ne.s32.totalorder %s44, %s45
    %p59 = scmp.eq.s32.totalorder %s37, 1
    %p60 = por %p58, %p59
    %p62 = scmp.ne.s32.totalorder %s45, %s61
    %p63 = scmp.eq.s32.totalorder %s37, 0
    %p64 = por %p62, %p63
    %s66 = sadd.s32 %s65, 1
    %p69 = scmp.eq.s32.totalorder %s31, 1
    %p70 = scmp.ne.s32.totalorder %s65, %s67
    %p71 = scmp.eq.s32.totalorder %s31, 0
    %p72 = por %p70, %p71
    %p73 = scmp.ne.s32.totalorder %s65, %s67
    %p74 = scmp.eq.s32.totalorder %s36, 1
    %p75 = por %p73, %p74
    %p76 = scmp.ne.s32.totalorder %s67, %s68
    %p77 = scmp.eq.s32.totalorder %s36, 0
    %p78 = por %p76, %p77
    %p79 = scmp.ne.s32.totalorder %s67, %s68
    %p80 = scmp.eq.s32.totalorder %s37, 1
    %p81 = por %p79, %p80
    %p83 = scmp.ne.s32.totalorder %s68, %s82
    %p84 = scmp.eq.s32.totalorder %s37, 0
    %p85 = por %p83, %p84
    %s87 = sadd.s32 %s86, 1
    %p90 = scmp.eq.s32.totalorder %s31, 1
    %p91 = scmp.ne.s32.totalorder %s86, %s88
    %p92 = scmp.eq.s32.totalorder %s31, 0
    %p93 = por %p91, %p92
    %p94 = scmp.ne.s32.totalorder %s86, %s88
    %p95 = scmp.eq.s32.totalorder %s36, 1
    %p96 = por %p94, %p95
    %p97 = scmp.ne.s32.totalorder %s88, %s89
    %p98 = scmp.eq.s32.totalorder %s36, 0
    %p99 = por %p97, %p98
    %p100 = scmp.ne.s32.totalorder %s88, %s89
    %p101 = scmp.eq.s32.totalorder %s37, 1
    %p102 = por %p100, %p101
    %p104 = scmp.ne.s32.totalorder %s89, %s103
    %p105 = scmp.eq.s32.totalorder %s37, 0
    %p106 = por %p104, %p105
    %s108 = sadd.s32 %s107, 1
    %p111 = scmp.eq.s32.totalorder %s31, 1
    %p112 = scmp.ne.s32.totalorder %s107, %s109
    %p113 = scmp.eq.s32.totalorder %s31, 0
    %p114 = por %p112, %p113
    %p115 = scmp.ne.s32.totalorder %s107, %s109
    %p116 = scmp.eq.s32.totalorder %s36, 1
    %p117 = por %p115, %p116
    %p118 = scmp.ne.s32.totalorder %s109, %s110
    %p119 = scmp.eq.s32.totalorder %s36, 0
    %p120 = por %p118, %p119
    %p121 = scmp.ne.s32.totalorder %s109, %s110
    %p122 = scmp.eq.s32.totalorder %s37, 1
    %p123 = por %p121, %p122
    %p125 = scmp.ne.s32.totalorder %s110, %s124
    %p126 = scmp.eq.s32.totalorder %s37, 0
    %p127 = por %p125, %p126
    %s129 = sadd.s32 %s128, 1
    %p132 = scmp.eq.s32.totalorder %s31, 1
    %p133 = scmp.ne.s32.totalorder %s128, %s130
    %p134 = scmp.eq.s32.totalorder %s31, 0
    %p135 = por %p133, %p134
    %p136 = scmp.ne.s32.totalorder %s128, %s130
    %p137 = scmp.eq.s32.totalorder %s36, 1
    %p138 = por %p136, %p137
    %p139 = scmp.ne.s32.totalorder %s130, %s131
    %p140 = scmp.eq.s32.totalorder %s36, 0
    %p141 = por %p139, %p140
    %p142 = scmp.ne.s32.totalorder %s130, %s131
    %p143 = scmp.eq.s32.totalorder %s37, 1
    %p144 = por %p142, %p143
    %p146 = scmp.ne.s32.totalorder %s131, %s145
    %p147 = scmp.eq.s32.totalorder %s37, 0
    %p148 = por %p146, %p147
    %s150 = sadd.s32 %s149, 1
    %p153 = scmp.eq.s32.totalorder %s31, 1
    %p154 = scmp.ne.s32.totalorder %s149, %s151
    %p155 = scmp.eq.s32.totalorder %s31, 0
    %p156 = por %p154, %p155
    %p157 = scmp.ne.s32.totalorder %s149, %s151
    %p158 = scmp.eq.s32.totalorder %s36, 1
    %p159 = por %p157, %p158
    %p160 = scmp.ne.s32.totalorder %s151, %s152
    %p161 = scmp.eq.s32.totalorder %s36, 0
    %p162 = por %p160, %p161
    %p163 = scmp.ne.s32.totalorder %s151, %s152
    %p164 = scmp.eq.s32.totalorder %s37, 1
    %p165 = por %p163, %p164
    %p167 = scmp.ne.s32.totalorder %s152, %s166
    %p168 = scmp.eq.s32.totalorder %s37, 0
    %p169 = por %p167, %p168
    %s171 = sadd.s32 %s170, 1
    %p174 = scmp.eq.s32.totalorder %s31, 1
    %p175 = scmp.ne.s32.totalorder %s170, %s172
    %p176 = scmp.eq.s32.totalorder %s31, 0
    %p177 = por %p175, %p176
    %p178 = scmp.ne.s32.totalorder %s170, %s172
    %p179 = scmp.eq.s32.totalorder %s36, 1
    %p180 = por %p178, %p179
    %p181 = scmp.ne.s32.totalorder %s172, %s173
    %p182 = scmp.eq.s32.totalorder %s36, 0
    %p183 = por %p181, %p182
    %p184 = scmp.ne.s32.totalorder %s172, %s173
    %p185 = scmp.eq.s32.totalorder %s37, 1
    %p186 = por %p184, %p185
    %p188 = scmp.ne.s32.totalorder %s173, %s187
    %p189 = scmp.eq.s32.totalorder %s37, 0
    %p190 = por %p188, %p189
    %s192 = sadd.s32 %s191, 1
    %p195 = scmp.eq.s32.totalorder %s31, 1
    %p196 = scmp.ne.s32.totalorder %s191, %s193
    %p197 = scmp.eq.s32.totalorder %s31, 0
    %p198 = por %p196, %p197
    %p199 = scmp.ne.s32.totalorder %s191, %s193
    %p200 = scmp.eq.s32.totalorder %s36, 1
    %p201 = por %p199, %p200
    %p202 = scmp.ne.s32.totalorder %s193, %s194
    %p203 = scmp.eq.s32.totalorder %s36, 0
    %p204 = por %p202, %p203
    %p205 = scmp.ne.s32.totalorder %s193, %s194
    %p206 = scmp.eq.s32.totalorder %s37, 1
    %p207 = por %p205, %p206
    %p209 = scmp.ne.s32.totalorder %s194, %s208
    %p210 = scmp.eq.s32.totalorder %s37, 0
    %p211 = por %p209, %p210
    %s213 = sadd.s32 %s212, 1
    %p216 = scmp.eq.s32.totalorder %s31, 1
    %p217 = scmp.ne.s32.totalorder %s212, %s214
    %p218 = scmp.eq.s32.totalorder %s31, 0
    %p219 = por %p217, %p218
    %p220 = scmp.ne.s32.totalorder %s212, %s214
    %p221 = scmp.eq.s32.totalorder %s36, 1
    %p222 = por %p220, %p221
    %p223 = scmp.ne.s32.totalorder %s214, %s215
    %p224 = scmp.eq.s32.totalorder %s36, 0
    %p225 = por %p223, %p224
    %p226 = scmp.ne.s32.totalorder %s214, %s215
    %p227 = scmp.eq.s32.totalorder %s37, 1
    %p228 = por %p226, %p227
    %p230 = scmp.ne.s32.totalorder %s215, %s229
    %p231 = scmp.eq.s32.totalorder %s37, 0
    %p232 = por %p230, %p231
    %s234 = sadd.s32 %s233, 1
    %p237 = scmp.eq.s32.totalorder %s31, 1
    %p238 = scmp.ne.s32.totalorder %s233, %s235
    %p239 = scmp.eq.s32.totalorder %s31, 0
    %p240 = por %p238, %p239
    %p241 = scmp.ne.s32.totalorder %s233, %s235
    %p242 = scmp.eq.s32.totalorder %s36, 1
    %p243 = por %p241, %p242
    %p244 = scmp.ne.s32.totalorder %s235, %s236
    %p245 = scmp.eq.s32.totalorder %s36, 0
    %p246 = por %p244, %p245
    %p247 = scmp.ne.s32.totalorder %s235, %s236
    %p248 = scmp.eq.s32.totalorder %s37, 1
    %p249 = por %p247, %p248
    %p251 = scmp.ne.s32.totalorder %s236, %s250
    %p252 = scmp.eq.s32.totalorder %s37, 0
    %p253 = por %p251, %p252
    %s255 = sadd.s32 %s254, 1
    %p258 = scmp.eq.s32.totalorder %s31, 1
    %p259 = scmp.ne.s32.totalorder %s254, %s256
    %p260 = scmp.eq.s32.totalorder %s31, 0
    %p261 = por %p259, %p260
    %p262 = scmp.ne.s32.totalorder %s254, %s256
    %p263 = scmp.eq.s32.totalorder %s36, 1
    %p264 = por %p262, %p263
    %p265 = scmp.ne.s32.totalorder %s256, %s257
    %p266 = scmp.eq.s32.totalorder %s36, 0
    %p267 = por %p265, %p266
    %p268 = scmp.ne.s32.totalorder %s256, %s257
    %p269 = scmp.eq.s32.totalorder %s37, 1
    %p270 = por %p268, %p269
    %p272 = scmp.ne.s32.totalorder %s257, %s271
    %p273 = scmp.eq.s32.totalorder %s37, 0
    %p274 = por %p272, %p273
    %s276 = sadd.s32 %s275, 1
    %p279 = scmp.eq.s32.totalorder %s31, 1
    %p280 = scmp.ne.s32.totalorder %s275, %s277
    %p281 = scmp.eq.s32.totalorder %s31, 0
    %p282 = por %p280, %p281
    %p283 = scmp.ne.s32.totalorder %s275, %s277
    %p284 = scmp.eq.s32.totalorder %s36, 1
    %p285 = por %p283, %p284
    %p286 = scmp.ne.s32.totalorder %s277, %s278
    %p287 = scmp.eq.s32.totalorder %s36, 0
    %p288 = por %p286, %p287
    %p289 = scmp.ne.s32.totalorder %s277, %s278
    %p290 = scmp.eq.s32.totalorder %s37, 1
    %p291 = por %p289, %p290
    %p293 = scmp.ne.s32.totalorder %s278, %s292
    %p294 = scmp.eq.s32.totalorder %s37, 0
    %p295 = por %p293, %p294
    %s297 = sadd.s32 %s296, 1
    %p300 = scmp.eq.s32.totalorder %s31, 1
    %p301 = scmp.ne.s32.totalorder %s296, %s298
    %p302 = scmp.eq.s32.totalorder %s31, 0
    %p303 = por %p301, %p302
    %p304 = scmp.ne.s32.totalorder %s296, %s298
    %p305 = scmp.eq.s32.totalorder %s36, 1
    %p306 = por %p304, %p305
    %p307 = scmp.ne.s32.totalorder %s298, %s299
    %p308 = scmp.eq.s32.totalorder %s36, 0
    %p309 = por %p307, %p308
    %p310 = scmp.ne.s32.totalorder %s298, %s299
    %p311 = scmp.eq.s32.totalorder %s37, 1
    %p312 = por %p310, %p311
    %p314 = scmp.ne.s32.totalorder %s299, %s313
    %p315 = scmp.eq.s32.totalorder %s37, 0
    %p316 = por %p314, %p315
    %s318 = sadd.s32 %s317, 1
    %p321 = scmp.eq.s32.totalorder %s31, 1
    %p322 = scmp.ne.s32.totalorder %s317, %s319
    %p323 = scmp.eq.s32.totalorder %s31, 0
    %p324 = por %p322, %p323
    %p325 = scmp.ne.s32.totalorder %s317, %s319
    %p326 = scmp.eq.s32.totalorder %s36, 1
    %p327 = por %p325, %p326
    %p328 = scmp.ne.s32.totalorder %s319, %s320
    %p329 = scmp.eq.s32.totalorder %s36, 0
    %p330 = por %p328, %p329
    %p331 = scmp.ne.s32.totalorder %s319, %s320
    %p332 = scmp.eq.s32.totalorder %s37, 1
    %p333 = por %p331, %p332
    %p335 = scmp.ne.s32.totalorder %s320, %s334
    %p336 = scmp.eq.s32.totalorder %s37, 0
    %p337 = por %p335, %p336
    %s339 = sadd.s32 %s338, 1
    %p342 = scmp.eq.s32.totalorder %s31, 1
    %p343 = scmp.ne.s32.totalorder %s338, %s340
    %p344 = scmp.eq.s32.totalorder %s31, 0
    %p345 = por %p343, %p344
    %p346 = scmp.ne.s32.totalorder %s338, %s340
    %p347 = scmp.eq.s32.totalorder %s36, 1
    %p348 = por %p346, %p347
    %p349 = scmp.ne.s32.totalorder %s340, %s341
    %p350 = scmp.eq.s32.totalorder %s36, 0
    %p351 = por %p349, %p350
    %p352 = scmp.ne.s32.totalorder %s340, %s341
    %p353 = scmp.eq.s32.totalorder %s37, 1
    %p354 = por %p352, %p353
    %p356 = scmp.ne.s32.totalorder %s341, %s355
    %p357 = scmp.eq.s32.totalorder %s37, 0
    %p358 = por %p356, %p357
    %s360 = sadd.s32 %s359, 1
    %p363 = scmp.eq.s32.totalorder %s31, 1
    %p364 = scmp.ne.s32.totalorder %s359, %s361
    %p365 = scmp.eq.s32.totalorder %s31, 0
    %p366 = por %p364, %p365
    %p367 = scmp.ne.s32.totalorder %s359, %s361
    %p368 = scmp.eq.s32.totalorder %s36, 1
    %p369 = por %p367, %p368
    %p370 = scmp.ne.s32.totalorder %s361, %s362
    %p371 = scmp.eq.s32.totalorder %s36, 0
    %p372 = por %p370, %p371
    %p373 = scmp.ne.s32.totalorder %s361, %s362
    %p374 = scmp.eq.s32.totalorder %s37, 1
    %p375 = por %p373, %p374
    %p377 = scmp.ne.s32.totalorder %s362, %s376
    %p378 = scmp.eq.s32.totalorder %s37, 0
    %p379 = por %p377, %p378
    %s381 = sadd.s32 %s380, 1
    %p384 = scmp.eq.s32.totalorder %s31, 1
    %p385 = scmp.ne.s32.totalorder %s380, %s382
    %p386 = scmp.eq.s32.totalorder %s31, 0
    %p387 = por %p385, %p386
    %p388 = scmp.ne.s32.totalorder %s380, %s382
    %p389 = scmp.eq.s32.totalorder %s36, 1
    %p390 = por %p388, %p389
    %p391 = scmp.ne.s32.totalorder %s382, %s383
    %p392 = scmp.eq.s32.totalorder %s36, 0
    %p393 = por %p391, %p392
    %p394 = scmp.ne.s32.totalorder %s382, %s383
    %p395 = scmp.eq.s32.totalorder %s37, 1
    %p396 = por %p394, %p395
    %p398 = scmp.ne.s32.totalorder %s383, %s397
    %p399 = scmp.eq.s32.totalorder %s37, 0
    %p400 = por %p398, %p399
    %s402 = sadd.s32 %s401, 1
    %p405 = scmp.eq.s32.totalorder %s31, 1
    %p406 = scmp.ne.s32.totalorder %s401, %s403
    %p407 = scmp.eq.s32.totalorder %s31, 0
    %p408 = por %p406, %p407
    %p409 = scmp.ne.s32.totalorder %s401, %s403
    %p410 = scmp.eq.s32.totalorder %s36, 1
    %p411 = por %p409, %p410
    %p412 = scmp.ne.s32.totalorder %s403, %s404
    %p413 = scmp.eq.s32.totalorder %s36, 0
    %p414 = por %p412, %p413
    %p415 = scmp.ne.s32.totalorder %s403, %s404
    %p416 = scmp.eq.s32.totalorder %s37, 1
    %p417 = por %p415, %p416
    %p419 = scmp.ne.s32.totalorder %s404, %s418
    %p420 = scmp.eq.s32.totalorder %s37, 0
    %p421 = por %p419, %p420
    %s423 = sadd.s32 %s422, 1
    %p426 = scmp.eq.s32.totalorder %s31, 1
    %p427 = scmp.ne.s32.totalorder %s422, %s424
    %p428 = scmp.eq.s32.totalorder %s31, 0
    %p429 = por %p427, %p428
    %p430 = scmp.ne.s32.totalorder %s422, %s424
    %p431 = scmp.eq.s32.totalorder %s36, 1
    %p432 = por %p430, %p431
    %p433 = scmp.ne.s32.totalorder %s424, %s425
    %p434 = scmp.eq.s32.totalorder %s36, 0
    %p435 = por %p433, %p434
    %p436 = scmp.ne.s32.totalorder %s424, %s425
    %p437 = scmp.eq.s32.totalorder %s37, 1
    %p438 = por %p436, %p437
    %p440 = scmp.ne.s32.totalorder %s425, %s439
    %p441 = scmp.eq.s32.totalorder %s37, 0
    %p442 = por %p440, %p441
    %s444 = sadd.s32 %s443, 1
    %p447 = scmp.eq.s32.totalorder %s31, 1
    %p448 = scmp.ne.s32.totalorder %s443, %s445
    %p449 = scmp.eq.s32.totalorder %s31, 0
    %p450 = por %p448, %p449
    %p451 = scmp.ne.s32.totalorder %s443, %s445
    %p452 = scmp.eq.s32.totalorder %s36, 1
    %p453 = por %p451, %p452
    %p454 = scmp.ne.s32.totalorder %s445, %s446
    %p455 = scmp.eq.s32.totalorder %s36, 0
    %p456 = por %p454, %p455
    %p457 = scmp.ne.s32.totalorder %s445, %s446
    %p458 = scmp.eq.s32.totalorder %s37, 1
    %p459 = por %p457, %p458
    %p461 = scmp.ne.s32.totalorder %s446, %s460
    %p462 = scmp.eq.s32.totalorder %s37, 0
    %p463 = por %p461, %p462
    %s465 = sadd.s32 %s464, 1
    %p468 = scmp.eq.s32.totalorder %s31, 1
    %p469 = scmp.ne.s32.totalorder %s464, %s466
    %p470 = scmp.eq.s32.totalorder %s31, 0
    %p471 = por %p469, %p470
    %p472 = scmp.ne.s32.totalorder %s464, %s466
    %p473 = scmp.eq.s32.totalorder %s36, 1
    %p474 = por %p472, %p473
    %p475 = scmp.ne.s32.totalorder %s466, %s467
    %p476 = scmp.eq.s32.totalorder %s36, 0
    %p477 = por %p475, %p476
    %p478 = scmp.ne.s32.totalorder %s466, %s467
    %p479 = scmp.eq.s32.totalorder %s37, 1
    %p480 = por %p478, %p479
    %p482 = scmp.ne.s32.totalorder %s467, %s481
    %p483 = scmp.eq.s32.totalorder %s37, 0
    %p484 = por %p482, %p483
    %s486 = sadd.s32 %s485, 1
    %p489 = scmp.eq.s32.totalorder %s31, 1
    %p490 = scmp.ne.s32.totalorder %s485, %s487
    %p491 = scmp.eq.s32.totalorder %s31, 0
    %p492 = por %p490, %p491
    %p493 = scmp.ne.s32.totalorder %s485, %s487
    %p494 = scmp.eq.s32.totalorder %s36, 1
    %p495 = por %p493, %p494
    %p496 = scmp.ne.s32.totalorder %s487, %s488
    %p497 = scmp.eq.s32.totalorder %s36, 0
    %p498 = por %p496, %p497
    %p499 = scmp.ne.s32.totalorder %s487, %s488
    %p500 = scmp.eq.s32.totalorder %s37, 1
    %p501 = por %p499, %p500
    %p503 = scmp.ne.s32.totalorder %s488, %s502
    %p504 = scmp.eq.s32.totalorder %s37, 0
    %p505 = por %p503, %p504
    %s507 = sadd.s32 %s506, 1
    %p510 = scmp.eq.s32.totalorder %s31, 1
    %p511 = scmp.ne.s32.totalorder %s506, %s508
    %p512 = scmp.eq.s32.totalorder %s31, 0
    %p513 = por %p511, %p512
    %p514 = scmp.ne.s32.totalorder %s506, %s508
    %p515 = scmp.eq.s32.totalorder %s36, 1
    %p516 = por %p514, %p515
    %p517 = scmp.ne.s32.totalorder %s508, %s509
    %p518 = scmp.eq.s32.totalorder %s36, 0
    %p519 = por %p517, %p518
    %p520 = scmp.ne.s32.totalorder %s508, %s509
    %p521 = scmp.eq.s32.totalorder %s37, 1
    %p522 = por %p520, %p521
    %p524 = scmp.ne.s32.totalorder %s509, %s523
    %p525 = scmp.eq.s32.totalorder %s37, 0
    %p526 = por %p524, %p525
    %s528 = sadd.s32 %s527, 1
    %p531 = scmp.eq.s32.totalorder %s31, 1
    %p532 = scmp.ne.s32.totalorder %s527, %s529
    %p533 = scmp.eq.s32.totalorder %s31, 0
    %p534 = por %p532, %p533
    %p535 = scmp.ne.s32.totalorder %s527, %s529
    %p536 = scmp.eq.s32.totalorder %s36, 1
    %p537 = por %p535, %p536
    %p538 = scmp.ne.s32.totalorder %s529, %s530
    %p539 = scmp.eq.s32.totalorder %s36, 0
    %p540 = por %p538, %p539
    %p541 = scmp.ne.s32.totalorder %s529, %s530
    %p542 = scmp.eq.s32.totalorder %s37, 1
    %p543 = por %p541, %p542
    %p545 = scmp.ne.s32.totalorder %s530, %s544
    %p546 = scmp.eq.s32.totalorder %s37, 0
    %p547 = por %p545, %p546
    %s549 = sadd.s32 %s548, 1
    %p552 = scmp.eq.s32.totalorder %s31, 1
    %p553 = scmp.ne.s32.totalorder %s548, %s550
    %p554 = scmp.eq.s32.totalorder %s31, 0
    %p555 = por %p553, %p554
    %p556 = scmp.ne.s32.totalorder %s548, %s550
    %p557 = scmp.eq.s32.totalorder %s36, 1
    %p558 = por %p556, %p557
    %p559 = scmp.ne.s32.totalorder %s550, %s551
    %p560 = scmp.eq.s32.totalorder %s36, 0
    %p561 = por %p559, %p560
    %p562 = scmp.ne.s32.totalorder %s550, %s551
    %p563 = scmp.eq.s32.totalorder %s37, 1
    %p564 = por %p562, %p563
    %p566 = scmp.ne.s32.totalorder %s551, %s565
    %p567 = scmp.eq.s32.totalorder %s37, 0
    %p568 = por %p566, %p567
    %s569 = ssub.s32 %s31, %s38
    %p570 = scmp.eq.s32.totalorder %s569, 0
    %s572 = sadd.s32 %s571, 1
    %s573 = scalar_select %p570, %s571, %s572
    %p576 = pneg %p570
    %p577 = scmp.eq.s32.totalorder %s31, 1
    %p578 = por %p576, %p577
    %p579 = scmp.ne.s32.totalorder %s571, %s574
    %p580 = scmp.eq.s32.totalorder %s31, 0
    %p581 = por %p579, %p580
    %p582 = scmp.ne.s32.totalorder %s571, %s574
    %p583 = scmp.eq.s32.totalorder %s36, 1
    %p584 = por %p582, %p583
    %p585 = scmp.ne.s32.totalorder %s574, %s575
    %p586 = scmp.eq.s32.totalorder %s36, 0
    %p587 = por %p585, %p586
    %p588 = scmp.ne.s32.totalorder %s574, %s575
    %p589 = scmp.eq.s32.totalorder %s37, 1
    %p590 = por %p588, %p589
    %p592 = scmp.ne.s32.totalorder %s575, %s591
    %p593 = scmp.eq.s32.totalorder %s37, 0
    %p594 = por %p592, %p593
    %p595 = scmp.le.s32.totalorder 1, %s31
    %p596 = scmp.lt.s32.totalorder %s31, 3
    %p597 = pnand %p595, %p596
    %p598 = pneg %p597
    // Predicated region
    $region9: #{bcos_resnet_forward.1} parent=5 // pred_check
      _
    $region10: #{bcos_resnet_forward.1} parent=5 // pred_check_branch
      %600 = sbr.rel (%p597) target = $region12
    $region11: #{bcos_resnet_forward.1} parent=5 // pred_region
      %s601 = ssub.s32 %s31, 1
      // Predicated region
      $region13: #{bcos_resnet_forward.1} parent=11 // pred_check
        %p602 = pneg %p78
      $region14: #{bcos_resnet_forward.1} parent=11 // pred_check_branch
        %604 = sbr.rel (%p602) target = $region16
      $region15: #{bcos_resnet_forward.1} parent=11 // pred_region
        _
      $region16: #{bcos_resnet_forward.1} parent=11 // pred_fallthru
        _
      // Predicated region
      $region17: #{bcos_resnet_forward.1} parent=11 // pred_check
        %p605 = pneg %p99
      $region18: #{bcos_resnet_forward.1} parent=11 // pred_check_branch
        %607 = sbr.rel (%p605) target = $region20
      $region19: #{bcos_resnet_forward.1} parent=11 // pred_region
        _
      $region20: #{bcos_resnet_forward.1} parent=11 // pred_fallthru
        _
      // Predicated region
      $region21: #{bcos_resnet_forward.1} parent=11 // pred_check
        %p608 = pneg %p120
      $region22: #{bcos_resnet_forward.1} parent=11 // pred_check_branch
        %610 = sbr.rel (%p608) target = $region24
      $region23: #{bcos_resnet_forward.1} parent=11 // pred_region
        _
      $region24: #{bcos_resnet_forward.1} parent=11 // pred_fallthru
        _
      // Predicated region
      $region25: #{bcos_resnet_forward.1} parent=11 // pred_check
        %p611 = pneg %p141
      $region26: #{bcos_resnet_forward.1} parent=11 // pred_check_branch
        %613 = sbr.rel (%p611) target = $region28
      $region27: #{bcos_resnet_forward.1} parent=11 // pred_region
        _
      $region28: #{bcos_resnet_forward.1} parent=11 // pred_fallthru
        _
      // Predicated region
      $region29: #{bcos_resnet_forward.1} parent=11 // pred_check
        %p614 = pneg %p162
      $region30: #{bcos_resnet_forward.1} parent=11 // pred_check_branch
        %616 = sbr.rel (%p614) target = $region32
      $region31: #{bcos_resnet_forward.1} parent=11 // pred_region
        _
      $region32: #{bcos_resnet_forward.1} parent=11 // pred_fallthru
        _
      // Predicated region
      $region33: #{bcos_resnet_forward.1} parent=11 // pred_check
        %p617 = pneg %p183
      $region34: #{bcos_resnet_forward.1} parent=11 // pred_check_branch
        %619 = sbr.rel (%p617) target = $region36
      $region35: #{bcos_resnet_forward.1} parent=11 // pred_region
        _
      $region36: #{bcos_resnet_forward.1} parent=11 // pred_fallthru
        _
      // Predicated region
      $region37: #{bcos_resnet_forward.1} parent=11 // pred_check
        %p620 = pneg %p204
      $region38: #{bcos_resnet_forward.1} parent=11 // pred_check_branch
        %622 = sbr.rel (%p620) target = $region40
      $region39: #{bcos_resnet_forward.1} parent=11 // pred_region
        _
      $region40: #{bcos_resnet_forward.1} parent=11 // pred_fallthru
        _
      // Predicated region
      $region41: #{bcos_resnet_forward.1} parent=11 // pred_check
        %p623 = pneg %p225
      $region42: #{bcos_resnet_forward.1} parent=11 // pred_check_branch
        %625 = sbr.rel (%p623) target = $region44
      $region43: #{bcos_resnet_forward.1} parent=11 // pred_region
        _
      $region44: #{bcos_resnet_forward.1} parent=11 // pred_fallthru
        _
      // Predicated region
      $region45: #{bcos_resnet_forward.1} parent=11 // pred_check
        %p626 = pneg %p246
      $region46: #{bcos_resnet_forward.1} parent=11 // pred_check_branch
        %628 = sbr.rel (%p626) target = $region48
      $region47: #{bcos_resnet_forward.1} parent=11 // pred_region
        _
      $region48: #{bcos_resnet_forward.1} parent=11 // pred_fallthru
        _
      // Predicated region
      $region49: #{bcos_resnet_forward.1} parent=11 // pred_check
        %p629 = pneg %p267
      $region50: #{bcos_resnet_forward.1} parent=11 // pred_check_branch
        %631 = sbr.rel (%p629) target = $region52
      $region51: #{bcos_resnet_forward.1} parent=11 // pred_region
        _
      $region52: #{bcos_resnet_forward.1} parent=11 // pred_fallthru
        _
      // Predicated region
      $region53: #{bcos_resnet_forward.1} parent=11 // pred_check
        %p632 = pneg %p288
      $region54: #{bcos_resnet_forward.1} parent=11 // pred_check_branch
        %634 = sbr.rel (%p632) target = $region56
      $region55: #{bcos_resnet_forward.1} parent=11 // pred_region
        _
      $region56: #{bcos_resnet_forward.1} parent=11 // pred_fallthru
        _
      // Predicated region
      $region57: #{bcos_resnet_forward.1} parent=11 // pred_check
        %p635 = pneg %p309
      $region58: #{bcos_resnet_forward.1} parent=11 // pred_check_branch
        %637 = sbr.rel (%p635) target = $region60
      $region59: #{bcos_resnet_forward.1} parent=11 // pred_region
        _
      $region60: #{bcos_resnet_forward.1} parent=11 // pred_fallthru
        _
      // Predicated region
      $region61: #{bcos_resnet_forward.1} parent=11 // pred_check
        %p638 = pneg %p330
      $region62: #{bcos_resnet_forward.1} parent=11 // pred_check_branch
        %640 = sbr.rel (%p638) target = $region64
      $region63: #{bcos_resnet_forward.1} parent=11 // pred_region
        _
      $region64: #{bcos_resnet_forward.1} parent=11 // pred_fallthru
        _
      // Predicated region
      $region65: #{bcos_resnet_forward.1} parent=11 // pred_check
        %p641 = pneg %p351
      $region66: #{bcos_resnet_forward.1} parent=11 // pred_check_branch
        %643 = sbr.rel (%p641) target = $region68
      $region67: #{bcos_resnet_forward.1} parent=11 // pred_region
        _
      $region68: #{bcos_resnet_forward.1} parent=11 // pred_fallthru
        _
      // Predicated region
      $region69: #{bcos_resnet_forward.1} parent=11 // pred_check
        %p644 = pneg %p372
      $region70: #{bcos_resnet_forward.1} parent=11 // pred_check_branch
        %646 = sbr.rel (%p644) target = $region72
      $region71: #{bcos_resnet_forward.1} parent=11 // pred_region
        _
      $region72: #{bcos_resnet_forward.1} parent=11 // pred_fallthru
        _
      // Predicated region
      $region73: #{bcos_resnet_forward.1} parent=11 // pred_check
        %p647 = pneg %p393
      $region74: #{bcos_resnet_forward.1} parent=11 // pred_check_branch
        %649 = sbr.rel (%p647) target = $region76
      $region75: #{bcos_resnet_forward.1} parent=11 // pred_region
        _
      $region76: #{bcos_resnet_forward.1} parent=11 // pred_fallthru
        _
      // Predicated region
      $region77: #{bcos_resnet_forward.1} parent=11 // pred_check
        %p650 = pneg %p414
      $region78: #{bcos_resnet_forward.1} parent=11 // pred_check_branch
        %652 = sbr.rel (%p650) target = $region80
      $region79: #{bcos_resnet_forward.1} parent=11 // pred_region
        _
      $region80: #{bcos_resnet_forward.1} parent=11 // pred_fallthru
        _
      // Predicated region
      $region81: #{bcos_resnet_forward.1} parent=11 // pred_check
        %p653 = pneg %p435
      $region82: #{bcos_resnet_forward.1} parent=11 // pred_check_branch
        %655 = sbr.rel (%p653) target = $region84
      $region83: #{bcos_resnet_forward.1} parent=11 // pred_region
        _
      $region84: #{bcos_resnet_forward.1} parent=11 // pred_fallthru
        _
      // Predicated region
      $region85: #{bcos_resnet_forward.1} parent=11 // pred_check
        %p656 = pneg %p456
      $region86: #{bcos_resnet_forward.1} parent=11 // pred_check_branch
        %658 = sbr.rel (%p656) target = $region88
      $region87: #{bcos_resnet_forward.1} parent=11 // pred_region
        _
      $region88: #{bcos_resnet_forward.1} parent=11 // pred_fallthru
        _
      // Predicated region
      $region89: #{bcos_resnet_forward.1} parent=11 // pred_check
        %p659 = pneg %p477
      $region90: #{bcos_resnet_forward.1} parent=11 // pred_check_branch
        %661 = sbr.rel (%p659) target = $region92
      $region91: #{bcos_resnet_forward.1} parent=11 // pred_region
        _
      $region92: #{bcos_resnet_forward.1} parent=11 // pred_fallthru
        _
      // Predicated region
      $region93: #{bcos_resnet_forward.1} parent=11 // pred_check
        %p662 = pneg %p498
      $region94: #{bcos_resnet_forward.1} parent=11 // pred_check_branch
        %664 = sbr.rel (%p662) target = $region96
      $region95: #{bcos_resnet_forward.1} parent=11 // pred_region
        _
      $region96: #{bcos_resnet_forward.1} parent=11 // pred_fallthru
        _
      // Predicated region
      $region97: #{bcos_resnet_forward.1} parent=11 // pred_check
        %p665 = pneg %p519
      $region98: #{bcos_resnet_forward.1} parent=11 // pred_check_branch
        %667 = sbr.rel (%p665) target = $region100
      $region99: #{bcos_resnet_forward.1} parent=11 // pred_region
        _
      $region100: #{bcos_resnet_forward.1} parent=11 // pred_fallthru
        _
      // Predicated region
      $region101: #{bcos_resnet_forward.1} parent=11 // pred_check
        %p668 = pneg %p540
      $region102: #{bcos_resnet_forward.1} parent=11 // pred_check_branch
        %670 = sbr.rel (%p668) target = $region104
      $region103: #{bcos_resnet_forward.1} parent=11 // pred_region
        _
      $region104: #{bcos_resnet_forward.1} parent=11 // pred_fallthru
        _
      // Predicated region
      $region105: #{bcos_resnet_forward.1} parent=11 // pred_check
        %p671 = pneg %p561
      $region106: #{bcos_resnet_forward.1} parent=11 // pred_check_branch
        %673 = sbr.rel (%p671) target = $region108
      $region107: #{bcos_resnet_forward.1} parent=11 // pred_region
        _
      $region108: #{bcos_resnet_forward.1} parent=11 // pred_fallthru
        _
    $region12: #{bcos_resnet_forward.1} parent=5 // pred_fallthru
      _
    %p674 = scmp.lt.s32.totalorder %s31, 2
    // Predicated region
    $region109: #{bcos_resnet_forward.1} parent=5 // pred_check
      %p675 = pneg %p674
    $region110: #{bcos_resnet_forward.1} parent=5 // pred_check_branch
      %677 = sbr.rel (%p675) target = $region112
    $region111: #{bcos_resnet_forward.1} parent=5 // pred_region
      // Predicated region
      $region113: #{bcos_resnet_forward.1} parent=111 // pred_check
        %p678 = pneg %p51
      $region114: #{bcos_resnet_forward.1} parent=111 // pred_check_branch
        %680 = sbr.rel (%p678) target = $region116
      $region115: #{bcos_resnet_forward.1} parent=111 // pred_region
        %p681 = scmp.lt.s32.totalorder %s31, 1
        %s682 = scalar_select %p681, %s31, 1
        %s683 = smul.addr %s682, 3
        %s684 = smul.addr %s683, 8
        %s685 = scalar_lea.vmem %s0, %s684
      $region116: #{bcos_resnet_forward.1} parent=111 // pred_fallthru
        _
    $region112: #{bcos_resnet_forward.1} parent=5 // pred_fallthru
      _
    %p686 = scmp.le.s32.totalorder 1, %s31
    %p687 = scmp.lt.s32.totalorder %s31, 3
    %p688 = pnand %p686, %p687
    %p689 = pneg %p688
    // Predicated region
    $region117: #{bcos_resnet_forward.1} parent=5 // pred_check
      _
    $region118: #{bcos_resnet_forward.1} parent=5 // pred_check_branch
      %691 = sbr.rel (%p688) target = $region120
    $region119: #{bcos_resnet_forward.1} parent=5 // pred_region
      %s692 = ssub.s32 %s31, 1
      %p693 = scmp.lt.s32.totalorder %s36, 1
      %s694 = scalar_select %p693, %s36, 1
      %s695 = smul.addr %s694, 3
      %s696 = smul.addr %s695, 8
      %s697 = scalar_lea.vmem %s0, %s696
      %p698 = pneg %p57
      %p699 = pneg %p54
      %p700 = pneg %p78
      %p701 = pneg %p75
      %p702 = pneg %p99
      %p703 = pneg %p96
      %p704 = pneg %p120
      %p705 = pneg %p117
      %p706 = pneg %p141
      %p707 = pneg %p138
      %p708 = pneg %p162
      %p709 = pneg %p159
      %p710 = pneg %p183
      %p711 = pneg %p180
      %p712 = pneg %p204
      %p713 = pneg %p201
      %p714 = pneg %p225
      %p715 = pneg %p222
      %p716 = pneg %p246
      %p717 = pneg %p243
      %p718 = pneg %p267
      %p719 = pneg %p264
      %p720 = pneg %p288
      %p721 = pneg %p285
      %p722 = pneg %p309
      %p723 = pneg %p306
      %p724 = pneg %p330
      %p725 = pneg %p327
      %p726 = pneg %p351
      %p727 = pneg %p348
      %p728 = pneg %p372
      %p729 = pneg %p369
      %p730 = pneg %p393
      %p731 = pneg %p390
      %p732 = pneg %p414
      %p733 = pneg %p411
      %p734 = pneg %p435
      %p735 = pneg %p432
      %p736 = pneg %p456
      %p737 = pneg %p453
      %p738 = pneg %p477
      %p739 = pneg %p474
      %p740 = pneg %p498
      %p741 = pneg %p495
      %p742 = pneg %p519
      %p743 = pneg %p516
      %p744 = pneg %p540
      %p745 = pneg %p537
      %p746 = pneg %p561
      %p747 = pneg %p558
      %p748 = pneg %p587
      %p749 = pneg %p584
      %p750 = scmp.lt.s32.totalorder %s36, 1
      %s751 = scalar_select %p750, %s36, 1
      %s752 = smul.addr %s751, 4
      %s753 = scalar_lea.vmem %s25, %s752
      %p754 = scmp.lt.s32.totalorder %s36, 1
      %s755 = scalar_select %p754, %s36, 1
      %s756 = smul.addr %s755, 3
      %s757 = smul.addr %s756, 8
      %s758 = scalar_lea.vmem %s0, %s757
      %p759 = scmp.lt.s32.totalorder %s36, 1
      %s760 = scalar_select %p759, %s36, 1
      %s761 = smul.addr %s760, 4
      %s762 = scalar_lea.vmem %s25, %s761
      %764 = vst [vmem:[#allocation3] sm:$0xff] 0.0
      %765 = vst [vmem:[#allocation3 + $0x8] sm:$0xff] 0.0
      %vm766 = vcmask 556032
      %767 = vst.msk [vmem:[#allocation3 + $0x10] sm:$0xff] %vm766, 0.0
      %768 = vst [vmem:[#allocation4] sm:$0xff] 0.0
      %769 = vst [vmem:[#allocation4 + $0x8] sm:$0xff] 0.0
      %770 = vst.msk [vmem:[#allocation4 + $0x10] sm:$0xff] %vm766, 0.0
      %771 = vst [vmem:[#allocation5] sm:$0xff] 0.0
      %772 = vst [vmem:[#allocation5 + $0x8] sm:$0xff] 0.0
      %773 = vst.msk [vmem:[#allocation5 + $0x10] sm:$0xff] %vm766, 0.0
      %774 = vst [vmem:[#allocation6] sm:$0xff] 0.0
      %775 = vst [vmem:[#allocation6 + $0x8] sm:$0xff] 0.0
      %vm776 = vcmask 244736
      %777 = vst.msk [vmem:[#allocation6 + $0x10] sm:$0xff] %vm776, 0.0
      %778 = vst [vmem:[#allocation6 + $0x18] sm:$0xff] 0.0
      %779 = vst [vmem:[#allocation6 + $0x20] sm:$0xff] 0.0
      %780 = vst.msk [vmem:[#allocation6 + $0x28] sm:$0xff] %vm776, 0.0
      %781 = vst [vmem:[#allocation6 + $0x30] sm:$0xff] 0.0
      %782 = vst [vmem:[#allocation6 + $0x38] sm:$0xff] 0.0
      %783 = vst.msk [vmem:[#allocation6 + $0x40] sm:$0xff] %vm776, 0.0
      %784 = vst [vmem:[#allocation6 + $0x48] sm:$0xff] 0.0
      %785 = vst [vmem:[#allocation6 + $0x50] sm:$0xff] 0.0
      %786 = vst.msk [vmem:[#allocation6 + $0x58] sm:$0xff] %vm776, 0.0
      %787 = vst [vmem:[#allocation6 + $0x60] sm:$0xff] 0.0
      %788 = vst [vmem:[#allocation6 + $0x68] sm:$0xff] 0.0
      %789 = vst.msk [vmem:[#allocation6 + $0x70] sm:$0xff] %vm776, 0.0
      %790 = vst [vmem:[#allocation6 + $0x78] sm:$0xff] 0.0
      %791 = vst [vmem:[#allocation6 + $0x80] sm:$0xff] 0.0
      %792 = vst.msk [vmem:[#allocation6 + $0x88] sm:$0xff] %vm776, 0.0
      %793 = vst [vmem:[#allocation6 + $0x90] sm:$0xff] 0.0
      %794 = vst [vmem:[#allocation6 + $0x98] sm:$0xff] 0.0
      %795 = vst.msk [vmem:[#allocation6 + $0xa0] sm:$0xff] %vm776, 0.0
      %796 = vst [vmem:[#allocation6 + $0xa8] sm:$0xff] 0.0
      %797 = vst [vmem:[#allocation6 + $0xb0] sm:$0xff] 0.0
      %798 = vst.msk [vmem:[#allocation6 + $0xb8] sm:$0xff] %vm776, 0.0
      %799 = vst [vmem:[#allocation6 + $0xc0] sm:$0xff] 0.0
      %800 = vst [vmem:[#allocation6 + $0xc8] sm:$0xff] 0.0
      %801 = vst.msk [vmem:[#allocation6 + $0xd0] sm:$0xff] %vm776, 0.0
      %v802 = vld [vmem:[%s758] sm:$0x3f]
      %v803 = vld [vmem:[%s758 + $0x8] sm:$0x3f]
      %v804 = vld [vmem:[%s758 + $0x10] sm:$0x3f]
      %805 = vst [vmem:[#allocation2] sm:$0x3f] %v802
      %806 = vst [vmem:[#allocation2 + $0x8] sm:$0x3f] %v803
      %vm807 = vcmask 553984
      %808 = vst.msk [vmem:[#allocation2 + $0x10] sm:$0x3f] %vm807, %v804
      %v809 = vld [vmem:[%s23] sm:$0x7]
      %v810 = vld [vmem:[%s24] sm:$0x1]
      %v811 = vld [vmem:[#allocation2] sm:$0x3f]
      %v812 = vld [vmem:[#allocation2 + $0x8] sm:$0x3f]
      %v813 = vld [vmem:[#allocation2 + $0x10] sm:$0x3f]
      %814 = vst [vmem:[#allocation6] sm:$0x3f] %v811
      %815 = vst [vmem:[#allocation6 + $0x8] sm:$0x3f] %v812
      %vm816 = vcmask 242688
      %817 = vst.msk [vmem:[#allocation6 + $0x10] sm:$0x3f] %vm816, %v813
      %v818 = vld [vmem:[#allocation2] sm:$0x3f]
      %v819 = vld [vmem:[#allocation2 + $0x8] sm:$0x3f]
      %v820 = vld [vmem:[#allocation2 + $0x10] sm:$0x3f]
      %824 = vrot.lane.b32.xlu0 %v818, 127
      %v825 = vpop.permute.xlu0 %824
      %826 = vrot.lane.b32.xlu0 %v819, 127
      %v827 = vpop.permute.xlu0 %826
      %828 = vrot.lane.b32.xlu0 %v820, 127
      %v829 = vpop.permute.xlu0 %828
      %vm830 = vcmask 1039360
      %v831 = vsel %vm830, %v825, %v827
      %v832 = vsel %vm830, %v827, %v829
      %836 = vst [vmem:[#allocation6 + $0x18] sm:$0x3f] %v831
      %837 = vst [vmem:[#allocation6 + $0x20] sm:$0x3f] %v832
      %838 = vst.msk [vmem:[#allocation6 + $0x28] sm:$0x3f] %vm816, %v829
      %v839 = vld [vmem:[#allocation2] sm:$0x3f]
      %v840 = vld [vmem:[#allocation2 + $0x8] sm:$0x3f]
      %v841 = vld [vmem:[#allocation2 + $0x10] sm:$0x3f]
      %845 = vrot.lane.b32.xlu0 %v839, 126
      %v846 = vpop.permute.xlu0 %845
      %847 = vrot.lane.b32.xlu0 %v840, 126
      %v848 = vpop.permute.xlu0 %847
      %849 = vrot.lane.b32.xlu0 %v841, 126
      %v850 = vpop.permute.xlu0 %849
      %vm851 = vcmask 1031168
      %v852 = vsel %vm851, %v846, %v848
      %v853 = vsel %vm851, %v848, %v850
      %857 = vst [vmem:[#allocation6 + $0x30] sm:$0x3f] %v852
      %858 = vst [vmem:[#allocation6 + $0x38] sm:$0x3f] %v853
      %859 = vst.msk [vmem:[#allocation6 + $0x40] sm:$0x3f] %vm816, %v850
      %v860 = vld [vmem:[#allocation2] sm:$0x3f]
      %v861 = vld [vmem:[#allocation2 + $0x8] sm:$0x3f]
      %v862 = vld [vmem:[#allocation2 + $0x10] sm:$0x3f]
      %866 = vrot.lane.b32.xlu0 %v860, 110
      %v867 = vpop.permute.xlu0 %866
      %868 = vrot.lane.b32.xlu0 %v861, 110
      %v869 = vpop.permute.xlu0 %868
      %870 = vrot.lane.b32.xlu0 %v862, 110
      %v871 = vpop.permute.xlu0 %870
      %vm872 = vcmask 900096
      %v873 = vsel %vm872, %v867, %v869
      %v874 = vsel %vm872, %v869, %v871
      %878 = vst [vmem:[#allocation6 + $0x48] sm:$0x3f] %v873
      %879 = vst [vmem:[#allocation6 + $0x50] sm:$0x3f] %v874
      %880 = vst.msk [vmem:[#allocation6 + $0x58] sm:$0x3f] %vm816, %v871
      %v881 = vld [vmem:[#allocation2] sm:$0x3f]
      %v882 = vld [vmem:[#allocation2 + $0x8] sm:$0x3f]
      %v883 = vld [vmem:[#allocation2 + $0x10] sm:$0x3f]
      %887 = vrot.lane.b32.xlu0 %v881, 109
      %v888 = vpop.permute.xlu0 %887
      %889 = vrot.lane.b32.xlu0 %v882, 109
      %v890 = vpop.permute.xlu0 %889
      %891 = vrot.lane.b32.xlu0 %v883, 109
      %v892 = vpop.permute.xlu0 %891
      %vm893 = vcmask 891904
      %v894 = vsel %vm893, %v888, %v890
      %v895 = vsel %vm893, %v890, %v892
      %899 = vst [vmem:[#allocation6 + $0x60] sm:$0x3f] %v894
      %900 = vst [vmem:[#allocation6 + $0x68] sm:$0x3f] %v895
      %901 = vst.msk [vmem:[#allocation6 + $0x70] sm:$0x3f] %vm816, %v892
      %v902 = vld [vmem:[#allocation2] sm:$0x3f]
      %v903 = vld [vmem:[#allocation2 + $0x8] sm:$0x3f]
      %v904 = vld [vmem:[#allocation2 + $0x10] sm:$0x3f]
      %908 = vrot.lane.b32.xlu0 %v902, 108
      %v909 = vpop.permute.xlu0 %908
      %910 = vrot.lane.b32.xlu0 %v903, 108
      %v911 = vpop.permute.xlu0 %910
      %912 = vrot.lane.b32.xlu0 %v904, 108
      %v913 = vpop.permute.xlu0 %912
      %vm914 = vcmask 883712
      %v915 = vsel %vm914, %v909, %v911
      %v916 = vsel %vm914, %v911, %v913
      %920 = vst [vmem:[#allocation6 + $0x78] sm:$0x3f] %v915
      %921 = vst [vmem:[#allocation6 + $0x80] sm:$0x3f] %v916
      %922 = vst.msk [vmem:[#allocation6 + $0x88] sm:$0x3f] %vm816, %v913
      %v923 = vld [vmem:[#allocation2] sm:$0x3f]
      %v924 = vld [vmem:[#allocation2 + $0x8] sm:$0x3f]
      %v925 = vld [vmem:[#allocation2 + $0x10] sm:$0x3f]
      %929 = vrot.lane.b32.xlu0 %v923, 92
      %v930 = vpop.permute.xlu0 %929
      %931 = vrot.lane.b32.xlu0 %v924, 92
      %v932 = vpop.permute.xlu0 %931
      %933 = vrot.lane.b32.xlu0 %v925, 92
      %v934 = vpop.permute.xlu0 %933
      %vm935 = vcmask 752640
      %v936 = vsel %vm935, %v930, %v932
      %v937 = vsel %vm935, %v932, %v934
      %941 = vst [vmem:[#allocation6 + $0x90] sm:$0x3f] %v936
      %942 = vst [vmem:[#allocation6 + $0x98] sm:$0x3f] %v937
      %943 = vst.msk [vmem:[#allocation6 + $0xa0] sm:$0x3f] %vm816, %v934
      %v944 = vld [vmem:[#allocation2] sm:$0x3f]
      %v945 = vld [vmem:[#allocation2 + $0x8] sm:$0x3f]
      %v946 = vld [vmem:[#allocation2 + $0x10] sm:$0x3f]
      %950 = vrot.lane.b32.xlu0 %v944, 91
      %v951 = vpop.permute.xlu0 %950
      %952 = vrot.lane.b32.xlu0 %v945, 91
      %v953 = vpop.permute.xlu0 %952
      %954 = vrot.lane.b32.xlu0 %v946, 91
      %v955 = vpop.permute.xlu0 %954
      %vm956 = vcmask 744448
      %v957 = vsel %vm956, %v951, %v953
      %v958 = vsel %vm956, %v953, %v955
      %962 = vst [vmem:[#allocation6 + $0xa8] sm:$0x3f] %v957
      %963 = vst [vmem:[#allocation6 + $0xb0] sm:$0x3f] %v958
      %964 = vst.msk [vmem:[#allocation6 + $0xb8] sm:$0x3f] %vm816, %v955
      %v965 = vld [vmem:[#allocation2] sm:$0x3f]
      %v966 = vld [vmem:[#allocation2 + $0x8] sm:$0x3f]
      %v967 = vld [vmem:[#allocation2 + $0x10] sm:$0x3f]
      %971 = vrot.lane.b32.xlu0 %v965, 90
      %v972 = vpop.permute.xlu0 %971
      %973 = vrot.lane.b32.xlu0 %v966, 90
      %v974 = vpop.permute.xlu0 %973
      %975 = vrot.lane.b32.xlu0 %v967, 90
      %v976 = vpop.permute.xlu0 %975
      %vm977 = vcmask 736256
      %v978 = vsel %vm977, %v972, %v974
      %v979 = vsel %vm977, %v974, %v976
      %983 = vst [vmem:[#allocation6 + $0xc0] sm:$0x3f] %v978
      %984 = vst [vmem:[#allocation6 + $0xc8] sm:$0x3f] %v979
      %985 = vst.msk [vmem:[#allocation6 + $0xd0] sm:$0x3f] %vm816, %v976
      %v986 = vld [vmem:[%s1] sm:$0xf]
      %v987 = vld [vmem:[#allocation6] sm:$0xff]
      %v988 = vld [vmem:[#allocation6 + $0x8] sm:$0xff]
      %v989 = vld [vmem:[#allocation6 + $0x10] sm:$0xff]
      %v990 = vld [vmem:[#allocation6 + $0x18] sm:$0xff]
      %v991 = vld [vmem:[#allocation6 + $0x20] sm:$0xff]
      %v992 = vld [vmem:[#allocation6 + $0x28] sm:$0xff]
      %v993 = vld [vmem:[#allocation6 + $0x30] sm:$0xff]
      %v994 = vld [vmem:[#allocation6 + $0x38] sm:$0xff]
      %v995 = vld [vmem:[#allocation6 + $0x40] sm:$0xff]
      %v996 = vld [vmem:[#allocation6 + $0x48] sm:$0xff]
      %v997 = vld [vmem:[#allocation6 + $0x50] sm:$0xff]
      %v998 = vld [vmem:[#allocation6 + $0x58] sm:$0xff]
      %v999 = vld [vmem:[#allocation6 + $0x60] sm:$0xff]
      %v1000 = vld [vmem:[#allocation6 + $0x68] sm:$0xff]
      %v1001 = vld [vmem:[#allocation6 + $0x70] sm:$0xff]
      %v1002 = vld [vmem:[#allocation6 + $0x78] sm:$0xff]
      %v1003 = vld [vmem:[#allocation6 + $0x80] sm:$0xff]
      %v1004 = vld [vmem:[#allocation6 + $0x88] sm:$0xff]
      %v1005 = vld [vmem:[#allocation6 + $0x90] sm:$0xff]
      %v1006 = vld [vmem:[#allocation6 + $0x98] sm:$0xff]
      %v1007 = vld [vmem:[#allocation6 + $0xa0] sm:$0xff]
      %v1008 = vld [vmem:[#allocation6 + $0xa8] sm:$0xff]
      %v1009 = vld [vmem:[#allocation6 + $0xb0] sm:$0xff]
      %v1010 = vld [vmem:[#allocation6 + $0xb8] sm:$0xff]
      %v1011 = vld [vmem:[#allocation6 + $0xc0] sm:$0xff]
      %v1012 = vld [vmem:[#allocation6 + $0xc8] sm:$0xff]
      %v1013 = vld [vmem:[#allocation6 + $0xd0] sm:$0xff]
      %v1014 = vpack.c.bf16 %v990, %v987
      %v1015 = vpack.c.bf16 %v991, %v988
      %v1016 = vpack.c.bf16 %v992, %v989
      %v1017 = vpack.c.bf16 %v996, %v993
      %v1018 = vpack.c.bf16 %v997, %v994
      %v1019 = vpack.c.bf16 %v998, %v995
      %v1020 = vpack.c.bf16 %v1002, %v999
      %v1021 = vpack.c.bf16 %v1003, %v1000
      %v1022 = vpack.c.bf16 %v1004, %v1001
      %v1023 = vpack.c.bf16 %v1008, %v1005
      %v1024 = vpack.c.bf16 %v1009, %v1006
      %v1025 = vpack.c.bf16 %v1010, %v1007
      %v1026 = vpack.c.bf16 %v1011, %v1011
      %v1027 = vpack.c.bf16 %v1012, %v1012
      %v1028 = vpack.c.bf16 %v1013, %v1013
      %vm1029 = vcmask 588800
      %v1031 = vsel %vm1029, %v986, 0
      %vm1033 = vcmask 1043456
      %v1035 = vsel %vm1033, %v1026, 0
      %v1038 = vsel %vm1033, %v1027, 0
      %v1041 = vsel %vm1033, %v1028, 0
      %1043 = vmatprep.subr.bf16.mxu0 %v1015
      %1044 = vmatpush1.bf16.msra.mxu0 %v1014
      %1045 = vmatprep.subr.bf16.mxu0 %v1018
      %1046 = vmatpush1.bf16.msra.mxu0 %v1017
      %1047 = vmatprep.subr.bf16.mxu0 %v1021
      %1048 = vmatpush1.bf16.msra.mxu0 %v1020
      %1049 = vmatprep.subr.bf16.mxu0 %v1024
      %1050 = vmatpush1.bf16.msra.mxu0 %v1023
      %1051 = vmatprep.subr.bf16.mxu0 %v1038
      %1052 = vmatpush1.bf16.msra.mxu0 %v1035
      %1053 = vmatprep.subr.bf16.mxu0 0
      %1054 = vmatpush1.bf16.msra.mxu0 0
      %1055 = vmatprep.subr.bf16.mxu0 0
      %1056 = vmatpush1.bf16.msra.mxu0 0
      %1057 = vmatprep.subr.bf16.mxu0 0
      %1058 = vmatpush1.bf16.msra.mxu0 0
      %1059 = vmatprep.subr.bf16.mxu0 0
      %1060 = vmatpush1.bf16.msra.mxu0 0
      %1061 = vmatprep.subr.bf16.mxu0 0
      %1062 = vmatpush1.bf16.msra.mxu0 0
      %1063 = vmatprep.subr.bf16.mxu0 0
      %1064 = vmatpush1.bf16.msra.mxu0 0
      %1065 = vmatprep.subr.bf16.mxu0 0
      %1066 = vmatpush1.bf16.msra.mxu0 0
      %1067 = vmatprep.subr.bf16.mxu0 0
      %1068 = vmatpush1.bf16.msra.mxu0 0
      %1069 = vmatprep.subr.bf16.mxu0 0
      %1070 = vmatpush1.bf16.msra.mxu0 0
      %1071 = vmatprep.subr.bf16.mxu0 0
      %1072 = vmatpush1.bf16.msra.mxu0 0
      %1073 = vmatprep.subr.bf16.mxu0 0
      %1074 = vmatpush1.bf16.msra.mxu0 0
      %1075 = vmatprep.mubr.bf16.mxu0 0
      %1076 = vmatmul.mubr.bf16.gmra.mrb[0].mxu0 %v1031
      %v1077 = vpop.f32.mrb[0].mxu0
      %v1078 = vadd.f32 0.0, %v1077
      %v1079 = vpop.f32.mrb[0].mxu0
      %v1080 = vadd.f32 0.0, %v1079
      %v1081 = vpop.f32.mrb[0].mxu0
      %v1082 = vpop.f32.mrb[0].mxu0
      %1083 = vdwg.mxu0
      %1084 = vmatprep.subr.bf16.mxu0 0
      %1085 = vmatpush1.bf16.msra.mxu0 %v1016
      %1086 = vmatprep.subr.bf16.mxu0 0
      %1087 = vmatpush1.bf16.msra.mxu0 %v1019
      %1088 = vmatprep.subr.bf16.mxu0 0
      %1089 = vmatpush1.bf16.msra.mxu0 %v1022
      %1090 = vmatprep.subr.bf16.mxu0 0
      %1091 = vmatpush1.bf16.msra.mxu0 %v1025
      %1092 = vmatprep.subr.bf16.mxu0 0
      %1093 = vmatpush1.bf16.msra.mxu0 %v1041
      %1094 = vmatprep.subr.bf16.mxu0 0
      %1095 = vmatpush1.bf16.msra.mxu0 0
      %1096 = vmatprep.subr.bf16.mxu0 0
      %1097 = vmatpush1.bf16.msra.mxu0 0
      %1098 = vmatprep.subr.bf16.mxu0 0
      %1099 = vmatpush1.bf16.msra.mxu0 0
      %1100 = vmatprep.subr.bf16.mxu0 0
      %1101 = vmatpush1.bf16.msra.mxu0 0
      %1102 = vmatprep.subr.bf16.mxu0 0
      %1103 = vmatpush1.bf16.msra.mxu0 0
      %1104 = vmatprep.subr.bf16.mxu0 0
      %1105 = vmatpush1.bf16.msra.mxu0 0
      %1106 = vmatprep.subr.bf16.mxu0 0
      %1107 = vmatpush1.bf16.msra.mxu0 0
      %1108 = vmatprep.subr.bf16.mxu0 0
      %1109 = vmatpush1.bf16.msra.mxu0 0
      %1110 = vmatprep.subr.bf16.mxu0 0
      %1111 = vmatpush1.bf16.msra.mxu0 0
      %1112 = vmatprep.subr.bf16.mxu0 0
      %1113 = vmatpush1.bf16.msra.mxu0 0
      %1114 = vmatprep.subr.bf16.mxu0 0
      %1115 = vmatpush1.bf16.msra.mxu0 0
      %1116 = vmatprep.mubr.bf16.mxu0 0
      %1117 = vmatmul.mubr.bf16.gmra.mrb[0].mxu0 %v1031
      %v1118 = vpop.f32.mrb[0].mxu0
      %v1119 = vadd.f32 0.0, %v1118
      %v1120 = vpop.f32.mrb[0].mxu0
      %v1121 = vpop.f32.mrb[0].mxu0
      %v1122 = vpop.f32.mrb[0].mxu0
      %1123 = vdwg.mxu0
      %v1124 = vld [vmem:[#allocation2] sm:$0x3f]
      %v1125 = vld [vmem:[#allocation2 + $0x8] sm:$0x3f]
      %v1126 = vld [vmem:[#allocation2 + $0x10] sm:$0x3f]
      %v1127 = vmul.f32 %v1124, %v1124
      %v1128 = vmul.f32 %v1125, %v1125
      %v1129 = vmul.f32 %v1126, %v1126
      %vm1130 = vcmask 48128
      %v1132 = vsel %vm1130, 1.0, 0
      %vm1134 = vcmask 1045504
      %v1136 = vsel %vm1134, %v1127, 0
      %v1139 = vsel %vm1134, %v1128, 0
      %v1142 = vsel %vm1134, %v1129, 0
      %1144 = vmatprep.subr.mxu0 %v1139
      %1145 = vmatpush1.msra.mxu0 %v1136
      %1146 = vmatprep.subr.mxu0 0.0
      %1147 = vmatpush1.msra.mxu0 0.0
      %1148 = vmatprep.subr.mxu0 0.0
      %1149 = vmatpush1.msra.mxu0 0.0
      %1150 = vmatprep.subr.mxu0 0.0
      %1151 = vmatpush1.msra.mxu0 0.0
      %1152 = vmatprep.subr.mxu0 0.0
      %1153 = vmatpush1.msra.mxu0 0.0
      %1154 = vmatprep.subr.mxu0 0.0
      %1155 = vmatpush1.msra.mxu0 0.0
      %1156 = vmatprep.subr.mxu0 0.0
      %1157 = vmatpush1.msra.mxu0 0.0
      %1158 = vmatprep.subr.mxu0 0.0
      %1159 = vmatpush1.msra.mxu0 0.0
      %1160 = vmatprep.subr.mxu0 0.0
      %1161 = vmatpush1.msra.mxu0 0.0
      %1162 = vmatprep.subr.mxu0 0.0
      %1163 = vmatpush1.msra.mxu0 0.0
      %1164 = vmatprep.subr.mxu0 0.0
      %1165 = vmatpush1.msra.mxu0 0.0
      %1166 = vmatprep.subr.mxu0 0.0
      %1167 = vmatpush1.msra.mxu0 0.0
      %1168 = vmatprep.subr.mxu0 0.0
      %1169 = vmatpush1.msra.mxu0 0.0
      %1170 = vmatprep.subr.mxu0 0.0
      %1171 = vmatpush1.msra.mxu0 0.0
      %1172 = vmatprep.subr.mxu0 0.0
      %1173 = vmatpush1.msra.mxu0 0.0
      %1174 = vmatprep.subr.mxu0 0.0
      %1175 = vmatpush1.msra.mxu0 0.0
      %1176 = vmatprep.subr.mxu0 0.0
      %1177 = vmatpush1.msra.mxu0 0.0
      %1178 = vmatprep.subr.mxu0 0.0
      %1179 = vmatpush1.msra.mxu0 0.0
      %1180 = vmatprep.subr.mxu0 0.0
      %1181 = vmatpush1.msra.mxu0 0.0
      %1182 = vmatprep.subr.mxu0 0.0
      %1183 = vmatpush1.msra.mxu0 0.0
      %1184 = vmatprep.subr.mxu0 0.0
      %1185 = vmatpush1.msra.mxu0 0.0
      %1186 = vmatprep.subr.mxu0 0.0
      %1187 = vmatpush1.msra.mxu0 0.0
      %1188 = vmatprep.subr.mxu0 0.0
      %1189 = vmatpush1.msra.mxu0 0.0
      %1190 = vmatprep.subr.mxu0 0.0
      %1191 = vmatpush1.msra.mxu0 0.0
      %1192 = vmatprep.subr.mxu0 0.0
      %1193 = vmatpush1.msra.mxu0 0.0
      %1194 = vmatprep.subr.mxu0 0.0
      %1195 = vmatpush1.msra.mxu0 0.0
      %1196 = vmatprep.subr.mxu0 0.0
      %1197 = vmatpush1.msra.mxu0 0.0
      %1198 = vmatprep.subr.mxu0 0.0
      %1199 = vmatpush1.msra.mxu0 0.0
      %1200 = vmatprep.subr.mxu0 0.0
      %1201 = vmatpush1.msra.mxu0 0.0
      %1202 = vmatprep.subr.mxu0 0.0
      %1203 = vmatpush1.msra.mxu0 0.0
      %1204 = vmatprep.subr.mxu0 0.0
      %1205 = vmatpush1.msra.mxu0 0.0
      %1206 = vmatprep.subr.mxu0 0.0
      %1207 = vmatpush1.msra.mxu0 0.0
      %1208 = vmatprep.mubr.f32.mxu0 0.0
      %1209 = vmatmul.mubr.f32.gmra.mrb[0].mxu0 %v1132
      %v1210 = vpop.f32.mrb[0].mxu0
      %v1211 = vadd.f32 0.0, %v1210
      %v1212 = vpop.f32.mrb[0].mxu0
      %v1213 = vadd.f32 0.0, %v1212
      %1214 = vdwg.mxu0
      %1215 = vmatprep.subr.mxu0 0.0
      %1216 = vmatpush1.msra.mxu0 %v1142
      %1217 = vmatprep.subr.mxu0 0.0
      %1218 = vmatpush1.msra.mxu0 0.0
      %1219 = vmatprep.subr.mxu0 0.0
      %1220 = vmatpush1.msra.mxu0 0.0
      %1221 = vmatprep.subr.mxu0 0.0
      %1222 = vmatpush1.msra.mxu0 0.0
      %1223 = vmatprep.subr.mxu0 0.0
      %1224 = vmatpush1.msra.mxu0 0.0
      %1225 = vmatprep.subr.mxu0 0.0
      %1226 = vmatpush1.msra.mxu0 0.0
      %1227 = vmatprep.subr.mxu0 0.0
      %1228 = vmatpush1.msra.mxu0 0.0
      %1229 = vmatprep.subr.mxu0 0.0
      %1230 = vmatpush1.msra.mxu0 0.0
      %1231 = vmatprep.subr.mxu0 0.0
      %1232 = vmatpush1.msra.mxu0 0.0
      %1233 = vmatprep.subr.mxu0 0.0
      %1234 = vmatpush1.msra.mxu0 0.0
      %1235 = vmatprep.subr.mxu0 0.0
      %1236 = vmatpush1.msra.mxu0 0.0
      %1237 = vmatprep.subr.mxu0 0.0
      %1238 = vmatpush1.msra.mxu0 0.0
      %1239 = vmatprep.subr.mxu0 0.0
      %1240 = vmatpush1.msra.mxu0 0.0
      %1241 = vmatprep.subr.mxu0 0.0
      %1242 = vmatpush1.msra.mxu0 0.0
      %1243 = vmatprep.subr.mxu0 0.0
      %1244 = vmatpush1.msra.mxu0 0.0
      %1245 = vmatprep.subr.mxu0 0.0
      %1246 = vmatpush1.msra.mxu0 0.0
      %1247 = vmatprep.subr.mxu0 0.0
      %1248 = vmatpush1.msra.mxu0 0.0
      %1249 = vmatprep.subr.mxu0 0.0
      %1250 = vmatpush1.msra.mxu0 0.0
      %1251 = vmatprep.subr.mxu0 0.0
      %1252 = vmatpush1.msra.mxu0 0.0
      %1253 = vmatprep.subr.mxu0 0.0
      %1254 = vmatpush1.msra.mxu0 0.0
      %1255 = vmatprep.subr.mxu0 0.0
      %1256 = vmatpush1.msra.mxu0 0.0
      %1257 = vmatprep.subr.mxu0 0.0
      %1258 = vmatpush1.msra.mxu0 0.0
      %1259 = vmatprep.subr.mxu0 0.0
      %1260 = vmatpush1.msra.mxu0 0.0
      %1261 = vmatprep.subr.mxu0 0.0
      %1262 = vmatpush1.msra.mxu0 0.0
      %1263 = vmatprep.subr.mxu0 0.0
      %1264 = vmatpush1.msra.mxu0 0.0
      %1265 = vmatprep.subr.mxu0 0.0
      %1266 = vmatpush1.msra.mxu0 0.0
      %1267 = vmatprep.subr.mxu0 0.0
      %1268 = vmatpush1.msra.mxu0 0.0
      %1269 = vmatprep.subr.mxu0 0.0
      %1270 = vmatpush1.msra.mxu0 0.0
      %1271 = vmatprep.subr.mxu0 0.0
      %1272 = vmatpush1.msra.mxu0 0.0
      %1273 = vmatprep.subr.mxu0 0.0
      %1274 = vmatpush1.msra.mxu0 0.0
      %1275 = vmatprep.subr.mxu0 0.0
      %1276 = vmatpush1.msra.mxu0 0.0
      %1277 = vmatprep.subr.mxu0 0.0
      %1278 = vmatpush1.msra.mxu0 0.0
      %1279 = vmatprep.mubr.f32.mxu0 0.0
      %1280 = vmatmul.mubr.f32.gmra.mrb[0].mxu0 %v1132
      %v1281 = vpop.f32.mrb[0].mxu0
      %v1282 = vadd.f32 0.0, %v1281
      %v1283 = vpop.f32.mrb[0].mxu0
      %1284 = vdwg.mxu0
      %1288 = vrot.lane.b32.xlu0 %v1211, 127
      %v1289 = vpop.permute.xlu0 %1288
      %1290 = vrot.lane.b32.xlu0 %v1213, 127
      %v1291 = vpop.permute.xlu0 %1290
      %1292 = vrot.lane.b32.xlu0 %v1282, 127
      %v1293 = vpop.permute.xlu0 %1292
      %v1294 = vsel %vm830, %v1289, %v1291
      %v1295 = vsel %vm830, %v1291, %v1293
      %v1299 = vadd.f32 %v1211, %v1294
      %v1300 = vadd.f32 %v1213, %v1295
      %v1301 = vadd.f32 %v1282, %v1293
      %1302 = vrot.lane.b32.xlu0 %v1211, 126
      %v1303 = vpop.permute.xlu0 %1302
      %1304 = vrot.lane.b32.xlu0 %v1213, 126
      %v1305 = vpop.permute.xlu0 %1304
      %1306 = vrot.lane.b32.xlu0 %v1282, 126
      %v1307 = vpop.permute.xlu0 %1306
      %v1308 = vsel %vm851, %v1303, %v1305
      %v1309 = vsel %vm851, %v1305, %v1307
      %v1313 = vadd.f32 %v1299, %v1308
      %v1314 = vadd.f32 %v1300, %v1309
      %v1315 = vadd.f32 %v1301, %v1307
      %1316 = vrot.lane.b32.xlu0 %v1211, 110
      %v1317 = vpop.permute.xlu0 %1316
      %1318 = vrot.lane.b32.xlu0 %v1213, 110
      %v1319 = vpop.permute.xlu0 %1318
      %1320 = vrot.lane.b32.xlu0 %v1282, 110
      %v1321 = vpop.permute.xlu0 %1320
      %v1322 = vsel %vm872, %v1317, %v1319
      %v1323 = vsel %vm872, %v1319, %v1321
      %v1327 = vadd.f32 %v1313, %v1322
      %v1328 = vadd.f32 %v1314, %v1323
      %v1329 = vadd.f32 %v1315, %v1321
      %1330 = vrot.lane.b32.xlu0 %v1211, 109
      %v1331 = vpop.permute.xlu0 %1330
      %1332 = vrot.lane.b32.xlu0 %v1213, 109
      %v1333 = vpop.permute.xlu0 %1332
      %1334 = vrot.lane.b32.xlu0 %v1282, 109
      %v1335 = vpop.permute.xlu0 %1334
      %v1336 = vsel %vm893, %v1331, %v1333
      %v1337 = vsel %vm893, %v1333, %v1335
      %v1341 = vadd.f32 %v1327, %v1336
      %v1342 = vadd.f32 %v1328, %v1337
      %v1343 = vadd.f32 %v1329, %v1335
      %1344 = vrot.lane.b32.xlu0 %v1211, 108
      %v1345 = vpop.permute.xlu0 %1344
      %1346 = vrot.lane.b32.xlu0 %v1213, 108
      %v1347 = vpop.permute.xlu0 %1346
      %1348 = vrot.lane.b32.xlu0 %v1282, 108
      %v1349 = vpop.permute.xlu0 %1348
      %v1350 = vsel %vm914, %v1345, %v1347
      %v1351 = vsel %vm914, %v1347, %v1349
      %v1355 = vadd.f32 %v1341, %v1350
      %v1356 = vadd.f32 %v1342, %v1351
      %v1357 = vadd.f32 %v1343, %v1349
      %1358 = vrot.lane.b32.xlu0 %v1211, 92
      %v1359 = vpop.permute.xlu0 %1358
      %1360 = vrot.lane.b32.xlu0 %v1213, 92
      %v1361 = vpop.permute.xlu0 %1360
      %1362 = vrot.lane.b32.xlu0 %v1282, 92
      %v1363 = vpop.permute.xlu0 %1362
      %v1364 = vsel %vm935, %v1359, %v1361
      %v1365 = vsel %vm935, %v1361, %v1363
      %v1369 = vadd.f32 %v1355, %v1364
      %v1370 = vadd.f32 %v1356, %v1365
      %v1371 = vadd.f32 %v1357, %v1363
      %1372 = vrot.lane.b32.xlu0 %v1211, 91
      %v1373 = vpop.permute.xlu0 %1372
      %1374 = vrot.lane.b32.xlu0 %v1213, 91
      %v1375 = vpop.permute.xlu0 %1374
      %1376 = vrot.lane.b32.xlu0 %v1282, 91
      %v1377 = vpop.permute.xlu0 %1376
      %v1378 = vsel %vm956, %v1373, %v1375
      %v1379 = vsel %vm956, %v1375, %v1377
      %v1383 = vadd.f32 %v1369, %v1378
      %v1384 = vadd.f32 %v1370, %v1379
      %v1385 = vadd.f32 %v1371, %v1377
      %1386 = vrot.lane.b32.xlu0 %v1211, 90
      %v1387 = vpop.permute.xlu0 %1386
      %1388 = vrot.lane.b32.xlu0 %v1213, 90
      %v1389 = vpop.permute.xlu0 %1388
      %1390 = vrot.lane.b32.xlu0 %v1282, 90
      %v1391 = vpop.permute.xlu0 %1390
      %v1392 = vsel %vm977, %v1387, %v1389
      %v1393 = vsel %vm977, %v1389, %v1391
      %v1397 = vadd.f32 %v1383, %v1392
      %v1398 = vadd.f32 %v1384, %v1393
      %v1399 = vadd.f32 %v1385, %v1391
      %v1400 = vand.u32 2147483647, %v1078
      %v1401 = vand.u32 2147483647, %v1080
      %v1402 = vand.u32 2147483647, %v1119
      %v1403 = vadd.f32 %v1397, 1e-06
      %v1404 = vadd.f32 %v1398, 1e-06
      %v1405 = vadd.f32 %v1399, 1e-06
      %v1406 = vrsqrt.pop %v1403
      %v1407 = vrsqrt.pop %v1404
      %v1408 = vrsqrt.pop %v1405
      %v1409 = vlaneseq
      %v1410 = vshrl.u32 %v1409, 7
      %v1411 = vsub.s32 0, %v1410
      %v1412 = vrot.slane %v1406, %v1411
      %v1413 = vlaneseq
      %v1414 = vshrl.u32 %v1413, 7
      %v1415 = vsub.s32 0, %v1414
      %v1416 = vrot.slane %v1407, %v1415
      %v1417 = vlaneseq
      %v1418 = vshrl.u32 %v1417, 7
      %v1419 = vsub.s32 0, %v1418
      %v1420 = vrot.slane %v1408, %v1419
      %v1421 = vmul.f32 %v1400, %v1412
      %v1422 = vmul.f32 %v1401, %v1416
      %v1423 = vmul.f32 %v1402, %v1420
      %v1424 = vmul.f32 %v1078, %v1421
      %v1425 = vmul.f32 %v1080, %v1422
      %v1426 = vmul.f32 %v1119, %v1423
      %v1428 = vlaneseq
      %v1429 = vshrl.u32 %v1428, 7
      %v1430 = vsub.s32 0, %v1429
      %v1431 = vrot.slane %v809, %v1430
      %v1432 = vlaneseq
      %v1433 = vshrl.u32 %v1432, 7
      %v1434 = vsub.s32 1, %v1433
      %v1435 = vrot.slane %v809, %v1434
      %v1436 = vlaneseq
      %v1437 = vshrl.u32 %v1436, 7
      %v1438 = vsub.s32 2, %v1437
      %v1439 = vrot.slane %v809, %v1438
      %v1443 = vmul.f32 %v1424, %v1431
      %v1444 = vmul.f32 %v1425, %v1435
      %v1445 = vmul.f32 %v1426, %v1439
      %v1446 = vld [vmem:[%s2] sm:$0xff]
      %vm1447 = vcmask 64512
      %v1448 = vsel %vm1447, 1.0, 0
      %1450 = vmatprep.subr.mxu0 %v1444
      %1451 = vmatpush1.msra.mxu0 %v1443
      %1452 = vmatprep.subr.mxu0 0.0
      %1453 = vmatpush1.msra.mxu0 0.0
      %1454 = vmatprep.subr.mxu0 0.0
      %1455 = vmatpush1.msra.mxu0 0.0
      %1456 = vmatprep.subr.mxu0 0.0
      %1457 = vmatpush1.msra.mxu0 0.0
      %1458 = vmatprep.subr.mxu0 0.0
      %1459 = vmatpush1.msra.mxu0 0.0
      %1460 = vmatprep.subr.mxu0 0.0
      %1461 = vmatpush1.msra.mxu0 0.0
      %1462 = vmatprep.subr.mxu0 0.0
      %1463 = vmatpush1.msra.mxu0 0.0
      %1464 = vmatprep.subr.mxu0 0.0
      %1465 = vmatpush1.msra.mxu0 0.0
      %1466 = vmatprep.subr.mxu0 0.0
      %1467 = vmatpush1.msra.mxu0 0.0
      %1468 = vmatprep.subr.mxu0 0.0
      %1469 = vmatpush1.msra.mxu0 0.0
      %1470 = vmatprep.subr.mxu0 0.0
      %1471 = vmatpush1.msra.mxu0 0.0
      %1472 = vmatprep.subr.mxu0 0.0
      %1473 = vmatpush1.msra.mxu0 0.0
      %1474 = vmatprep.subr.mxu0 0.0
      %1475 = vmatpush1.msra.mxu0 0.0
      %1476 = vmatprep.subr.mxu0 0.0
      %1477 = vmatpush1.msra.mxu0 0.0
      %1478 = vmatprep.subr.mxu0 0.0
      %1479 = vmatpush1.msra.mxu0 0.0
      %1480 = vmatprep.subr.mxu0 0.0
      %1481 = vmatpush1.msra.mxu0 0.0
      %1482 = vmatprep.subr.mxu0 0.0
      %1483 = vmatpush1.msra.mxu0 0.0
      %1484 = vmatprep.subr.mxu0 0.0
      %1485 = vmatpush1.msra.mxu0 0.0
      %1486 = vmatprep.subr.mxu0 0.0
      %1487 = vmatpush1.msra.mxu0 0.0
      %1488 = vmatprep.subr.mxu0 0.0
      %1489 = vmatpush1.msra.mxu0 0.0
      %1490 = vmatprep.subr.mxu0 0.0
      %1491 = vmatpush1.msra.mxu0 0.0
      %1492 = vmatprep.subr.mxu0 0.0
      %1493 = vmatpush1.msra.mxu0 0.0
      %1494 = vmatprep.subr.mxu0 0.0
      %1495 = vmatpush1.msra.mxu0 0.0
      %1496 = vmatprep.subr.mxu0 0.0
      %1497 = vmatpush1.msra.mxu0 0.0
      %1498 = vmatprep.subr.mxu0 0.0
      %1499 = vmatpush1.msra.mxu0 0.0
      %1500 = vmatprep.subr.mxu0 0.0
      %1501 = vmatpush1.msra.mxu0 0.0
      %1502 = vmatprep.subr.mxu0 0.0
      %1503 = vmatpush1.msra.mxu0 0.0
      %1504 = vmatprep.subr.mxu0 0.0
      %1505 = vmatpush1.msra.mxu0 0.0
      %1506 = vmatprep.subr.mxu0 0.0
      %1507 = vmatpush1.msra.mxu0 0.0
      %1508 = vmatprep.subr.mxu0 0.0
      %1509 = vmatpush1.msra.mxu0 0.0
      %1510 = vmatprep.subr.mxu0 0.0
      %1511 = vmatpush1.msra.mxu0 0.0
      %1512 = vmatprep.subr.mxu0 0.0
      %1513 = vmatpush1.msra.mxu0 0.0
      %1514 = vmatprep.mubr.f32.mxu0 0.0
      %1515 = vmatmul.mubr.f32.gmra.mrb[0].mxu0 %v1448
      %v1516 = vpop.f32.mrb[0].mxu0
      %v1517 = vadd.f32 0.0, %v1516
      %v1518 = vpop.f32.mrb[0].mxu0
      %v1519 = vadd.f32 0.0, %v1518
      %1520 = vdwg.mxu0
      %1521 = vmatprep.subr.mxu0 0.0
      %1522 = vmatpush1.msra.mxu0 %v1445
      %1523 = vmatprep.subr.mxu0 0.0
      %1524 = vmatpush1.msra.mxu0 0.0
      %1525 = vmatprep.subr.mxu0 0.0
      %1526 = vmatpush1.msra.mxu0 0.0
      %1527 = vmatprep.subr.mxu0 0.0
      %1528 = vmatpush1.msra.mxu0 0.0
      %1529 = vmatprep.subr.mxu0 0.0
      %1530 = vmatpush1.msra.mxu0 0.0
      %1531 = vmatprep.subr.mxu0 0.0
      %1532 = vmatpush1.msra.mxu0 0.0
      %1533 = vmatprep.subr.mxu0 0.0
      %1534 = vmatpush1.msra.mxu0 0.0
      %1535 = vmatprep.subr.mxu0 0.0
      %1536 = vmatpush1.msra.mxu0 0.0
      %1537 = vmatprep.subr.mxu0 0.0
      %1538 = vmatpush1.msra.mxu0 0.0
      %1539 = vmatprep.subr.mxu0 0.0
      %1540 = vmatpush1.msra.mxu0 0.0
      %1541 = vmatprep.subr.mxu0 0.0
      %1542 = vmatpush1.msra.mxu0 0.0
      %1543 = vmatprep.subr.mxu0 0.0
      %1544 = vmatpush1.msra.mxu0 0.0
      %1545 = vmatprep.subr.mxu0 0.0
      %1546 = vmatpush1.msra.mxu0 0.0
      %1547 = vmatprep.subr.mxu0 0.0
      %1548 = vmatpush1.msra.mxu0 0.0
      %1549 = vmatprep.subr.mxu0 0.0
      %1550 = vmatpush1.msra.mxu0 0.0
      %1551 = vmatprep.subr.mxu0 0.0
      %1552 = vmatpush1.msra.mxu0 0.0
      %1553 = vmatprep.subr.mxu0 0.0
      %1554 = vmatpush1.msra.mxu0 0.0
      %1555 = vmatprep.subr.mxu0 0.0
      %1556 = vmatpush1.msra.mxu0 0.0
      %1557 = vmatprep.subr.mxu0 0.0
      %1558 = vmatpush1.msra.mxu0 0.0
      %1559 = vmatprep.subr.mxu0 0.0
      %1560 = vmatpush1.msra.mxu0 0.0
      %1561 = vmatprep.subr.mxu0 0.0
      %1562 = vmatpush1.msra.mxu0 0.0
      %1563 = vmatprep.subr.mxu0 0.0
      %1564 = vmatpush1.msra.mxu0 0.0
      %1565 = vmatprep.subr.mxu0 0.0
      %1566 = vmatpush1.msra.mxu0 0.0
      %1567 = vmatprep.subr.mxu0 0.0
      %1568 = vmatpush1.msra.mxu0 0.0
      %1569 = vmatprep.subr.mxu0 0.0
      %1570 = vmatpush1.msra.mxu0 0.0
      %1571 = vmatprep.subr.mxu0 0.0
      %1572 = vmatpush1.msra.mxu0 0.0
      %1573 = vmatprep.subr.mxu0 0.0
      %1574 = vmatpush1.msra.mxu0 0.0
      %1575 = vmatprep.subr.mxu0 0.0
      %1576 = vmatpush1.msra.mxu0 0.0
      %1577 = vmatprep.subr.mxu0 0.0
      %1578 = vmatpush1.msra.mxu0 0.0
      %1579 = vmatprep.subr.mxu0 0.0
      %1580 = vmatpush1.msra.mxu0 0.0
      %1581 = vmatprep.subr.mxu0 0.0
      %1582 = vmatpush1.msra.mxu0 0.0
      %1583 = vmatprep.subr.mxu0 0.0
      %1584 = vmatpush1.msra.mxu0 0.0
      %1585 = vmatprep.mubr.f32.mxu0 0.0
      %1586 = vmatmul.mubr.f32.gmra.mrb[0].mxu0 %v1448
      %v1587 = vpop.f32.mrb[0].mxu0
      %v1588 = vadd.f32 0.0, %v1587
      %v1589 = vpop.f32.mrb[0].mxu0
      %1590 = vdwg.mxu0
      %v1591 = vmul.f32 %v1517, 0.125
      %v1592 = vmul.f32 %v1519, 0.125
      %v1593 = vmul.f32 %v1588, 0.125
      %v1594 = vmul.f32 %v1443, %v1443
      %v1595 = vmul.f32 %v1444, %v1444
      %v1596 = vmul.f32 %v1445, %v1445
      %1597 = vmatprep.subr.mxu0 %v1595
      %1598 = vmatpush1.msra.mxu0 %v1594
      %1599 = vmatprep.subr.mxu0 0.0
      %1600 = vmatpush1.msra.mxu0 0.0
      %1601 = vmatprep.subr.mxu0 0.0
      %1602 = vmatpush1.msra.mxu0 0.0
      %1603 = vmatprep.subr.mxu0 0.0
      %1604 = vmatpush1.msra.mxu0 0.0
      %1605 = vmatprep.subr.mxu0 0.0
      %1606 = vmatpush1.msra.mxu0 0.0
      %1607 = vmatprep.subr.mxu0 0.0
      %1608 = vmatpush1.msra.mxu0 0.0
      %1609 = vmatprep.subr.mxu0 0.0
      %1610 = vmatpush1.msra.mxu0 0.0
      %1611 = vmatprep.subr.mxu0 0.0
      %1612 = vmatpush1.msra.mxu0 0.0
      %1613 = vmatprep.subr.mxu0 0.0
      %1614 = vmatpush1.msra.mxu0 0.0
      %1615 = vmatprep.subr.mxu0 0.0
      %1616 = vmatpush1.msra.mxu0 0.0
      %1617 = vmatprep.subr.mxu0 0.0
      %1618 = vmatpush1.msra.mxu0 0.0
      %1619 = vmatprep.subr.mxu0 0.0
      %1620 = vmatpush1.msra.mxu0 0.0
      %1621 = vmatprep.subr.mxu0 0.0
      %1622 = vmatpush1.msra.mxu0 0.0
      %1623 = vmatprep.subr.mxu0 0.0
      %1624 = vmatpush1.msra.mxu0 0.0
      %1625 = vmatprep.subr.mxu0 0.0
      %1626 = vmatpush1.msra.mxu0 0.0
      %1627 = vmatprep.subr.mxu0 0.0
      %1628 = vmatpush1.msra.mxu0 0.0
      %1629 = vmatprep.subr.mxu0 0.0
      %1630 = vmatpush1.msra.mxu0 0.0
      %1631 = vmatprep.subr.mxu0 0.0
      %1632 = vmatpush1.msra.mxu0 0.0
      %1633 = vmatprep.subr.mxu0 0.0
      %1634 = vmatpush1.msra.mxu0 0.0
      %1635 = vmatprep.subr.mxu0 0.0
      %1636 = vmatpush1.msra.mxu0 0.0
      %1637 = vmatprep.subr.mxu0 0.0
      %1638 = vmatpush1.msra.mxu0 0.0
      %1639 = vmatprep.subr.mxu0 0.0
      %1640 = vmatpush1.msra.mxu0 0.0
      %1641 = vmatprep.subr.mxu0 0.0
      %1642 = vmatpush1.msra.mxu0 0.0
      %1643 = vmatprep.subr.mxu0 0.0
      %1644 = vmatpush1.msra.mxu0 0.0
      %1645 = vmatprep.subr.mxu0 0.0
      %1646 = vmatpush1.msra.mxu0 0.0
      %1647 = vmatprep.subr.mxu0 0.0
      %1648 = vmatpush1.msra.mxu0 0.0
      %1649 = vmatprep.subr.mxu0 0.0
      %1650 = vmatpush1.msra.mxu0 0.0
      %1651 = vmatprep.subr.mxu0 0.0
      %1652 = vmatpush1.msra.mxu0 0.0
      %1653 = vmatprep.subr.mxu0 0.0
      %1654 = vmatpush1.msra.mxu0 0.0
      %1655 = vmatprep.subr.mxu0 0.0
      %1656 = vmatpush1.msra.mxu0 0.0
      %1657 = vmatprep.subr.mxu0 0.0
      %1658 = vmatpush1.msra.mxu0 0.0
      %1659 = vmatprep.subr.mxu0 0.0
      %1660 = vmatpush1.msra.mxu0 0.0
      %1661 = vmatprep.mubr.f32.mxu0 0.0
      %1662 = vmatmul.mubr.f32.gmra.mrb[0].mxu0 %v1448
      %v1663 = vpop.f32.mrb[0].mxu0
      %v1664 = vadd.f32 0.0, %v1663
      %v1665 = vpop.f32.mrb[0].mxu0
      %v1666 = vadd.f32 0.0, %v1665
      %1667 = vdwg.mxu0
      %1668 = vmatprep.subr.mxu0 0.0
      %1669 = vmatpush1.msra.mxu0 %v1596
      %1670 = vmatprep.subr.mxu0 0.0
      %1671 = vmatpush1.msra.mxu0 0.0
      %1672 = vmatprep.subr.mxu0 0.0
      %1673 = vmatpush1.msra.mxu0 0.0
      %1674 = vmatprep.subr.mxu0 0.0
      %1675 = vmatpush1.msra.mxu0 0.0
      %1676 = vmatprep.subr.mxu0 0.0
      %1677 = vmatpush1.msra.mxu0 0.0
      %1678 = vmatprep.subr.mxu0 0.0
      %1679 = vmatpush1.msra.mxu0 0.0
      %1680 = vmatprep.subr.mxu0 0.0
      %1681 = vmatpush1.msra.mxu0 0.0
      %1682 = vmatprep.subr.mxu0 0.0
      %1683 = vmatpush1.msra.mxu0 0.0
      %1684 = vmatprep.subr.mxu0 0.0
      %1685 = vmatpush1.msra.mxu0 0.0
      %1686 = vmatprep.subr.mxu0 0.0
      %1687 = vmatpush1.msra.mxu0 0.0
      %1688 = vmatprep.subr.mxu0 0.0
      %1689 = vmatpush1.msra.mxu0 0.0
      %1690 = vmatprep.subr.mxu0 0.0
      %1691 = vmatpush1.msra.mxu0 0.0
      %1692 = vmatprep.subr.mxu0 0.0
      %1693 = vmatpush1.msra.mxu0 0.0
      %1694 = vmatprep.subr.mxu0 0.0
      %1695 = vmatpush1.msra.mxu0 0.0
      %1696 = vmatprep.subr.mxu0 0.0
      %1697 = vmatpush1.msra.mxu0 0.0
      %1698 = vmatprep.subr.mxu0 0.0
      %1699 = vmatpush1.msra.mxu0 0.0
      %1700 = vmatprep.subr.mxu0 0.0
      %1701 = vmatpush1.msra.mxu0 0.0
      %1702 = vmatprep.subr.mxu0 0.0
      %1703 = vmatpush1.msra.mxu0 0.0
      %1704 = vmatprep.subr.mxu0 0.0
      %1705 = vmatpush1.msra.mxu0 0.0
      %1706 = vmatprep.subr.mxu0 0.0
      %1707 = vmatpush1.msra.mxu0 0.0
      %1708 = vmatprep.subr.mxu0 0.0
      %1709 = vmatpush1.msra.mxu0 0.0
      %1710 = vmatprep.subr.mxu0 0.0
      %1711 = vmatpush1.msra.mxu0 0.0
      %1712 = vmatprep.subr.mxu0 0.0
      %1713 = vmatpush1.msra.mxu0 0.0
      %1714 = vmatprep.subr.mxu0 0.0
      %1715 = vmatpush1.msra.mxu0 0.0
      %1716 = vmatprep.subr.mxu0 0.0
      %1717 = vmatpush1.msra.mxu0 0.0
      %1718 = vmatprep.subr.mxu0 0.0
      %1719 = vmatpush1.msra.mxu0 0.0
      %1720 = vmatprep.subr.mxu0 0.0
      %1721 = vmatpush1.msra.mxu0 0.0
      %1722 = vmatprep.subr.mxu0 0.0
      %1723 = vmatpush1.msra.mxu0 0.0
      %1724 = vmatprep.subr.mxu0 0.0
      %1725 = vmatpush1.msra.mxu0 0.0
      %1726 = vmatprep.subr.mxu0 0.0
      %1727 = vmatpush1.msra.mxu0 0.0
      %1728 = vmatprep.subr.mxu0 0.0
      %1729 = vmatpush1.msra.mxu0 0.0
      %1730 = vmatprep.subr.mxu0 0.0
      %1731 = vmatpush1.msra.mxu0 0.0
      %1732 = vmatprep.mubr.f32.mxu0 0.0
      %1733 = vmatmul.mubr.f32.gmra.mrb[0].mxu0 %v1448
      %v1734 = vpop.f32.mrb[0].mxu0
      %v1735 = vadd.f32 0.0, %v1734
      %v1736 = vpop.f32.mrb[0].mxu0
      %1737 = vdwg.mxu0
      %v1738 = vmul.f32 %v1664, 0.125
      %v1739 = vmul.f32 %v1666, 0.125
      %v1740 = vmul.f32 %v1735, 0.125
      %v1741 = vmul.f32 %v1591, %v1591
      %v1742 = vmul.f32 %v1592, %v1592
      %v1743 = vmul.f32 %v1593, %v1593
      %v1744 = vsub.f32 %v1738, %v1741
      %v1745 = vsub.f32 %v1739, %v1742
      %v1746 = vsub.f32 %v1740, %v1743
      %v1747 = vmax.f32 %v1744, 0.0
      %v1748 = vmax.f32 %v1745, 0.0
      %v1749 = vmax.f32 %v1746, 0.0
      %v1750 = vlaneseq
      %v1751 = vshrl.u32 %v1750, 7
      %v1752 = vsub.s32 0, %v1751
      %v1753 = vrot.slane %v1591, %v1752
      %v1754 = vlaneseq
      %v1755 = vshrl.u32 %v1754, 7
      %v1756 = vsub.s32 0, %v1755
      %v1757 = vrot.slane %v1592, %v1756
      %v1758 = vlaneseq
      %v1759 = vshrl.u32 %v1758, 7
      %v1760 = vsub.s32 0, %v1759
      %v1761 = vrot.slane %v1593, %v1760
      %v1762 = vsub.f32 %v1443, %v1753
      %v1763 = vsub.f32 %v1444, %v1757
      %v1764 = vsub.f32 %v1445, %v1761
      %v1765 = vadd.f32 %v1747, 1e-05
      %v1766 = vadd.f32 %v1748, 1e-05
      %v1767 = vadd.f32 %v1749, 1e-05
      %v1768 = vrsqrt.pop %v1765
      %v1769 = vrsqrt.pop %v1766
      %v1770 = vrsqrt.pop %v1767
      %v1771 = vlaneseq
      %v1772 = vshrl.u32 %v1771, 7
      %v1773 = vsub.s32 0, %v1772
      %v1774 = vrot.slane %v1768, %v1773
      %v1775 = vlaneseq
      %v1776 = vshrl.u32 %v1775, 7
      %v1777 = vsub.s32 0, %v1776
      %v1778 = vrot.slane %v1769, %v1777
      %v1779 = vlaneseq
      %v1780 = vshrl.u32 %v1779, 7
      %v1781 = vsub.s32 0, %v1780
      %v1782 = vrot.slane %v1770, %v1781
      %v1783 = vmul.f32 %v1762, %v1774
      %v1784 = vmul.f32 %v1763, %v1778
      %v1785 = vmul.f32 %v1764, %v1782
      %1787 = vset.pattern.permute.xlu0 0
      %1788 = vperm.xlu0 %1787, %v1446
      %v1789 = vpop.permute.xlu0 %1788
      %v1791 = vmul.f32 %v1783, %v1789
      %v1792 = vmul.f32 %v1784, %v1789
      %v1793 = vmul.f32 %v1785, %v1789
      %1797 = vrot.lane.b32.xlu0 %v1791, 19
      %v1798 = vpop.permute.xlu0 %1797
      %1799 = vrot.lane.b32.xlu0 %v1792, 19
      %v1800 = vpop.permute.xlu0 %1799
      %1801 = vrot.lane.b32.xlu0 %v1793, 19
      %v1802 = vpop.permute.xlu0 %1801
      %vm1803 = vcmask 154624
      %v1804 = vsel %vm1803, %v1798, %v1800
      %v1805 = vsel %vm1803, %v1800, %v1802
      %vm1809 = vcmask 1047704
      %1810 = vst.msk [vmem:[#allocation3] sm:$0xff] %vm1809, %v1798
      %1811 = vst [vmem:[#allocation3 + $0x8] sm:$0xff] %v1804
      %vm1812 = vcmask 400384
      %1813 = vst.msk [vmem:[#allocation3 + $0x10] sm:$0xff] %vm1812, %v1805
      %v1814 = vld [vmem:[#allocation3] sm:$0xff]
      %v1815 = vld [vmem:[#allocation3 + $0x8] sm:$0xff]
      %v1816 = vld [vmem:[#allocation3 + $0x10] sm:$0xff]
      %1817 = vst [vmem:[#allocation6] sm:$0xff] %v1814
      %1818 = vst [vmem:[#allocation6 + $0x8] sm:$0xff] %v1815
      %1819 = vst.msk [vmem:[#allocation6 + $0x10] sm:$0xff] %vm776, %v1816
      %v1820 = vld [vmem:[#allocation3] sm:$0xff]
      %v1821 = vld [vmem:[#allocation3 + $0x8] sm:$0xff]
      %v1822 = vld [vmem:[#allocation3 + $0x10] sm:$0xff]
      %1826 = vrot.lane.b32.xlu0 %v1820, 127
      %v1827 = vpop.permute.xlu0 %1826
      %1828 = vrot.lane.b32.xlu0 %v1821, 127
      %v1829 = vpop.permute.xlu0 %1828
      %1830 = vrot.lane.b32.xlu0 %v1822, 127
      %v1831 = vpop.permute.xlu0 %1830
      %v1832 = vsel %vm830, %v1827, %v1829
      %v1833 = vsel %vm830, %v1829, %v1831
      %1837 = vst [vmem:[#allocation6 + $0x18] sm:$0xff] %v1832
      %1838 = vst [vmem:[#allocation6 + $0x20] sm:$0xff] %v1833
      %1839 = vst.msk [vmem:[#allocation6 + $0x28] sm:$0xff] %vm776, %v1831
      %v1840 = vld [vmem:[#allocation3] sm:$0xff]
      %v1841 = vld [vmem:[#allocation3 + $0x8] sm:$0xff]
      %v1842 = vld [vmem:[#allocation3 + $0x10] sm:$0xff]
      %1846 = vrot.lane.b32.xlu0 %v1840, 126
      %v1847 = vpop.permute.xlu0 %1846
      %1848 = vrot.lane.b32.xlu0 %v1841, 126
      %v1849 = vpop.permute.xlu0 %1848
      %1850 = vrot.lane.b32.xlu0 %v1842, 126
      %v1851 = vpop.permute.xlu0 %1850
      %v1852 = vsel %vm851, %v1847, %v1849
      %v1853 = vsel %vm851, %v1849, %v1851
      %1857 = vst [vmem:[#allocation6 + $0x30] sm:$0xff] %v1852
      %1858 = vst [vmem:[#allocation6 + $0x38] sm:$0xff] %v1853
      %1859 = vst.msk [vmem:[#allocation6 + $0x40] sm:$0xff] %vm776, %v1851
      %v1860 = vld [vmem:[#allocation3] sm:$0xff]
      %v1861 = vld [vmem:[#allocation3 + $0x8] sm:$0xff]
      %v1862 = vld [vmem:[#allocation3 + $0x10] sm:$0xff]
      %1866 = vrot.lane.b32.xlu0 %v1860, 110
      %v1867 = vpop.permute.xlu0 %1866
      %1868 = vrot.lane.b32.xlu0 %v1861, 110
      %v1869 = vpop.permute.xlu0 %1868
      %1870 = vrot.lane.b32.xlu0 %v1862, 110
      %v1871 = vpop.permute.xlu0 %1870
      %v1872 = vsel %vm872, %v1867, %v1869
      %v1873 = vsel %vm872, %v1869, %v1871
      %1877 = vst [vmem:[#allocation6 + $0x48] sm:$0xff] %v1872
      %1878 = vst [vmem:[#allocation6 + $0x50] sm:$0xff] %v1873
      %1879 = vst.msk [vmem:[#allocation6 + $0x58] sm:$0xff] %vm776, %v1871
      %v1880 = vld [vmem:[#allocation3] sm:$0xff]
      %v1881 = vld [vmem:[#allocation3 + $0x8] sm:$0xff]
      %v1882 = vld [vmem:[#allocation3 + $0x10] sm:$0xff]
      %1886 = vrot.lane.b32.xlu0 %v1880, 109
      %v1887 = vpop.permute.xlu0 %1886
      %1888 = vrot.lane.b32.xlu0 %v1881, 109
      %v1889 = vpop.permute.xlu0 %1888
      %1890 = vrot.lane.b32.xlu0 %v1882, 109
      %v1891 = vpop.permute.xlu0 %1890
      %v1892 = vsel %vm893, %v1887, %v1889
      %v1893 = vsel %vm893, %v1889, %v1891
      %1897 = vst [vmem:[#allocation6 + $0x60] sm:$0xff] %v1892
      %1898 = vst [vmem:[#allocation6 + $0x68] sm:$0xff] %v1893
      %1899 = vst.msk [vmem:[#allocation6 + $0x70] sm:$0xff] %vm776, %v1891
      %v1900 = vld [vmem:[#allocation3] sm:$0xff]
      %v1901 = vld [vmem:[#allocation3 + $0x8] sm:$0xff]
      %v1902 = vld [vmem:[#allocation3 + $0x10] sm:$0xff]
      %1906 = vrot.lane.b32.xlu0 %v1900, 108
      %v1907 = vpop.permute.xlu0 %1906
      %1908 = vrot.lane.b32.xlu0 %v1901, 108
      %v1909 = vpop.permute.xlu0 %1908
      %1910 = vrot.lane.b32.xlu0 %v1902, 108
      %v1911 = vpop.permute.xlu0 %1910
      %v1912 = vsel %vm914, %v1907, %v1909
      %v1913 = vsel %vm914, %v1909, %v1911
      %1917 = vst [vmem:[#allocation6 + $0x78] sm:$0xff] %v1912
      %1918 = vst [vmem:[#allocation6 + $0x80] sm:$0xff] %v1913
      %1919 = vst.msk [vmem:[#allocation6 + $0x88] sm:$0xff] %vm776, %v1911
      %v1920 = vld [vmem:[#allocation3] sm:$0xff]
      %v1921 = vld [vmem:[#allocation3 + $0x8] sm:$0xff]
      %v1922 = vld [vmem:[#allocation3 + $0x10] sm:$0xff]
      %1926 = vrot.lane.b32.xlu0 %v1920, 92
      %v1927 = vpop.permute.xlu0 %1926
      %1928 = vrot.lane.b32.xlu0 %v1921, 92
      %v1929 = vpop.permute.xlu0 %1928
      %1930 = vrot.lane.b32.xlu0 %v1922, 92
      %v1931 = vpop.permute.xlu0 %1930
      %v1932 = vsel %vm935, %v1927, %v1929
      %v1933 = vsel %vm935, %v1929, %v1931
      %1937 = vst [vmem:[#allocation6 + $0x90] sm:$0xff] %v1932
      %1938 = vst [vmem:[#allocation6 + $0x98] sm:$0xff] %v1933
      %1939 = vst.msk [vmem:[#allocation6 + $0xa0] sm:$0xff] %vm776, %v1931
      %v1940 = vld [vmem:[#allocation3] sm:$0xff]
      %v1941 = vld [vmem:[#allocation3 + $0x8] sm:$0xff]
      %v1942 = vld [vmem:[#allocation3 + $0x10] sm:$0xff]
      %1946 = vrot.lane.b32.xlu0 %v1940, 91
      %v1947 = vpop.permute.xlu0 %1946
      %1948 = vrot.lane.b32.xlu0 %v1941, 91
      %v1949 = vpop.permute.xlu0 %1948
      %1950 = vrot.lane.b32.xlu0 %v1942, 91
      %v1951 = vpop.permute.xlu0 %1950
      %v1952 = vsel %vm956, %v1947, %v1949
      %v1953 = vsel %vm956, %v1949, %v1951
      %1957 = vst [vmem:[#allocation6 + $0xa8] sm:$0xff] %v1952
      %1958 = vst [vmem:[#allocation6 + $0xb0] sm:$0xff] %v1953
      %1959 = vst.msk [vmem:[#allocation6 + $0xb8] sm:$0xff] %vm776, %v1951
      %v1960 = vld [vmem:[#allocation3] sm:$0xff]
      %v1961 = vld [vmem:[#allocation3 + $0x8] sm:$0xff]
      %v1962 = vld [vmem:[#allocation3 + $0x10] sm:$0xff]
      %1966 = vrot.lane.b32.xlu0 %v1960, 90
      %v1967 = vpop.permute.xlu0 %1966
      %1968 = vrot.lane.b32.xlu0 %v1961, 90
      %v1969 = vpop.permute.xlu0 %1968
      %1970 = vrot.lane.b32.xlu0 %v1962, 90
      %v1971 = vpop.permute.xlu0 %1970
      %v1972 = vsel %vm977, %v1967, %v1969
      %v1973 = vsel %vm977, %v1969, %v1971
      %1977 = vst [vmem:[#allocation6 + $0xc0] sm:$0xff] %v1972
      %1978 = vst [vmem:[#allocation6 + $0xc8] sm:$0xff] %v1973
      %1979 = vst.msk [vmem:[#allocation6 + $0xd0] sm:$0xff] %vm776, %v1971
      %v1980 = vld [vmem:[%s3] sm:$0xf]
      %v1981 = vld [vmem:[#allocation6] sm:$0xff]
      %v1982 = vld [vmem:[#allocation6 + $0x8] sm:$0xff]
      %v1983 = vld [vmem:[#allocation6 + $0x10] sm:$0xff]
      %v1984 = vld [vmem:[#allocation6 + $0x18] sm:$0xff]
      %v1985 = vld [vmem:[#allocation6 + $0x20] sm:$0xff]
      %v1986 = vld [vmem:[#allocation6 + $0x28] sm:$0xff]
      %v1987 = vld [vmem:[#allocation6 + $0x30] sm:$0xff]
      %v1988 = vld [vmem:[#allocation6 + $0x38] sm:$0xff]
      %v1989 = vld [vmem:[#allocation6 + $0x40] sm:$0xff]
      %v1990 = vld [vmem:[#allocation6 + $0x48] sm:$0xff]
      %v1991 = vld [vmem:[#allocation6 + $0x50] sm:$0xff]
      %v1992 = vld [vmem:[#allocation6 + $0x58] sm:$0xff]
      %v1993 = vld [vmem:[#allocation6 + $0x60] sm:$0xff]
      %v1994 = vld [vmem:[#allocation6 + $0x68] sm:$0xff]
      %v1995 = vld [vmem:[#allocation6 + $0x70] sm:$0xff]
      %v1996 = vld [vmem:[#allocation6 + $0x78] sm:$0xff]
      %v1997 = vld [vmem:[#allocation6 + $0x80] sm:$0xff]
      %v1998 = vld [vmem:[#allocation6 + $0x88] sm:$0xff]
      %v1999 = vld [vmem:[#allocation6 + $0x90] sm:$0xff]
      %v2000 = vld [vmem:[#allocation6 + $0x98] sm:$0xff]
      %v2001 = vld [vmem:[#allocation6 + $0xa0] sm:$0xff]
      %v2002 = vld [vmem:[#allocation6 + $0xa8] sm:$0xff]
      %v2003 = vld [vmem:[#allocation6 + $0xb0] sm:$0xff]
      %v2004 = vld [vmem:[#allocation6 + $0xb8] sm:$0xff]
      %v2005 = vld [vmem:[#allocation6 + $0xc0] sm:$0xff]
      %v2006 = vld [vmem:[#allocation6 + $0xc8] sm:$0xff]
      %v2007 = vld [vmem:[#allocation6 + $0xd0] sm:$0xff]
      %v2008 = vpack.c.bf16 %v1984, %v1981
      %v2009 = vpack.c.bf16 %v1985, %v1982
      %v2010 = vpack.c.bf16 %v1986, %v1983
      %v2011 = vpack.c.bf16 %v1990, %v1987
      %v2012 = vpack.c.bf16 %v1991, %v1988
      %v2013 = vpack.c.bf16 %v1992, %v1989
      %v2014 = vpack.c.bf16 %v1996, %v1993
      %v2015 = vpack.c.bf16 %v1997, %v1994
      %v2016 = vpack.c.bf16 %v1998, %v1995
      %v2017 = vpack.c.bf16 %v2002, %v1999
      %v2018 = vpack.c.bf16 %v2003, %v2000
      %v2019 = vpack.c.bf16 %v2004, %v2001
      %v2020 = vpack.c.bf16 %v2005, %v2005
      %v2021 = vpack.c.bf16 %v2006, %v2006
      %v2022 = vpack.c.bf16 %v2007, %v2007
      %v2024 = vsel %vm1029, %v1980, 0
      %v2027 = vsel %vm1033, %v2020, 0
      %v2030 = vsel %vm1033, %v2021, 0
      %v2033 = vsel %vm1033, %v2022, 0
      %2035 = vmatprep.subr.bf16.mxu0 %v2009
      %2036 = vmatpush1.bf16.msra.mxu0 %v2008
      %2037 = vmatprep.subr.bf16.mxu0 %v2012
      %2038 = vmatpush1.bf16.msra.mxu0 %v2011
      %2039 = vmatprep.subr.bf16.mxu0 %v2015
      %2040 = vmatpush1.bf16.msra.mxu0 %v2014
      %2041 = vmatprep.subr.bf16.mxu0 %v2018
      %2042 = vmatpush1.bf16.msra.mxu0 %v2017
      %2043 = vmatprep.subr.bf16.mxu0 %v2030
      %2044 = vmatpush1.bf16.msra.mxu0 %v2027
      %2045 = vmatprep.subr.bf16.mxu0 0
      %2046 = vmatpush1.bf16.msra.mxu0 0
      %2047 = vmatprep.subr.bf16.mxu0 0
      %2048 = vmatpush1.bf16.msra.mxu0 0
      %2049 = vmatprep.subr.bf16.mxu0 0
      %2050 = vmatpush1.bf16.msra.mxu0 0
      %2051 = vmatprep.subr.bf16.mxu0 0
      %2052 = vmatpush1.bf16.msra.mxu0 0
      %2053 = vmatprep.subr.bf16.mxu0 0
      %2054 = vmatpush1.bf16.msra.mxu0 0
      %2055 = vmatprep.subr.bf16.mxu0 0
      %2056 = vmatpush1.bf16.msra.mxu0 0
      %2057 = vmatprep.subr.bf16.mxu0 0
      %2058 = vmatpush1.bf16.msra.mxu0 0
      %2059 = vmatprep.subr.bf16.mxu0 0
      %2060 = vmatpush1.bf16.msra.mxu0 0
      %2061 = vmatprep.subr.bf16.mxu0 0
      %2062 = vmatpush1.bf16.msra.mxu0 0
      %2063 = vmatprep.subr.bf16.mxu0 0
      %2064 = vmatpush1.bf16.msra.mxu0 0
      %2065 = vmatprep.subr.bf16.mxu0 0
      %2066 = vmatpush1.bf16.msra.mxu0 0
      %2067 = vmatprep.mubr.bf16.mxu0 0
      %2068 = vmatmul.mubr.bf16.gmra.mrb[0].mxu0 %v2024
      %v2069 = vpop.f32.mrb[0].mxu0
      %v2070 = vadd.f32 0.0, %v2069
      %v2071 = vpop.f32.mrb[0].mxu0
      %v2072 = vadd.f32 0.0, %v2071
      %v2073 = vpop.f32.mrb[0].mxu0
      %v2074 = vpop.f32.mrb[0].mxu0
      %2075 = vdwg.mxu0
      %2076 = vmatprep.subr.bf16.mxu0 0
      %2077 = vmatpush1.bf16.msra.mxu0 %v2010
      %2078 = vmatprep.subr.bf16.mxu0 0
      %2079 = vmatpush1.bf16.msra.mxu0 %v2013
      %2080 = vmatprep.subr.bf16.mxu0 0
      %2081 = vmatpush1.bf16.msra.mxu0 %v2016
      %2082 = vmatprep.subr.bf16.mxu0 0
      %2083 = vmatpush1.bf16.msra.mxu0 %v2019
      %2084 = vmatprep.subr.bf16.mxu0 0
      %2085 = vmatpush1.bf16.msra.mxu0 %v2033
      %2086 = vmatprep.subr.bf16.mxu0 0
      %2087 = vmatpush1.bf16.msra.mxu0 0
      %2088 = vmatprep.subr.bf16.mxu0 0
      %2089 = vmatpush1.bf16.msra.mxu0 0
      %2090 = vmatprep.subr.bf16.mxu0 0
      %2091 = vmatpush1.bf16.msra.mxu0 0
      %2092 = vmatprep.subr.bf16.mxu0 0
      %2093 = vmatpush1.bf16.msra.mxu0 0
      %2094 = vmatprep.subr.bf16.mxu0 0
      %2095 = vmatpush1.bf16.msra.mxu0 0
      %2096 = vmatprep.subr.bf16.mxu0 0
      %2097 = vmatpush1.bf16.msra.mxu0 0
      %2098 = vmatprep.subr.bf16.mxu0 0
      %2099 = vmatpush1.bf16.msra.mxu0 0
      %2100 = vmatprep.subr.bf16.mxu0 0
      %2101 = vmatpush1.bf16.msra.mxu0 0
      %2102 = vmatprep.subr.bf16.mxu0 0
      %2103 = vmatpush1.bf16.msra.mxu0 0
      %2104 = vmatprep.subr.bf16.mxu0 0
      %2105 = vmatpush1.bf16.msra.mxu0 0
      %2106 = vmatprep.subr.bf16.mxu0 0
      %2107 = vmatpush1.bf16.msra.mxu0 0
      %2108 = vmatprep.mubr.bf16.mxu0 0
      %2109 = vmatmul.mubr.bf16.gmra.mrb[0].mxu0 %v2024
      %v2110 = vpop.f32.mrb[0].mxu0
      %v2111 = vadd.f32 0.0, %v2110
      %v2112 = vpop.f32.mrb[0].mxu0
      %v2113 = vpop.f32.mrb[0].mxu0
      %v2114 = vpop.f32.mrb[0].mxu0
      %2115 = vdwg.mxu0
      %v2116 = vld [vmem:[#allocation3] sm:$0xff]
      %v2117 = vld [vmem:[#allocation3 + $0x8] sm:$0xff]
      %v2118 = vld [vmem:[#allocation3 + $0x10] sm:$0xff]
      %v2119 = vmul.f32 %v2116, %v2116
      %v2120 = vmul.f32 %v2117, %v2117
      %v2121 = vmul.f32 %v2118, %v2118
      %2122 = vmatprep.subr.mxu0 %v2120
      %2123 = vmatpush1.msra.mxu0 %v2119
      %2124 = vmatprep.subr.mxu0 0.0
      %2125 = vmatpush1.msra.mxu0 0.0
      %2126 = vmatprep.subr.mxu0 0.0
      %2127 = vmatpush1.msra.mxu0 0.0
      %2128 = vmatprep.subr.mxu0 0.0
      %2129 = vmatpush1.msra.mxu0 0.0
      %2130 = vmatprep.subr.mxu0 0.0
      %2131 = vmatpush1.msra.mxu0 0.0
      %2132 = vmatprep.subr.mxu0 0.0
      %2133 = vmatpush1.msra.mxu0 0.0
      %2134 = vmatprep.subr.mxu0 0.0
      %2135 = vmatpush1.msra.mxu0 0.0
      %2136 = vmatprep.subr.mxu0 0.0
      %2137 = vmatpush1.msra.mxu0 0.0
      %2138 = vmatprep.subr.mxu0 0.0
      %2139 = vmatpush1.msra.mxu0 0.0
      %2140 = vmatprep.subr.mxu0 0.0
      %2141 = vmatpush1.msra.mxu0 0.0
      %2142 = vmatprep.subr.mxu0 0.0
      %2143 = vmatpush1.msra.mxu0 0.0
      %2144 = vmatprep.subr.mxu0 0.0
      %2145 = vmatpush1.msra.mxu0 0.0
      %2146 = vmatprep.subr.mxu0 0.0
      %2147 = vmatpush1.msra.mxu0 0.0
      %2148 = vmatprep.subr.mxu0 0.0
      %2149 = vmatpush1.msra.mxu0 0.0
      %2150 = vmatprep.subr.mxu0 0.0
      %2151 = vmatpush1.msra.mxu0 0.0
      %2152 = vmatprep.subr.mxu0 0.0
      %2153 = vmatpush1.msra.mxu0 0.0
      %2154 = vmatprep.subr.mxu0 0.0
      %2155 = vmatpush1.msra.mxu0 0.0
      %2156 = vmatprep.subr.mxu0 0.0
      %2157 = vmatpush1.msra.mxu0 0.0
      %2158 = vmatprep.subr.mxu0 0.0
      %2159 = vmatpush1.msra.mxu0 0.0
      %2160 = vmatprep.subr.mxu0 0.0
      %2161 = vmatpush1.msra.mxu0 0.0
      %2162 = vmatprep.subr.mxu0 0.0
      %2163 = vmatpush1.msra.mxu0 0.0
      %2164 = vmatprep.subr.mxu0 0.0
      %2165 = vmatpush1.msra.mxu0 0.0
      %2166 = vmatprep.subr.mxu0 0.0
      %2167 = vmatpush1.msra.mxu0 0.0
      %2168 = vmatprep.subr.mxu0 0.0
      %2169 = vmatpush1.msra.mxu0 0.0
      %2170 = vmatprep.subr.mxu0 0.0
      %2171 = vmatpush1.msra.mxu0 0.0
      %2172 = vmatprep.subr.mxu0 0.0
      %2173 = vmatpush1.msra.mxu0 0.0
      %2174 = vmatprep.subr.mxu0 0.0
      %2175 = vmatpush1.msra.mxu0 0.0
      %2176 = vmatprep.subr.mxu0 0.0
      %2177 = vmatpush1.msra.mxu0 0.0
      %2178 = vmatprep.subr.mxu0 0.0
      %2179 = vmatpush1.msra.mxu0 0.0
      %2180 = vmatprep.subr.mxu0 0.0
      %2181 = vmatpush1.msra.mxu0 0.0
      %2182 = vmatprep.subr.mxu0 0.0
      %2183 = vmatpush1.msra.mxu0 0.0
      %2184 = vmatprep.subr.mxu0 0.0
      %2185 = vmatpush1.msra.mxu0 0.0
      %2186 = vmatprep.mubr.f32.mxu0 0.0
      %2187 = vmatmul.mubr.f32.gmra.mrb[0].mxu0 %v1448
      %v2188 = vpop.f32.mrb[0].mxu0
      %v2189 = vadd.f32 0.0, %v2188
      %v2190 = vpop.f32.mrb[0].mxu0
      %v2191 = vadd.f32 0.0, %v2190
      %2192 = vdwg.mxu0
      %2193 = vmatprep.subr.mxu0 0.0
      %2194 = vmatpush1.msra.mxu0 %v2121
      %2195 = vmatprep.subr.mxu0 0.0
      %2196 = vmatpush1.msra.mxu0 0.0
      %2197 = vmatprep.subr.mxu0 0.0
      %2198 = vmatpush1.msra.mxu0 0.0
      %2199 = vmatprep.subr.mxu0 0.0
      %2200 = vmatpush1.msra.mxu0 0.0
      %2201 = vmatprep.subr.mxu0 0.0
      %2202 = vmatpush1.msra.mxu0 0.0
      %2203 = vmatprep.subr.mxu0 0.0
      %2204 = vmatpush1.msra.mxu0 0.0
      %2205 = vmatprep.subr.mxu0 0.0
      %2206 = vmatpush1.msra.mxu0 0.0
      %2207 = vmatprep.subr.mxu0 0.0
      %2208 = vmatpush1.msra.mxu0 0.0
      %2209 = vmatprep.subr.mxu0 0.0
      %2210 = vmatpush1.msra.mxu0 0.0
      %2211 = vmatprep.subr.mxu0 0.0
      %2212 = vmatpush1.msra.mxu0 0.0
      %2213 = vmatprep.subr.mxu0 0.0
      %2214 = vmatpush1.msra.mxu0 0.0
      %2215 = vmatprep.subr.mxu0 0.0
      %2216 = vmatpush1.msra.mxu0 0.0
      %2217 = vmatprep.subr.mxu0 0.0
      %2218 = vmatpush1.msra.mxu0 0.0
      %2219 = vmatprep.subr.mxu0 0.0
      %2220 = vmatpush1.msra.mxu0 0.0
      %2221 = vmatprep.subr.mxu0 0.0
      %2222 = vmatpush1.msra.mxu0 0.0
      %2223 = vmatprep.subr.mxu0 0.0
      %2224 = vmatpush1.msra.mxu0 0.0
      %2225 = vmatprep.subr.mxu0 0.0
      %2226 = vmatpush1.msra.mxu0 0.0
      %2227 = vmatprep.subr.mxu0 0.0
      %2228 = vmatpush1.msra.mxu0 0.0
      %2229 = vmatprep.subr.mxu0 0.0
      %2230 = vmatpush1.msra.mxu0 0.0
      %2231 = vmatprep.subr.mxu0 0.0
      %2232 = vmatpush1.msra.mxu0 0.0
      %2233 = vmatprep.subr.mxu0 0.0
      %2234 = vmatpush1.msra.mxu0 0.0
      %2235 = vmatprep.subr.mxu0 0.0
      %2236 = vmatpush1.msra.mxu0 0.0
      %2237 = vmatprep.subr.mxu0 0.0
      %2238 = vmatpush1.msra.mxu0 0.0
      %2239 = vmatprep.subr.mxu0 0.0
      %2240 = vmatpush1.msra.mxu0 0.0
      %2241 = vmatprep.subr.mxu0 0.0
      %2242 = vmatpush1.msra.mxu0 0.0
      %2243 = vmatprep.subr.mxu0 0.0
      %2244 = vmatpush1.msra.mxu0 0.0
      %2245 = vmatprep.subr.mxu0 0.0
      %2246 = vmatpush1.msra.mxu0 0.0
      %2247 = vmatprep.subr.mxu0 0.0
      %2248 = vmatpush1.msra.mxu0 0.0
      %2249 = vmatprep.subr.mxu0 0.0
      %2250 = vmatpush1.msra.mxu0 0.0
      %2251 = vmatprep.subr.mxu0 0.0
      %2252 = vmatpush1.msra.mxu0 0.0
      %2253 = vmatprep.subr.mxu0 0.0
      %2254 = vmatpush1.msra.mxu0 0.0
      %2255 = vmatprep.subr.mxu0 0.0
      %2256 = vmatpush1.msra.mxu0 0.0
      %2257 = vmatprep.mubr.f32.mxu0 0.0
      %2258 = vmatmul.mubr.f32.gmra.mrb[0].mxu0 %v1448
      %v2259 = vpop.f32.mrb[0].mxu0
      %v2260 = vadd.f32 0.0, %v2259
      %v2261 = vpop.f32.mrb[0].mxu0
      %2262 = vdwg.mxu0
      %2266 = vrot.lane.b32.xlu0 %v2189, 127
      %v2267 = vpop.permute.xlu0 %2266
      %2268 = vrot.lane.b32.xlu0 %v2191, 127
      %v2269 = vpop.permute.xlu0 %2268
      %2270 = vrot.lane.b32.xlu0 %v2260, 127
      %v2271 = vpop.permute.xlu0 %2270
      %v2272 = vsel %vm830, %v2267, %v2269
      %v2273 = vsel %vm830, %v2269, %v2271
      %v2277 = vadd.f32 %v2189, %v2272
      %v2278 = vadd.f32 %v2191, %v2273
      %v2279 = vadd.f32 %v2260, %v2271
      %2280 = vrot.lane.b32.xlu0 %v2189, 126
      %v2281 = vpop.permute.xlu0 %2280
      %2282 = vrot.lane.b32.xlu0 %v2191, 126
      %v2283 = vpop.permute.xlu0 %2282
      %2284 = vrot.lane.b32.xlu0 %v2260, 126
      %v2285 = vpop.permute.xlu0 %2284
      %v2286 = vsel %vm851, %v2281, %v2283
      %v2287 = vsel %vm851, %v2283, %v2285
      %v2291 = vadd.f32 %v2277, %v2286
      %v2292 = vadd.f32 %v2278, %v2287
      %v2293 = vadd.f32 %v2279, %v2285
      %2294 = vrot.lane.b32.xlu0 %v2189, 110
      %v2295 = vpop.permute.xlu0 %2294
      %2296 = vrot.lane.b32.xlu0 %v2191, 110
      %v2297 = vpop.permute.xlu0 %2296
      %2298 = vrot.lane.b32.xlu0 %v2260, 110
      %v2299 = vpop.permute.xlu0 %2298
      %v2300 = vsel %vm872, %v2295, %v2297
      %v2301 = vsel %vm872, %v2297, %v2299
      %v2305 = vadd.f32 %v2291, %v2300
      %v2306 = vadd.f32 %v2292, %v2301
      %v2307 = vadd.f32 %v2293, %v2299
      %2308 = vrot.lane.b32.xlu0 %v2189, 109
      %v2309 = vpop.permute.xlu0 %2308
      %2310 = vrot.lane.b32.xlu0 %v2191, 109
      %v2311 = vpop.permute.xlu0 %2310
      %2312 = vrot.lane.b32.xlu0 %v2260, 109
      %v2313 = vpop.permute.xlu0 %2312
      %v2314 = vsel %vm893, %v2309, %v2311
      %v2315 = vsel %vm893, %v2311, %v2313
      %v2319 = vadd.f32 %v2305, %v2314
      %v2320 = vadd.f32 %v2306, %v2315
      %v2321 = vadd.f32 %v2307, %v2313
      %2322 = vrot.lane.b32.xlu0 %v2189, 108
      %v2323 = vpop.permute.xlu0 %2322
      %2324 = vrot.lane.b32.xlu0 %v2191, 108
      %v2325 = vpop.permute.xlu0 %2324
      %2326 = vrot.lane.b32.xlu0 %v2260, 108
      %v2327 = vpop.permute.xlu0 %2326
      %v2328 = vsel %vm914, %v2323, %v2325
      %v2329 = vsel %vm914, %v2325, %v2327
      %v2333 = vadd.f32 %v2319, %v2328
      %v2334 = vadd.f32 %v2320, %v2329
      %v2335 = vadd.f32 %v2321, %v2327
      %2336 = vrot.lane.b32.xlu0 %v2189, 92
      %v2337 = vpop.permute.xlu0 %2336
      %2338 = vrot.lane.b32.xlu0 %v2191, 92
      %v2339 = vpop.permute.xlu0 %2338
      %2340 = vrot.lane.b32.xlu0 %v2260, 92
      %v2341 = vpop.permute.xlu0 %2340
      %v2342 = vsel %vm935, %v2337, %v2339
      %v2343 = vsel %vm935, %v2339, %v2341
      %v2347 = vadd.f32 %v2333, %v2342
      %v2348 = vadd.f32 %v2334, %v2343
      %v2349 = vadd.f32 %v2335, %v2341
      %2350 = vrot.lane.b32.xlu0 %v2189, 91
      %v2351 = vpop.permute.xlu0 %2350
      %2352 = vrot.lane.b32.xlu0 %v2191, 91
      %v2353 = vpop.permute.xlu0 %2352
      %2354 = vrot.lane.b32.xlu0 %v2260, 91
      %v2355 = vpop.permute.xlu0 %2354
      %v2356 = vsel %vm956, %v2351, %v2353
      %v2357 = vsel %vm956, %v2353, %v2355
      %v2361 = vadd.f32 %v2347, %v2356
      %v2362 = vadd.f32 %v2348, %v2357
      %v2363 = vadd.f32 %v2349, %v2355
      %2364 = vrot.lane.b32.xlu0 %v2189, 90
      %v2365 = vpop.permute.xlu0 %2364
      %2366 = vrot.lane.b32.xlu0 %v2191, 90
      %v2367 = vpop.permute.xlu0 %2366
      %2368 = vrot.lane.b32.xlu0 %v2260, 90
      %v2369 = vpop.permute.xlu0 %2368
      %v2370 = vsel %vm977, %v2365, %v2367
      %v2371 = vsel %vm977, %v2367, %v2369
      %v2375 = vadd.f32 %v2361, %v2370
      %v2376 = vadd.f32 %v2362, %v2371
      %v2377 = vadd.f32 %v2363, %v2369
      %v2378 = vand.u32 2147483647, %v2070
      %v2379 = vand.u32 2147483647, %v2072
      %v2380 = vand.u32 2147483647, %v2111
      %v2381 = vadd.f32 %v2375, 1e-06
      %v2382 = vadd.f32 %v2376, 1e-06
      %v2383 = vadd.f32 %v2377, 1e-06
      %v2384 = vrsqrt.pop %v2381
      %v2385 = vrsqrt.pop %v2382
      %v2386 = vrsqrt.pop %v2383
      %v2387 = vlaneseq
      %v2388 = vshrl.u32 %v2387, 7
      %v2389 = vsub.s32 0, %v2388
      %v2390 = vrot.slane %v2384, %v2389
      %v2391 = vlaneseq
      %v2392 = vshrl.u32 %v2391, 7
      %v2393 = vsub.s32 0, %v2392
      %v2394 = vrot.slane %v2385, %v2393
      %v2395 = vlaneseq
      %v2396 = vshrl.u32 %v2395, 7
      %v2397 = vsub.s32 0, %v2396
      %v2398 = vrot.slane %v2386, %v2397
      %v2399 = vmul.f32 %v2378, %v2390
      %v2400 = vmul.f32 %v2379, %v2394
      %v2401 = vmul.f32 %v2380, %v2398
      %v2402 = vmul.f32 %v2070, %v2399
      %v2403 = vmul.f32 %v2072, %v2400
      %v2404 = vmul.f32 %v2111, %v2401
      %v2405 = vmul.f32 %v2402, %v1431
      %v2406 = vmul.f32 %v2403, %v1435
      %v2407 = vmul.f32 %v2404, %v1439
      %v2408 = vld [vmem:[%s4] sm:$0xff]
      %2409 = vmatprep.subr.mxu0 %v2406
      %2410 = vmatpush1.msra.mxu0 %v2405
      %2411 = vmatprep.subr.mxu0 0.0
      %2412 = vmatpush1.msra.mxu0 0.0
      %2413 = vmatprep.subr.mxu0 0.0
      %2414 = vmatpush1.msra.mxu0 0.0
      %2415 = vmatprep.subr.mxu0 0.0
      %2416 = vmatpush1.msra.mxu0 0.0
      %2417 = vmatprep.subr.mxu0 0.0
      %2418 = vmatpush1.msra.mxu0 0.0
      %2419 = vmatprep.subr.mxu0 0.0
      %2420 = vmatpush1.msra.mxu0 0.0
      %2421 = vmatprep.subr.mxu0 0.0
      %2422 = vmatpush1.msra.mxu0 0.0
      %2423 = vmatprep.subr.mxu0 0.0
      %2424 = vmatpush1.msra.mxu0 0.0
      %2425 = vmatprep.subr.mxu0 0.0
      %2426 = vmatpush1.msra.mxu0 0.0
      %2427 = vmatprep.subr.mxu0 0.0
      %2428 = vmatpush1.msra.mxu0 0.0
      %2429 = vmatprep.subr.mxu0 0.0
      %2430 = vmatpush1.msra.mxu0 0.0
      %2431 = vmatprep.subr.mxu0 0.0
      %2432 = vmatpush1.msra.mxu0 0.0
      %2433 = vmatprep.subr.mxu0 0.0
      %2434 = vmatpush1.msra.mxu0 0.0
      %2435 = vmatprep.subr.mxu0 0.0
      %2436 = vmatpush1.msra.mxu0 0.0
      %2437 = vmatprep.subr.mxu0 0.0
      %2438 = vmatpush1.msra.mxu0 0.0
      %2439 = vmatprep.subr.mxu0 0.0
      %2440 = vmatpush1.msra.mxu0 0.0
      %2441 = vmatprep.subr.mxu0 0.0
      %2442 = vmatpush1.msra.mxu0 0.0
      %2443 = vmatprep.subr.mxu0 0.0
      %2444 = vmatpush1.msra.mxu0 0.0
      %2445 = vmatprep.subr.mxu0 0.0
      %2446 = vmatpush1.msra.mxu0 0.0
      %2447 = vmatprep.subr.mxu0 0.0
      %2448 = vmatpush1.msra.mxu0 0.0
      %2449 = vmatprep.subr.mxu0 0.0
      %2450 = vmatpush1.msra.mxu0 0.0
      %2451 = vmatprep.subr.mxu0 0.0
      %2452 = vmatpush1.msra.mxu0 0.0
      %2453 = vmatprep.subr.mxu0 0.0
      %2454 = vmatpush1.msra.mxu0 0.0
      %2455 = vmatprep.subr.mxu0 0.0
      %2456 = vmatpush1.msra.mxu0 0.0
      %2457 = vmatprep.subr.mxu0 0.0
      %2458 = vmatpush1.msra.mxu0 0.0
      %2459 = vmatprep.subr.mxu0 0.0
      %2460 = vmatpush1.msra.mxu0 0.0
      %2461 = vmatprep.subr.mxu0 0.0
      %2462 = vmatpush1.msra.mxu0 0.0
      %2463 = vmatprep.subr.mxu0 0.0
      %2464 = vmatpush1.msra.mxu0 0.0
      %2465 = vmatprep.subr.mxu0 0.0
      %2466 = vmatpush1.msra.mxu0 0.0
      %2467 = vmatprep.subr.mxu0 0.0
      %2468 = vmatpush1.msra.mxu0 0.0
      %2469 = vmatprep.subr.mxu0 0.0
      %2470 = vmatpush1.msra.mxu0 0.0
      %2471 = vmatprep.subr.mxu0 0.0
      %2472 = vmatpush1.msra.mxu0 0.0
      %2473 = vmatprep.mubr.f32.mxu0 0.0
      %2474 = vmatmul.mubr.f32.gmra.mrb[0].mxu0 %v1448
      %v2475 = vpop.f32.mrb[0].mxu0
      %v2476 = vadd.f32 0.0, %v2475
      %v2477 = vpop.f32.mrb[0].mxu0
      %v2478 = vadd.f32 0.0, %v2477
      %2479 = vdwg.mxu0
      %2480 = vmatprep.subr.mxu0 0.0
      %2481 = vmatpush1.msra.mxu0 %v2407
      %2482 = vmatprep.subr.mxu0 0.0
      %2483 = vmatpush1.msra.mxu0 0.0
      %2484 = vmatprep.subr.mxu0 0.0
      %2485 = vmatpush1.msra.mxu0 0.0
      %2486 = vmatprep.subr.mxu0 0.0
      %2487 = vmatpush1.msra.mxu0 0.0
      %2488 = vmatprep.subr.mxu0 0.0
      %2489 = vmatpush1.msra.mxu0 0.0
      %2490 = vmatprep.subr.mxu0 0.0
      %2491 = vmatpush1.msra.mxu0 0.0
      %2492 = vmatprep.subr.mxu0 0.0
      %2493 = vmatpush1.msra.mxu0 0.0
      %2494 = vmatprep.subr.mxu0 0.0
      %2495 = vmatpush1.msra.mxu0 0.0
      %2496 = vmatprep.subr.mxu0 0.0
      %2497 = vmatpush1.msra.mxu0 0.0
      %2498 = vmatprep.subr.mxu0 0.0
      %2499 = vmatpush1.msra.mxu0 0.0
      %2500 = vmatprep.subr.mxu0 0.0
      %2501 = vmatpush1.msra.mxu0 0.0
      %2502 = vmatprep.subr.mxu0 0.0
      %2503 = vmatpush1.msra.mxu0 0.0
      %2504 = vmatprep.subr.mxu0 0.0
      %2505 = vmatpush1.msra.mxu0 0.0
      %2506 = vmatprep.subr.mxu0 0.0
      %2507 = vmatpush1.msra.mxu0 0.0
      %2508 = vmatprep.subr.mxu0 0.0
      %2509 = vmatpush1.msra.mxu0 0.0
      %2510 = vmatprep.subr.mxu0 0.0
      %2511 = vmatpush1.msra.mxu0 0.0
      %2512 = vmatprep.subr.mxu0 0.0
      %2513 = vmatpush1.msra.mxu0 0.0
      %2514 = vmatprep.subr.mxu0 0.0
      %2515 = vmatpush1.msra.mxu0 0.0
      %2516 = vmatprep.subr.mxu0 0.0
      %2517 = vmatpush1.msra.mxu0 0.0
      %2518 = vmatprep.subr.mxu0 0.0
      %2519 = vmatpush1.msra.mxu0 0.0
      %2520 = vmatprep.subr.mxu0 0.0
      %2521 = vmatpush1.msra.mxu0 0.0
      %2522 = vmatprep.subr.mxu0 0.0
      %2523 = vmatpush1.msra.mxu0 0.0
      %2524 = vmatprep.subr.mxu0 0.0
      %2525 = vmatpush1.msra.mxu0 0.0
      %2526 = vmatprep.subr.mxu0 0.0
      %2527 = vmatpush1.msra.mxu0 0.0
      %2528 = vmatprep.subr.mxu0 0.0
      %2529 = vmatpush1.msra.mxu0 0.0
      %2530 = vmatprep.subr.mxu0 0.0
      %2531 = vmatpush1.msra.mxu0 0.0
      %2532 = vmatprep.subr.mxu0 0.0
      %2533 = vmatpush1.msra.mxu0 0.0
      %2534 = vmatprep.subr.mxu0 0.0
      %2535 = vmatpush1.msra.mxu0 0.0
      %2536 = vmatprep.subr.mxu0 0.0
      %2537 = vmatpush1.msra.mxu0 0.0
      %2538 = vmatprep.subr.mxu0 0.0
      %2539 = vmatpush1.msra.mxu0 0.0
      %2540 = vmatprep.subr.mxu0 0.0
      %2541 = vmatpush1.msra.mxu0 0.0
      %2542 = vmatprep.subr.mxu0 0.0
      %2543 = vmatpush1.msra.mxu0 0.0
      %2544 = vmatprep.mubr.f32.mxu0 0.0
      %2545 = vmatmul.mubr.f32.gmra.mrb[0].mxu0 %v1448
      %v2546 = vpop.f32.mrb[0].mxu0
      %v2547 = vadd.f32 0.0, %v2546
      %v2548 = vpop.f32.mrb[0].mxu0
      %2549 = vdwg.mxu0
      %v2550 = vmul.f32 %v2476, 0.125
      %v2551 = vmul.f32 %v2478, 0.125
      %v2552 = vmul.f32 %v2547, 0.125
      %v2553 = vmul.f32 %v2405, %v2405
      %v2554 = vmul.f32 %v2406, %v2406
      %v2555 = vmul.f32 %v2407, %v2407
      %2556 = vmatprep.subr.mxu0 %v2554
      %2557 = vmatpush1.msra.mxu0 %v2553
      %2558 = vmatprep.subr.mxu0 0.0
      %2559 = vmatpush1.msra.mxu0 0.0
      %2560 = vmatprep.subr.mxu0 0.0
      %2561 = vmatpush1.msra.mxu0 0.0
      %2562 = vmatprep.subr.mxu0 0.0
      %2563 = vmatpush1.msra.mxu0 0.0
      %2564 = vmatprep.subr.mxu0 0.0
      %2565 = vmatpush1.msra.mxu0 0.0
      %2566 = vmatprep.subr.mxu0 0.0
      %2567 = vmatpush1.msra.mxu0 0.0
      %2568 = vmatprep.subr.mxu0 0.0
      %2569 = vmatpush1.msra.mxu0 0.0
      %2570 = vmatprep.subr.mxu0 0.0
      %2571 = vmatpush1.msra.mxu0 0.0
      %2572 = vmatprep.subr.mxu0 0.0
      %2573 = vmatpush1.msra.mxu0 0.0
      %2574 = vmatprep.subr.mxu0 0.0
      %2575 = vmatpush1.msra.mxu0 0.0
      %2576 = vmatprep.subr.mxu0 0.0
      %2577 = vmatpush1.msra.mxu0 0.0
      %2578 = vmatprep.subr.mxu0 0.0
      %2579 = vmatpush1.msra.mxu0 0.0
      %2580 = vmatprep.subr.mxu0 0.0
      %2581 = vmatpush1.msra.mxu0 0.0
      %2582 = vmatprep.subr.mxu0 0.0
      %2583 = vmatpush1.msra.mxu0 0.0
      %2584 = vmatprep.subr.mxu0 0.0
      %2585 = vmatpush1.msra.mxu0 0.0
      %2586 = vmatprep.subr.mxu0 0.0
      %2587 = vmatpush1.msra.mxu0 0.0
      %2588 = vmatprep.subr.mxu0 0.0
      %2589 = vmatpush1.msra.mxu0 0.0
      %2590 = vmatprep.subr.mxu0 0.0
      %2591 = vmatpush1.msra.mxu0 0.0
      %2592 = vmatprep.subr.mxu0 0.0
      %2593 = vmatpush1.msra.mxu0 0.0
      %2594 = vmatprep.subr.mxu0 0.0
      %2595 = vmatpush1.msra.mxu0 0.0
      %2596 = vmatprep.subr.mxu0 0.0
      %2597 = vmatpush1.msra.mxu0 0.0
      %2598 = vmatprep.subr.mxu0 0.0
      %2599 = vmatpush1.msra.mxu0 0.0
      %2600 = vmatprep.subr.mxu0 0.0
      %2601 = vmatpush1.msra.mxu0 0.0
      %2602 = vmatprep.subr.mxu0 0.0
      %2603 = vmatpush1.msra.mxu0 0.0
      %2604 = vmatprep.subr.mxu0 0.0
      %2605 = vmatpush1.msra.mxu0 0.0
      %2606 = vmatprep.subr.mxu0 0.0
      %2607 = vmatpush1.msra.mxu0 0.0
      %2608 = vmatprep.subr.mxu0 0.0
      %2609 = vmatpush1.msra.mxu0 0.0
      %2610 = vmatprep.subr.mxu0 0.0
      %2611 = vmatpush1.msra.mxu0 0.0
      %2612 = vmatprep.subr.mxu0 0.0
      %2613 = vmatpush1.msra.mxu0 0.0
      %2614 = vmatprep.subr.mxu0 0.0
      %2615 = vmatpush1.msra.mxu0 0.0
      %2616 = vmatprep.subr.mxu0 0.0
      %2617 = vmatpush1.msra.mxu0 0.0
      %2618 = vmatprep.subr.mxu0 0.0
      %2619 = vmatpush1.msra.mxu0 0.0
      %2620 = vmatprep.mubr.f32.mxu0 0.0
      %2621 = vmatmul.mubr.f32.gmra.mrb[0].mxu0 %v1448
      %v2622 = vpop.f32.mrb[0].mxu0
      %v2623 = vadd.f32 0.0, %v2622
      %v2624 = vpop.f32.mrb[0].mxu0
      %v2625 = vadd.f32 0.0, %v2624
      %2626 = vdwg.mxu0
      %2627 = vmatprep.subr.mxu0 0.0
      %2628 = vmatpush1.msra.mxu0 %v2555
      %2629 = vmatprep.subr.mxu0 0.0
      %2630 = vmatpush1.msra.mxu0 0.0
      %2631 = vmatprep.subr.mxu0 0.0
      %2632 = vmatpush1.msra.mxu0 0.0
      %2633 = vmatprep.subr.mxu0 0.0
      %2634 = vmatpush1.msra.mxu0 0.0
      %2635 = vmatprep.subr.mxu0 0.0
      %2636 = vmatpush1.msra.mxu0 0.0
      %2637 = vmatprep.subr.mxu0 0.0
      %2638 = vmatpush1.msra.mxu0 0.0
      %2639 = vmatprep.subr.mxu0 0.0
      %2640 = vmatpush1.msra.mxu0 0.0
      %2641 = vmatprep.subr.mxu0 0.0
      %2642 = vmatpush1.msra.mxu0 0.0
      %2643 = vmatprep.subr.mxu0 0.0
      %2644 = vmatpush1.msra.mxu0 0.0
      %2645 = vmatprep.subr.mxu0 0.0
      %2646 = vmatpush1.msra.mxu0 0.0
      %2647 = vmatprep.subr.mxu0 0.0
      %2648 = vmatpush1.msra.mxu0 0.0
      %2649 = vmatprep.subr.mxu0 0.0
      %2650 = vmatpush1.msra.mxu0 0.0
      %2651 = vmatprep.subr.mxu0 0.0
      %2652 = vmatpush1.msra.mxu0 0.0
      %2653 = vmatprep.subr.mxu0 0.0
      %2654 = vmatpush1.msra.mxu0 0.0
      %2655 = vmatprep.subr.mxu0 0.0
      %2656 = vmatpush1.msra.mxu0 0.0
      %2657 = vmatprep.subr.mxu0 0.0
      %2658 = vmatpush1.msra.mxu0 0.0
      %2659 = vmatprep.subr.mxu0 0.0
      %2660 = vmatpush1.msra.mxu0 0.0
      %2661 = vmatprep.subr.mxu0 0.0
      %2662 = vmatpush1.msra.mxu0 0.0
      %2663 = vmatprep.subr.mxu0 0.0
      %2664 = vmatpush1.msra.mxu0 0.0
      %2665 = vmatprep.subr.mxu0 0.0
      %2666 = vmatpush1.msra.mxu0 0.0
      %2667 = vmatprep.subr.mxu0 0.0
      %2668 = vmatpush1.msra.mxu0 0.0
      %2669 = vmatprep.subr.mxu0 0.0
      %2670 = vmatpush1.msra.mxu0 0.0
      %2671 = vmatprep.subr.mxu0 0.0
      %2672 = vmatpush1.msra.mxu0 0.0
      %2673 = vmatprep.subr.mxu0 0.0
      %2674 = vmatpush1.msra.mxu0 0.0
      %2675 = vmatprep.subr.mxu0 0.0
      %2676 = vmatpush1.msra.mxu0 0.0
      %2677 = vmatprep.subr.mxu0 0.0
      %2678 = vmatpush1.msra.mxu0 0.0
      %2679 = vmatprep.subr.mxu0 0.0
      %2680 = vmatpush1.msra.mxu0 0.0
      %2681 = vmatprep.subr.mxu0 0.0
      %2682 = vmatpush1.msra.mxu0 0.0
      %2683 = vmatprep.subr.mxu0 0.0
      %2684 = vmatpush1.msra.mxu0 0.0
      %2685 = vmatprep.subr.mxu0 0.0
      %2686 = vmatpush1.msra.mxu0 0.0
      %2687 = vmatprep.subr.mxu0 0.0
      %2688 = vmatpush1.msra.mxu0 0.0
      %2689 = vmatprep.subr.mxu0 0.0
      %2690 = vmatpush1.msra.mxu0 0.0
      %2691 = vmatprep.mubr.f32.mxu0 0.0
      %2692 = vmatmul.mubr.f32.gmra.mrb[0].mxu0 %v1448
      %v2693 = vpop.f32.mrb[0].mxu0
      %v2694 = vadd.f32 0.0, %v2693
      %v2695 = vpop.f32.mrb[0].mxu0
      %2696 = vdwg.mxu0
      %v2697 = vmul.f32 %v2623, 0.125
      %v2698 = vmul.f32 %v2625, 0.125
      %v2699 = vmul.f32 %v2694, 0.125
      %v2700 = vmul.f32 %v2550, %v2550
      %v2701 = vmul.f32 %v2551, %v2551
      %v2702 = vmul.f32 %v2552, %v2552
      %v2703 = vsub.f32 %v2697, %v2700
      %v2704 = vsub.f32 %v2698, %v2701
      %v2705 = vsub.f32 %v2699, %v2702
      %v2706 = vmax.f32 %v2703, 0.0
      %v2707 = vmax.f32 %v2704, 0.0
      %v2708 = vmax.f32 %v2705, 0.0
      %v2709 = vlaneseq
      %v2710 = vshrl.u32 %v2709, 7
      %v2711 = vsub.s32 0, %v2710
      %v2712 = vrot.slane %v2550, %v2711
      %v2713 = vlaneseq
      %v2714 = vshrl.u32 %v2713, 7
      %v2715 = vsub.s32 0, %v2714
      %v2716 = vrot.slane %v2551, %v2715
      %v2717 = vlaneseq
      %v2718 = vshrl.u32 %v2717, 7
      %v2719 = vsub.s32 0, %v2718
      %v2720 = vrot.slane %v2552, %v2719
      %v2721 = vsub.f32 %v2405, %v2712
      %v2722 = vsub.f32 %v2406, %v2716
      %v2723 = vsub.f32 %v2407, %v2720
      %v2724 = vadd.f32 %v2706, 1e-05
      %v2725 = vadd.f32 %v2707, 1e-05
      %v2726 = vadd.f32 %v2708, 1e-05
      %v2727 = vrsqrt.pop %v2724
      %v2728 = vrsqrt.pop %v2725
      %v2729 = vrsqrt.pop %v2726
      %v2730 = vlaneseq
      %v2731 = vshrl.u32 %v2730, 7
      %v2732 = vsub.s32 0, %v2731
      %v2733 = vrot.slane %v2727, %v2732
      %v2734 = vlaneseq
      %v2735 = vshrl.u32 %v2734, 7
      %v2736 = vsub.s32 0, %v2735
      %v2737 = vrot.slane %v2728, %v2736
      %v2738 = vlaneseq
      %v2739 = vshrl.u32 %v2738, 7
      %v2740 = vsub.s32 0, %v2739
      %v2741 = vrot.slane %v2729, %v2740
      %v2742 = vmul.f32 %v2721, %v2733
      %v2743 = vmul.f32 %v2722, %v2737
      %v2744 = vmul.f32 %v2723, %v2741
      %2746 = vset.pattern.permute.xlu0 0
      %2747 = vperm.xlu0 %2746, %v2408
      %v2748 = vpop.permute.xlu0 %2747
      %v2750 = vmul.f32 %v2742, %v2748
      %v2751 = vmul.f32 %v2743, %v2748
      %v2752 = vmul.f32 %v2744, %v2748
      %2756 = vrot.lane.b32.xlu0 %v2750, 19
      %v2757 = vpop.permute.xlu0 %2756
      %2758 = vrot.lane.b32.xlu0 %v2751, 19
      %v2759 = vpop.permute.xlu0 %2758
      %2760 = vrot.lane.b32.xlu0 %v2752, 19
      %v2761 = vpop.permute.xlu0 %2760
      %v2762 = vsel %vm1803, %v2757, %v2759
      %v2763 = vsel %vm1803, %v2759, %v2761
      %2767 = vst.msk [vmem:[#allocation4] sm:$0xff] %vm1809, %v2757
      %2768 = vst [vmem:[#allocation4 + $0x8] sm:$0xff] %v2762
      %2769 = vst.msk [vmem:[#allocation4 + $0x10] sm:$0xff] %vm1812, %v2763
      %v2770 = vld [vmem:[#allocation4] sm:$0xff]
      %v2771 = vld [vmem:[#allocation4 + $0x8] sm:$0xff]
      %v2772 = vld [vmem:[#allocation4 + $0x10] sm:$0xff]
      %2773 = vst [vmem:[#allocation6] sm:$0xff] %v2770
      %2774 = vst [vmem:[#allocation6 + $0x8] sm:$0xff] %v2771
      %2775 = vst.msk [vmem:[#allocation6 + $0x10] sm:$0xff] %vm776, %v2772
      %v2776 = vld [vmem:[#allocation4] sm:$0xff]
      %v2777 = vld [vmem:[#allocation4 + $0x8] sm:$0xff]
      %v2778 = vld [vmem:[#allocation4 + $0x10] sm:$0xff]
      %2782 = vrot.lane.b32.xlu0 %v2776, 127
      %v2783 = vpop.permute.xlu0 %2782
      %2784 = vrot.lane.b32.xlu0 %v2777, 127
      %v2785 = vpop.permute.xlu0 %2784
      %2786 = vrot.lane.b32.xlu0 %v2778, 127
      %v2787 = vpop.permute.xlu0 %2786
      %v2788 = vsel %vm830, %v2783, %v2785
      %v2789 = vsel %vm830, %v2785, %v2787
      %2793 = vst [vmem:[#allocation6 + $0x18] sm:$0xff] %v2788
      %2794 = vst [vmem:[#allocation6 + $0x20] sm:$0xff] %v2789
      %2795 = vst.msk [vmem:[#allocation6 + $0x28] sm:$0xff] %vm776, %v2787
      %v2796 = vld [vmem:[#allocation4] sm:$0xff]
      %v2797 = vld [vmem:[#allocation4 + $0x8] sm:$0xff]
      %v2798 = vld [vmem:[#allocation4 + $0x10] sm:$0xff]
      %2802 = vrot.lane.b32.xlu0 %v2796, 126
      %v2803 = vpop.permute.xlu0 %2802
      %2804 = vrot.lane.b32.xlu0 %v2797, 126
      %v2805 = vpop.permute.xlu0 %2804
      %2806 = vrot.lane.b32.xlu0 %v2798, 126
      %v2807 = vpop.permute.xlu0 %2806
      %v2808 = vsel %vm851, %v2803, %v2805
      %v2809 = vsel %vm851, %v2805, %v2807
      %2813 = vst [vmem:[#allocation6 + $0x30] sm:$0xff] %v2808
      %2814 = vst [vmem:[#allocation6 + $0x38] sm:$0xff] %v2809
      %2815 = vst.msk [vmem:[#allocation6 + $0x40] sm:$0xff] %vm776, %v2807
      %v2816 = vld [vmem:[#allocation4] sm:$0xff]
      %v2817 = vld [vmem:[#allocation4 + $0x8] sm:$0xff]
      %v2818 = vld [vmem:[#allocation4 + $0x10] sm:$0xff]
      %2822 = vrot.lane.b32.xlu0 %v2816, 110
      %v2823 = vpop.permute.xlu0 %2822
      %2824 = vrot.lane.b32.xlu0 %v2817, 110
      %v2825 = vpop.permute.xlu0 %2824
      %2826 = vrot.lane.b32.xlu0 %v2818, 110
      %v2827 = vpop.permute.xlu0 %2826
      %v2828 = vsel %vm872, %v2823, %v2825
      %v2829 = vsel %vm872, %v2825, %v2827
      %2833 = vst [vmem:[#allocation6 + $0x48] sm:$0xff] %v2828
      %2834 = vst [vmem:[#allocation6 + $0x50] sm:$0xff] %v2829
      %2835 = vst.msk [vmem:[#allocation6 + $0x58] sm:$0xff] %vm776, %v2827
      %v2836 = vld [vmem:[#allocation4] sm:$0xff]
      %v2837 = vld [vmem:[#allocation4 + $0x8] sm:$0xff]
      %v2838 = vld [vmem:[#allocation4 + $0x10] sm:$0xff]
      %2842 = vrot.lane.b32.xlu0 %v2836, 109
      %v2843 = vpop.permute.xlu0 %2842
      %2844 = vrot.lane.b32.xlu0 %v2837, 109
      %v2845 = vpop.permute.xlu0 %2844
      %2846 = vrot.lane.b32.xlu0 %v2838, 109
      %v2847 = vpop.permute.xlu0 %2846
      %v2848 = vsel %vm893, %v2843, %v2845
      %v2849 = vsel %vm893, %v2845, %v2847
      %2853 = vst [vmem:[#allocation6 + $0x60] sm:$0xff] %v2848
      %2854 = vst [vmem:[#allocation6 + $0x68] sm:$0xff] %v2849
      %2855 = vst.msk [vmem:[#allocation6 + $0x70] sm:$0xff] %vm776, %v2847
      %v2856 = vld [vmem:[#allocation4] sm:$0xff]
      %v2857 = vld [vmem:[#allocation4 + $0x8] sm:$0xff]
      %v2858 = vld [vmem:[#allocation4 + $0x10] sm:$0xff]
      %2862 = vrot.lane.b32.xlu0 %v2856, 108
      %v2863 = vpop.permute.xlu0 %2862
      %2864 = vrot.lane.b32.xlu0 %v2857, 108
      %v2865 = vpop.permute.xlu0 %2864
      %2866 = vrot.lane.b32.xlu0 %v2858, 108
      %v2867 = vpop.permute.xlu0 %2866
      %v2868 = vsel %vm914, %v2863, %v2865
      %v2869 = vsel %vm914, %v2865, %v2867
      %2873 = vst [vmem:[#allocation6 + $0x78] sm:$0xff] %v2868
      %2874 = vst [vmem:[#allocation6 + $0x80] sm:$0xff] %v2869
      %2875 = vst.msk [vmem:[#allocation6 + $0x88] sm:$0xff] %vm776, %v2867
      %v2876 = vld [vmem:[#allocation4] sm:$0xff]
      %v2877 = vld [vmem:[#allocation4 + $0x8] sm:$0xff]
      %v2878 = vld [vmem:[#allocation4 + $0x10] sm:$0xff]
      %2882 = vrot.lane.b32.xlu0 %v2876, 92
      %v2883 = vpop.permute.xlu0 %2882
      %2884 = vrot.lane.b32.xlu0 %v2877, 92
      %v2885 = vpop.permute.xlu0 %2884
      %2886 = vrot.lane.b32.xlu0 %v2878, 92
      %v2887 = vpop.permute.xlu0 %2886
      %v2888 = vsel %vm935, %v2883, %v2885
      %v2889 = vsel %vm935, %v2885, %v2887
      %2893 = vst [vmem:[#allocation6 + $0x90] sm:$0xff] %v2888
      %2894 = vst [vmem:[#allocation6 + $0x98] sm:$0xff] %v2889
      %2895 = vst.msk [vmem:[#allocation6 + $0xa0] sm:$0xff] %vm776, %v2887
      %v2896 = vld [vmem:[#allocation4] sm:$0xff]
      %v2897 = vld [vmem:[#allocation4 + $0x8] sm:$0xff]
      %v2898 = vld [vmem:[#allocation4 + $0x10] sm:$0xff]
      %2902 = vrot.lane.b32.xlu0 %v2896, 91
      %v2903 = vpop.permute.xlu0 %2902
      %2904 = vrot.lane.b32.xlu0 %v2897, 91
      %v2905 = vpop.permute.xlu0 %2904
      %2906 = vrot.lane.b32.xlu0 %v2898, 91
      %v2907 = vpop.permute.xlu0 %2906
      %v2908 = vsel %vm956, %v2903, %v2905
      %v2909 = vsel %vm956, %v2905, %v2907
      %2913 = vst [vmem:[#allocation6 + $0xa8] sm:$0xff] %v2908
      %2914 = vst [vmem:[#allocation6 + $0xb0] sm:$0xff] %v2909
      %2915 = vst.msk [vmem:[#allocation6 + $0xb8] sm:$0xff] %vm776, %v2907
      %v2916 = vld [vmem:[#allocation4] sm:$0xff]
      %v2917 = vld [vmem:[#allocation4 + $0x8] sm:$0xff]
      %v2918 = vld [vmem:[#allocation4 + $0x10] sm:$0xff]
      %2922 = vrot.lane.b32.xlu0 %v2916, 90
      %v2923 = vpop.permute.xlu0 %2922
      %2924 = vrot.lane.b32.xlu0 %v2917, 90
      %v2925 = vpop.permute.xlu0 %2924
      %2926 = vrot.lane.b32.xlu0 %v2918, 90
      %v2927 = vpop.permute.xlu0 %2926
      %v2928 = vsel %vm977, %v2923, %v2925
      %v2929 = vsel %vm977, %v2925, %v2927
      %2933 = vst [vmem:[#allocation6 + $0xc0] sm:$0xff] %v2928
      %2934 = vst [vmem:[#allocation6 + $0xc8] sm:$0xff] %v2929
      %2935 = vst.msk [vmem:[#allocation6 + $0xd0] sm:$0xff] %vm776, %v2927
      %v2936 = vld [vmem:[%s5] sm:$0xf]
      %v2937 = vld [vmem:[#allocation6] sm:$0xff]
      %v2938 = vld [vmem:[#allocation6 + $0x8] sm:$0xff]
      %v2939 = vld [vmem:[#allocation6 + $0x10] sm:$0xff]
      %v2940 = vld [vmem:[#allocation6 + $0x18] sm:$0xff]
      %v2941 = vld [vmem:[#allocation6 + $0x20] sm:$0xff]
      %v2942 = vld [vmem:[#allocation6 + $0x28] sm:$0xff]
      %v2943 = vld [vmem:[#allocation6 + $0x30] sm:$0xff]
      %v2944 = vld [vmem:[#allocation6 + $0x38] sm:$0xff]
      %v2945 = vld [vmem:[#allocation6 + $0x40] sm:$0xff]
      %v2946 = vld [vmem:[#allocation6 + $0x48] sm:$0xff]
      %v2947 = vld [vmem:[#allocation6 + $0x50] sm:$0xff]
      %v2948 = vld [vmem:[#allocation6 + $0x58] sm:$0xff]
      %v2949 = vld [vmem:[#allocation6 + $0x60] sm:$0xff]
      %v2950 = vld [vmem:[#allocation6 + $0x68] sm:$0xff]
      %v2951 = vld [vmem:[#allocation6 + $0x70] sm:$0xff]
      %v2952 = vld [vmem:[#allocation6 + $0x78] sm:$0xff]
      %v2953 = vld [vmem:[#allocation6 + $0x80] sm:$0xff]
      %v2954 = vld [vmem:[#allocation6 + $0x88] sm:$0xff]
      %v2955 = vld [vmem:[#allocation6 + $0x90] sm:$0xff]
      %v2956 = vld [vmem:[#allocation6 + $0x98] sm:$0xff]
      %v2957 = vld [vmem:[#allocation6 + $0xa0] sm:$0xff]
      %v2958 = vld [vmem:[#allocation6 + $0xa8] sm:$0xff]
      %v2959 = vld [vmem:[#allocation6 + $0xb0] sm:$0xff]
      %v2960 = vld [vmem:[#allocation6 + $0xb8] sm:$0xff]
      %v2961 = vld [vmem:[#allocation6 + $0xc0] sm:$0xff]
      %v2962 = vld [vmem:[#allocation6 + $0xc8] sm:$0xff]
      %v2963 = vld [vmem:[#allocation6 + $0xd0] sm:$0xff]
      %v2964 = vpack.c.bf16 %v2940, %v2937
      %v2965 = vpack.c.bf16 %v2941, %v2938
      %v2966 = vpack.c.bf16 %v2942, %v2939
      %v2967 = vpack.c.bf16 %v2946, %v2943
      %v2968 = vpack.c.bf16 %v2947, %v2944
      %v2969 = vpack.c.bf16 %v2948, %v2945
      %v2970 = vpack.c.bf16 %v2952, %v2949
      %v2971 = vpack.c.bf16 %v2953, %v2950
      %v2972 = vpack.c.bf16 %v2954, %v2951
      %v2973 = vpack.c.bf16 %v2958, %v2955
      %v2974 = vpack.c.bf16 %v2959, %v2956
      %v2975 = vpack.c.bf16 %v2960, %v2957
      %v2976 = vpack.c.bf16 %v2961, %v2961
      %v2977 = vpack.c.bf16 %v2962, %v2962
      %v2978 = vpack.c.bf16 %v2963, %v2963
      %v2980 = vsel %vm1029, %v2936, 0
      %v2983 = vsel %vm1033, %v2976, 0
      %v2986 = vsel %vm1033, %v2977, 0
      %v2989 = vsel %vm1033, %v2978, 0
      %2991 = vmatprep.subr.bf16.mxu0 %v2965
      %2992 = vmatpush1.bf16.msra.mxu0 %v2964
      %2993 = vmatprep.subr.bf16.mxu0 %v2968
      %2994 = vmatpush1.bf16.msra.mxu0 %v2967
      %2995 = vmatprep.subr.bf16.mxu0 %v2971
      %2996 = vmatpush1.bf16.msra.mxu0 %v2970
      %2997 = vmatprep.subr.bf16.mxu0 %v2974
      %2998 = vmatpush1.bf16.msra.mxu0 %v2973
      %2999 = vmatprep.subr.bf16.mxu0 %v2986
      %3000 = vmatpush1.bf16.msra.mxu0 %v2983
      %3001 = vmatprep.subr.bf16.mxu0 0
      %3002 = vmatpush1.bf16.msra.mxu0 0
      %3003 = vmatprep.subr.bf16.mxu0 0
      %3004 = vmatpush1.bf16.msra.mxu0 0
      %3005 = vmatprep.subr.bf16.mxu0 0
      %3006 = vmatpush1.bf16.msra.mxu0 0
      %3007 = vmatprep.subr.bf16.mxu0 0
      %3008 = vmatpush1.bf16.msra.mxu0 0
      %3009 = vmatprep.subr.bf16.mxu0 0
      %3010 = vmatpush1.bf16.msra.mxu0 0
      %3011 = vmatprep.subr.bf16.mxu0 0
      %3012 = vmatpush1.bf16.msra.mxu0 0
      %3013 = vmatprep.subr.bf16.mxu0 0
      %3014 = vmatpush1.bf16.msra.mxu0 0
      %3015 = vmatprep.subr.bf16.mxu0 0
      %3016 = vmatpush1.bf16.msra.mxu0 0
      %3017 = vmatprep.subr.bf16.mxu0 0
      %3018 = vmatpush1.bf16.msra.mxu0 0
      %3019 = vmatprep.subr.bf16.mxu0 0
      %3020 = vmatpush1.bf16.msra.mxu0 0
      %3021 = vmatprep.subr.bf16.mxu0 0
      %3022 = vmatpush1.bf16.msra.mxu0 0
      %3023 = vmatprep.mubr.bf16.mxu0 0
      %3024 = vmatmul.mubr.bf16.gmra.mrb[0].mxu0 %v2980
      %v3025 = vpop.f32.mrb[0].mxu0
      %v3026 = vadd.f32 0.0, %v3025
      %v3027 = vpop.f32.mrb[0].mxu0
      %v3028 = vadd.f32 0.0, %v3027
      %v3029 = vpop.f32.mrb[0].mxu0
      %v3030 = vpop.f32.mrb[0].mxu0
      %3031 = vdwg.mxu0
      %3032 = vmatprep.subr.bf16.mxu0 0
      %3033 = vmatpush1.bf16.msra.mxu0 %v2966
      %3034 = vmatprep.subr.bf16.mxu0 0
      %3035 = vmatpush1.bf16.msra.mxu0 %v2969
      %3036 = vmatprep.subr.bf16.mxu0 0
      %3037 = vmatpush1.bf16.msra.mxu0 %v2972
      %3038 = vmatprep.subr.bf16.mxu0 0
      %3039 = vmatpush1.bf16.msra.mxu0 %v2975
      %3040 = vmatprep.subr.bf16.mxu0 0
      %3041 = vmatpush1.bf16.msra.mxu0 %v2989
      %3042 = vmatprep.subr.bf16.mxu0 0
      %3043 = vmatpush1.bf16.msra.mxu0 0
      %3044 = vmatprep.subr.bf16.mxu0 0
      %3045 = vmatpush1.bf16.msra.mxu0 0
      %3046 = vmatprep.subr.bf16.mxu0 0
      %3047 = vmatpush1.bf16.msra.mxu0 0
      %3048 = vmatprep.subr.bf16.mxu0 0
      %3049 = vmatpush1.bf16.msra.mxu0 0
      %3050 = vmatprep.subr.bf16.mxu0 0
      %3051 = vmatpush1.bf16.msra.mxu0 0
      %3052 = vmatprep.subr.bf16.mxu0 0
      %3053 = vmatpush1.bf16.msra.mxu0 0
      %3054 = vmatprep.subr.bf16.mxu0 0
      %3055 = vmatpush1.bf16.msra.mxu0 0
      %3056 = vmatprep.subr.bf16.mxu0 0
      %3057 = vmatpush1.bf16.msra.mxu0 0
      %3058 = vmatprep.subr.bf16.mxu0 0
      %3059 = vmatpush1.bf16.msra.mxu0 0
      %3060 = vmatprep.subr.bf16.mxu0 0
      %3061 = vmatpush1.bf16.msra.mxu0 0
      %3062 = vmatprep.subr.bf16.mxu0 0
      %3063 = vmatpush1.bf16.msra.mxu0 0
      %3064 = vmatprep.mubr.bf16.mxu0 0
      %3065 = vmatmul.mubr.bf16.gmra.mrb[0].mxu0 %v2980
      %v3066 = vpop.f32.mrb[0].mxu0
      %v3067 = vadd.f32 0.0, %v3066
      %v3068 = vpop.f32.mrb[0].mxu0
      %v3069 = vpop.f32.mrb[0].mxu0
      %v3070 = vpop.f32.mrb[0].mxu0
      %3071 = vdwg.mxu0
      %v3072 = vld [vmem:[#allocation4] sm:$0xff]
      %v3073 = vld [vmem:[#allocation4 + $0x8] sm:$0xff]
      %v3074 = vld [vmem:[#allocation4 + $0x10] sm:$0xff]
      %v3075 = vmul.f32 %v3072, %v3072
      %v3076 = vmul.f32 %v3073, %v3073
      %v3077 = vmul.f32 %v3074, %v3074
      %3078 = vmatprep.subr.mxu0 %v3076
      %3079 = vmatpush1.msra.mxu0 %v3075
      %3080 = vmatprep.subr.mxu0 0.0
      %3081 = vmatpush1.msra.mxu0 0.0
      %3082 = vmatprep.subr.mxu0 0.0
      %3083 = vmatpush1.msra.mxu0 0.0
      %3084 = vmatprep.subr.mxu0 0.0
      %3085 = vmatpush1.msra.mxu0 0.0
      %3086 = vmatprep.subr.mxu0 0.0
      %3087 = vmatpush1.msra.mxu0 0.0
      %3088 = vmatprep.subr.mxu0 0.0
      %3089 = vmatpush1.msra.mxu0 0.0
      %3090 = vmatprep.subr.mxu0 0.0
      %3091 = vmatpush1.msra.mxu0 0.0
      %3092 = vmatprep.subr.mxu0 0.0
      %3093 = vmatpush1.msra.mxu0 0.0
      %3094 = vmatprep.subr.mxu0 0.0
      %3095 = vmatpush1.msra.mxu0 0.0
      %3096 = vmatprep.subr.mxu0 0.0
      %3097 = vmatpush1.msra.mxu0 0.0
      %3098 = vmatprep.subr.mxu0 0.0
      %3099 = vmatpush1.msra.mxu0 0.0
      %3100 = vmatprep.subr.mxu0 0.0
      %3101 = vmatpush1.msra.mxu0 0.0
      %3102 = vmatprep.subr.mxu0 0.0
      %3103 = vmatpush1.msra.mxu0 0.0
      %3104 = vmatprep.subr.mxu0 0.0
      %3105 = vmatpush1.msra.mxu0 0.0
      %3106 = vmatprep.subr.mxu0 0.0
      %3107 = vmatpush1.msra.mxu0 0.0
      %3108 = vmatprep.subr.mxu0 0.0
      %3109 = vmatpush1.msra.mxu0 0.0
      %3110 = vmatprep.subr.mxu0 0.0
      %3111 = vmatpush1.msra.mxu0 0.0
      %3112 = vmatprep.subr.mxu0 0.0
      %3113 = vmatpush1.msra.mxu0 0.0
      %3114 = vmatprep.subr.mxu0 0.0
      %3115 = vmatpush1.msra.mxu0 0.0
      %3116 = vmatprep.subr.mxu0 0.0
      %3117 = vmatpush1.msra.mxu0 0.0
      %3118 = vmatprep.subr.mxu0 0.0
      %3119 = vmatpush1.msra.mxu0 0.0
      %3120 = vmatprep.subr.mxu0 0.0
      %3121 = vmatpush1.msra.mxu0 0.0
      %3122 = vmatprep.subr.mxu0 0.0
      %3123 = vmatpush1.msra.mxu0 0.0
      %3124 = vmatprep.subr.mxu0 0.0
      %3125 = vmatpush1.msra.mxu0 0.0
      %3126 = vmatprep.subr.mxu0 0.0
      %3127 = vmatpush1.msra.mxu0 0.0
      %3128 = vmatprep.subr.mxu0 0.0
      %3129 = vmatpush1.msra.mxu0 0.0
      %3130 = vmatprep.subr.mxu0 0.0
      %3131 = vmatpush1.msra.mxu0 0.0
      %3132 = vmatprep.subr.mxu0 0.0
      %3133 = vmatpush1.msra.mxu0 0.0
      %3134 = vmatprep.subr.mxu0 0.0
      %3135 = vmatpush1.msra.mxu0 0.0
      %3136 = vmatprep.subr.mxu0 0.0
      %3137 = vmatpush1.msra.mxu0 0.0
      %3138 = vmatprep.subr.mxu0 0.0
      %3139 = vmatpush1.msra.mxu0 0.0
      %3140 = vmatprep.subr.mxu0 0.0
      %3141 = vmatpush1.msra.mxu0 0.0
      %3142 = vmatprep.mubr.f32.mxu0 0.0
      %3143 = vmatmul.mubr.f32.gmra.mrb[0].mxu0 %v1448
      %v3144 = vpop.f32.mrb[0].mxu0
      %v3145 = vadd.f32 0.0, %v3144
      %v3146 = vpop.f32.mrb[0].mxu0
      %v3147 = vadd.f32 0.0, %v3146
      %3148 = vdwg.mxu0
      %3149 = vmatprep.subr.mxu0 0.0
      %3150 = vmatpush1.msra.mxu0 %v3077
      %3151 = vmatprep.subr.mxu0 0.0
      %3152 = vmatpush1.msra.mxu0 0.0
      %3153 = vmatprep.subr.mxu0 0.0
      %3154 = vmatpush1.msra.mxu0 0.0
      %3155 = vmatprep.subr.mxu0 0.0
      %3156 = vmatpush1.msra.mxu0 0.0
      %3157 = vmatprep.subr.mxu0 0.0
      %3158 = vmatpush1.msra.mxu0 0.0
      %3159 = vmatprep.subr.mxu0 0.0
      %3160 = vmatpush1.msra.mxu0 0.0
      %3161 = vmatprep.subr.mxu0 0.0
      %3162 = vmatpush1.msra.mxu0 0.0
      %3163 = vmatprep.subr.mxu0 0.0
      %3164 = vmatpush1.msra.mxu0 0.0
      %3165 = vmatprep.subr.mxu0 0.0
      %3166 = vmatpush1.msra.mxu0 0.0
      %3167 = vmatprep.subr.mxu0 0.0
      %3168 = vmatpush1.msra.mxu0 0.0
      %3169 = vmatprep.subr.mxu0 0.0
      %3170 = vmatpush1.msra.mxu0 0.0
      %3171 = vmatprep.subr.mxu0 0.0
      %3172 = vmatpush1.msra.mxu0 0.0
      %3173 = vmatprep.subr.mxu0 0.0
      %3174 = vmatpush1.msra.mxu0 0.0
      %3175 = vmatprep.subr.mxu0 0.0
      %3176 = vmatpush1.msra.mxu0 0.0
      %3177 = vmatprep.subr.mxu0 0.0
      %3178 = vmatpush1.msra.mxu0 0.0
      %3179 = vmatprep.subr.mxu0 0.0
      %3180 = vmatpush1.msra.mxu0 0.0
      %3181 = vmatprep.subr.mxu0 0.0
      %3182 = vmatpush1.msra.mxu0 0.0
      %3183 = vmatprep.subr.mxu0 0.0
      %3184 = vmatpush1.msra.mxu0 0.0
      %3185 = vmatprep.subr.mxu0 0.0
      %3186 = vmatpush1.msra.mxu0 0.0
      %3187 = vmatprep.subr.mxu0 0.0
      %3188 = vmatpush1.msra.mxu0 0.0
      %3189 = vmatprep.subr.mxu0 0.0
      %3190 = vmatpush1.msra.mxu0 0.0
      %3191 = vmatprep.subr.mxu0 0.0
      %3192 = vmatpush1.msra.mxu0 0.0
      %3193 = vmatprep.subr.mxu0 0.0
      %3194 = vmatpush1.msra.mxu0 0.0
      %3195 = vmatprep.subr.mxu0 0.0
      %3196 = vmatpush1.msra.mxu0 0.0
      %3197 = vmatprep.subr.mxu0 0.0
      %3198 = vmatpush1.msra.mxu0 0.0
      %3199 = vmatprep.subr.mxu0 0.0
      %3200 = vmatpush1.msra.mxu0 0.0
      %3201 = vmatprep.subr.mxu0 0.0
      %3202 = vmatpush1.msra.mxu0 0.0
      %3203 = vmatprep.subr.mxu0 0.0
      %3204 = vmatpush1.msra.mxu0 0.0
      %3205 = vmatprep.subr.mxu0 0.0
      %3206 = vmatpush1.msra.mxu0 0.0
      %3207 = vmatprep.subr.mxu0 0.0
      %3208 = vmatpush1.msra.mxu0 0.0
      %3209 = vmatprep.subr.mxu0 0.0
      %3210 = vmatpush1.msra.mxu0 0.0
      %3211 = vmatprep.subr.mxu0 0.0
      %3212 = vmatpush1.msra.mxu0 0.0
      %3213 = vmatprep.mubr.f32.mxu0 0.0
      %3214 = vmatmul.mubr.f32.gmra.mrb[0].mxu0 %v1448
      %v3215 = vpop.f32.mrb[0].mxu0
      %v3216 = vadd.f32 0.0, %v3215
      %v3217 = vpop.f32.mrb[0].mxu0
      %3218 = vdwg.mxu0
      %3222 = vrot.lane.b32.xlu0 %v3145, 127
      %v3223 = vpop.permute.xlu0 %3222
      %3224 = vrot.lane.b32.xlu0 %v3147, 127
      %v3225 = vpop.permute.xlu0 %3224
      %3226 = vrot.lane.b32.xlu0 %v3216, 127
      %v3227 = vpop.permute.xlu0 %3226
      %v3228 = vsel %vm830, %v3223, %v3225
      %v3229 = vsel %vm830, %v3225, %v3227
      %v3233 = vadd.f32 %v3145, %v3228
      %v3234 = vadd.f32 %v3147, %v3229
      %v3235 = vadd.f32 %v3216, %v3227
      %3236 = vrot.lane.b32.xlu0 %v3145, 126
      %v3237 = vpop.permute.xlu0 %3236
      %3238 = vrot.lane.b32.xlu0 %v3147, 126
      %v3239 = vpop.permute.xlu0 %3238
      %3240 = vrot.lane.b32.xlu0 %v3216, 126
      %v3241 = vpop.permute.xlu0 %3240
      %v3242 = vsel %vm851, %v3237, %v3239
      %v3243 = vsel %vm851, %v3239, %v3241
      %v3247 = vadd.f32 %v3233, %v3242
      %v3248 = vadd.f32 %v3234, %v3243
      %v3249 = vadd.f32 %v3235, %v3241
      %3250 = vrot.lane.b32.xlu0 %v3145, 110
      %v3251 = vpop.permute.xlu0 %3250
      %3252 = vrot.lane.b32.xlu0 %v3147, 110
      %v3253 = vpop.permute.xlu0 %3252
      %3254 = vrot.lane.b32.xlu0 %v3216, 110
      %v3255 = vpop.permute.xlu0 %3254
      %v3256 = vsel %vm872, %v3251, %v3253
      %v3257 = vsel %vm872, %v3253, %v3255
      %v3261 = vadd.f32 %v3247, %v3256
      %v3262 = vadd.f32 %v3248, %v3257
      %v3263 = vadd.f32 %v3249, %v3255
      %3264 = vrot.lane.b32.xlu0 %v3145, 109
      %v3265 = vpop.permute.xlu0 %3264
      %3266 = vrot.lane.b32.xlu0 %v3147, 109
      %v3267 = vpop.permute.xlu0 %3266
      %3268 = vrot.lane.b32.xlu0 %v3216, 109
      %v3269 = vpop.permute.xlu0 %3268
      %v3270 = vsel %vm893, %v3265, %v3267
      %v3271 = vsel %vm893, %v3267, %v3269
      %v3275 = vadd.f32 %v3261, %v3270
      %v3276 = vadd.f32 %v3262, %v3271
      %v3277 = vadd.f32 %v3263, %v3269
      %3278 = vrot.lane.b32.xlu0 %v3145, 108
      %v3279 = vpop.permute.xlu0 %3278
      %3280 = vrot.lane.b32.xlu0 %v3147, 108
      %v3281 = vpop.permute.xlu0 %3280
      %3282 = vrot.lane.b32.xlu0 %v3216, 108
      %v3283 = vpop.permute.xlu0 %3282
      %v3284 = vsel %vm914, %v3279, %v3281
      %v3285 = vsel %vm914, %v3281, %v3283
      %v3289 = vadd.f32 %v3275, %v3284
      %v3290 = vadd.f32 %v3276, %v3285
      %v3291 = vadd.f32 %v3277, %v3283
      %3292 = vrot.lane.b32.xlu0 %v3145, 92
      %v3293 = vpop.permute.xlu0 %3292
      %3294 = vrot.lane.b32.xlu0 %v3147, 92
      %v3295 = vpop.permute.xlu0 %3294
      %3296 = vrot.lane.b32.xlu0 %v3216, 92
      %v3297 = vpop.permute.xlu0 %3296
      %v3298 = vsel %vm935, %v3293, %v3295
      %v3299 = vsel %vm935, %v3295, %v3297
      %v3303 = vadd.f32 %v3289, %v3298
      %v3304 = vadd.f32 %v3290, %v3299
      %v3305 = vadd.f32 %v3291, %v3297
      %3306 = vrot.lane.b32.xlu0 %v3145, 91
      %v3307 = vpop.permute.xlu0 %3306
      %3308 = vrot.lane.b32.xlu0 %v3147, 91
      %v3309 = vpop.permute.xlu0 %3308
      %3310 = vrot.lane.b32.xlu0 %v3216, 91
      %v3311 = vpop.permute.xlu0 %3310
      %v3312 = vsel %vm956, %v3307, %v3309
      %v3313 = vsel %vm956, %v3309, %v3311
      %v3317 = vadd.f32 %v3303, %v3312
      %v3318 = vadd.f32 %v3304, %v3313
      %v3319 = vadd.f32 %v3305, %v3311
      %3320 = vrot.lane.b32.xlu0 %v3145, 90
      %v3321 = vpop.permute.xlu0 %3320
      %3322 = vrot.lane.b32.xlu0 %v3147, 90
      %v3323 = vpop.permute.xlu0 %3322
      %3324 = vrot.lane.b32.xlu0 %v3216, 90
      %v3325 = vpop.permute.xlu0 %3324
      %v3326 = vsel %vm977, %v3321, %v3323
      %v3327 = vsel %vm977, %v3323, %v3325
      %v3331 = vadd.f32 %v3317, %v3326
      %v3332 = vadd.f32 %v3318, %v3327
      %v3333 = vadd.f32 %v3319, %v3325
      %v3334 = vand.u32 2147483647, %v3026
      %v3335 = vand.u32 2147483647, %v3028
      %v3336 = vand.u32 2147483647, %v3067
      %v3337 = vadd.f32 %v3331, 1e-06
      %v3338 = vadd.f32 %v3332, 1e-06
      %v3339 = vadd.f32 %v3333, 1e-06
      %v3340 = vrsqrt.pop %v3337
      %v3341 = vrsqrt.pop %v3338
      %v3342 = vrsqrt.pop %v3339
      %v3343 = vlaneseq
      %v3344 = vshrl.u32 %v3343, 7
      %v3345 = vsub.s32 0, %v3344
      %v3346 = vrot.slane %v3340, %v3345
      %v3347 = vlaneseq
      %v3348 = vshrl.u32 %v3347, 7
      %v3349 = vsub.s32 0, %v3348
      %v3350 = vrot.slane %v3341, %v3349
      %v3351 = vlaneseq
      %v3352 = vshrl.u32 %v3351, 7
      %v3353 = vsub.s32 0, %v3352
      %v3354 = vrot.slane %v3342, %v3353
      %v3355 = vmul.f32 %v3334, %v3346
      %v3356 = vmul.f32 %v3335, %v3350
      %v3357 = vmul.f32 %v3336, %v3354
      %v3358 = vmul.f32 %v3026, %v3355
      %v3359 = vmul.f32 %v3028, %v3356
      %v3360 = vmul.f32 %v3067, %v3357
      %v3361 = vmul.f32 %v3358, %v1431
      %v3362 = vmul.f32 %v3359, %v1435
      %v3363 = vmul.f32 %v3360, %v1439
      %v3364 = vld [vmem:[%s6] sm:$0xff]
      %3365 = vmatprep.subr.mxu0 %v3362
      %3366 = vmatpush1.msra.mxu0 %v3361
      %3367 = vmatprep.subr.mxu0 0.0
      %3368 = vmatpush1.msra.mxu0 0.0
      %3369 = vmatprep.subr.mxu0 0.0
      %3370 = vmatpush1.msra.mxu0 0.0
      %3371 = vmatprep.subr.mxu0 0.0
      %3372 = vmatpush1.msra.mxu0 0.0
      %3373 = vmatprep.subr.mxu0 0.0
      %3374 = vmatpush1.msra.mxu0 0.0
      %3375 = vmatprep.subr.mxu0 0.0
      %3376 = vmatpush1.msra.mxu0 0.0
      %3377 = vmatprep.subr.mxu0 0.0
      %3378 = vmatpush1.msra.mxu0 0.0
      %3379 = vmatprep.subr.mxu0 0.0
      %3380 = vmatpush1.msra.mxu0 0.0
      %3381 = vmatprep.subr.mxu0 0.0
      %3382 = vmatpush1.msra.mxu0 0.0
      %3383 = vmatprep.subr.mxu0 0.0
      %3384 = vmatpush1.msra.mxu0 0.0
      %3385 = vmatprep.subr.mxu0 0.0
      %3386 = vmatpush1.msra.mxu0 0.0
      %3387 = vmatprep.subr.mxu0 0.0
      %3388 = vmatpush1.msra.mxu0 0.0
      %3389 = vmatprep.subr.mxu0 0.0
      %3390 = vmatpush1.msra.mxu0 0.0
      %3391 = vmatprep.subr.mxu0 0.0
      %3392 = vmatpush1.msra.mxu0 0.0
      %3393 = vmatprep.subr.mxu0 0.0
      %3394 = vmatpush1.msra.mxu0 0.0
      %3395 = vmatprep.subr.mxu0 0.0
      %3396 = vmatpush1.msra.mxu0 0.0
      %3397 = vmatprep.subr.mxu0 0.0
      %3398 = vmatpush1.msra.mxu0 0.0
      %3399 = vmatprep.subr.mxu0 0.0
      %3400 = vmatpush1.msra.mxu0 0.0
      %3401 = vmatprep.subr.mxu0 0.0
      %3402 = vmatpush1.msra.mxu0 0.0
      %3403 = vmatprep.subr.mxu0 0.0
      %3404 = vmatpush1.msra.mxu0 0.0
      %3405 = vmatprep.subr.mxu0 0.0
      %3406 = vmatpush1.msra.mxu0 0.0
      %3407 = vmatprep.subr.mxu0 0.0
      %3408 = vmatpush1.msra.mxu0 0.0
      %3409 = vmatprep.subr.mxu0 0.0
      %3410 = vmatpush1.msra.mxu0 0.0
      %3411 = vmatprep.subr.mxu0 0.0
      %3412 = vmatpush1.msra.mxu0 0.0
      %3413 = vmatprep.subr.mxu0 0.0
      %3414 = vmatpush1.msra.mxu0 0.0
      %3415 = vmatprep.subr.mxu0 0.0
      %3416 = vmatpush1.msra.mxu0 0.0
      %3417 = vmatprep.subr.mxu0 0.0
      %3418 = vmatpush1.msra.mxu0 0.0
      %3419 = vmatprep.subr.mxu0 0.0
      %3420 = vmatpush1.msra.mxu0 0.0
      %3421 = vmatprep.subr.mxu0 0.0
      %3422 = vmatpush1.msra.mxu0 0.0
      %3423 = vmatprep.subr.mxu0 0.0
      %3424 = vmatpush1.msra.mxu0 0.0
      %3425 = vmatprep.subr.mxu0 0.0
      %3426 = vmatpush1.msra.mxu0 0.0
      %3427 = vmatprep.subr.mxu0 0.0
      %3428 = vmatpush1.msra.mxu0 0.0
      %3429 = vmatprep.mubr.f32.mxu0 0.0
      %3430 = vmatmul.mubr.f32.gmra.mrb[0].mxu0 %v1448
      %v3431 = vpop.f32.mrb[0].mxu0
      %v3432 = vadd.f32 0.0, %v3431
      %v3433 = vpop.f32.mrb[0].mxu0
      %v3434 = vadd.f32 0.0, %v3433
      %3435 = vdwg.mxu0
      %3436 = vmatprep.subr.mxu0 0.0
      %3437 = vmatpush1.msra.mxu0 %v3363
      %3438 = vmatprep.subr.mxu0 0.0
      %3439 = vmatpush1.msra.mxu0 0.0
      %3440 = vmatprep.subr.mxu0 0.0
      %3441 = vmatpush1.msra.mxu0 0.0
      %3442 = vmatprep.subr.mxu0 0.0
      %3443 = vmatpush1.msra.mxu0 0.0
      %3444 = vmatprep.subr.mxu0 0.0
      %3445 = vmatpush1.msra.mxu0 0.0
      %3446 = vmatprep.subr.mxu0 0.0
      %3447 = vmatpush1.msra.mxu0 0.0
      %3448 = vmatprep.subr.mxu0 0.0
      %3449 = vmatpush1.msra.mxu0 0.0
      %3450 = vmatprep.subr.mxu0 0.0
      %3451 = vmatpush1.msra.mxu0 0.0
      %3452 = vmatprep.subr.mxu0 0.0
      %3453 = vmatpush1.msra.mxu0 0.0
      %3454 = vmatprep.subr.mxu0 0.0
      %3455 = vmatpush1.msra.mxu0 0.0
      %3456 = vmatprep.subr.mxu0 0.0
      %3457 = vmatpush1.msra.mxu0 0.0
      %3458 = vmatprep.subr.mxu0 0.0
      %3459 = vmatpush1.msra.mxu0 0.0
      %3460 = vmatprep.subr.mxu0 0.0
      %3461 = vmatpush1.msra.mxu0 0.0
      %3462 = vmatprep.subr.mxu0 0.0
      %3463 = vmatpush1.msra.mxu0 0.0
      %3464 = vmatprep.subr.mxu0 0.0
      %3465 = vmatpush1.msra.mxu0 0.0
      %3466 = vmatprep.subr.mxu0 0.0
      %3467 = vmatpush1.msra.mxu0 0.0
      %3468 = vmatprep.subr.mxu0 0.0
      %3469 = vmatpush1.msra.mxu0 0.0
      %3470 = vmatprep.subr.mxu0 0.0
      %3471 = vmatpush1.msra.mxu0 0.0
      %3472 = vmatprep.subr.mxu0 0.0
      %3473 = vmatpush1.msra.mxu0 0.0
      %3474 = vmatprep.subr.mxu0 0.0
      %3475 = vmatpush1.msra.mxu0 0.0
      %3476 = vmatprep.subr.mxu0 0.0
      %3477 = vmatpush1.msra.mxu0 0.0
      %3478 = vmatprep.subr.mxu0 0.0
      %3479 = vmatpush1.msra.mxu0 0.0
      %3480 = vmatprep.subr.mxu0 0.0
      %3481 = vmatpush1.msra.mxu0 0.0
      %3482 = vmatprep.subr.mxu0 0.0
      %3483 = vmatpush1.msra.mxu0 0.0
      %3484 = vmatprep.subr.mxu0 0.0
      %3485 = vmatpush1.msra.mxu0 0.0
      %3486 = vmatprep.subr.mxu0 0.0
      %3487 = vmatpush1.msra.mxu0 0.0
      %3488 = vmatprep.subr.mxu0 0.0
      %3489 = vmatpush1.msra.mxu0 0.0
      %3490 = vmatprep.subr.mxu0 0.0
      %3491 = vmatpush1.msra.mxu0 0.0
      %3492 = vmatprep.subr.mxu0 0.0
      %3493 = vmatpush1.msra.mxu0 0.0
      %3494 = vmatprep.subr.mxu0 0.0
      %3495 = vmatpush1.msra.mxu0 0.0
      %3496 = vmatprep.subr.mxu0 0.0
      %3497 = vmatpush1.msra.mxu0 0.0
      %3498 = vmatprep.subr.mxu0 0.0
      %3499 = vmatpush1.msra.mxu0 0.0
      %3500 = vmatprep.mubr.f32.mxu0 0.0
      %3501 = vmatmul.mubr.f32.gmra.mrb[0].mxu0 %v1448
      %v3502 = vpop.f32.mrb[0].mxu0
      %v3503 = vadd.f32 0.0, %v3502
      %v3504 = vpop.f32.mrb[0].mxu0
      %3505 = vdwg.mxu0
      %v3506 = vmul.f32 %v3432, 0.125
      %v3507 = vmul.f32 %v3434, 0.125
      %v3508 = vmul.f32 %v3503, 0.125
      %v3509 = vmul.f32 %v3361, %v3361
      %v3510 = vmul.f32 %v3362, %v3362
      %v3511 = vmul.f32 %v3363, %v3363
      %3512 = vmatprep.subr.mxu0 %v3510
      %3513 = vmatpush1.msra.mxu0 %v3509
      %3514 = vmatprep.subr.mxu0 0.0
      %3515 = vmatpush1.msra.mxu0 0.0
      %3516 = vmatprep.subr.mxu0 0.0
      %3517 = vmatpush1.msra.mxu0 0.0
      %3518 = vmatprep.subr.mxu0 0.0
      %3519 = vmatpush1.msra.mxu0 0.0
      %3520 = vmatprep.subr.mxu0 0.0
      %3521 = vmatpush1.msra.mxu0 0.0
      %3522 = vmatprep.subr.mxu0 0.0
      %3523 = vmatpush1.msra.mxu0 0.0
      %3524 = vmatprep.subr.mxu0 0.0
      %3525 = vmatpush1.msra.mxu0 0.0
      %3526 = vmatprep.subr.mxu0 0.0
      %3527 = vmatpush1.msra.mxu0 0.0
      %3528 = vmatprep.subr.mxu0 0.0
      %3529 = vmatpush1.msra.mxu0 0.0
      %3530 = vmatprep.subr.mxu0 0.0
      %3531 = vmatpush1.msra.mxu0 0.0
      %3532 = vmatprep.subr.mxu0 0.0
      %3533 = vmatpush1.msra.mxu0 0.0
      %3534 = vmatprep.subr.mxu0 0.0
      %3535 = vmatpush1.msra.mxu0 0.0
      %3536 = vmatprep.subr.mxu0 0.0
      %3537 = vmatpush1.msra.mxu0 0.0
      %3538 = vmatprep.subr.mxu0 0.0
      %3539 = vmatpush1.msra.mxu0 0.0
      %3540 = vmatprep.subr.mxu0 0.0
      %3541 = vmatpush1.msra.mxu0 0.0
      %3542 = vmatprep.subr.mxu0 0.0
      %3543 = vmatpush1.msra.mxu0 0.0
      %3544 = vmatprep.subr.mxu0 0.0
      %3545 = vmatpush1.msra.mxu0 0.0
      %3546 = vmatprep.subr.mxu0 0.0
      %3547 = vmatpush1.msra.mxu0 0.0
      %3548 = vmatprep.subr.mxu0 0.0
      %3549 = vmatpush1.msra.mxu0 0.0
      %3550 = vmatprep.subr.mxu0 0.0
      %3551 = vmatpush1.msra.mxu0 0.0
      %3552 = vmatprep.subr.mxu0 0.0
      %3553 = vmatpush1.msra.mxu0 0.0
      %3554 = vmatprep.subr.mxu0 0.0
      %3555 = vmatpush1.msra.mxu0 0.0
      %3556 = vmatprep.subr.mxu0 0.0
      %3557 = vmatpush1.msra.mxu0 0.0
      %3558 = vmatprep.subr.mxu0 0.0
      %3559 = vmatpush1.msra.mxu0 0.0
      %3560 = vmatprep.subr.mxu0 0.0
      %3561 = vmatpush1.msra.mxu0 0.0
      %3562 = vmatprep.subr.mxu0 0.0
      %3563 = vmatpush1.msra.mxu0 0.0
      %3564 = vmatprep.subr.mxu0 0.0
      %3565 = vmatpush1.msra.mxu0 0.0
      %3566 = vmatprep.subr.mxu0 0.0
      %3567 = vmatpush1.msra.mxu0 0.0
      %3568 = vmatprep.subr.mxu0 0.0
      %3569 = vmatpush1.msra.mxu0 0.0
      %3570 = vmatprep.subr.mxu0 0.0
      %3571 = vmatpush1.msra.mxu0 0.0
      %3572 = vmatprep.subr.mxu0 0.0
      %3573 = vmatpush1.msra.mxu0 0.0
      %3574 = vmatprep.subr.mxu0 0.0
      %3575 = vmatpush1.msra.mxu0 0.0
      %3576 = vmatprep.mubr.f32.mxu0 0.0
      %3577 = vmatmul.mubr.f32.gmra.mrb[0].mxu0 %v1448
      %v3578 = vpop.f32.mrb[0].mxu0
      %v3579 = vadd.f32 0.0, %v3578
      %v3580 = vpop.f32.mrb[0].mxu0
      %v3581 = vadd.f32 0.0, %v3580
      %3582 = vdwg.mxu0
      %3583 = vmatprep.subr.mxu0 0.0
      %3584 = vmatpush1.msra.mxu0 %v3511
      %3585 = vmatprep.subr.mxu0 0.0
      %3586 = vmatpush1.msra.mxu0 0.0
      %3587 = vmatprep.subr.mxu0 0.0
      %3588 = vmatpush1.msra.mxu0 0.0
      %3589 = vmatprep.subr.mxu0 0.0
      %3590 = vmatpush1.msra.mxu0 0.0
      %3591 = vmatprep.subr.mxu0 0.0
      %3592 = vmatpush1.msra.mxu0 0.0
      %3593 = vmatprep.subr.mxu0 0.0
      %3594 = vmatpush1.msra.mxu0 0.0
      %3595 = vmatprep.subr.mxu0 0.0
      %3596 = vmatpush1.msra.mxu0 0.0
      %3597 = vmatprep.subr.mxu0 0.0
      %3598 = vmatpush1.msra.mxu0 0.0
      %3599 = vmatprep.subr.mxu0 0.0
      %3600 = vmatpush1.msra.mxu0 0.0
      %3601 = vmatprep.subr.mxu0 0.0
      %3602 = vmatpush1.msra.mxu0 0.0
      %3603 = vmatprep.subr.mxu0 0.0
      %3604 = vmatpush1.msra.mxu0 0.0
      %3605 = vmatprep.subr.mxu0 0.0
      %3606 = vmatpush1.msra.mxu0 0.0
      %3607 = vmatprep.subr.mxu0 0.0
      %3608 = vmatpush1.msra.mxu0 0.0
      %3609 = vmatprep.subr.mxu0 0.0
      %3610 = vmatpush1.msra.mxu0 0.0
      %3611 = vmatprep.subr.mxu0 0.0
      %3612 = vmatpush1.msra.mxu0 0.0
      %3613 = vmatprep.subr.mxu0 0.0
      %3614 = vmatpush1.msra.mxu0 0.0
      %3615 = vmatprep.subr.mxu0 0.0
      %3616 = vmatpush1.msra.mxu0 0.0
      %3617 = vmatprep.subr.mxu0 0.0
      %3618 = vmatpush1.msra.mxu0 0.0
      %3619 = vmatprep.subr.mxu0 0.0
      %3620 = vmatpush1.msra.mxu0 0.0
      %3621 = vmatprep.subr.mxu0 0.0
      %3622 = vmatpush1.msra.mxu0 0.0
      %3623 = vmatprep.subr.mxu0 0.0
      %3624 = vmatpush1.msra.mxu0 0.0
      %3625 = vmatprep.subr.mxu0 0.0
      %3626 = vmatpush1.msra.mxu0 0.0
      %3627 = vmatprep.subr.mxu0 0.0
      %3628 = vmatpush1.msra.mxu0 0.0
      %3629 = vmatprep.subr.mxu0 0.0
      %3630 = vmatpush1.msra.mxu0 0.0
      %3631 = vmatprep.subr.mxu0 0.0
      %3632 = vmatpush1.msra.mxu0 0.0
      %3633 = vmatprep.subr.mxu0 0.0
      %3634 = vmatpush1.msra.mxu0 0.0
      %3635 = vmatprep.subr.mxu0 0.0
      %3636 = vmatpush1.msra.mxu0 0.0
      %3637 = vmatprep.subr.mxu0 0.0
      %3638 = vmatpush1.msra.mxu0 0.0
      %3639 = vmatprep.subr.mxu0 0.0
      %3640 = vmatpush1.msra.mxu0 0.0
      %3641 = vmatprep.subr.mxu0 0.0
      %3642 = vmatpush1.msra.mxu0 0.0
      %3643 = vmatprep.subr.mxu0 0.0
      %3644 = vmatpush1.msra.mxu0 0.0
      %3645 = vmatprep.subr.mxu0 0.0
      %3646 = vmatpush1.msra.mxu0 0.0
      %3647 = vmatprep.mubr.f32.mxu0 0.0
      %3648 = vmatmul.mubr.f32.gmra.mrb[0].mxu0 %v1448
      %v3649 = vpop.f32.mrb[0].mxu0
      %v3650 = vadd.f32 0.0, %v3649
      %v3651 = vpop.f32.mrb[0].mxu0
      %3652 = vdwg.mxu0
      %v3653 = vmul.f32 %v3579, 0.125
      %v3654 = vmul.f32 %v3581, 0.125
      %v3655 = vmul.f32 %v3650, 0.125
      %v3656 = vmul.f32 %v3506, %v3506
      %v3657 = vmul.f32 %v3507, %v3507
      %v3658 = vmul.f32 %v3508, %v3508
      %v3659 = vsub.f32 %v3653, %v3656
      %v3660 = vsub.f32 %v3654, %v3657
      %v3661 = vsub.f32 %v3655, %v3658
      %v3662 = vmax.f32 %v3659, 0.0
      %v3663 = vmax.f32 %v3660, 0.0
      %v3664 = vmax.f32 %v3661, 0.0
      %v3665 = vlaneseq
      %v3666 = vshrl.u32 %v3665, 7
      %v3667 = vsub.s32 0, %v3666
      %v3668 = vrot.slane %v3506, %v3667
      %v3669 = vlaneseq
      %v3670 = vshrl.u32 %v3669, 7
      %v3671 = vsub.s32 0, %v3670
      %v3672 = vrot.slane %v3507, %v3671
      %v3673 = vlaneseq
      %v3674 = vshrl.u32 %v3673, 7
      %v3675 = vsub.s32 0, %v3674
      %v3676 = vrot.slane %v3508, %v3675
      %v3677 = vsub.f32 %v3361, %v3668
      %v3678 = vsub.f32 %v3362, %v3672
      %v3679 = vsub.f32 %v3363, %v3676
      %v3680 = vadd.f32 %v3662, 1e-05
      %v3681 = vadd.f32 %v3663, 1e-05
      %v3682 = vadd.f32 %v3664, 1e-05
      %v3683 = vrsqrt.pop %v3680
      %v3684 = vrsqrt.pop %v3681
      %v3685 = vrsqrt.pop %v3682
      %v3686 = vlaneseq
      %v3687 = vshrl.u32 %v3686, 7
      %v3688 = vsub.s32 0, %v3687
      %v3689 = vrot.slane %v3683, %v3688
      %v3690 = vlaneseq
      %v3691 = vshrl.u32 %v3690, 7
      %v3692 = vsub.s32 0, %v3691
      %v3693 = vrot.slane %v3684, %v3692
      %v3694 = vlaneseq
      %v3695 = vshrl.u32 %v3694, 7
      %v3696 = vsub.s32 0, %v3695
      %v3697 = vrot.slane %v3685, %v3696
      %v3698 = vmul.f32 %v3677, %v3689
      %v3699 = vmul.f32 %v3678, %v3693
      %v3700 = vmul.f32 %v3679, %v3697
      %3702 = vset.pattern.permute.xlu0 0
      %3703 = vperm.xlu0 %3702, %v3364
      %v3704 = vpop.permute.xlu0 %3703
      %v3706 = vmul.f32 %v3698, %v3704
      %v3707 = vmul.f32 %v3699, %v3704
      %v3708 = vmul.f32 %v3700, %v3704
      %v3709 = vld [vmem:[#allocation3] sm:$0xff]
      %v3710 = vld [vmem:[#allocation3 + $0x8] sm:$0xff]
      %v3711 = vld [vmem:[#allocation3 + $0x10] sm:$0xff]
      %3715 = vrot.lane.b32.xlu0 %v3709, 109
      %v3716 = vpop.permute.xlu0 %3715
      %3717 = vrot.lane.b32.xlu0 %v3710, 109
      %v3718 = vpop.permute.xlu0 %3717
      %3719 = vrot.lane.b32.xlu0 %v3711, 109
      %v3720 = vpop.permute.xlu0 %3719
      %v3721 = vsel %vm893, %v3716, %v3718
      %v3722 = vsel %vm893, %v3718, %v3720
      %v3726 = vadd.f32 %v3706, %v3721
      %v3727 = vadd.f32 %v3707, %v3722
      %v3728 = vadd.f32 %v3708, %v3720
      %3732 = vrot.lane.b32.xlu0 %v3726, 19
      %v3733 = vpop.permute.xlu0 %3732
      %3734 = vrot.lane.b32.xlu0 %v3727, 19
      %v3735 = vpop.permute.xlu0 %3734
      %3736 = vrot.lane.b32.xlu0 %v3728, 19
      %v3737 = vpop.permute.xlu0 %3736
      %v3738 = vsel %vm1803, %v3733, %v3735
      %v3739 = vsel %vm1803, %v3735, %v3737
      %3743 = vst.msk [vmem:[#allocation5] sm:$0xff] %vm1809, %v3733
      %3744 = vst [vmem:[#allocation5 + $0x8] sm:$0xff] %v3738
      %3745 = vst.msk [vmem:[#allocation5 + $0x10] sm:$0xff] %vm1812, %v3739
      %v3746 = vld [vmem:[#allocation5] sm:$0xff]
      %v3747 = vld [vmem:[#allocation5 + $0x8] sm:$0xff]
      %v3748 = vld [vmem:[#allocation5 + $0x10] sm:$0xff]
      %3749 = vst [vmem:[#allocation6] sm:$0xff] %v3746
      %3750 = vst [vmem:[#allocation6 + $0x8] sm:$0xff] %v3747
      %3751 = vst.msk [vmem:[#allocation6 + $0x10] sm:$0xff] %vm776, %v3748
      %v3752 = vld [vmem:[#allocation5] sm:$0xff]
      %v3753 = vld [vmem:[#allocation5 + $0x8] sm:$0xff]
      %v3754 = vld [vmem:[#allocation5 + $0x10] sm:$0xff]
      %3758 = vrot.lane.b32.xlu0 %v3752, 127
      %v3759 = vpop.permute.xlu0 %3758
      %3760 = vrot.lane.b32.xlu0 %v3753, 127
      %v3761 = vpop.permute.xlu0 %3760
      %3762 = vrot.lane.b32.xlu0 %v3754, 127
      %v3763 = vpop.permute.xlu0 %3762
      %v3764 = vsel %vm830, %v3759, %v3761
      %v3765 = vsel %vm830, %v3761, %v3763
      %3769 = vst [vmem:[#allocation6 + $0x18] sm:$0xff] %v3764
      %3770 = vst [vmem:[#allocation6 + $0x20] sm:$0xff] %v3765
      %3771 = vst.msk [vmem:[#allocation6 + $0x28] sm:$0xff] %vm776, %v3763
      %v3772 = vld [vmem:[#allocation5] sm:$0xff]
      %v3773 = vld [vmem:[#allocation5 + $0x8] sm:$0xff]
      %v3774 = vld [vmem:[#allocation5 + $0x10] sm:$0xff]
      %3778 = vrot.lane.b32.xlu0 %v3772, 126
      %v3779 = vpop.permute.xlu0 %3778
      %3780 = vrot.lane.b32.xlu0 %v3773, 126
      %v3781 = vpop.permute.xlu0 %3780
      %3782 = vrot.lane.b32.xlu0 %v3774, 126
      %v3783 = vpop.permute.xlu0 %3782
      %v3784 = vsel %vm851, %v3779, %v3781
      %v3785 = vsel %vm851, %v3781, %v3783
      %3789 = vst [vmem:[#allocation6 + $0x30] sm:$0xff] %v3784
      %3790 = vst [vmem:[#allocation6 + $0x38] sm:$0xff] %v3785
      %3791 = vst.msk [vmem:[#allocation6 + $0x40] sm:$0xff] %vm776, %v3783
      %v3792 = vld [vmem:[#allocation5] sm:$0xff]
      %v3793 = vld [vmem:[#allocation5 + $0x8] sm:$0xff]
      %v3794 = vld [vmem:[#allocation5 + $0x10] sm:$0xff]
      %3798 = vrot.lane.b32.xlu0 %v3792, 110
      %v3799 = vpop.permute.xlu0 %3798
      %3800 = vrot.lane.b32.xlu0 %v3793, 110
      %v3801 = vpop.permute.xlu0 %3800
      %3802 = vrot.lane.b32.xlu0 %v3794, 110
      %v3803 = vpop.permute.xlu0 %3802
      %v3804 = vsel %vm872, %v3799, %v3801
      %v3805 = vsel %vm872, %v3801, %v3803
      %3809 = vst [vmem:[#allocation6 + $0x48] sm:$0xff] %v3804
      %3810 = vst [vmem:[#allocation6 + $0x50] sm:$0xff] %v3805
      %3811 = vst.msk [vmem:[#allocation6 + $0x58] sm:$0xff] %vm776, %v3803
      %v3812 = vld [vmem:[#allocation5] sm:$0xff]
      %v3813 = vld [vmem:[#allocation5 + $0x8] sm:$0xff]
      %v3814 = vld [vmem:[#allocation5 + $0x10] sm:$0xff]
      %3818 = vrot.lane.b32.xlu0 %v3812, 109
      %v3819 = vpop.permute.xlu0 %3818
      %3820 = vrot.lane.b32.xlu0 %v3813, 109
      %v3821 = vpop.permute.xlu0 %3820
      %3822 = vrot.lane.b32.xlu0 %v3814, 109
      %v3823 = vpop.permute.xlu0 %3822
      %v3824 = vsel %vm893, %v3819, %v3821
      %v3825 = vsel %vm893, %v3821, %v3823
      %3829 = vst [vmem:[#allocation6 + $0x60] sm:$0xff] %v3824
      %3830 = vst [vmem:[#allocation6 + $0x68] sm:$0xff] %v3825
      %3831 = vst.msk [vmem:[#allocation6 + $0x70] sm:$0xff] %vm776, %v3823
      %v3832 = vld [vmem:[#allocation5] sm:$0xff]
      %v3833 = vld [vmem:[#allocation5 + $0x8] sm:$0xff]
      %v3834 = vld [vmem:[#allocation5 + $0x10] sm:$0xff]
      %3838 = vrot.lane.b32.xlu0 %v3832, 108
      %v3839 = vpop.permute.xlu0 %3838
      %3840 = vrot.lane.b32.xlu0 %v3833, 108
      %v3841 = vpop.permute.xlu0 %3840
      %3842 = vrot.lane.b32.xlu0 %v3834, 108
      %v3843 = vpop.permute.xlu0 %3842
      %v3844 = vsel %vm914, %v3839, %v3841
      %v3845 = vsel %vm914, %v3841, %v3843
      %3849 = vst [vmem:[#allocation6 + $0x78] sm:$0xff] %v3844
      %3850 = vst [vmem:[#allocation6 + $0x80] sm:$0xff] %v3845
      %3851 = vst.msk [vmem:[#allocation6 + $0x88] sm:$0xff] %vm776, %v3843
      %v3852 = vld [vmem:[#allocation5] sm:$0xff]
      %v3853 = vld [vmem:[#allocation5 + $0x8] sm:$0xff]
      %v3854 = vld [vmem:[#allocation5 + $0x10] sm:$0xff]
      %3858 = vrot.lane.b32.xlu0 %v3852, 92
      %v3859 = vpop.permute.xlu0 %3858
      %3860 = vrot.lane.b32.xlu0 %v3853, 92
      %v3861 = vpop.permute.xlu0 %3860
      %3862 = vrot.lane.b32.xlu0 %v3854, 92
      %v3863 = vpop.permute.xlu0 %3862
      %v3864 = vsel %vm935, %v3859, %v3861
      %v3865 = vsel %vm935, %v3861, %v3863
      %3869 = vst [vmem:[#allocation6 + $0x90] sm:$0xff] %v3864
      %3870 = vst [vmem:[#allocation6 + $0x98] sm:$0xff] %v3865
      %3871 = vst.msk [vmem:[#allocation6 + $0xa0] sm:$0xff] %vm776, %v3863
      %v3872 = vld [vmem:[#allocation5] sm:$0xff]
      %v3873 = vld [vmem:[#allocation5 + $0x8] sm:$0xff]
      %v3874 = vld [vmem:[#allocation5 + $0x10] sm:$0xff]
      %3878 = vrot.lane.b32.xlu0 %v3872, 91
      %v3879 = vpop.permute.xlu0 %3878
      %3880 = vrot.lane.b32.xlu0 %v3873, 91
      %v3881 = vpop.permute.xlu0 %3880
      %3882 = vrot.lane.b32.xlu0 %v3874, 91
      %v3883 = vpop.permute.xlu0 %3882
      %v3884 = vsel %vm956, %v3879, %v3881
      %v3885 = vsel %vm956, %v3881, %v3883
      %3889 = vst [vmem:[#allocation6 + $0xa8] sm:$0xff] %v3884
      %3890 = vst [vmem:[#allocation6 + $0xb0] sm:$0xff] %v3885
      %3891 = vst.msk [vmem:[#allocation6 + $0xb8] sm:$0xff] %vm776, %v3883
      %v3892 = vld [vmem:[#allocation5] sm:$0xff]
      %v3893 = vld [vmem:[#allocation5 + $0x8] sm:$0xff]
      %v3894 = vld [vmem:[#allocation5 + $0x10] sm:$0xff]
      %3898 = vrot.lane.b32.xlu0 %v3892, 90
      %v3899 = vpop.permute.xlu0 %3898
      %3900 = vrot.lane.b32.xlu0 %v3893, 90
      %v3901 = vpop.permute.xlu0 %3900
      %3902 = vrot.lane.b32.xlu0 %v3894, 90
      %v3903 = vpop.permute.xlu0 %3902
      %v3904 = vsel %vm977, %v3899, %v3901
      %v3905 = vsel %vm977, %v3901, %v3903
      %3909 = vst [vmem:[#allocation6 + $0xc0] sm:$0xff] %v3904
      %3910 = vst [vmem:[#allocation6 + $0xc8] sm:$0xff] %v3905
      %3911 = vst.msk [vmem:[#allocation6 + $0xd0] sm:$0xff] %vm776, %v3903
      %v3912 = vld [vmem:[%s7] sm:$0xf]
      %v3913 = vld [vmem:[%s7 + $0x4] sm:$0xf]
      %v3914 = vld [vmem:[#allocation6] sm:$0xff]
      %v3915 = vld [vmem:[#allocation6 + $0x8] sm:$0xff]
      %v3916 = vld [vmem:[#allocation6 + $0x10] sm:$0xff]
      %v3917 = vld [vmem:[#allocation6 + $0x18] sm:$0xff]
      %v3918 = vld [vmem:[#allocation6 + $0x20] sm:$0xff]
      %v3919 = vld [vmem:[#allocation6 + $0x28] sm:$0xff]
      %v3920 = vld [vmem:[#allocation6 + $0x30] sm:$0xff]
      %v3921 = vld [vmem:[#allocation6 + $0x38] sm:$0xff]
      %v3922 = vld [vmem:[#allocation6 + $0x40] sm:$0xff]
      %v3923 = vld [vmem:[#allocation6 + $0x48] sm:$0xff]
      %v3924 = vld [vmem:[#allocation6 + $0x50] sm:$0xff]
      %v3925 = vld [vmem:[#allocation6 + $0x58] sm:$0xff]
      %v3926 = vld [vmem:[#allocation6 + $0x60] sm:$0xff]
      %v3927 = vld [vmem:[#allocation6 + $0x68] sm:$0xff]
      %v3928 = vld [vmem:[#allocation6 + $0x70] sm:$0xff]
      %v3929 = vld [vmem:[#allocation6 + $0x78] sm:$0xff]
      %v3930 = vld [vmem:[#allocation6 + $0x80] sm:$0xff]
      %v3931 = vld [vmem:[#allocation6 + $0x88] sm:$0xff]
      %v3932 = vld [vmem:[#allocation6 + $0x90] sm:$0xff]
      %v3933 = vld [vmem:[#allocation6 + $0x98] sm:$0xff]
      %v3934 = vld [vmem:[#allocation6 + $0xa0] sm:$0xff]
      %v3935 = vld [vmem:[#allocation6 + $0xa8] sm:$0xff]
      %v3936 = vld [vmem:[#allocation6 + $0xb0] sm:$0xff]
      %v3937 = vld [vmem:[#allocation6 + $0xb8] sm:$0xff]
      %v3938 = vld [vmem:[#allocation6 + $0xc0] sm:$0xff]
      %v3939 = vld [vmem:[#allocation6 + $0xc8] sm:$0xff]
      %v3940 = vld [vmem:[#allocation6 + $0xd0] sm:$0xff]
      %v3941 = vpack.c.bf16 %v3917, %v3914
      %v3942 = vpack.c.bf16 %v3918, %v3915
      %v3943 = vpack.c.bf16 %v3919, %v3916
      %v3944 = vpack.c.bf16 %v3923, %v3920
      %v3945 = vpack.c.bf16 %v3924, %v3921
      %v3946 = vpack.c.bf16 %v3925, %v3922
      %v3947 = vpack.c.bf16 %v3929, %v3926
      %v3948 = vpack.c.bf16 %v3930, %v3927
      %v3949 = vpack.c.bf16 %v3931, %v3928
      %v3950 = vpack.c.bf16 %v3935, %v3932
      %v3951 = vpack.c.bf16 %v3936, %v3933
      %v3952 = vpack.c.bf16 %v3937, %v3934
      %v3953 = vpack.c.bf16 %v3938, %v3938
      %v3954 = vpack.c.bf16 %v3939, %v3939
      %v3955 = vpack.c.bf16 %v3940, %v3940
      %v3958 = vunpack.c.l.b16 %v3912
      %v3959 = vunpack.c.l.b16 %v3913
      %v3960 = vpack.c.b16 %v3959, %v3958
      %v3962 = vsel %vm1029, %v3960, 0
      %v3965 = vsel %vm1033, %v3953, 0
      %v3968 = vsel %vm1033, %v3954, 0
      %v3971 = vsel %vm1033, %v3955, 0
      %3973 = vmatprep.subr.bf16.mxu0 %v3942
      %3974 = vmatpush1.bf16.msra.mxu0 %v3941
      %3975 = vmatprep.subr.bf16.mxu0 %v3945
      %3976 = vmatpush1.bf16.msra.mxu0 %v3944
      %3977 = vmatprep.subr.bf16.mxu0 %v3948
      %3978 = vmatpush1.bf16.msra.mxu0 %v3947
      %3979 = vmatprep.subr.bf16.mxu0 %v3951
      %3980 = vmatpush1.bf16.msra.mxu0 %v3950
      %3981 = vmatprep.subr.bf16.mxu0 %v3968
      %3982 = vmatpush1.bf16.msra.mxu0 %v3965
      %3983 = vmatprep.subr.bf16.mxu0 0
      %3984 = vmatpush1.bf16.msra.mxu0 0
      %3985 = vmatprep.subr.bf16.mxu0 0
      %3986 = vmatpush1.bf16.msra.mxu0 0
      %3987 = vmatprep.subr.bf16.mxu0 0
      %3988 = vmatpush1.bf16.msra.mxu0 0
      %3989 = vmatprep.subr.bf16.mxu0 0
      %3990 = vmatpush1.bf16.msra.mxu0 0
      %3991 = vmatprep.subr.bf16.mxu0 0
      %3992 = vmatpush1.bf16.msra.mxu0 0
      %3993 = vmatprep.subr.bf16.mxu0 0
      %3994 = vmatpush1.bf16.msra.mxu0 0
      %3995 = vmatprep.subr.bf16.mxu0 0
      %3996 = vmatpush1.bf16.msra.mxu0 0
      %3997 = vmatprep.subr.bf16.mxu0 0
      %3998 = vmatpush1.bf16.msra.mxu0 0
      %3999 = vmatprep.subr.bf16.mxu0 0
      %4000 = vmatpush1.bf16.msra.mxu0 0
      %4001 = vmatprep.subr.bf16.mxu0 0
      %4002 = vmatpush1.bf16.msra.mxu0 0
      %4003 = vmatprep.subr.bf16.mxu0 0
      %4004 = vmatpush1.bf16.msra.mxu0 0
      %4005 = vmatprep.mubr.bf16.mxu0 0
      %4006 = vmatmul.mubr.bf16.gmra.mrb[0].mxu0 %v3962
      %v4007 = vpop.f32.mrb[0].mxu0
      %v4008 = vadd.f32 0.0, %v4007
      %v4009 = vpop.f32.mrb[0].mxu0
      %v4010 = vadd.f32 0.0, %v4009
      %v4011 = vpop.f32.mrb[0].mxu0
      %v4012 = vadd.f32 0.0, %v4011
      %v4013 = vpop.f32.mrb[0].mxu0
      %v4014 = vadd.f32 0.0, %v4013
      %4015 = vdwg.mxu0
      %4016 = vmatprep.subr.bf16.mxu0 0
      %4017 = vmatpush1.bf16.msra.mxu0 %v3943
      %4018 = vmatprep.subr.bf16.mxu0 0
      %4019 = vmatpush1.bf16.msra.mxu0 %v3946
      %4020 = vmatprep.subr.bf16.mxu0 0
      %4021 = vmatpush1.bf16.msra.mxu0 %v3949
      %4022 = vmatprep.subr.bf16.mxu0 0
      %4023 = vmatpush1.bf16.msra.mxu0 %v3952
      %4024 = vmatprep.subr.bf16.mxu0 0
      %4025 = vmatpush1.bf16.msra.mxu0 %v3971
      %4026 = vmatprep.subr.bf16.mxu0 0
      %4027 = vmatpush1.bf16.msra.mxu0 0
      %4028 = vmatprep.subr.bf16.mxu0 0
      %4029 = vmatpush1.bf16.msra.mxu0 0
      %4030 = vmatprep.subr.bf16.mxu0 0
      %4031 = vmatpush1.bf16.msra.mxu0 0
      %4032 = vmatprep.subr.bf16.mxu0 0
      %4033 = vmatpush1.bf16.msra.mxu0 0
      %4034 = vmatprep.subr.bf16.mxu0 0
      %4035 = vmatpush1.bf16.msra.mxu0 0
      %4036 = vmatprep.subr.bf16.mxu0 0
      %4037 = vmatpush1.bf16.msra.mxu0 0
      %4038 = vmatprep.subr.bf16.mxu0 0
      %4039 = vmatpush1.bf16.msra.mxu0 0
      %4040 = vmatprep.subr.bf16.mxu0 0
      %4041 = vmatpush1.bf16.msra.mxu0 0
      %4042 = vmatprep.subr.bf16.mxu0 0
      %4043 = vmatpush1.bf16.msra.mxu0 0
      %4044 = vmatprep.subr.bf16.mxu0 0
      %4045 = vmatpush1.bf16.msra.mxu0 0
      %4046 = vmatprep.subr.bf16.mxu0 0
      %4047 = vmatpush1.bf16.msra.mxu0 0
      %4048 = vmatprep.mubr.bf16.mxu0 0
      %4049 = vmatmul.mubr.bf16.gmra.mrb[0].mxu0 %v3962
      %v4050 = vpop.f32.mrb[0].mxu0
      %v4051 = vadd.f32 0.0, %v4050
      %v4052 = vpop.f32.mrb[0].mxu0
      %v4053 = vpop.f32.mrb[0].mxu0
      %v4054 = vadd.f32 0.0, %v4053
      %v4055 = vpop.f32.mrb[0].mxu0
      %4056 = vdwg.mxu0
      %v4057 = vld [vmem:[#allocation5] sm:$0xff]
      %v4058 = vld [vmem:[#allocation5 + $0x8] sm:$0xff]
      %v4059 = vld [vmem:[#allocation5 + $0x10] sm:$0xff]
      %v4060 = vmul.f32 %v4057, %v4057
      %v4061 = vmul.f32 %v4058, %v4058
      %v4062 = vmul.f32 %v4059, %v4059
      %4063 = vmatprep.subr.mxu0 %v4061
      %4064 = vmatpush1.msra.mxu0 %v4060
      %4065 = vmatprep.subr.mxu0 0.0
      %4066 = vmatpush1.msra.mxu0 0.0
      %4067 = vmatprep.subr.mxu0 0.0
      %4068 = vmatpush1.msra.mxu0 0.0
      %4069 = vmatprep.subr.mxu0 0.0
      %4070 = vmatpush1.msra.mxu0 0.0
      %4071 = vmatprep.subr.mxu0 0.0
      %4072 = vmatpush1.msra.mxu0 0.0
      %4073 = vmatprep.subr.mxu0 0.0
      %4074 = vmatpush1.msra.mxu0 0.0
      %4075 = vmatprep.subr.mxu0 0.0
      %4076 = vmatpush1.msra.mxu0 0.0
      %4077 = vmatprep.subr.mxu0 0.0
      %4078 = vmatpush1.msra.mxu0 0.0
      %4079 = vmatprep.subr.mxu0 0.0
      %4080 = vmatpush1.msra.mxu0 0.0
      %4081 = vmatprep.subr.mxu0 0.0
      %4082 = vmatpush1.msra.mxu0 0.0
      %4083 = vmatprep.subr.mxu0 0.0
      %4084 = vmatpush1.msra.mxu0 0.0
      %4085 = vmatprep.subr.mxu0 0.0
      %4086 = vmatpush1.msra.mxu0 0.0
      %4087 = vmatprep.subr.mxu0 0.0
      %4088 = vmatpush1.msra.mxu0 0.0
      %4089 = vmatprep.subr.mxu0 0.0
      %4090 = vmatpush1.msra.mxu0 0.0
      %4091 = vmatprep.subr.mxu0 0.0
      %4092 = vmatpush1.msra.mxu0 0.0
      %4093 = vmatprep.subr.mxu0 0.0
      %4094 = vmatpush1.msra.mxu0 0.0
      %4095 = vmatprep.subr.mxu0 0.0
      %4096 = vmatpush1.msra.mxu0 0.0
      %4097 = vmatprep.subr.mxu0 0.0
      %4098 = vmatpush1.msra.mxu0 0.0
      %4099 = vmatprep.subr.mxu0 0.0
      %4100 = vmatpush1.msra.mxu0 0.0
      %4101 = vmatprep.subr.mxu0 0.0
      %4102 = vmatpush1.msra.mxu0 0.0
      %4103 = vmatprep.subr.mxu0 0.0
      %4104 = vmatpush1.msra.mxu0 0.0
      %4105 = vmatprep.subr.mxu0 0.0
      %4106 = vmatpush1.msra.mxu0 0.0
      %4107 = vmatprep.subr.mxu0 0.0
      %4108 = vmatpush1.msra.mxu0 0.0
      %4109 = vmatprep.subr.mxu0 0.0
      %4110 = vmatpush1.msra.mxu0 0.0
      %4111 = vmatprep.subr.mxu0 0.0
      %4112 = vmatpush1.msra.mxu0 0.0
      %4113 = vmatprep.subr.mxu0 0.0
      %4114 = vmatpush1.msra.mxu0 0.0
      %4115 = vmatprep.subr.mxu0 0.0
      %4116 = vmatpush1.msra.mxu0 0.0
      %4117 = vmatprep.subr.mxu0 0.0
      %4118 = vmatpush1.msra.mxu0 0.0
      %4119 = vmatprep.subr.mxu0 0.0
      %4120 = vmatpush1.msra.mxu0 0.0
      %4121 = vmatprep.subr.mxu0 0.0
      %4122 = vmatpush1.msra.mxu0 0.0
      %4123 = vmatprep.subr.mxu0 0.0
      %4124 = vmatpush1.msra.mxu0 0.0
      %4125 = vmatprep.subr.mxu0 0.0
      %4126 = vmatpush1.msra.mxu0 0.0
      %4127 = vmatprep.mubr.f32.mxu0 0.0
      %4128 = vmatmul.mubr.f32.gmra.mrb[0].mxu0 %v1448
      %v4129 = vpop.f32.mrb[0].mxu0
      %v4130 = vadd.f32 0.0, %v4129
      %v4131 = vpop.f32.mrb[0].mxu0
      %v4132 = vadd.f32 0.0, %v4131
      %4133 = vdwg.mxu0
      %4134 = vmatprep.subr.mxu0 0.0
      %4135 = vmatpush1.msra.mxu0 %v4062
      %4136 = vmatprep.subr.mxu0 0.0
      %4137 = vmatpush1.msra.mxu0 0.0
      %4138 = vmatprep.subr.mxu0 0.0
      %4139 = vmatpush1.msra.mxu0 0.0
      %4140 = vmatprep.subr.mxu0 0.0
      %4141 = vmatpush1.msra.mxu0 0.0
      %4142 = vmatprep.subr.mxu0 0.0
      %4143 = vmatpush1.msra.mxu0 0.0
      %4144 = vmatprep.subr.mxu0 0.0
      %4145 = vmatpush1.msra.mxu0 0.0
      %4146 = vmatprep.subr.mxu0 0.0
      %4147 = vmatpush1.msra.mxu0 0.0
      %4148 = vmatprep.subr.mxu0 0.0
      %4149 = vmatpush1.msra.mxu0 0.0
      %4150 = vmatprep.subr.mxu0 0.0
      %4151 = vmatpush1.msra.mxu0 0.0
      %4152 = vmatprep.subr.mxu0 0.0
      %4153 = vmatpush1.msra.mxu0 0.0
      %4154 = vmatprep.subr.mxu0 0.0
      %4155 = vmatpush1.msra.mxu0 0.0
      %4156 = vmatprep.subr.mxu0 0.0
      %4157 = vmatpush1.msra.mxu0 0.0
      %4158 = vmatprep.subr.mxu0 0.0
      %4159 = vmatpush1.msra.mxu0 0.0
      %4160 = vmatprep.subr.mxu0 0.0
      %4161 = vmatpush1.msra.mxu0 0.0
      %4162 = vmatprep.subr.mxu0 0.0
      %4163 = vmatpush1.msra.mxu0 0.0
      %4164 = vmatprep.subr.mxu0 0.0
      %4165 = vmatpush1.msra.mxu0 0.0
      %4166 = vmatprep.subr.mxu0 0.0
      %4167 = vmatpush1.msra.mxu0 0.0
      %4168 = vmatprep.subr.mxu0 0.0
      %4169 = vmatpush1.msra.mxu0 0.0
      %4170 = vmatprep.subr.mxu0 0.0
      %4171 = vmatpush1.msra.mxu0 0.0
      %4172 = vmatprep.subr.mxu0 0.0
      %4173 = vmatpush1.msra.mxu0 0.0
      %4174 = vmatprep.subr.mxu0 0.0
      %4175 = vmatpush1.msra.mxu0 0.0
      %4176 = vmatprep.subr.mxu0 0.0
      %4177 = vmatpush1.msra.mxu0 0.0
      %4178 = vmatprep.subr.mxu0 0.0
      %4179 = vmatpush1.msra.mxu0 0.0
      %4180 = vmatprep.subr.mxu0 0.0
      %4181 = vmatpush1.msra.mxu0 0.0
      %4182 = vmatprep.subr.mxu0 0.0
      %4183 = vmatpush1.msra.mxu0 0.0
      %4184 = vmatprep.subr.mxu0 0.0
      %4185 = vmatpush1.msra.mxu0 0.0
      %4186 = vmatprep.subr.mxu0 0.0
      %4187 = vmatpush1.msra.mxu0 0.0
      %4188 = vmatprep.subr.mxu0 0.0
      %4189 = vmatpush1.msra.mxu0 0.0
      %4190 = vmatprep.subr.mxu0 0.0
      %4191 = vmatpush1.msra.mxu0 0.0
      %4192 = vmatprep.subr.mxu0 0.0
      %4193 = vmatpush1.msra.mxu0 0.0
      %4194 = vmatprep.subr.mxu0 0.0
      %4195 = vmatpush1.msra.mxu0 0.0
      %4196 = vmatprep.subr.mxu0 0.0
      %4197 = vmatpush1.msra.mxu0 0.0
      %4198 = vmatprep.mubr.f32.mxu0 0.0
      %4199 = vmatmul.mubr.f32.gmra.mrb[0].mxu0 %v1448
      %v4200 = vpop.f32.mrb[0].mxu0
      %v4201 = vadd.f32 0.0, %v4200
      %v4202 = vpop.f32.mrb[0].mxu0
      %4203 = vdwg.mxu0
      %4207 = vrot.lane.b32.xlu0 %v4130, 127
      %v4208 = vpop.permute.xlu0 %4207
      %4209 = vrot.lane.b32.xlu0 %v4132, 127
      %v4210 = vpop.permute.xlu0 %4209
      %4211 = vrot.lane.b32.xlu0 %v4201, 127
      %v4212 = vpop.permute.xlu0 %4211
      %v4213 = vsel %vm830, %v4208, %v4210
      %v4214 = vsel %vm830, %v4210, %v4212
      %v4218 = vadd.f32 %v4130, %v4213
      %v4219 = vadd.f32 %v4132, %v4214
      %v4220 = vadd.f32 %v4201, %v4212
      %4221 = vrot.lane.b32.xlu0 %v4130, 126
      %v4222 = vpop.permute.xlu0 %4221
      %4223 = vrot.lane.b32.xlu0 %v4132, 126
      %v4224 = vpop.permute.xlu0 %4223
      %4225 = vrot.lane.b32.xlu0 %v4201, 126
      %v4226 = vpop.permute.xlu0 %4225
      %v4227 = vsel %vm851, %v4222, %v4224
      %v4228 = vsel %vm851, %v4224, %v4226
      %v4232 = vadd.f32 %v4218, %v4227
      %v4233 = vadd.f32 %v4219, %v4228
      %v4234 = vadd.f32 %v4220, %v4226
      %4235 = vrot.lane.b32.xlu0 %v4130, 110
      %v4236 = vpop.permute.xlu0 %4235
      %4237 = vrot.lane.b32.xlu0 %v4132, 110
      %v4238 = vpop.permute.xlu0 %4237
      %4239 = vrot.lane.b32.xlu0 %v4201, 110
      %v4240 = vpop.permute.xlu0 %4239
      %v4241 = vsel %vm872, %v4236, %v4238
      %v4242 = vsel %vm872, %v4238, %v4240
      %v4246 = vadd.f32 %v4232, %v4241
      %v4247 = vadd.f32 %v4233, %v4242
      %v4248 = vadd.f32 %v4234, %v4240
      %4249 = vrot.lane.b32.xlu0 %v4130, 109
      %v4250 = vpop.permute.xlu0 %4249
      %4251 = vrot.lane.b32.xlu0 %v4132, 109
      %v4252 = vpop.permute.xlu0 %4251
      %4253 = vrot.lane.b32.xlu0 %v4201, 109
      %v4254 = vpop.permute.xlu0 %4253
      %v4255 = vsel %vm893, %v4250, %v4252
      %v4256 = vsel %vm893, %v4252, %v4254
      %v4260 = vadd.f32 %v4246, %v4255
      %v4261 = vadd.f32 %v4247, %v4256
      %v4262 = vadd.f32 %v4248, %v4254
      %4263 = vrot.lane.b32.xlu0 %v4130, 108
      %v4264 = vpop.permute.xlu0 %4263
      %4265 = vrot.lane.b32.xlu0 %v4132, 108
      %v4266 = vpop.permute.xlu0 %4265
      %4267 = vrot.lane.b32.xlu0 %v4201, 108
      %v4268 = vpop.permute.xlu0 %4267
      %v4269 = vsel %vm914, %v4264, %v4266
      %v4270 = vsel %vm914, %v4266, %v4268
      %v4274 = vadd.f32 %v4260, %v4269
      %v4275 = vadd.f32 %v4261, %v4270
      %v4276 = vadd.f32 %v4262, %v4268
      %4277 = vrot.lane.b32.xlu0 %v4130, 92
      %v4278 = vpop.permute.xlu0 %4277
      %4279 = vrot.lane.b32.xlu0 %v4132, 92
      %v4280 = vpop.permute.xlu0 %4279
      %4281 = vrot.lane.b32.xlu0 %v4201, 92
      %v4282 = vpop.permute.xlu0 %4281
      %v4283 = vsel %vm935, %v4278, %v4280
      %v4284 = vsel %vm935, %v4280, %v4282
      %v4288 = vadd.f32 %v4274, %v4283
      %v4289 = vadd.f32 %v4275, %v4284
      %v4290 = vadd.f32 %v4276, %v4282
      %4291 = vrot.lane.b32.xlu0 %v4130, 91
      %v4292 = vpop.permute.xlu0 %4291
      %4293 = vrot.lane.b32.xlu0 %v4132, 91
      %v4294 = vpop.permute.xlu0 %4293
      %4295 = vrot.lane.b32.xlu0 %v4201, 91
      %v4296 = vpop.permute.xlu0 %4295
      %v4297 = vsel %vm956, %v4292, %v4294
      %v4298 = vsel %vm956, %v4294, %v4296
      %v4302 = vadd.f32 %v4288, %v4297
      %v4303 = vadd.f32 %v4289, %v4298
      %v4304 = vadd.f32 %v4290, %v4296
      %4305 = vrot.lane.b32.xlu0 %v4130, 90
      %v4306 = vpop.permute.xlu0 %4305
      %4307 = vrot.lane.b32.xlu0 %v4132, 90
      %v4308 = vpop.permute.xlu0 %4307
      %4309 = vrot.lane.b32.xlu0 %v4201, 90
      %v4310 = vpop.permute.xlu0 %4309
      %v4311 = vsel %vm977, %v4306, %v4308
      %v4312 = vsel %vm977, %v4308, %v4310
      %v4316 = vadd.f32 %v4302, %v4311
      %v4317 = vadd.f32 %v4303, %v4312
      %v4318 = vadd.f32 %v4304, %v4310
      %v4319 = vand.u32 2147483647, %v4008
      %v4320 = vand.u32 2147483647, %v4010
      %v4321 = vand.u32 2147483647, %v4051
      %v4322 = vand.u32 2147483647, %v4012
      %v4323 = vand.u32 2147483647, %v4014
      %v4324 = vand.u32 2147483647, %v4054
      %v4325 = vadd.f32 %v4316, 1e-06
      %v4326 = vadd.f32 %v4317, 1e-06
      %v4327 = vadd.f32 %v4318, 1e-06
      %v4328 = vrsqrt.pop %v4325
      %v4329 = vrsqrt.pop %v4326
      %v4330 = vrsqrt.pop %v4327
      %v4331 = vlaneseq
      %v4332 = vshrl.u32 %v4331, 7
      %v4333 = vsub.s32 0, %v4332
      %v4334 = vrot.slane %v4328, %v4333
      %v4335 = vlaneseq
      %v4336 = vshrl.u32 %v4335, 7
      %v4337 = vsub.s32 0, %v4336
      %v4338 = vrot.slane %v4329, %v4337
      %v4339 = vlaneseq
      %v4340 = vshrl.u32 %v4339, 7
      %v4341 = vsub.s32 0, %v4340
      %v4342 = vrot.slane %v4330, %v4341
      %v4343 = vmul.f32 %v4319, %v4334
      %v4344 = vmul.f32 %v4320, %v4338
      %v4345 = vmul.f32 %v4321, %v4342
      %v4346 = vmul.f32 %v4322, %v4334
      %v4347 = vmul.f32 %v4323, %v4338
      %v4348 = vmul.f32 %v4324, %v4342
      %v4349 = vmul.f32 %v4008, %v4343
      %v4350 = vmul.f32 %v4010, %v4344
      %v4351 = vmul.f32 %v4051, %v4345
      %v4352 = vmul.f32 %v4012, %v4346
      %v4353 = vmul.f32 %v4014, %v4347
      %v4354 = vmul.f32 %v4054, %v4348
      %v4355 = vld [vmem:[%s20] sm:$0xff]
      %v4356 = vld [vmem:[%s20 + $0x8] sm:$0xff]
      %v4357 = vld [vmem:[%s20 + $0x10] sm:$0xff]
      %v4358 = vld [vmem:[%s20 + $0x18] sm:$0xff]
      %v4359 = vld [vmem:[%s20 + $0x20] sm:$0xff]
      %v4360 = vld [vmem:[%s20 + $0x28] sm:$0xff]
      %v4361 = vld [vmem:[%s20 + $0x30] sm:$0xff]
      %v4362 = vld [vmem:[%s20 + $0x38] sm:$0xff]
      %v4363 = vld [vmem:[%s20 + $0x40] sm:$0xff]
      %v4364 = vld [vmem:[%s20 + $0x48] sm:$0xff]
      %v4365 = vld [vmem:[%s20 + $0x50] sm:$0xff]
      %v4366 = vld [vmem:[%s20 + $0x58] sm:$0xff]
      %v4367 = vld [vmem:[%s20 + $0x60] sm:$0xff]
      %v4368 = vld [vmem:[%s20 + $0x68] sm:$0xff]
      %v4369 = vld [vmem:[%s20 + $0x70] sm:$0xff]
      %v4370 = vld [vmem:[%s20 + $0x78] sm:$0xff]
      %v4371 = vld [vmem:[%s20 + $0x80] sm:$0xff]
      %v4372 = vld [vmem:[%s20 + $0x88] sm:$0xff]
      %v4373 = vld [vmem:[%s20 + $0x90] sm:$0xff]
      %v4374 = vld [vmem:[%s20 + $0x98] sm:$0xff]
      %v4375 = vld [vmem:[%s20 + $0xa0] sm:$0xff]
      %v4376 = vld [vmem:[%s20 + $0xa8] sm:$0xff]
      %v4377 = vld [vmem:[%s20 + $0xb0] sm:$0xff]
      %v4378 = vld [vmem:[%s20 + $0xb8] sm:$0xff]
      %v4379 = vld [vmem:[%s20 + $0xc0] sm:$0xff]
      %v4380 = vld [vmem:[%s20 + $0xc8] sm:$0xff]
      %v4381 = vld [vmem:[%s20 + $0xd0] sm:$0xff]
      %v4382 = vld [vmem:[%s20 + $0xd8] sm:$0xff]
      %v4383 = vld [vmem:[%s20 + $0xe0] sm:$0xff]
      %v4384 = vld [vmem:[%s20 + $0xe8] sm:$0xff]
      %v4385 = vld [vmem:[%s20 + $0xf0] sm:$0xff]
      %v4386 = vld [vmem:[%s20 + $0xf8] sm:$0xff]
      %v4387 = vld [vmem:[%s20 + $0x100] sm:$0xff]
      %v4388 = vld [vmem:[%s20 + $0x108] sm:$0xff]
      %v4389 = vld [vmem:[%s20 + $0x110] sm:$0xff]
      %v4390 = vld [vmem:[%s20 + $0x118] sm:$0x3f]
      %v4392 = vsel %vm776, %v4351, 0
      %v4395 = vsel %vm776, %v4354, 0
      %v4398 = vsel %vm1134, %v4390, 0
      %4400 = vmatprep.subr.mxu0 0.0
      %4401 = vmatpush1.msra.mxu0 %v4355
      %4402 = vmatprep.subr.mxu0 0.0
      %4403 = vmatpush1.msra.mxu0 %v4356
      %4404 = vmatprep.subr.mxu0 0.0
      %4405 = vmatpush1.msra.mxu0 %v4357
      %4406 = vmatprep.subr.mxu0 0.0
      %4407 = vmatpush1.msra.mxu0 %v4358
      %4408 = vmatprep.subr.mxu0 0.0
      %4409 = vmatpush1.msra.mxu0 %v4359
      %4410 = vmatprep.subr.mxu0 0.0
      %4411 = vmatpush1.msra.mxu0 %v4360
      %4412 = vmatprep.subr.mxu0 0.0
      %4413 = vmatpush1.msra.mxu0 %v4361
      %4414 = vmatprep.subr.mxu0 0.0
      %4415 = vmatpush1.msra.mxu0 %v4362
      %4416 = vmatprep.subr.mxu0 0.0
      %4417 = vmatpush1.msra.mxu0 %v4363
      %4418 = vmatprep.subr.mxu0 0.0
      %4419 = vmatpush1.msra.mxu0 %v4364
      %4420 = vmatprep.subr.mxu0 0.0
      %4421 = vmatpush1.msra.mxu0 %v4365
      %4422 = vmatprep.subr.mxu0 0.0
      %4423 = vmatpush1.msra.mxu0 %v4366
      %4424 = vmatprep.subr.mxu0 0.0
      %4425 = vmatpush1.msra.mxu0 %v4367
      %4426 = vmatprep.subr.mxu0 0.0
      %4427 = vmatpush1.msra.mxu0 %v4368
      %4428 = vmatprep.subr.mxu0 0.0
      %4429 = vmatpush1.msra.mxu0 %v4369
      %4430 = vmatprep.subr.mxu0 0.0
      %4431 = vmatpush1.msra.mxu0 %v4370
      %4432 = vmatprep.subr.mxu0 0.0
      %4433 = vmatpush1.msra.mxu0 %v4371
      %4434 = vmatprep.subr.mxu0 0.0
      %4435 = vmatpush1.msra.mxu0 %v4372
      %4436 = vmatprep.subr.mxu0 0.0
      %4437 = vmatpush1.msra.mxu0 %v4373
      %4438 = vmatprep.subr.mxu0 0.0
      %4439 = vmatpush1.msra.mxu0 %v4374
      %4440 = vmatprep.subr.mxu0 0.0
      %4441 = vmatpush1.msra.mxu0 %v4375
      %4442 = vmatprep.subr.mxu0 0.0
      %4443 = vmatpush1.msra.mxu0 %v4376
      %4444 = vmatprep.subr.mxu0 0.0
      %4445 = vmatpush1.msra.mxu0 %v4377
      %4446 = vmatprep.subr.mxu0 0.0
      %4447 = vmatpush1.msra.mxu0 %v4378
      %4448 = vmatprep.subr.mxu0 0.0
      %4449 = vmatpush1.msra.mxu0 %v4379
      %4450 = vmatprep.subr.mxu0 0.0
      %4451 = vmatpush1.msra.mxu0 %v4380
      %4452 = vmatprep.subr.mxu0 0.0
      %4453 = vmatpush1.msra.mxu0 %v4381
      %4454 = vmatprep.subr.mxu0 0.0
      %4455 = vmatpush1.msra.mxu0 %v4382
      %4456 = vmatprep.subr.mxu0 0.0
      %4457 = vmatpush1.msra.mxu0 %v4383
      %4458 = vmatprep.subr.mxu0 0.0
      %4459 = vmatpush1.msra.mxu0 %v4384
      %4460 = vmatprep.subr.mxu0 0.0
      %4461 = vmatpush1.msra.mxu0 %v4385
      %4462 = vmatprep.subr.mxu0 0.0
      %4463 = vmatpush1.msra.mxu0 %v4386
      %4464 = vmatprep.mubr.f32.mxu0 %v4350
      %4465 = vmatmul.mubr.f32.gmra.mrb[0].mxu0 %v4349
      %v4466 = vpop.f32.mrb[0].mxu0
      %v4467 = vadd.f32 0.0, %v4466
      %v4468 = vpop.f32.mrb[0].mxu0
      %4469 = vmatprep.mubr.f32.mxu0 %v4353
      %4470 = vmatmul.mubr.f32.gmra.mrb[0].mxu0 %v4352
      %v4471 = vpop.f32.mrb[0].mxu0
      %v4472 = vadd.f32 0.0, %v4471
      %v4473 = vpop.f32.mrb[0].mxu0
      %4474 = vdwg.mxu0
      %4475 = vmatprep.subr.mxu0 0.0
      %4476 = vmatpush1.msra.mxu0 %v4387
      %4477 = vmatprep.subr.mxu0 0.0
      %4478 = vmatpush1.msra.mxu0 %v4388
      %4479 = vmatprep.subr.mxu0 0.0
      %4480 = vmatpush1.msra.mxu0 %v4389
      %4481 = vmatprep.subr.mxu0 0.0
      %4482 = vmatpush1.msra.mxu0 %v4398
      %4483 = vmatprep.subr.mxu0 0.0
      %4484 = vmatpush1.msra.mxu0 0.0
      %4485 = vmatprep.subr.mxu0 0.0
      %4486 = vmatpush1.msra.mxu0 0.0
      %4487 = vmatprep.subr.mxu0 0.0
      %4488 = vmatpush1.msra.mxu0 0.0
      %4489 = vmatprep.subr.mxu0 0.0
      %4490 = vmatpush1.msra.mxu0 0.0
      %4491 = vmatprep.subr.mxu0 0.0
      %4492 = vmatpush1.msra.mxu0 0.0
      %4493 = vmatprep.subr.mxu0 0.0
      %4494 = vmatpush1.msra.mxu0 0.0
      %4495 = vmatprep.subr.mxu0 0.0
      %4496 = vmatpush1.msra.mxu0 0.0
      %4497 = vmatprep.subr.mxu0 0.0
      %4498 = vmatpush1.msra.mxu0 0.0
      %4499 = vmatprep.subr.mxu0 0.0
      %4500 = vmatpush1.msra.mxu0 0.0
      %4501 = vmatprep.subr.mxu0 0.0
      %4502 = vmatpush1.msra.mxu0 0.0
      %4503 = vmatprep.subr.mxu0 0.0
      %4504 = vmatpush1.msra.mxu0 0.0
      %4505 = vmatprep.subr.mxu0 0.0
      %4506 = vmatpush1.msra.mxu0 0.0
      %4507 = vmatprep.subr.mxu0 0.0
      %4508 = vmatpush1.msra.mxu0 0.0
      %4509 = vmatprep.subr.mxu0 0.0
      %4510 = vmatpush1.msra.mxu0 0.0
      %4511 = vmatprep.subr.mxu0 0.0
      %4512 = vmatpush1.msra.mxu0 0.0
      %4513 = vmatprep.subr.mxu0 0.0
      %4514 = vmatpush1.msra.mxu0 0.0
      %4515 = vmatprep.subr.mxu0 0.0
      %4516 = vmatpush1.msra.mxu0 0.0
      %4517 = vmatprep.subr.mxu0 0.0
      %4518 = vmatpush1.msra.mxu0 0.0
      %4519 = vmatprep.subr.mxu0 0.0
      %4520 = vmatpush1.msra.mxu0 0.0
      %4521 = vmatprep.subr.mxu0 0.0
      %4522 = vmatpush1.msra.mxu0 0.0
      %4523 = vmatprep.subr.mxu0 0.0
      %4524 = vmatpush1.msra.mxu0 0.0
      %4525 = vmatprep.subr.mxu0 0.0
      %4526 = vmatpush1.msra.mxu0 0.0
      %4527 = vmatprep.subr.mxu0 0.0
      %4528 = vmatpush1.msra.mxu0 0.0
      %4529 = vmatprep.subr.mxu0 0.0
      %4530 = vmatpush1.msra.mxu0 0.0
      %4531 = vmatprep.subr.mxu0 0.0
      %4532 = vmatpush1.msra.mxu0 0.0
      %4533 = vmatprep.subr.mxu0 0.0
      %4534 = vmatpush1.msra.mxu0 0.0
      %4535 = vmatprep.subr.mxu0 0.0
      %4536 = vmatpush1.msra.mxu0 0.0
      %4537 = vmatprep.subr.mxu0 0.0
      %4538 = vmatpush1.msra.mxu0 0.0
      %4539 = vmatprep.mubr.f32.mxu0 0.0
      %4540 = vmatmul.mubr.f32.gmra.mrb[0].mxu0 %v4392
      %v4541 = vpop.f32.mrb[0].mxu0
      %v4542 = vadd.f32 %v4467, %v4541
      %v4543 = vpop.f32.mrb[0].mxu0
      %4544 = vmatprep.mubr.f32.mxu0 0.0
      %4545 = vmatmul.mubr.f32.gmra.mrb[0].mxu0 %v4395
      %v4546 = vpop.f32.mrb[0].mxu0
      %v4547 = vadd.f32 %v4472, %v4546
      %v4548 = vpop.f32.mrb[0].mxu0
      %4549 = vdwg.mxu0
      %v4550 = vld [vmem:[%s8] sm:$0xff]
      %v4551 = vld [vmem:[%s8 + $0x8] sm:$0xff]
      %v4553 = vsel %vm1447, %v4550, 0
      %v4556 = vsel %vm1447, %v4551, 0
      %4558 = vmatprep.subr.mxu0 %v3727
      %4559 = vmatpush1.msra.mxu0 %v3726
      %4560 = vmatprep.subr.mxu0 0.0
      %4561 = vmatpush1.msra.mxu0 0.0
      %4562 = vmatprep.subr.mxu0 0.0
      %4563 = vmatpush1.msra.mxu0 0.0
      %4564 = vmatprep.subr.mxu0 0.0
      %4565 = vmatpush1.msra.mxu0 0.0
      %4566 = vmatprep.subr.mxu0 0.0
      %4567 = vmatpush1.msra.mxu0 0.0
      %4568 = vmatprep.subr.mxu0 0.0
      %4569 = vmatpush1.msra.mxu0 0.0
      %4570 = vmatprep.subr.mxu0 0.0
      %4571 = vmatpush1.msra.mxu0 0.0
      %4572 = vmatprep.subr.mxu0 0.0
      %4573 = vmatpush1.msra.mxu0 0.0
      %4574 = vmatprep.subr.mxu0 0.0
      %4575 = vmatpush1.msra.mxu0 0.0
      %4576 = vmatprep.subr.mxu0 0.0
      %4577 = vmatpush1.msra.mxu0 0.0
      %4578 = vmatprep.subr.mxu0 0.0
      %4579 = vmatpush1.msra.mxu0 0.0
      %4580 = vmatprep.subr.mxu0 0.0
      %4581 = vmatpush1.msra.mxu0 0.0
      %4582 = vmatprep.subr.mxu0 0.0
      %4583 = vmatpush1.msra.mxu0 0.0
      %4584 = vmatprep.subr.mxu0 0.0
      %4585 = vmatpush1.msra.mxu0 0.0
      %4586 = vmatprep.subr.mxu0 0.0
      %4587 = vmatpush1.msra.mxu0 0.0
      %4588 = vmatprep.subr.mxu0 0.0
      %4589 = vmatpush1.msra.mxu0 0.0
      %4590 = vmatprep.subr.mxu0 0.0
      %4591 = vmatpush1.msra.mxu0 0.0
      %4592 = vmatprep.subr.mxu0 0.0
      %4593 = vmatpush1.msra.mxu0 0.0
      %4594 = vmatprep.subr.mxu0 0.0
      %4595 = vmatpush1.msra.mxu0 0.0
      %4596 = vmatprep.subr.mxu0 0.0
      %4597 = vmatpush1.msra.mxu0 0.0
      %4598 = vmatprep.subr.mxu0 0.0
      %4599 = vmatpush1.msra.mxu0 0.0
      %4600 = vmatprep.subr.mxu0 0.0
      %4601 = vmatpush1.msra.mxu0 0.0
      %4602 = vmatprep.subr.mxu0 0.0
      %4603 = vmatpush1.msra.mxu0 0.0
      %4604 = vmatprep.subr.mxu0 0.0
      %4605 = vmatpush1.msra.mxu0 0.0
      %4606 = vmatprep.subr.mxu0 0.0
      %4607 = vmatpush1.msra.mxu0 0.0
      %4608 = vmatprep.subr.mxu0 0.0
      %4609 = vmatpush1.msra.mxu0 0.0
      %4610 = vmatprep.subr.mxu0 0.0
      %4611 = vmatpush1.msra.mxu0 0.0
      %4612 = vmatprep.subr.mxu0 0.0
      %4613 = vmatpush1.msra.mxu0 0.0
      %4614 = vmatprep.subr.mxu0 0.0
      %4615 = vmatpush1.msra.mxu0 0.0
      %4616 = vmatprep.subr.mxu0 0.0
      %4617 = vmatpush1.msra.mxu0 0.0
      %4618 = vmatprep.subr.mxu0 0.0
      %4619 = vmatpush1.msra.mxu0 0.0
      %4620 = vmatprep.subr.mxu0 0.0
      %4621 = vmatpush1.msra.mxu0 0.0
      %4622 = vmatprep.mubr.f32.mxu0 0.0
      %4623 = vmatmul.mubr.f32.gmra.mrb[0].mxu0 %v4553
      %v4624 = vpop.f32.mrb[0].mxu0
      %v4625 = vadd.f32 0.0, %v4624
      %v4626 = vpop.f32.mrb[0].mxu0
      %v4627 = vadd.f32 0.0, %v4626
      %4628 = vmatprep.mubr.f32.mxu0 0.0
      %4629 = vmatmul.mubr.f32.gmra.mrb[0].mxu0 %v4556
      %v4630 = vpop.f32.mrb[0].mxu0
      %v4631 = vadd.f32 0.0, %v4630
      %v4632 = vpop.f32.mrb[0].mxu0
      %v4633 = vadd.f32 0.0, %v4632
      %4634 = vdwg.mxu0
      %4635 = vmatprep.subr.mxu0 0.0
      %4636 = vmatpush1.msra.mxu0 %v3728
      %4637 = vmatprep.subr.mxu0 0.0
      %4638 = vmatpush1.msra.mxu0 0.0
      %4639 = vmatprep.subr.mxu0 0.0
      %4640 = vmatpush1.msra.mxu0 0.0
      %4641 = vmatprep.subr.mxu0 0.0
      %4642 = vmatpush1.msra.mxu0 0.0
      %4643 = vmatprep.subr.mxu0 0.0
      %4644 = vmatpush1.msra.mxu0 0.0
      %4645 = vmatprep.subr.mxu0 0.0
      %4646 = vmatpush1.msra.mxu0 0.0
      %4647 = vmatprep.subr.mxu0 0.0
      %4648 = vmatpush1.msra.mxu0 0.0
      %4649 = vmatprep.subr.mxu0 0.0
      %4650 = vmatpush1.msra.mxu0 0.0
      %4651 = vmatprep.subr.mxu0 0.0
      %4652 = vmatpush1.msra.mxu0 0.0
      %4653 = vmatprep.subr.mxu0 0.0
      %4654 = vmatpush1.msra.mxu0 0.0
      %4655 = vmatprep.subr.mxu0 0.0
      %4656 = vmatpush1.msra.mxu0 0.0
      %4657 = vmatprep.subr.mxu0 0.0
      %4658 = vmatpush1.msra.mxu0 0.0
      %4659 = vmatprep.subr.mxu0 0.0
      %4660 = vmatpush1.msra.mxu0 0.0
      %4661 = vmatprep.subr.mxu0 0.0
      %4662 = vmatpush1.msra.mxu0 0.0
      %4663 = vmatprep.subr.mxu0 0.0
      %4664 = vmatpush1.msra.mxu0 0.0
      %4665 = vmatprep.subr.mxu0 0.0
      %4666 = vmatpush1.msra.mxu0 0.0
      %4667 = vmatprep.subr.mxu0 0.0
      %4668 = vmatpush1.msra.mxu0 0.0
      %4669 = vmatprep.subr.mxu0 0.0
      %4670 = vmatpush1.msra.mxu0 0.0
      %4671 = vmatprep.subr.mxu0 0.0
      %4672 = vmatpush1.msra.mxu0 0.0
      %4673 = vmatprep.subr.mxu0 0.0
      %4674 = vmatpush1.msra.mxu0 0.0
      %4675 = vmatprep.subr.mxu0 0.0
      %4676 = vmatpush1.msra.mxu0 0.0
      %4677 = vmatprep.subr.mxu0 0.0
      %4678 = vmatpush1.msra.mxu0 0.0
      %4679 = vmatprep.subr.mxu0 0.0
      %4680 = vmatpush1.msra.mxu0 0.0
      %4681 = vmatprep.subr.mxu0 0.0
      %4682 = vmatpush1.msra.mxu0 0.0
      %4683 = vmatprep.subr.mxu0 0.0
      %4684 = vmatpush1.msra.mxu0 0.0
      %4685 = vmatprep.subr.mxu0 0.0
      %4686 = vmatpush1.msra.mxu0 0.0
      %4687 = vmatprep.subr.mxu0 0.0
      %4688 = vmatpush1.msra.mxu0 0.0
      %4689 = vmatprep.subr.mxu0 0.0
      %4690 = vmatpush1.msra.mxu0 0.0
      %4691 = vmatprep.subr.mxu0 0.0
      %4692 = vmatpush1.msra.mxu0 0.0
      %4693 = vmatprep.subr.mxu0 0.0
      %4694 = vmatpush1.msra.mxu0 0.0
      %4695 = vmatprep.subr.mxu0 0.0
      %4696 = vmatpush1.msra.mxu0 0.0
      %4697 = vmatprep.subr.mxu0 0.0
      %4698 = vmatpush1.msra.mxu0 0.0
      %4699 = vmatprep.mubr.f32.mxu0 0.0
      %4700 = vmatmul.mubr.f32.gmra.mrb[0].mxu0 %v4553
      %v4701 = vpop.f32.mrb[0].mxu0
      %v4702 = vadd.f32 0.0, %v4701
      %v4703 = vpop.f32.mrb[0].mxu0
      %4704 = vmatprep.mubr.f32.mxu0 0.0
      %4705 = vmatmul.mubr.f32.gmra.mrb[0].mxu0 %v4556
      %v4706 = vpop.f32.mrb[0].mxu0
      %v4707 = vadd.f32 0.0, %v4706
      %v4708 = vpop.f32.mrb[0].mxu0
      %4709 = vdwg.mxu0
      %v4710 = vmul.f32 %v3726, %v3726
      %v4711 = vmul.f32 %v3727, %v3727
      %v4712 = vmul.f32 %v3728, %v3728
      %v4713 = vand.u32 2147483647, %v4625
      %v4714 = vand.u32 2147483647, %v4627
      %v4715 = vand.u32 2147483647, %v4702
      %v4716 = vand.u32 2147483647, %v4631
      %v4717 = vand.u32 2147483647, %v4633
      %v4718 = vand.u32 2147483647, %v4707
      %4719 = vmatprep.subr.mxu0 %v4711
      %4720 = vmatpush1.msra.mxu0 %v4710
      %4721 = vmatprep.subr.mxu0 0.0
      %4722 = vmatpush1.msra.mxu0 0.0
      %4723 = vmatprep.subr.mxu0 0.0
      %4724 = vmatpush1.msra.mxu0 0.0
      %4725 = vmatprep.subr.mxu0 0.0
      %4726 = vmatpush1.msra.mxu0 0.0
      %4727 = vmatprep.subr.mxu0 0.0
      %4728 = vmatpush1.msra.mxu0 0.0
      %4729 = vmatprep.subr.mxu0 0.0
      %4730 = vmatpush1.msra.mxu0 0.0
      %4731 = vmatprep.subr.mxu0 0.0
      %4732 = vmatpush1.msra.mxu0 0.0
      %4733 = vmatprep.subr.mxu0 0.0
      %4734 = vmatpush1.msra.mxu0 0.0
      %4735 = vmatprep.subr.mxu0 0.0
      %4736 = vmatpush1.msra.mxu0 0.0
      %4737 = vmatprep.subr.mxu0 0.0
      %4738 = vmatpush1.msra.mxu0 0.0
      %4739 = vmatprep.subr.mxu0 0.0
      %4740 = vmatpush1.msra.mxu0 0.0
      %4741 = vmatprep.subr.mxu0 0.0
      %4742 = vmatpush1.msra.mxu0 0.0
      %4743 = vmatprep.subr.mxu0 0.0
      %4744 = vmatpush1.msra.mxu0 0.0
      %4745 = vmatprep.subr.mxu0 0.0
      %4746 = vmatpush1.msra.mxu0 0.0
      %4747 = vmatprep.subr.mxu0 0.0
      %4748 = vmatpush1.msra.mxu0 0.0
      %4749 = vmatprep.subr.mxu0 0.0
      %4750 = vmatpush1.msra.mxu0 0.0
      %4751 = vmatprep.subr.mxu0 0.0
      %4752 = vmatpush1.msra.mxu0 0.0
      %4753 = vmatprep.subr.mxu0 0.0
      %4754 = vmatpush1.msra.mxu0 0.0
      %4755 = vmatprep.subr.mxu0 0.0
      %4756 = vmatpush1.msra.mxu0 0.0
      %4757 = vmatprep.subr.mxu0 0.0
      %4758 = vmatpush1.msra.mxu0 0.0
      %4759 = vmatprep.subr.mxu0 0.0
      %4760 = vmatpush1.msra.mxu0 0.0
      %4761 = vmatprep.subr.mxu0 0.0
      %4762 = vmatpush1.msra.mxu0 0.0
      %4763 = vmatprep.subr.mxu0 0.0
      %4764 = vmatpush1.msra.mxu0 0.0
      %4765 = vmatprep.subr.mxu0 0.0
      %4766 = vmatpush1.msra.mxu0 0.0
      %4767 = vmatprep.subr.mxu0 0.0
      %4768 = vmatpush1.msra.mxu0 0.0
      %4769 = vmatprep.subr.mxu0 0.0
      %4770 = vmatpush1.msra.mxu0 0.0
      %4771 = vmatprep.subr.mxu0 0.0
      %4772 = vmatpush1.msra.mxu0 0.0
      %4773 = vmatprep.subr.mxu0 0.0
      %4774 = vmatpush1.msra.mxu0 0.0
      %4775 = vmatprep.subr.mxu0 0.0
      %4776 = vmatpush1.msra.mxu0 0.0
      %4777 = vmatprep.subr.mxu0 0.0
      %4778 = vmatpush1.msra.mxu0 0.0
      %4779 = vmatprep.subr.mxu0 0.0
      %4780 = vmatpush1.msra.mxu0 0.0
      %4781 = vmatprep.subr.mxu0 0.0
      %4782 = vmatpush1.msra.mxu0 0.0
      %4783 = vmatprep.mubr.f32.mxu0 0.0
      %4784 = vmatmul.mubr.f32.gmra.mrb[0].mxu0 %v1448
      %v4785 = vpop.f32.mrb[0].mxu0
      %v4786 = vadd.f32 1e-06, %v4785
      %v4787 = vpop.f32.mrb[0].mxu0
      %v4788 = vadd.f32 1e-06, %v4787
      %4789 = vdwg.mxu0
      %4790 = vmatprep.subr.mxu0 0.0
      %4791 = vmatpush1.msra.mxu0 %v4712
      %4792 = vmatprep.subr.mxu0 0.0
      %4793 = vmatpush1.msra.mxu0 0.0
      %4794 = vmatprep.subr.mxu0 0.0
      %4795 = vmatpush1.msra.mxu0 0.0
      %4796 = vmatprep.subr.mxu0 0.0
      %4797 = vmatpush1.msra.mxu0 0.0
      %4798 = vmatprep.subr.mxu0 0.0
      %4799 = vmatpush1.msra.mxu0 0.0
      %4800 = vmatprep.subr.mxu0 0.0
      %4801 = vmatpush1.msra.mxu0 0.0
      %4802 = vmatprep.subr.mxu0 0.0
      %4803 = vmatpush1.msra.mxu0 0.0
      %4804 = vmatprep.subr.mxu0 0.0
      %4805 = vmatpush1.msra.mxu0 0.0
      %4806 = vmatprep.subr.mxu0 0.0
      %4807 = vmatpush1.msra.mxu0 0.0
      %4808 = vmatprep.subr.mxu0 0.0
      %4809 = vmatpush1.msra.mxu0 0.0
      %4810 = vmatprep.subr.mxu0 0.0
      %4811 = vmatpush1.msra.mxu0 0.0
      %4812 = vmatprep.subr.mxu0 0.0
      %4813 = vmatpush1.msra.mxu0 0.0
      %4814 = vmatprep.subr.mxu0 0.0
      %4815 = vmatpush1.msra.mxu0 0.0
      %4816 = vmatprep.subr.mxu0 0.0
      %4817 = vmatpush1.msra.mxu0 0.0
      %4818 = vmatprep.subr.mxu0 0.0
      %4819 = vmatpush1.msra.mxu0 0.0
      %4820 = vmatprep.subr.mxu0 0.0
      %4821 = vmatpush1.msra.mxu0 0.0
      %4822 = vmatprep.subr.mxu0 0.0
      %4823 = vmatpush1.msra.mxu0 0.0
      %4824 = vmatprep.subr.mxu0 0.0
      %4825 = vmatpush1.msra.mxu0 0.0
      %4826 = vmatprep.subr.mxu0 0.0
      %4827 = vmatpush1.msra.mxu0 0.0
      %4828 = vmatprep.subr.mxu0 0.0
      %4829 = vmatpush1.msra.mxu0 0.0
      %4830 = vmatprep.subr.mxu0 0.0
      %4831 = vmatpush1.msra.mxu0 0.0
      %4832 = vmatprep.subr.mxu0 0.0
      %4833 = vmatpush1.msra.mxu0 0.0
      %4834 = vmatprep.subr.mxu0 0.0
      %4835 = vmatpush1.msra.mxu0 0.0
      %4836 = vmatprep.subr.mxu0 0.0
      %4837 = vmatpush1.msra.mxu0 0.0
      %4838 = vmatprep.subr.mxu0 0.0
      %4839 = vmatpush1.msra.mxu0 0.0
      %4840 = vmatprep.subr.mxu0 0.0
      %4841 = vmatpush1.msra.mxu0 0.0
      %4842 = vmatprep.subr.mxu0 0.0
      %4843 = vmatpush1.msra.mxu0 0.0
      %4844 = vmatprep.subr.mxu0 0.0
      %4845 = vmatpush1.msra.mxu0 0.0
      %4846 = vmatprep.subr.mxu0 0.0
      %4847 = vmatpush1.msra.mxu0 0.0
      %4848 = vmatprep.subr.mxu0 0.0
      %4849 = vmatpush1.msra.mxu0 0.0
      %4850 = vmatprep.subr.mxu0 0.0
      %4851 = vmatpush1.msra.mxu0 0.0
      %4852 = vmatprep.subr.mxu0 0.0
      %4853 = vmatpush1.msra.mxu0 0.0
      %4854 = vmatprep.mubr.f32.mxu0 0.0
      %4855 = vmatmul.mubr.f32.gmra.mrb[0].mxu0 %v1448
      %v4856 = vpop.f32.mrb[0].mxu0
      %v4857 = vadd.f32 1e-06, %v4856
      %v4858 = vpop.f32.mrb[0].mxu0
      %4859 = vdwg.mxu0
      %v4860 = vrsqrt.pop %v4786
      %v4861 = vrsqrt.pop %v4788
      %v4862 = vrsqrt.pop %v4857
      %v4863 = vlaneseq
      %v4864 = vshrl.u32 %v4863, 7
      %v4865 = vsub.s32 0, %v4864
      %v4866 = vrot.slane %v4860, %v4865
      %v4867 = vlaneseq
      %v4868 = vshrl.u32 %v4867, 7
      %v4869 = vsub.s32 0, %v4868
      %v4870 = vrot.slane %v4861, %v4869
      %v4871 = vlaneseq
      %v4872 = vshrl.u32 %v4871, 7
      %v4873 = vsub.s32 0, %v4872
      %v4874 = vrot.slane %v4862, %v4873
      %v4875 = vmul.f32 %v4713, %v4866
      %v4876 = vmul.f32 %v4714, %v4870
      %v4877 = vmul.f32 %v4715, %v4874
      %v4878 = vmul.f32 %v4716, %v4866
      %v4879 = vmul.f32 %v4717, %v4870
      %v4880 = vmul.f32 %v4718, %v4874
      %v4881 = vmul.f32 %v4625, %v4875
      %v4882 = vmul.f32 %v4627, %v4876
      %v4883 = vmul.f32 %v4702, %v4877
      %v4884 = vmul.f32 %v4631, %v4878
      %v4885 = vmul.f32 %v4633, %v4879
      %v4886 = vmul.f32 %v4707, %v4880
      %v4888 = vsel %vm776, %v4883, 0
      %v4891 = vsel %vm776, %v4886, 0
      %4893 = vmatprep.subr.mxu0 0.0
      %4894 = vmatpush1.msra.mxu0 %v4355
      %4895 = vmatprep.subr.mxu0 0.0
      %4896 = vmatpush1.msra.mxu0 %v4356
      %4897 = vmatprep.subr.mxu0 0.0
      %4898 = vmatpush1.msra.mxu0 %v4357
      %4899 = vmatprep.subr.mxu0 0.0
      %4900 = vmatpush1.msra.mxu0 %v4358
      %4901 = vmatprep.subr.mxu0 0.0
      %4902 = vmatpush1.msra.mxu0 %v4359
      %4903 = vmatprep.subr.mxu0 0.0
      %4904 = vmatpush1.msra.mxu0 %v4360
      %4905 = vmatprep.subr.mxu0 0.0
      %4906 = vmatpush1.msra.mxu0 %v4361
      %4907 = vmatprep.subr.mxu0 0.0
      %4908 = vmatpush1.msra.mxu0 %v4362
      %4909 = vmatprep.subr.mxu0 0.0
      %4910 = vmatpush1.msra.mxu0 %v4363
      %4911 = vmatprep.subr.mxu0 0.0
      %4912 = vmatpush1.msra.mxu0 %v4364
      %4913 = vmatprep.subr.mxu0 0.0
      %4914 = vmatpush1.msra.mxu0 %v4365
      %4915 = vmatprep.subr.mxu0 0.0
      %4916 = vmatpush1.msra.mxu0 %v4366
      %4917 = vmatprep.subr.mxu0 0.0
      %4918 = vmatpush1.msra.mxu0 %v4367
      %4919 = vmatprep.subr.mxu0 0.0
      %4920 = vmatpush1.msra.mxu0 %v4368
      %4921 = vmatprep.subr.mxu0 0.0
      %4922 = vmatpush1.msra.mxu0 %v4369
      %4923 = vmatprep.subr.mxu0 0.0
      %4924 = vmatpush1.msra.mxu0 %v4370
      %4925 = vmatprep.subr.mxu0 0.0
      %4926 = vmatpush1.msra.mxu0 %v4371
      %4927 = vmatprep.subr.mxu0 0.0
      %4928 = vmatpush1.msra.mxu0 %v4372
      %4929 = vmatprep.subr.mxu0 0.0
      %4930 = vmatpush1.msra.mxu0 %v4373
      %4931 = vmatprep.subr.mxu0 0.0
      %4932 = vmatpush1.msra.mxu0 %v4374
      %4933 = vmatprep.subr.mxu0 0.0
      %4934 = vmatpush1.msra.mxu0 %v4375
      %4935 = vmatprep.subr.mxu0 0.0
      %4936 = vmatpush1.msra.mxu0 %v4376
      %4937 = vmatprep.subr.mxu0 0.0
      %4938 = vmatpush1.msra.mxu0 %v4377
      %4939 = vmatprep.subr.mxu0 0.0
      %4940 = vmatpush1.msra.mxu0 %v4378
      %4941 = vmatprep.subr.mxu0 0.0
      %4942 = vmatpush1.msra.mxu0 %v4379
      %4943 = vmatprep.subr.mxu0 0.0
      %4944 = vmatpush1.msra.mxu0 %v4380
      %4945 = vmatprep.subr.mxu0 0.0
      %4946 = vmatpush1.msra.mxu0 %v4381
      %4947 = vmatprep.subr.mxu0 0.0
      %4948 = vmatpush1.msra.mxu0 %v4382
      %4949 = vmatprep.subr.mxu0 0.0
      %4950 = vmatpush1.msra.mxu0 %v4383
      %4951 = vmatprep.subr.mxu0 0.0
      %4952 = vmatpush1.msra.mxu0 %v4384
      %4953 = vmatprep.subr.mxu0 0.0
      %4954 = vmatpush1.msra.mxu0 %v4385
      %4955 = vmatprep.subr.mxu0 0.0
      %4956 = vmatpush1.msra.mxu0 %v4386
      %4957 = vmatprep.mubr.f32.mxu0 %v4882
      %4958 = vmatmul.mubr.f32.gmra.mrb[0].mxu0 %v4881
      %v4959 = vpop.f32.mrb[0].mxu0
      %v4960 = vadd.f32 0.0, %v4959
      %v4961 = vpop.f32.mrb[0].mxu0
      %4962 = vmatprep.mubr.f32.mxu0 %v4885
      %4963 = vmatmul.mubr.f32.gmra.mrb[0].mxu0 %v4884
      %v4964 = vpop.f32.mrb[0].mxu0
      %v4965 = vadd.f32 0.0, %v4964
      %v4966 = vpop.f32.mrb[0].mxu0
      %4967 = vdwg.mxu0
      %4968 = vmatprep.subr.mxu0 0.0
      %4969 = vmatpush1.msra.mxu0 %v4387
      %4970 = vmatprep.subr.mxu0 0.0
      %4971 = vmatpush1.msra.mxu0 %v4388
      %4972 = vmatprep.subr.mxu0 0.0
      %4973 = vmatpush1.msra.mxu0 %v4389
      %4974 = vmatprep.subr.mxu0 0.0
      %4975 = vmatpush1.msra.mxu0 %v4398
      %4976 = vmatprep.subr.mxu0 0.0
      %4977 = vmatpush1.msra.mxu0 0.0
      %4978 = vmatprep.subr.mxu0 0.0
      %4979 = vmatpush1.msra.mxu0 0.0
      %4980 = vmatprep.subr.mxu0 0.0
      %4981 = vmatpush1.msra.mxu0 0.0
      %4982 = vmatprep.subr.mxu0 0.0
      %4983 = vmatpush1.msra.mxu0 0.0
      %4984 = vmatprep.subr.mxu0 0.0
      %4985 = vmatpush1.msra.mxu0 0.0
      %4986 = vmatprep.subr.mxu0 0.0
      %4987 = vmatpush1.msra.mxu0 0.0
      %4988 = vmatprep.subr.mxu0 0.0
      %4989 = vmatpush1.msra.mxu0 0.0
      %4990 = vmatprep.subr.mxu0 0.0
      %4991 = vmatpush1.msra.mxu0 0.0
      %4992 = vmatprep.subr.mxu0 0.0
      %4993 = vmatpush1.msra.mxu0 0.0
      %4994 = vmatprep.subr.mxu0 0.0
      %4995 = vmatpush1.msra.mxu0 0.0
      %4996 = vmatprep.subr.mxu0 0.0
      %4997 = vmatpush1.msra.mxu0 0.0
      %4998 = vmatprep.subr.mxu0 0.0
      %4999 = vmatpush1.msra.mxu0 0.0
      %5000 = vmatprep.subr.mxu0 0.0
      %5001 = vmatpush1.msra.mxu0 0.0
      %5002 = vmatprep.subr.mxu0 0.0
      %5003 = vmatpush1.msra.mxu0 0.0
      %5004 = vmatprep.subr.mxu0 0.0
      %5005 = vmatpush1.msra.mxu0 0.0
      %5006 = vmatprep.subr.mxu0 0.0
      %5007 = vmatpush1.msra.mxu0 0.0
      %5008 = vmatprep.subr.mxu0 0.0
      %5009 = vmatpush1.msra.mxu0 0.0
      %5010 = vmatprep.subr.mxu0 0.0
      %5011 = vmatpush1.msra.mxu0 0.0
      %5012 = vmatprep.subr.mxu0 0.0
      %5013 = vmatpush1.msra.mxu0 0.0
      %5014 = vmatprep.subr.mxu0 0.0
      %5015 = vmatpush1.msra.mxu0 0.0
      %5016 = vmatprep.subr.mxu0 0.0
      %5017 = vmatpush1.msra.mxu0 0.0
      %5018 = vmatprep.subr.mxu0 0.0
      %5019 = vmatpush1.msra.mxu0 0.0
      %5020 = vmatprep.subr.mxu0 0.0
      %5021 = vmatpush1.msra.mxu0 0.0
      %5022 = vmatprep.subr.mxu0 0.0
      %5023 = vmatpush1.msra.mxu0 0.0
      %5024 = vmatprep.subr.mxu0 0.0
      %5025 = vmatpush1.msra.mxu0 0.0
      %5026 = vmatprep.subr.mxu0 0.0
      %5027 = vmatpush1.msra.mxu0 0.0
      %5028 = vmatprep.subr.mxu0 0.0
      %5029 = vmatpush1.msra.mxu0 0.0
      %5030 = vmatprep.subr.mxu0 0.0
      %5031 = vmatpush1.msra.mxu0 0.0
      %5032 = vmatprep.mubr.f32.mxu0 0.0
      %5033 = vmatmul.mubr.f32.gmra.mrb[0].mxu0 %v4888
      %v5034 = vpop.f32.mrb[0].mxu0
      %v5035 = vadd.f32 %v4960, %v5034
      %v5036 = vpop.f32.mrb[0].mxu0
      %5037 = vmatprep.mubr.f32.mxu0 0.0
      %5038 = vmatmul.mubr.f32.gmra.mrb[0].mxu0 %v4891
      %v5039 = vpop.f32.mrb[0].mxu0
      %v5040 = vadd.f32 %v4965, %v5039
      %v5041 = vpop.f32.mrb[0].mxu0
      %5042 = vdwg.mxu0
      %v5043 = vld [vmem:[%s9] sm:$0xff]
      %v5044 = vld [vmem:[%s9 + $0x8] sm:$0xff]
      %vm5045 = vcmask 130048
      %v5046 = vsel %vm5045, 1.0, 0
      %5048 = vmatprep.subr.mxu0 0.0
      %5049 = vmatpush1.msra.mxu0 %v4542
      %5050 = vmatprep.subr.mxu0 0.0
      %5051 = vmatpush1.msra.mxu0 %v4547
      %5052 = vmatprep.subr.mxu0 0.0
      %5053 = vmatpush1.msra.mxu0 0.0
      %5054 = vmatprep.subr.mxu0 0.0
      %5055 = vmatpush1.msra.mxu0 0.0
      %5056 = vmatprep.subr.mxu0 0.0
      %5057 = vmatpush1.msra.mxu0 0.0
      %5058 = vmatprep.subr.mxu0 0.0
      %5059 = vmatpush1.msra.mxu0 0.0
      %5060 = vmatprep.subr.mxu0 0.0
      %5061 = vmatpush1.msra.mxu0 0.0
      %5062 = vmatprep.subr.mxu0 0.0
      %5063 = vmatpush1.msra.mxu0 0.0
      %5064 = vmatprep.subr.mxu0 0.0
      %5065 = vmatpush1.msra.mxu0 0.0
      %5066 = vmatprep.subr.mxu0 0.0
      %5067 = vmatpush1.msra.mxu0 0.0
      %5068 = vmatprep.subr.mxu0 0.0
      %5069 = vmatpush1.msra.mxu0 0.0
      %5070 = vmatprep.subr.mxu0 0.0
      %5071 = vmatpush1.msra.mxu0 0.0
      %5072 = vmatprep.subr.mxu0 0.0
      %5073 = vmatpush1.msra.mxu0 0.0
      %5074 = vmatprep.subr.mxu0 0.0
      %5075 = vmatpush1.msra.mxu0 0.0
      %5076 = vmatprep.subr.mxu0 0.0
      %5077 = vmatpush1.msra.mxu0 0.0
      %5078 = vmatprep.subr.mxu0 0.0
      %5079 = vmatpush1.msra.mxu0 0.0
      %5080 = vmatprep.subr.mxu0 0.0
      %5081 = vmatpush1.msra.mxu0 0.0
      %5082 = vmatprep.subr.mxu0 0.0
      %5083 = vmatpush1.msra.mxu0 0.0
      %5084 = vmatprep.subr.mxu0 0.0
      %5085 = vmatpush1.msra.mxu0 0.0
      %5086 = vmatprep.subr.mxu0 0.0
      %5087 = vmatpush1.msra.mxu0 0.0
      %5088 = vmatprep.subr.mxu0 0.0
      %5089 = vmatpush1.msra.mxu0 0.0
      %5090 = vmatprep.subr.mxu0 0.0
      %5091 = vmatpush1.msra.mxu0 0.0
      %5092 = vmatprep.subr.mxu0 0.0
      %5093 = vmatpush1.msra.mxu0 0.0
      %5094 = vmatprep.subr.mxu0 0.0
      %5095 = vmatpush1.msra.mxu0 0.0
      %5096 = vmatprep.subr.mxu0 0.0
      %5097 = vmatpush1.msra.mxu0 0.0
      %5098 = vmatprep.subr.mxu0 0.0
      %5099 = vmatpush1.msra.mxu0 0.0
      %5100 = vmatprep.subr.mxu0 0.0
      %5101 = vmatpush1.msra.mxu0 0.0
      %5102 = vmatprep.subr.mxu0 0.0
      %5103 = vmatpush1.msra.mxu0 0.0
      %5104 = vmatprep.subr.mxu0 0.0
      %5105 = vmatpush1.msra.mxu0 0.0
      %5106 = vmatprep.subr.mxu0 0.0
      %5107 = vmatpush1.msra.mxu0 0.0
      %5108 = vmatprep.subr.mxu0 0.0
      %5109 = vmatpush1.msra.mxu0 0.0
      %5110 = vmatprep.subr.mxu0 0.0
      %5111 = vmatpush1.msra.mxu0 0.0
      %5112 = vmatprep.mubr.f32.mxu0 0.0
      %5113 = vmatmul.mubr.f32.gmra.mrb[0].mxu0 %v5046
      %v5114 = vpop.f32.mrb[0].mxu0
      %v5115 = vadd.f32 0.0, %v5114
      %v5116 = vpop.f32.mrb[0].mxu0
      %5117 = vdwg.mxu0
      %v5118 = vmul.f32 %v5115, 0.0625
      %v5119 = vmul.f32 %v4542, %v4542
      %v5120 = vmul.f32 %v4547, %v4547
      %5121 = vmatprep.subr.mxu0 0.0
      %5122 = vmatpush1.msra.mxu0 %v5119
      %5123 = vmatprep.subr.mxu0 0.0
      %5124 = vmatpush1.msra.mxu0 %v5120
      %5125 = vmatprep.subr.mxu0 0.0
      %5126 = vmatpush1.msra.mxu0 0.0
      %5127 = vmatprep.subr.mxu0 0.0
      %5128 = vmatpush1.msra.mxu0 0.0
      %5129 = vmatprep.subr.mxu0 0.0
      %5130 = vmatpush1.msra.mxu0 0.0
      %5131 = vmatprep.subr.mxu0 0.0
      %5132 = vmatpush1.msra.mxu0 0.0
      %5133 = vmatprep.subr.mxu0 0.0
      %5134 = vmatpush1.msra.mxu0 0.0
      %5135 = vmatprep.subr.mxu0 0.0
      %5136 = vmatpush1.msra.mxu0 0.0
      %5137 = vmatprep.subr.mxu0 0.0
      %5138 = vmatpush1.msra.mxu0 0.0
      %5139 = vmatprep.subr.mxu0 0.0
      %5140 = vmatpush1.msra.mxu0 0.0
      %5141 = vmatprep.subr.mxu0 0.0
      %5142 = vmatpush1.msra.mxu0 0.0
      %5143 = vmatprep.subr.mxu0 0.0
      %5144 = vmatpush1.msra.mxu0 0.0
      %5145 = vmatprep.subr.mxu0 0.0
      %5146 = vmatpush1.msra.mxu0 0.0
      %5147 = vmatprep.subr.mxu0 0.0
      %5148 = vmatpush1.msra.mxu0 0.0
      %5149 = vmatprep.subr.mxu0 0.0
      %5150 = vmatpush1.msra.mxu0 0.0
      %5151 = vmatprep.subr.mxu0 0.0
      %5152 = vmatpush1.msra.mxu0 0.0
      %5153 = vmatprep.subr.mxu0 0.0
      %5154 = vmatpush1.msra.mxu0 0.0
      %5155 = vmatprep.subr.mxu0 0.0
      %5156 = vmatpush1.msra.mxu0 0.0
      %5157 = vmatprep.subr.mxu0 0.0
      %5158 = vmatpush1.msra.mxu0 0.0
      %5159 = vmatprep.subr.mxu0 0.0
      %5160 = vmatpush1.msra.mxu0 0.0
      %5161 = vmatprep.subr.mxu0 0.0
      %5162 = vmatpush1.msra.mxu0 0.0
      %5163 = vmatprep.subr.mxu0 0.0
      %5164 = vmatpush1.msra.mxu0 0.0
      %5165 = vmatprep.subr.mxu0 0.0
      %5166 = vmatpush1.msra.mxu0 0.0
      %5167 = vmatprep.subr.mxu0 0.0
      %5168 = vmatpush1.msra.mxu0 0.0
      %5169 = vmatprep.subr.mxu0 0.0
      %5170 = vmatpush1.msra.mxu0 0.0
      %5171 = vmatprep.subr.mxu0 0.0
      %5172 = vmatpush1.msra.mxu0 0.0
      %5173 = vmatprep.subr.mxu0 0.0
      %5174 = vmatpush1.msra.mxu0 0.0
      %5175 = vmatprep.subr.mxu0 0.0
      %5176 = vmatpush1.msra.mxu0 0.0
      %5177 = vmatprep.subr.mxu0 0.0
      %5178 = vmatpush1.msra.mxu0 0.0
      %5179 = vmatprep.subr.mxu0 0.0
      %5180 = vmatpush1.msra.mxu0 0.0
      %5181 = vmatprep.subr.mxu0 0.0
      %5182 = vmatpush1.msra.mxu0 0.0
      %5183 = vmatprep.subr.mxu0 0.0
      %5184 = vmatpush1.msra.mxu0 0.0
      %5185 = vmatprep.mubr.f32.mxu0 0.0
      %5186 = vmatmul.mubr.f32.gmra.mrb[0].mxu0 %v5046
      %v5187 = vpop.f32.mrb[0].mxu0
      %v5188 = vadd.f32 0.0, %v5187
      %v5189 = vpop.f32.mrb[0].mxu0
      %5190 = vdwg.mxu0
      %v5191 = vmul.f32 %v5188, 0.0625
      %v5192 = vmul.f32 %v5118, %v5118
      %v5193 = vsub.f32 %v5191, %v5192
      %v5194 = vmax.f32 %v5193, 0.0
      %v5195 = vlaneseq
      %v5196 = vshrl.u32 %v5195, 7
      %v5197 = vsub.s32 0, %v5196
      %v5198 = vrot.slane %v5118, %v5197
      %v5199 = vsub.f32 %v4542, %v5198
      %v5200 = vsub.f32 %v4547, %v5198
      %v5201 = vadd.f32 %v5194, 1e-05
      %v5202 = vrsqrt.pop %v5201
      %v5203 = vlaneseq
      %v5204 = vshrl.u32 %v5203, 7
      %v5205 = vsub.s32 0, %v5204
      %v5206 = vrot.slane %v5202, %v5205
      %v5207 = vmul.f32 %v5199, %v5206
      %v5208 = vmul.f32 %v5200, %v5206
      %5210 = vset.pattern.permute.xlu0 0
      %5211 = vperm.xlu0 %5210, %v5043
      %v5212 = vpop.permute.xlu0 %5211
      %5215 = vset.pattern.permute.xlu0 0
      %5216 = vperm.xlu0 %5215, %v5044
      %v5217 = vpop.permute.xlu0 %5216
      %v5219 = vmul.f32 %v5207, %v5212
      %v5220 = vmul.f32 %v5208, %v5217
      %vm5221 = vcmask 818176
      %5222 = vst.msk [vmem:[#allocation7] sm:$0xff] %vm5221, %v5219
      %5223 = vst.msk [vmem:[#allocation7 + $0x8] sm:$0xff] %vm5221, %v5220
      %v5224 = vld [vmem:[#allocation7] sm:$0xff]
      %v5225 = vld [vmem:[#allocation7 + $0x8] sm:$0xff]
      %vm5226 = vcmask 637952
      %5227 = vst.msk [vmem:[#allocation9] sm:$0xff] %vm5226, %v5224
      %5228 = vst.msk [vmem:[#allocation9 + $0x8] sm:$0xff] %vm5226, %v5225
      %v5229 = vld [vmem:[#allocation7] sm:$0xff]
      %v5230 = vld [vmem:[#allocation7 + $0x8] sm:$0xff]
      %5233 = vrot.lane.b32.xlu0 %v5229, 127
      %v5234 = vpop.permute.xlu0 %5233
      %5235 = vrot.lane.b32.xlu0 %v5230, 127
      %v5236 = vpop.permute.xlu0 %5235
      %5239 = vst.msk [vmem:[#allocation9 + $0x10] sm:$0xff] %vm5226, %v5234
      %5240 = vst.msk [vmem:[#allocation9 + $0x18] sm:$0xff] %vm5226, %v5236
      %v5241 = vld [vmem:[#allocation7] sm:$0xff]
      %v5242 = vld [vmem:[#allocation7 + $0x8] sm:$0xff]
      %5245 = vrot.lane.b32.xlu0 %v5241, 126
      %v5246 = vpop.permute.xlu0 %5245
      %5247 = vrot.lane.b32.xlu0 %v5242, 126
      %v5248 = vpop.permute.xlu0 %5247
      %5251 = vst.msk [vmem:[#allocation9 + $0x20] sm:$0xff] %vm5226, %v5246
      %5252 = vst.msk [vmem:[#allocation9 + $0x28] sm:$0xff] %vm5226, %v5248
      %v5253 = vld [vmem:[#allocation7] sm:$0xff]
      %v5254 = vld [vmem:[#allocation7 + $0x8] sm:$0xff]
      %5257 = vrot.lane.b32.xlu0 %v5253, 118
      %v5258 = vpop.permute.xlu0 %5257
      %5259 = vrot.lane.b32.xlu0 %v5254, 118
      %v5260 = vpop.permute.xlu0 %5259
      %5263 = vst.msk [vmem:[#allocation9 + $0x30] sm:$0xff] %vm5226, %v5258
      %5264 = vst.msk [vmem:[#allocation9 + $0x38] sm:$0xff] %vm5226, %v5260
      %v5265 = vld [vmem:[#allocation7] sm:$0xff]
      %v5266 = vld [vmem:[#allocation7 + $0x8] sm:$0xff]
      %5269 = vrot.lane.b32.xlu0 %v5265, 117
      %v5270 = vpop.permute.xlu0 %5269
      %5271 = vrot.lane.b32.xlu0 %v5266, 117
      %v5272 = vpop.permute.xlu0 %5271
      %5275 = vst.msk [vmem:[#allocation9 + $0x40] sm:$0xff] %vm5226, %v5270
      %5276 = vst.msk [vmem:[#allocation9 + $0x48] sm:$0xff] %vm5226, %v5272
      %v5277 = vld [vmem:[#allocation7] sm:$0xff]
      %v5278 = vld [vmem:[#allocation7 + $0x8] sm:$0xff]
      %5281 = vrot.lane.b32.xlu0 %v5277, 116
      %v5282 = vpop.permute.xlu0 %5281
      %5283 = vrot.lane.b32.xlu0 %v5278, 116
      %v5284 = vpop.permute.xlu0 %5283
      %5287 = vst.msk [vmem:[#allocation9 + $0x50] sm:$0xff] %vm5226, %v5282
      %5288 = vst.msk [vmem:[#allocation9 + $0x58] sm:$0xff] %vm5226, %v5284
      %v5289 = vld [vmem:[#allocation7] sm:$0xff]
      %v5290 = vld [vmem:[#allocation7 + $0x8] sm:$0xff]
      %5293 = vrot.lane.b32.xlu0 %v5289, 108
      %v5294 = vpop.permute.xlu0 %5293
      %5295 = vrot.lane.b32.xlu0 %v5290, 108
      %v5296 = vpop.permute.xlu0 %5295
      %5299 = vst.msk [vmem:[#allocation9 + $0x60] sm:$0xff] %vm5226, %v5294
      %5300 = vst.msk [vmem:[#allocation9 + $0x68] sm:$0xff] %vm5226, %v5296
      %v5301 = vld [vmem:[#allocation7] sm:$0xff]
      %v5302 = vld [vmem:[#allocation7 + $0x8] sm:$0xff]
      %5305 = vrot.lane.b32.xlu0 %v5301, 107
      %v5306 = vpop.permute.xlu0 %5305
      %5307 = vrot.lane.b32.xlu0 %v5302, 107
      %v5308 = vpop.permute.xlu0 %5307
      %5311 = vst.msk [vmem:[#allocation9 + $0x70] sm:$0xff] %vm5226, %v5306
      %5312 = vst.msk [vmem:[#allocation9 + $0x78] sm:$0xff] %vm5226, %v5308
      %v5313 = vld [vmem:[#allocation7] sm:$0xff]
      %v5314 = vld [vmem:[#allocation7 + $0x8] sm:$0xff]
      %5317 = vrot.lane.b32.xlu0 %v5313, 106
      %v5318 = vpop.permute.xlu0 %5317
      %5319 = vrot.lane.b32.xlu0 %v5314, 106
      %v5320 = vpop.permute.xlu0 %5319
      %5323 = vst.msk [vmem:[#allocation9 + $0x80] sm:$0xff] %vm5226, %v5318
      %5324 = vst.msk [vmem:[#allocation9 + $0x88] sm:$0xff] %vm5226, %v5320
      %v5325 = vld [vmem:[%s10] sm:$0xff]
      %v5326 = vld [vmem:[%s10 + $0x8] sm:$0xff]
      %v5327 = vld [vmem:[#allocation9] sm:$0xff]
      %v5328 = vld [vmem:[#allocation9 + $0x8] sm:$0xff]
      %v5329 = vld [vmem:[#allocation9 + $0x10] sm:$0xff]
      %v5330 = vld [vmem:[#allocation9 + $0x18] sm:$0xff]
      %v5331 = vld [vmem:[#allocation9 + $0x20] sm:$0xff]
      %v5332 = vld [vmem:[#allocation9 + $0x28] sm:$0xff]
      %v5333 = vld [vmem:[#allocation9 + $0x30] sm:$0xff]
      %v5334 = vld [vmem:[#allocation9 + $0x38] sm:$0xff]
      %v5335 = vld [vmem:[#allocation9 + $0x40] sm:$0xff]
      %v5336 = vld [vmem:[#allocation9 + $0x48] sm:$0xff]
      %v5337 = vld [vmem:[#allocation9 + $0x50] sm:$0xff]
      %v5338 = vld [vmem:[#allocation9 + $0x58] sm:$0xff]
      %v5339 = vld [vmem:[#allocation9 + $0x60] sm:$0xff]
      %v5340 = vld [vmem:[#allocation9 + $0x68] sm:$0xff]
      %v5341 = vld [vmem:[#allocation9 + $0x70] sm:$0xff]
      %v5342 = vld [vmem:[#allocation9 + $0x78] sm:$0xff]
      %v5343 = vld [vmem:[#allocation9 + $0x80] sm:$0xff]
      %v5344 = vld [vmem:[#allocation9 + $0x88] sm:$0xff]
      %v5345 = vpack.c.bf16 %v5328, %v5327
      %v5346 = vpack.c.bf16 %v5330, %v5329
      %v5347 = vpack.c.bf16 %v5332, %v5331
      %v5348 = vpack.c.bf16 %v5334, %v5333
      %v5349 = vpack.c.bf16 %v5336, %v5335
      %v5350 = vpack.c.bf16 %v5338, %v5337
      %v5351 = vpack.c.bf16 %v5340, %v5339
      %v5352 = vpack.c.bf16 %v5342, %v5341
      %v5353 = vpack.c.bf16 %v5344, %v5343
      %v5356 = vunpack.c.l.b16 %v5325
      %v5357 = vunpack.c.h.b16 %v5325
      %v5358 = vunpack.c.l.b16 %v5326
      %v5359 = vunpack.c.h.b16 %v5326
      %v5360 = vpack.c.b16 %v5358, %v5356
      %v5361 = vpack.c.b16 %v5359, %v5357
      %v5364 = vsel %vm5045, %v5361, 0
      %5366 = vmatprep.subr.bf16.mxu0 0
      %5367 = vmatpush1.bf16.msra.mxu0 %v5345
      %5368 = vmatprep.subr.bf16.mxu0 0
      %5369 = vmatpush1.bf16.msra.mxu0 %v5346
      %5370 = vmatprep.subr.bf16.mxu0 0
      %5371 = vmatpush1.bf16.msra.mxu0 %v5347
      %5372 = vmatprep.subr.bf16.mxu0 0
      %5373 = vmatpush1.bf16.msra.mxu0 %v5348
      %5374 = vmatprep.subr.bf16.mxu0 0
      %5375 = vmatpush1.bf16.msra.mxu0 %v5349
      %5376 = vmatprep.subr.bf16.mxu0 0
      %5377 = vmatpush1.bf16.msra.mxu0 %v5350
      %5378 = vmatprep.subr.bf16.mxu0 0
      %5379 = vmatpush1.bf16.msra.mxu0 %v5351
      %5380 = vmatprep.subr.bf16.mxu0 0
      %5381 = vmatpush1.bf16.msra.mxu0 %v5352
      %5382 = vmatprep.subr.bf16.mxu0 0
      %5383 = vmatpush1.bf16.msra.mxu0 %v5353
      %5384 = vmatprep.subr.bf16.mxu0 0
      %5385 = vmatpush1.bf16.msra.mxu0 0
      %5386 = vmatprep.subr.bf16.mxu0 0
      %5387 = vmatpush1.bf16.msra.mxu0 0
      %5388 = vmatprep.subr.bf16.mxu0 0
      %5389 = vmatpush1.bf16.msra.mxu0 0
      %5390 = vmatprep.subr.bf16.mxu0 0
      %5391 = vmatpush1.bf16.msra.mxu0 0
      %5392 = vmatprep.subr.bf16.mxu0 0
      %5393 = vmatpush1.bf16.msra.mxu0 0
      %5394 = vmatprep.subr.bf16.mxu0 0
      %5395 = vmatpush1.bf16.msra.mxu0 0
      %5396 = vmatprep.subr.bf16.mxu0 0
      %5397 = vmatpush1.bf16.msra.mxu0 0
      %5398 = vmatprep.mubr.bf16.mxu0 %v5364
      %5399 = vmatmul.mubr.bf16.gmra.mrb[0].mxu0 %v5360
      %v5400 = vpop.f32.mrb[0].mxu0
      %v5401 = vadd.f32 0.0, %v5400
      %v5402 = vpop.f32.mrb[0].mxu0
      %v5403 = vpop.f32.mrb[0].mxu0
      %v5404 = vadd.f32 0.0, %v5403
      %v5405 = vpop.f32.mrb[0].mxu0
      %5406 = vdwg.mxu0
      %v5407 = vld [vmem:[#allocation7] sm:$0xff]
      %v5408 = vld [vmem:[#allocation7 + $0x8] sm:$0xff]
      %v5409 = vmul.f32 %v5407, %v5407
      %v5410 = vmul.f32 %v5408, %v5408
      %5411 = vmatprep.subr.mxu0 0.0
      %5412 = vmatpush1.msra.mxu0 %v5409
      %5413 = vmatprep.subr.mxu0 0.0
      %5414 = vmatpush1.msra.mxu0 %v5410
      %5415 = vmatprep.subr.mxu0 0.0
      %5416 = vmatpush1.msra.mxu0 0.0
      %5417 = vmatprep.subr.mxu0 0.0
      %5418 = vmatpush1.msra.mxu0 0.0
      %5419 = vmatprep.subr.mxu0 0.0
      %5420 = vmatpush1.msra.mxu0 0.0
      %5421 = vmatprep.subr.mxu0 0.0
      %5422 = vmatpush1.msra.mxu0 0.0
      %5423 = vmatprep.subr.mxu0 0.0
      %5424 = vmatpush1.msra.mxu0 0.0
      %5425 = vmatprep.subr.mxu0 0.0
      %5426 = vmatpush1.msra.mxu0 0.0
      %5427 = vmatprep.subr.mxu0 0.0
      %5428 = vmatpush1.msra.mxu0 0.0
      %5429 = vmatprep.subr.mxu0 0.0
      %5430 = vmatpush1.msra.mxu0 0.0
      %5431 = vmatprep.subr.mxu0 0.0
      %5432 = vmatpush1.msra.mxu0 0.0
      %5433 = vmatprep.subr.mxu0 0.0
      %5434 = vmatpush1.msra.mxu0 0.0
      %5435 = vmatprep.subr.mxu0 0.0
      %5436 = vmatpush1.msra.mxu0 0.0
      %5437 = vmatprep.subr.mxu0 0.0
      %5438 = vmatpush1.msra.mxu0 0.0
      %5439 = vmatprep.subr.mxu0 0.0
      %5440 = vmatpush1.msra.mxu0 0.0
      %5441 = vmatprep.subr.mxu0 0.0
      %5442 = vmatpush1.msra.mxu0 0.0
      %5443 = vmatprep.subr.mxu0 0.0
      %5444 = vmatpush1.msra.mxu0 0.0
      %5445 = vmatprep.subr.mxu0 0.0
      %5446 = vmatpush1.msra.mxu0 0.0
      %5447 = vmatprep.subr.mxu0 0.0
      %5448 = vmatpush1.msra.mxu0 0.0
      %5449 = vmatprep.subr.mxu0 0.0
      %5450 = vmatpush1.msra.mxu0 0.0
      %5451 = vmatprep.subr.mxu0 0.0
      %5452 = vmatpush1.msra.mxu0 0.0
      %5453 = vmatprep.subr.mxu0 0.0
      %5454 = vmatpush1.msra.mxu0 0.0
      %5455 = vmatprep.subr.mxu0 0.0
      %5456 = vmatpush1.msra.mxu0 0.0
      %5457 = vmatprep.subr.mxu0 0.0
      %5458 = vmatpush1.msra.mxu0 0.0
      %5459 = vmatprep.subr.mxu0 0.0
      %5460 = vmatpush1.msra.mxu0 0.0
      %5461 = vmatprep.subr.mxu0 0.0
      %5462 = vmatpush1.msra.mxu0 0.0
      %5463 = vmatprep.subr.mxu0 0.0
      %5464 = vmatpush1.msra.mxu0 0.0
      %5465 = vmatprep.subr.mxu0 0.0
      %5466 = vmatpush1.msra.mxu0 0.0
      %5467 = vmatprep.subr.mxu0 0.0
      %5468 = vmatpush1.msra.mxu0 0.0
      %5469 = vmatprep.subr.mxu0 0.0
      %5470 = vmatpush1.msra.mxu0 0.0
      %5471 = vmatprep.subr.mxu0 0.0
      %5472 = vmatpush1.msra.mxu0 0.0
      %5473 = vmatprep.subr.mxu0 0.0
      %5474 = vmatpush1.msra.mxu0 0.0
      %5475 = vmatprep.mubr.f32.mxu0 0.0
      %5476 = vmatmul.mubr.f32.gmra.mrb[0].mxu0 %v5046
      %v5477 = vpop.f32.mrb[0].mxu0
      %v5478 = vadd.f32 0.0, %v5477
      %v5479 = vpop.f32.mrb[0].mxu0
      %5480 = vdwg.mxu0
      %5482 = vrot.lane.b32.xlu0 %v5478, 127
      %v5483 = vpop.permute.xlu0 %5482
      %v5485 = vadd.f32 %v5478, %v5483
      %5486 = vrot.lane.b32.xlu0 %v5478, 126
      %v5487 = vpop.permute.xlu0 %5486
      %v5489 = vadd.f32 %v5485, %v5487
      %5490 = vrot.lane.b32.xlu0 %v5478, 118
      %v5491 = vpop.permute.xlu0 %5490
      %v5493 = vadd.f32 %v5489, %v5491
      %5494 = vrot.lane.b32.xlu0 %v5478, 117
      %v5495 = vpop.permute.xlu0 %5494
      %v5497 = vadd.f32 %v5493, %v5495
      %5498 = vrot.lane.b32.xlu0 %v5478, 116
      %v5499 = vpop.permute.xlu0 %5498
      %v5501 = vadd.f32 %v5497, %v5499
      %5502 = vrot.lane.b32.xlu0 %v5478, 108
      %v5503 = vpop.permute.xlu0 %5502
      %v5505 = vadd.f32 %v5501, %v5503
      %5506 = vrot.lane.b32.xlu0 %v5478, 107
      %v5507 = vpop.permute.xlu0 %5506
      %v5509 = vadd.f32 %v5505, %v5507
      %5510 = vrot.lane.b32.xlu0 %v5478, 106
      %v5511 = vpop.permute.xlu0 %5510
      %v5513 = vadd.f32 %v5509, %v5511
      %v5514 = vand.u32 2147483647, %v5401
      %v5515 = vand.u32 2147483647, %v5404
      %v5516 = vadd.f32 %v5513, 1e-06
      %v5517 = vrsqrt.pop %v5516
      %v5518 = vlaneseq
      %v5519 = vshrl.u32 %v5518, 7
      %v5520 = vsub.s32 0, %v5519
      %v5521 = vrot.slane %v5517, %v5520
      %v5522 = vmul.f32 %v5514, %v5521
      %v5523 = vmul.f32 %v5515, %v5521
      %v5524 = vmul.f32 %v5401, %v5522
      %v5525 = vmul.f32 %v5404, %v5523
      %v5527 = vlaneseq
      %v5528 = vshrl.u32 %v5527, 7
      %v5529 = vsub.s32 0, %v5528
      %v5530 = vrot.slane %v810, %v5529
      %v5532 = vmul.f32 %v5524, %v5530
      %v5533 = vmul.f32 %v5525, %v5530
      %v5534 = vld [vmem:[%s12] sm:$0xff]
      %v5535 = vld [vmem:[%s12 + $0x8] sm:$0xff]
      %5536 = vmatprep.subr.mxu0 0.0
      %5537 = vmatpush1.msra.mxu0 %v5035
      %5538 = vmatprep.subr.mxu0 0.0
      %5539 = vmatpush1.msra.mxu0 %v5040
      %5540 = vmatprep.subr.mxu0 0.0
      %5541 = vmatpush1.msra.mxu0 0.0
      %5542 = vmatprep.subr.mxu0 0.0
      %5543 = vmatpush1.msra.mxu0 0.0
      %5544 = vmatprep.subr.mxu0 0.0
      %5545 = vmatpush1.msra.mxu0 0.0
      %5546 = vmatprep.subr.mxu0 0.0
      %5547 = vmatpush1.msra.mxu0 0.0
      %5548 = vmatprep.subr.mxu0 0.0
      %5549 = vmatpush1.msra.mxu0 0.0
      %5550 = vmatprep.subr.mxu0 0.0
      %5551 = vmatpush1.msra.mxu0 0.0
      %5552 = vmatprep.subr.mxu0 0.0
      %5553 = vmatpush1.msra.mxu0 0.0
      %5554 = vmatprep.subr.mxu0 0.0
      %5555 = vmatpush1.msra.mxu0 0.0
      %5556 = vmatprep.subr.mxu0 0.0
      %5557 = vmatpush1.msra.mxu0 0.0
      %5558 = vmatprep.subr.mxu0 0.0
      %5559 = vmatpush1.msra.mxu0 0.0
      %5560 = vmatprep.subr.mxu0 0.0
      %5561 = vmatpush1.msra.mxu0 0.0
      %5562 = vmatprep.subr.mxu0 0.0
      %5563 = vmatpush1.msra.mxu0 0.0
      %5564 = vmatprep.subr.mxu0 0.0
      %5565 = vmatpush1.msra.mxu0 0.0
      %5566 = vmatprep.subr.mxu0 0.0
      %5567 = vmatpush1.msra.mxu0 0.0
      %5568 = vmatprep.subr.mxu0 0.0
      %5569 = vmatpush1.msra.mxu0 0.0
      %5570 = vmatprep.subr.mxu0 0.0
      %5571 = vmatpush1.msra.mxu0 0.0
      %5572 = vmatprep.subr.mxu0 0.0
      %5573 = vmatpush1.msra.mxu0 0.0
      %5574 = vmatprep.subr.mxu0 0.0
      %5575 = vmatpush1.msra.mxu0 0.0
      %5576 = vmatprep.subr.mxu0 0.0
      %5577 = vmatpush1.msra.mxu0 0.0
      %5578 = vmatprep.subr.mxu0 0.0
      %5579 = vmatpush1.msra.mxu0 0.0
      %5580 = vmatprep.subr.mxu0 0.0
      %5581 = vmatpush1.msra.mxu0 0.0
      %5582 = vmatprep.subr.mxu0 0.0
      %5583 = vmatpush1.msra.mxu0 0.0
      %5584 = vmatprep.subr.mxu0 0.0
      %5585 = vmatpush1.msra.mxu0 0.0
      %5586 = vmatprep.subr.mxu0 0.0
      %5587 = vmatpush1.msra.mxu0 0.0
      %5588 = vmatprep.subr.mxu0 0.0
      %5589 = vmatpush1.msra.mxu0 0.0
      %5590 = vmatprep.subr.mxu0 0.0
      %5591 = vmatpush1.msra.mxu0 0.0
      %5592 = vmatprep.subr.mxu0 0.0
      %5593 = vmatpush1.msra.mxu0 0.0
      %5594 = vmatprep.subr.mxu0 0.0
      %5595 = vmatpush1.msra.mxu0 0.0
      %5596 = vmatprep.subr.mxu0 0.0
      %5597 = vmatpush1.msra.mxu0 0.0
      %5598 = vmatprep.subr.mxu0 0.0
      %5599 = vmatpush1.msra.mxu0 0.0
      %5600 = vmatprep.mubr.f32.mxu0 0.0
      %5601 = vmatmul.mubr.f32.gmra.mrb[0].mxu0 %v5046
      %v5602 = vpop.f32.mrb[0].mxu0
      %v5603 = vadd.f32 0.0, %v5602
      %v5604 = vpop.f32.mrb[0].mxu0
      %5605 = vdwg.mxu0
      %v5606 = vmul.f32 %v5603, 0.0625
      %v5607 = vmul.f32 %v5035, %v5035
      %v5608 = vmul.f32 %v5040, %v5040
      %5609 = vmatprep.subr.mxu0 0.0
      %5610 = vmatpush1.msra.mxu0 %v5607
      %5611 = vmatprep.subr.mxu0 0.0
      %5612 = vmatpush1.msra.mxu0 %v5608
      %5613 = vmatprep.subr.mxu0 0.0
      %5614 = vmatpush1.msra.mxu0 0.0
      %5615 = vmatprep.subr.mxu0 0.0
      %5616 = vmatpush1.msra.mxu0 0.0
      %5617 = vmatprep.subr.mxu0 0.0
      %5618 = vmatpush1.msra.mxu0 0.0
      %5619 = vmatprep.subr.mxu0 0.0
      %5620 = vmatpush1.msra.mxu0 0.0
      %5621 = vmatprep.subr.mxu0 0.0
      %5622 = vmatpush1.msra.mxu0 0.0
      %5623 = vmatprep.subr.mxu0 0.0
      %5624 = vmatpush1.msra.mxu0 0.0
      %5625 = vmatprep.subr.mxu0 0.0
      %5626 = vmatpush1.msra.mxu0 0.0
      %5627 = vmatprep.subr.mxu0 0.0
      %5628 = vmatpush1.msra.mxu0 0.0
      %5629 = vmatprep.subr.mxu0 0.0
      %5630 = vmatpush1.msra.mxu0 0.0
      %5631 = vmatprep.subr.mxu0 0.0
      %5632 = vmatpush1.msra.mxu0 0.0
      %5633 = vmatprep.subr.mxu0 0.0
      %5634 = vmatpush1.msra.mxu0 0.0
      %5635 = vmatprep.subr.mxu0 0.0
      %5636 = vmatpush1.msra.mxu0 0.0
      %5637 = vmatprep.subr.mxu0 0.0
      %5638 = vmatpush1.msra.mxu0 0.0
      %5639 = vmatprep.subr.mxu0 0.0
      %5640 = vmatpush1.msra.mxu0 0.0
      %5641 = vmatprep.subr.mxu0 0.0
      %5642 = vmatpush1.msra.mxu0 0.0
      %5643 = vmatprep.subr.mxu0 0.0
      %5644 = vmatpush1.msra.mxu0 0.0
      %5645 = vmatprep.subr.mxu0 0.0
      %5646 = vmatpush1.msra.mxu0 0.0
      %5647 = vmatprep.subr.mxu0 0.0
      %5648 = vmatpush1.msra.mxu0 0.0
      %5649 = vmatprep.subr.mxu0 0.0
      %5650 = vmatpush1.msra.mxu0 0.0
      %5651 = vmatprep.subr.mxu0 0.0
      %5652 = vmatpush1.msra.mxu0 0.0
      %5653 = vmatprep.subr.mxu0 0.0
      %5654 = vmatpush1.msra.mxu0 0.0
      %5655 = vmatprep.subr.mxu0 0.0
      %5656 = vmatpush1.msra.mxu0 0.0
      %5657 = vmatprep.subr.mxu0 0.0
      %5658 = vmatpush1.msra.mxu0 0.0
      %5659 = vmatprep.subr.mxu0 0.0
      %5660 = vmatpush1.msra.mxu0 0.0
      %5661 = vmatprep.subr.mxu0 0.0
      %5662 = vmatpush1.msra.mxu0 0.0
      %5663 = vmatprep.subr.mxu0 0.0
      %5664 = vmatpush1.msra.mxu0 0.0
      %5665 = vmatprep.subr.mxu0 0.0
      %5666 = vmatpush1.msra.mxu0 0.0
      %5667 = vmatprep.subr.mxu0 0.0
      %5668 = vmatpush1.msra.mxu0 0.0
      %5669 = vmatprep.subr.mxu0 0.0
      %5670 = vmatpush1.msra.mxu0 0.0
      %5671 = vmatprep.subr.mxu0 0.0
      %5672 = vmatpush1.msra.mxu0 0.0
      %5673 = vmatprep.mubr.f32.mxu0 0.0
      %5674 = vmatmul.mubr.f32.gmra.mrb[0].mxu0 %v5046
      %v5675 = vpop.f32.mrb[0].mxu0
      %v5676 = vadd.f32 0.0, %v5675
      %v5677 = vpop.f32.mrb[0].mxu0
      %5678 = vdwg.mxu0
      %v5679 = vmul.f32 %v5676, 0.0625
      %v5680 = vmul.f32 %v5606, %v5606
      %v5681 = vsub.f32 %v5679, %v5680
      %v5682 = vmax.f32 %v5681, 0.0
      %v5683 = vlaneseq
      %v5684 = vshrl.u32 %v5683, 7
      %v5685 = vsub.s32 0, %v5684
      %v5686 = vrot.slane %v5606, %v5685
      %v5687 = vsub.f32 %v5035, %v5686
      %v5688 = vsub.f32 %v5040, %v5686
      %v5689 = vadd.f32 %v5682, 1e-05
      %v5690 = vrsqrt.pop %v5689
      %v5691 = vlaneseq
      %v5692 = vshrl.u32 %v5691, 7
      %v5693 = vsub.s32 0, %v5692
      %v5694 = vrot.slane %v5690, %v5693
      %v5695 = vmul.f32 %v5687, %v5694
      %v5696 = vmul.f32 %v5688, %v5694
      %5698 = vset.pattern.permute.xlu0 0
      %5699 = vperm.xlu0 %5698, %v5534
      %v5700 = vpop.permute.xlu0 %5699
      %5703 = vset.pattern.permute.xlu0 0
      %5704 = vperm.xlu0 %5703, %v5535
      %v5705 = vpop.permute.xlu0 %5704
      %v5707 = vmul.f32 %v5695, %v5700
      %v5708 = vmul.f32 %v5696, %v5705
      %v5709 = vld [vmem:[%s11] sm:$0xff]
      %v5710 = vld [vmem:[%s11 + $0x8] sm:$0xff]
      %5711 = vmatprep.subr.mxu0 0.0
      %5712 = vmatpush1.msra.mxu0 %v5532
      %5713 = vmatprep.subr.mxu0 0.0
      %5714 = vmatpush1.msra.mxu0 %v5533
      %5715 = vmatprep.subr.mxu0 0.0
      %5716 = vmatpush1.msra.mxu0 0.0
      %5717 = vmatprep.subr.mxu0 0.0
      %5718 = vmatpush1.msra.mxu0 0.0
      %5719 = vmatprep.subr.mxu0 0.0
      %5720 = vmatpush1.msra.mxu0 0.0
      %5721 = vmatprep.subr.mxu0 0.0
      %5722 = vmatpush1.msra.mxu0 0.0
      %5723 = vmatprep.subr.mxu0 0.0
      %5724 = vmatpush1.msra.mxu0 0.0
      %5725 = vmatprep.subr.mxu0 0.0
      %5726 = vmatpush1.msra.mxu0 0.0
      %5727 = vmatprep.subr.mxu0 0.0
      %5728 = vmatpush1.msra.mxu0 0.0
      %5729 = vmatprep.subr.mxu0 0.0
      %5730 = vmatpush1.msra.mxu0 0.0
      %5731 = vmatprep.subr.mxu0 0.0
      %5732 = vmatpush1.msra.mxu0 0.0
      %5733 = vmatprep.subr.mxu0 0.0
      %5734 = vmatpush1.msra.mxu0 0.0
      %5735 = vmatprep.subr.mxu0 0.0
      %5736 = vmatpush1.msra.mxu0 0.0
      %5737 = vmatprep.subr.mxu0 0.0
      %5738 = vmatpush1.msra.mxu0 0.0
      %5739 = vmatprep.subr.mxu0 0.0
      %5740 = vmatpush1.msra.mxu0 0.0
      %5741 = vmatprep.subr.mxu0 0.0
      %5742 = vmatpush1.msra.mxu0 0.0
      %5743 = vmatprep.subr.mxu0 0.0
      %5744 = vmatpush1.msra.mxu0 0.0
      %5745 = vmatprep.subr.mxu0 0.0
      %5746 = vmatpush1.msra.mxu0 0.0
      %5747 = vmatprep.subr.mxu0 0.0
      %5748 = vmatpush1.msra.mxu0 0.0
      %5749 = vmatprep.subr.mxu0 0.0
      %5750 = vmatpush1.msra.mxu0 0.0
      %5751 = vmatprep.subr.mxu0 0.0
      %5752 = vmatpush1.msra.mxu0 0.0
      %5753 = vmatprep.subr.mxu0 0.0
      %5754 = vmatpush1.msra.mxu0 0.0
      %5755 = vmatprep.subr.mxu0 0.0
      %5756 = vmatpush1.msra.mxu0 0.0
      %5757 = vmatprep.subr.mxu0 0.0
      %5758 = vmatpush1.msra.mxu0 0.0
      %5759 = vmatprep.subr.mxu0 0.0
      %5760 = vmatpush1.msra.mxu0 0.0
      %5761 = vmatprep.subr.mxu0 0.0
      %5762 = vmatpush1.msra.mxu0 0.0
      %5763 = vmatprep.subr.mxu0 0.0
      %5764 = vmatpush1.msra.mxu0 0.0
      %5765 = vmatprep.subr.mxu0 0.0
      %5766 = vmatpush1.msra.mxu0 0.0
      %5767 = vmatprep.subr.mxu0 0.0
      %5768 = vmatpush1.msra.mxu0 0.0
      %5769 = vmatprep.subr.mxu0 0.0
      %5770 = vmatpush1.msra.mxu0 0.0
      %5771 = vmatprep.subr.mxu0 0.0
      %5772 = vmatpush1.msra.mxu0 0.0
      %5773 = vmatprep.subr.mxu0 0.0
      %5774 = vmatpush1.msra.mxu0 0.0
      %5775 = vmatprep.mubr.f32.mxu0 0.0
      %5776 = vmatmul.mubr.f32.gmra.mrb[0].mxu0 %v5046
      %v5777 = vpop.f32.mrb[0].mxu0
      %v5778 = vadd.f32 0.0, %v5777
      %v5779 = vpop.f32.mrb[0].mxu0
      %5780 = vdwg.mxu0
      %v5781 = vmul.f32 %v5778, 0.0625
      %v5782 = vmul.f32 %v5532, %v5532
      %v5783 = vmul.f32 %v5533, %v5533
      %5784 = vmatprep.subr.mxu0 0.0
      %5785 = vmatpush1.msra.mxu0 %v5782
      %5786 = vmatprep.subr.mxu0 0.0
      %5787 = vmatpush1.msra.mxu0 %v5783
      %5788 = vmatprep.subr.mxu0 0.0
      %5789 = vmatpush1.msra.mxu0 0.0
      %5790 = vmatprep.subr.mxu0 0.0
      %5791 = vmatpush1.msra.mxu0 0.0
      %5792 = vmatprep.subr.mxu0 0.0
      %5793 = vmatpush1.msra.mxu0 0.0
      %5794 = vmatprep.subr.mxu0 0.0
      %5795 = vmatpush1.msra.mxu0 0.0
      %5796 = vmatprep.subr.mxu0 0.0
      %5797 = vmatpush1.msra.mxu0 0.0
      %5798 = vmatprep.subr.mxu0 0.0
      %5799 = vmatpush1.msra.mxu0 0.0
      %5800 = vmatprep.subr.mxu0 0.0
      %5801 = vmatpush1.msra.mxu0 0.0
      %5802 = vmatprep.subr.mxu0 0.0
      %5803 = vmatpush1.msra.mxu0 0.0
      %5804 = vmatprep.subr.mxu0 0.0
      %5805 = vmatpush1.msra.mxu0 0.0
      %5806 = vmatprep.subr.mxu0 0.0
      %5807 = vmatpush1.msra.mxu0 0.0
      %5808 = vmatprep.subr.mxu0 0.0
      %5809 = vmatpush1.msra.mxu0 0.0
      %5810 = vmatprep.subr.mxu0 0.0
      %5811 = vmatpush1.msra.mxu0 0.0
      %5812 = vmatprep.subr.mxu0 0.0
      %5813 = vmatpush1.msra.mxu0 0.0
      %5814 = vmatprep.subr.mxu0 0.0
      %5815 = vmatpush1.msra.mxu0 0.0
      %5816 = vmatprep.subr.mxu0 0.0
      %5817 = vmatpush1.msra.mxu0 0.0
      %5818 = vmatprep.subr.mxu0 0.0
      %5819 = vmatpush1.msra.mxu0 0.0
      %5820 = vmatprep.subr.mxu0 0.0
      %5821 = vmatpush1.msra.mxu0 0.0
      %5822 = vmatprep.subr.mxu0 0.0
      %5823 = vmatpush1.msra.mxu0 0.0
      %5824 = vmatprep.subr.mxu0 0.0
      %5825 = vmatpush1.msra.mxu0 0.0
      %5826 = vmatprep.subr.mxu0 0.0
      %5827 = vmatpush1.msra.mxu0 0.0
      %5828 = vmatprep.subr.mxu0 0.0
      %5829 = vmatpush1.msra.mxu0 0.0
      %5830 = vmatprep.subr.mxu0 0.0
      %5831 = vmatpush1.msra.mxu0 0.0
      %5832 = vmatprep.subr.mxu0 0.0
      %5833 = vmatpush1.msra.mxu0 0.0
      %5834 = vmatprep.subr.mxu0 0.0
      %5835 = vmatpush1.msra.mxu0 0.0
      %5836 = vmatprep.subr.mxu0 0.0
      %5837 = vmatpush1.msra.mxu0 0.0
      %5838 = vmatprep.subr.mxu0 0.0
      %5839 = vmatpush1.msra.mxu0 0.0
      %5840 = vmatprep.subr.mxu0 0.0
      %5841 = vmatpush1.msra.mxu0 0.0
      %5842 = vmatprep.subr.mxu0 0.0
      %5843 = vmatpush1.msra.mxu0 0.0
      %5844 = vmatprep.subr.mxu0 0.0
      %5845 = vmatpush1.msra.mxu0 0.0
      %5846 = vmatprep.subr.mxu0 0.0
      %5847 = vmatpush1.msra.mxu0 0.0
      %5848 = vmatprep.mubr.f32.mxu0 0.0
      %5849 = vmatmul.mubr.f32.gmra.mrb[0].mxu0 %v5046
      %v5850 = vpop.f32.mrb[0].mxu0
      %v5851 = vadd.f32 0.0, %v5850
      %v5852 = vpop.f32.mrb[0].mxu0
      %5853 = vdwg.mxu0
      %v5854 = vmul.f32 %v5851, 0.0625
      %v5855 = vmul.f32 %v5781, %v5781
      %v5856 = vsub.f32 %v5854, %v5855
      %v5857 = vmax.f32 %v5856, 0.0
      %v5858 = vlaneseq
      %v5859 = vshrl.u32 %v5858, 7
      %v5860 = vsub.s32 0, %v5859
      %v5861 = vrot.slane %v5781, %v5860
      %v5862 = vsub.f32 %v5532, %v5861
      %v5863 = vsub.f32 %v5533, %v5861
      %v5864 = vadd.f32 %v5857, 1e-05
      %v5865 = vrsqrt.pop %v5864
      %v5866 = vlaneseq
      %v5867 = vshrl.u32 %v5866, 7
      %v5868 = vsub.s32 0, %v5867
      %v5869 = vrot.slane %v5865, %v5868
      %v5870 = vmul.f32 %v5862, %v5869
      %v5871 = vmul.f32 %v5863, %v5869
      %5873 = vset.pattern.permute.xlu0 0
      %5874 = vperm.xlu0 %5873, %v5709
      %v5875 = vpop.permute.xlu0 %5874
      %5878 = vset.pattern.permute.xlu0 0
      %5879 = vperm.xlu0 %5878, %v5710
      %v5880 = vpop.permute.xlu0 %5879
      %v5882 = vmul.f32 %v5870, %v5875
      %v5883 = vmul.f32 %v5871, %v5880
      %5886 = vrot.lane.b32.xlu0 %v5882, 11
      %v5887 = vpop.permute.xlu0 %5886
      %5888 = vrot.lane.b32.xlu0 %v5883, 11
      %v5889 = vpop.permute.xlu0 %5888
      %v5892 = vadd.f32 %v5707, %v5887
      %v5893 = vadd.f32 %v5708, %v5889
      %5894 = vst.msk [vmem:[#allocation8] sm:$0xff] %vm5221, %v5707
      %5895 = vst.msk [vmem:[#allocation8 + $0x8] sm:$0xff] %vm5221, %v5708
      %vm5896 = vcmask 728152
      %5897 = vst.msk [vmem:[#allocation8] sm:$0xff] %vm5896, %v5892
      %5898 = vst.msk [vmem:[#allocation8 + $0x8] sm:$0xff] %vm5896, %v5893
      %v5899 = vld [vmem:[#allocation8] sm:$0xff]
      %v5900 = vld [vmem:[#allocation8 + $0x8] sm:$0xff]
      %5901 = vst.msk [vmem:[#allocation9] sm:$0xff] %vm5226, %v5899
      %5902 = vst.msk [vmem:[#allocation9 + $0x8] sm:$0xff] %vm5226, %v5900
      %v5903 = vld [vmem:[#allocation8] sm:$0xff]
      %v5904 = vld [vmem:[#allocation8 + $0x8] sm:$0xff]
      %5907 = vrot.lane.b32.xlu0 %v5903, 127
      %v5908 = vpop.permute.xlu0 %5907
      %5909 = vrot.lane.b32.xlu0 %v5904, 127
      %v5910 = vpop.permute.xlu0 %5909
      %5913 = vst.msk [vmem:[#allocation9 + $0x10] sm:$0xff] %vm5226, %v5908
      %5914 = vst.msk [vmem:[#allocation9 + $0x18] sm:$0xff] %vm5226, %v5910
      %v5915 = vld [vmem:[#allocation8] sm:$0xff]
      %v5916 = vld [vmem:[#allocation8 + $0x8] sm:$0xff]
      %5919 = vrot.lane.b32.xlu0 %v5915, 126
      %v5920 = vpop.permute.xlu0 %5919
      %5921 = vrot.lane.b32.xlu0 %v5916, 126
      %v5922 = vpop.permute.xlu0 %5921
      %5925 = vst.msk [vmem:[#allocation9 + $0x20] sm:$0xff] %vm5226, %v5920
      %5926 = vst.msk [vmem:[#allocation9 + $0x28] sm:$0xff] %vm5226, %v5922
      %v5927 = vld [vmem:[#allocation8] sm:$0xff]
      %v5928 = vld [vmem:[#allocation8 + $0x8] sm:$0xff]
      %5931 = vrot.lane.b32.xlu0 %v5927, 118
      %v5932 = vpop.permute.xlu0 %5931
      %5933 = vrot.lane.b32.xlu0 %v5928, 118
      %v5934 = vpop.permute.xlu0 %5933
      %5937 = vst.msk [vmem:[#allocation9 + $0x30] sm:$0xff] %vm5226, %v5932
      %5938 = vst.msk [vmem:[#allocation9 + $0x38] sm:$0xff] %vm5226, %v5934
      %v5939 = vld [vmem:[#allocation8] sm:$0xff]
      %v5940 = vld [vmem:[#allocation8 + $0x8] sm:$0xff]
      %5943 = vrot.lane.b32.xlu0 %v5939, 117
      %v5944 = vpop.permute.xlu0 %5943
      %5945 = vrot.lane.b32.xlu0 %v5940, 117
      %v5946 = vpop.permute.xlu0 %5945
      %5949 = vst.msk [vmem:[#allocation9 + $0x40] sm:$0xff] %vm5226, %v5944
      %5950 = vst.msk [vmem:[#allocation9 + $0x48] sm:$0xff] %vm5226, %v5946
      %v5951 = vld [vmem:[#allocation8] sm:$0xff]
      %v5952 = vld [vmem:[#allocation8 + $0x8] sm:$0xff]
      %5955 = vrot.lane.b32.xlu0 %v5951, 116
      %v5956 = vpop.permute.xlu0 %5955
      %5957 = vrot.lane.b32.xlu0 %v5952, 116
      %v5958 = vpop.permute.xlu0 %5957
      %5961 = vst.msk [vmem:[#allocation9 + $0x50] sm:$0xff] %vm5226, %v5956
      %5962 = vst.msk [vmem:[#allocation9 + $0x58] sm:$0xff] %vm5226, %v5958
      %v5963 = vld [vmem:[#allocation8] sm:$0xff]
      %v5964 = vld [vmem:[#allocation8 + $0x8] sm:$0xff]
      %5967 = vrot.lane.b32.xlu0 %v5963, 108
      %v5968 = vpop.permute.xlu0 %5967
      %5969 = vrot.lane.b32.xlu0 %v5964, 108
      %v5970 = vpop.permute.xlu0 %5969
      %5973 = vst.msk [vmem:[#allocation9 + $0x60] sm:$0xff] %vm5226, %v5968
      %5974 = vst.msk [vmem:[#allocation9 + $0x68] sm:$0xff] %vm5226, %v5970
      %v5975 = vld [vmem:[#allocation8] sm:$0xff]
      %v5976 = vld [vmem:[#allocation8 + $0x8] sm:$0xff]
      %5979 = vrot.lane.b32.xlu0 %v5975, 107
      %v5980 = vpop.permute.xlu0 %5979
      %5981 = vrot.lane.b32.xlu0 %v5976, 107
      %v5982 = vpop.permute.xlu0 %5981
      %5985 = vst.msk [vmem:[#allocation9 + $0x70] sm:$0xff] %vm5226, %v5980
      %5986 = vst.msk [vmem:[#allocation9 + $0x78] sm:$0xff] %vm5226, %v5982
      %v5987 = vld [vmem:[#allocation8] sm:$0xff]
      %v5988 = vld [vmem:[#allocation8 + $0x8] sm:$0xff]
      %5991 = vrot.lane.b32.xlu0 %v5987, 106
      %v5992 = vpop.permute.xlu0 %5991
      %5993 = vrot.lane.b32.xlu0 %v5988, 106
      %v5994 = vpop.permute.xlu0 %5993
      %5997 = vst.msk [vmem:[#allocation9 + $0x80] sm:$0xff] %vm5226, %v5992
      %5998 = vst.msk [vmem:[#allocation9 + $0x88] sm:$0xff] %vm5226, %v5994
      %v5999 = vld [vmem:[%s13] sm:$0xff]
      %v6000 = vld [vmem:[%s13 + $0x8] sm:$0xff]
      %v6001 = vld [vmem:[%s13 + $0x10] sm:$0xff]
      %v6002 = vld [vmem:[%s13 + $0x18] sm:$0xff]
      %v6003 = vld [vmem:[#allocation9] sm:$0xff]
      %v6004 = vld [vmem:[#allocation9 + $0x8] sm:$0xff]
      %v6005 = vld [vmem:[#allocation9 + $0x10] sm:$0xff]
      %v6006 = vld [vmem:[#allocation9 + $0x18] sm:$0xff]
      %v6007 = vld [vmem:[#allocation9 + $0x20] sm:$0xff]
      %v6008 = vld [vmem:[#allocation9 + $0x28] sm:$0xff]
      %v6009 = vld [vmem:[#allocation9 + $0x30] sm:$0xff]
      %v6010 = vld [vmem:[#allocation9 + $0x38] sm:$0xff]
      %v6011 = vld [vmem:[#allocation9 + $0x40] sm:$0xff]
      %v6012 = vld [vmem:[#allocation9 + $0x48] sm:$0xff]
      %v6013 = vld [vmem:[#allocation9 + $0x50] sm:$0xff]
      %v6014 = vld [vmem:[#allocation9 + $0x58] sm:$0xff]
      %v6015 = vld [vmem:[#allocation9 + $0x60] sm:$0xff]
      %v6016 = vld [vmem:[#allocation9 + $0x68] sm:$0xff]
      %v6017 = vld [vmem:[#allocation9 + $0x70] sm:$0xff]
      %v6018 = vld [vmem:[#allocation9 + $0x78] sm:$0xff]
      %v6019 = vld [vmem:[#allocation9 + $0x80] sm:$0xff]
      %v6020 = vld [vmem:[#allocation9 + $0x88] sm:$0xff]
      %v6021 = vpack.c.bf16 %v6004, %v6003
      %v6022 = vpack.c.bf16 %v6006, %v6005
      %v6023 = vpack.c.bf16 %v6008, %v6007
      %v6024 = vpack.c.bf16 %v6010, %v6009
      %v6025 = vpack.c.bf16 %v6012, %v6011
      %v6026 = vpack.c.bf16 %v6014, %v6013
      %v6027 = vpack.c.bf16 %v6016, %v6015
      %v6028 = vpack.c.bf16 %v6018, %v6017
      %v6029 = vpack.c.bf16 %v6020, %v6019
      %v6034 = vunpack.c.l.b16 %v5999
      %v6035 = vunpack.c.h.b16 %v5999
      %v6036 = vunpack.c.l.b16 %v6000
      %v6037 = vunpack.c.h.b16 %v6000
      %v6038 = vunpack.c.l.b16 %v6001
      %v6039 = vunpack.c.h.b16 %v6001
      %v6040 = vunpack.c.l.b16 %v6002
      %v6041 = vunpack.c.h.b16 %v6002
      %v6042 = vpack.c.b16 %v6036, %v6034
      %v6043 = vpack.c.b16 %v6037, %v6035
      %v6044 = vpack.c.b16 %v6040, %v6038
      %v6045 = vpack.c.b16 %v6041, %v6039
      %v6049 = vsel %vm5045, %v6043, 0
      %v6052 = vsel %vm5045, %v6045, 0
      %6054 = vmatprep.subr.bf16.mxu0 0
      %6055 = vmatpush1.bf16.msra.mxu0 %v6021
      %6056 = vmatprep.subr.bf16.mxu0 0
      %6057 = vmatpush1.bf16.msra.mxu0 %v6022
      %6058 = vmatprep.subr.bf16.mxu0 0
      %6059 = vmatpush1.bf16.msra.mxu0 %v6023
      %6060 = vmatprep.subr.bf16.mxu0 0
      %6061 = vmatpush1.bf16.msra.mxu0 %v6024
      %6062 = vmatprep.subr.bf16.mxu0 0
      %6063 = vmatpush1.bf16.msra.mxu0 %v6025
      %6064 = vmatprep.subr.bf16.mxu0 0
      %6065 = vmatpush1.bf16.msra.mxu0 %v6026
      %6066 = vmatprep.subr.bf16.mxu0 0
      %6067 = vmatpush1.bf16.msra.mxu0 %v6027
      %6068 = vmatprep.subr.bf16.mxu0 0
      %6069 = vmatpush1.bf16.msra.mxu0 %v6028
      %6070 = vmatprep.subr.bf16.mxu0 0
      %6071 = vmatpush1.bf16.msra.mxu0 %v6029
      %6072 = vmatprep.subr.bf16.mxu0 0
      %6073 = vmatpush1.bf16.msra.mxu0 0
      %6074 = vmatprep.subr.bf16.mxu0 0
      %6075 = vmatpush1.bf16.msra.mxu0 0
      %6076 = vmatprep.subr.bf16.mxu0 0
      %6077 = vmatpush1.bf16.msra.mxu0 0
      %6078 = vmatprep.subr.bf16.mxu0 0
      %6079 = vmatpush1.bf16.msra.mxu0 0
      %6080 = vmatprep.subr.bf16.mxu0 0
      %6081 = vmatpush1.bf16.msra.mxu0 0
      %6082 = vmatprep.subr.bf16.mxu0 0
      %6083 = vmatpush1.bf16.msra.mxu0 0
      %6084 = vmatprep.subr.bf16.mxu0 0
      %6085 = vmatpush1.bf16.msra.mxu0 0
      %6086 = vmatprep.mubr.bf16.mxu0 %v6049
      %6087 = vmatmul.mubr.bf16.gmra.mrb[0].mxu0 %v6042
      %v6088 = vpop.f32.mrb[0].mxu0
      %v6089 = vadd.f32 0.0, %v6088
      %v6090 = vpop.f32.mrb[0].mxu0
      %v6091 = vpop.f32.mrb[0].mxu0
      %v6092 = vadd.f32 0.0, %v6091
      %v6093 = vpop.f32.mrb[0].mxu0
      %6094 = vmatprep.mubr.bf16.mxu0 %v6052
      %6095 = vmatmul.mubr.bf16.gmra.mrb[0].mxu0 %v6044
      %v6096 = vpop.f32.mrb[0].mxu0
      %v6097 = vadd.f32 0.0, %v6096
      %v6098 = vpop.f32.mrb[0].mxu0
      %v6099 = vpop.f32.mrb[0].mxu0
      %v6100 = vadd.f32 0.0, %v6099
      %v6101 = vpop.f32.mrb[0].mxu0
      %6102 = vdwg.mxu0
      %v6103 = vld [vmem:[#allocation8] sm:$0xff]
      %v6104 = vld [vmem:[#allocation8 + $0x8] sm:$0xff]
      %v6105 = vmul.f32 %v6103, %v6103
      %v6106 = vmul.f32 %v6104, %v6104
      %6107 = vmatprep.subr.mxu0 0.0
      %6108 = vmatpush1.msra.mxu0 %v6105
      %6109 = vmatprep.subr.mxu0 0.0
      %6110 = vmatpush1.msra.mxu0 %v6106
      %6111 = vmatprep.subr.mxu0 0.0
      %6112 = vmatpush1.msra.mxu0 0.0
      %6113 = vmatprep.subr.mxu0 0.0
      %6114 = vmatpush1.msra.mxu0 0.0
      %6115 = vmatprep.subr.mxu0 0.0
      %6116 = vmatpush1.msra.mxu0 0.0
      %6117 = vmatprep.subr.mxu0 0.0
      %6118 = vmatpush1.msra.mxu0 0.0
      %6119 = vmatprep.subr.mxu0 0.0
      %6120 = vmatpush1.msra.mxu0 0.0
      %6121 = vmatprep.subr.mxu0 0.0
      %6122 = vmatpush1.msra.mxu0 0.0
      %6123 = vmatprep.subr.mxu0 0.0
      %6124 = vmatpush1.msra.mxu0 0.0
      %6125 = vmatprep.subr.mxu0 0.0
      %6126 = vmatpush1.msra.mxu0 0.0
      %6127 = vmatprep.subr.mxu0 0.0
      %6128 = vmatpush1.msra.mxu0 0.0
      %6129 = vmatprep.subr.mxu0 0.0
      %6130 = vmatpush1.msra.mxu0 0.0
      %6131 = vmatprep.subr.mxu0 0.0
      %6132 = vmatpush1.msra.mxu0 0.0
      %6133 = vmatprep.subr.mxu0 0.0
      %6134 = vmatpush1.msra.mxu0 0.0
      %6135 = vmatprep.subr.mxu0 0.0
      %6136 = vmatpush1.msra.mxu0 0.0
      %6137 = vmatprep.subr.mxu0 0.0
      %6138 = vmatpush1.msra.mxu0 0.0
      %6139 = vmatprep.subr.mxu0 0.0
      %6140 = vmatpush1.msra.mxu0 0.0
      %6141 = vmatprep.subr.mxu0 0.0
      %6142 = vmatpush1.msra.mxu0 0.0
      %6143 = vmatprep.subr.mxu0 0.0
      %6144 = vmatpush1.msra.mxu0 0.0
      %6145 = vmatprep.subr.mxu0 0.0
      %6146 = vmatpush1.msra.mxu0 0.0
      %6147 = vmatprep.subr.mxu0 0.0
      %6148 = vmatpush1.msra.mxu0 0.0
      %6149 = vmatprep.subr.mxu0 0.0
      %6150 = vmatpush1.msra.mxu0 0.0
      %6151 = vmatprep.subr.mxu0 0.0
      %6152 = vmatpush1.msra.mxu0 0.0
      %6153 = vmatprep.subr.mxu0 0.0
      %6154 = vmatpush1.msra.mxu0 0.0
      %6155 = vmatprep.subr.mxu0 0.0
      %6156 = vmatpush1.msra.mxu0 0.0
      %6157 = vmatprep.subr.mxu0 0.0
      %6158 = vmatpush1.msra.mxu0 0.0
      %6159 = vmatprep.subr.mxu0 0.0
      %6160 = vmatpush1.msra.mxu0 0.0
      %6161 = vmatprep.subr.mxu0 0.0
      %6162 = vmatpush1.msra.mxu0 0.0
      %6163 = vmatprep.subr.mxu0 0.0
      %6164 = vmatpush1.msra.mxu0 0.0
      %6165 = vmatprep.subr.mxu0 0.0
      %6166 = vmatpush1.msra.mxu0 0.0
      %6167 = vmatprep.subr.mxu0 0.0
      %6168 = vmatpush1.msra.mxu0 0.0
      %6169 = vmatprep.subr.mxu0 0.0
      %6170 = vmatpush1.msra.mxu0 0.0
      %6171 = vmatprep.mubr.f32.mxu0 0.0
      %6172 = vmatmul.mubr.f32.gmra.mrb[0].mxu0 %v5046
      %v6173 = vpop.f32.mrb[0].mxu0
      %v6174 = vadd.f32 0.0, %v6173
      %v6175 = vpop.f32.mrb[0].mxu0
      %6176 = vdwg.mxu0
      %6178 = vrot.lane.b32.xlu0 %v6174, 127
      %v6179 = vpop.permute.xlu0 %6178
      %v6181 = vadd.f32 %v6174, %v6179
      %6182 = vrot.lane.b32.xlu0 %v6174, 126
      %v6183 = vpop.permute.xlu0 %6182
      %v6185 = vadd.f32 %v6181, %v6183
      %6186 = vrot.lane.b32.xlu0 %v6174, 118
      %v6187 = vpop.permute.xlu0 %6186
      %v6189 = vadd.f32 %v6185, %v6187
      %6190 = vrot.lane.b32.xlu0 %v6174, 117
      %v6191 = vpop.permute.xlu0 %6190
      %v6193 = vadd.f32 %v6189, %v6191
      %6194 = vrot.lane.b32.xlu0 %v6174, 116
      %v6195 = vpop.permute.xlu0 %6194
      %v6197 = vadd.f32 %v6193, %v6195
      %6198 = vrot.lane.b32.xlu0 %v6174, 108
      %v6199 = vpop.permute.xlu0 %6198
      %v6201 = vadd.f32 %v6197, %v6199
      %6202 = vrot.lane.b32.xlu0 %v6174, 107
      %v6203 = vpop.permute.xlu0 %6202
      %v6205 = vadd.f32 %v6201, %v6203
      %6206 = vrot.lane.b32.xlu0 %v6174, 106
      %v6207 = vpop.permute.xlu0 %6206
      %v6209 = vadd.f32 %v6205, %v6207
      %v6210 = vand.u32 2147483647, %v6089
      %v6211 = vand.u32 2147483647, %v6092
      %v6212 = vand.u32 2147483647, %v6097
      %v6213 = vand.u32 2147483647, %v6100
      %v6214 = vadd.f32 %v6209, 1e-06
      %v6215 = vrsqrt.pop %v6214
      %v6216 = vlaneseq
      %v6217 = vshrl.u32 %v6216, 7
      %v6218 = vsub.s32 0, %v6217
      %v6219 = vrot.slane %v6215, %v6218
      %v6220 = vmul.f32 %v6210, %v6219
      %v6221 = vmul.f32 %v6211, %v6219
      %v6222 = vmul.f32 %v6212, %v6219
      %v6223 = vmul.f32 %v6213, %v6219
      %v6224 = vmul.f32 %v6089, %v6220
      %v6225 = vmul.f32 %v6092, %v6221
      %v6226 = vmul.f32 %v6097, %v6222
      %v6227 = vmul.f32 %v6100, %v6223
      %v6228 = vld [vmem:[%s21] sm:$0xff]
      %v6229 = vld [vmem:[%s21 + $0x8] sm:$0xff]
      %v6230 = vld [vmem:[%s21 + $0x10] sm:$0xff]
      %v6231 = vld [vmem:[%s21 + $0x18] sm:$0xff]
      %v6232 = vld [vmem:[%s21 + $0x20] sm:$0xff]
      %v6233 = vld [vmem:[%s21 + $0x28] sm:$0xff]
      %v6234 = vld [vmem:[%s21 + $0x30] sm:$0xff]
      %v6235 = vld [vmem:[%s21 + $0x38] sm:$0xff]
      %v6236 = vld [vmem:[%s21 + $0x40] sm:$0xff]
      %v6237 = vld [vmem:[%s21 + $0x48] sm:$0x3f]
      %v6239 = vsel %vm5226, %v6224, 0
      %v6242 = vsel %vm5226, %v6225, 0
      %v6245 = vsel %vm5226, %v6226, 0
      %v6248 = vsel %vm5226, %v6227, 0
      %v6251 = vsel %vm1134, %v6237, 0
      %6253 = vmatprep.subr.mxu0 0.0
      %6254 = vmatpush1.msra.mxu0 %v6228
      %6255 = vmatprep.subr.mxu0 0.0
      %6256 = vmatpush1.msra.mxu0 %v6229
      %6257 = vmatprep.subr.mxu0 0.0
      %6258 = vmatpush1.msra.mxu0 %v6230
      %6259 = vmatprep.subr.mxu0 0.0
      %6260 = vmatpush1.msra.mxu0 %v6231
      %6261 = vmatprep.subr.mxu0 0.0
      %6262 = vmatpush1.msra.mxu0 %v6232
      %6263 = vmatprep.subr.mxu0 0.0
      %6264 = vmatpush1.msra.mxu0 %v6233
      %6265 = vmatprep.subr.mxu0 0.0
      %6266 = vmatpush1.msra.mxu0 %v6234
      %6267 = vmatprep.subr.mxu0 0.0
      %6268 = vmatpush1.msra.mxu0 %v6235
      %6269 = vmatprep.subr.mxu0 0.0
      %6270 = vmatpush1.msra.mxu0 %v6236
      %6271 = vmatprep.subr.mxu0 0.0
      %6272 = vmatpush1.msra.mxu0 %v6251
      %6273 = vmatprep.subr.mxu0 0.0
      %6274 = vmatpush1.msra.mxu0 0.0
      %6275 = vmatprep.subr.mxu0 0.0
      %6276 = vmatpush1.msra.mxu0 0.0
      %6277 = vmatprep.subr.mxu0 0.0
      %6278 = vmatpush1.msra.mxu0 0.0
      %6279 = vmatprep.subr.mxu0 0.0
      %6280 = vmatpush1.msra.mxu0 0.0
      %6281 = vmatprep.subr.mxu0 0.0
      %6282 = vmatpush1.msra.mxu0 0.0
      %6283 = vmatprep.subr.mxu0 0.0
      %6284 = vmatpush1.msra.mxu0 0.0
      %6285 = vmatprep.subr.mxu0 0.0
      %6286 = vmatpush1.msra.mxu0 0.0
      %6287 = vmatprep.subr.mxu0 0.0
      %6288 = vmatpush1.msra.mxu0 0.0
      %6289 = vmatprep.subr.mxu0 0.0
      %6290 = vmatpush1.msra.mxu0 0.0
      %6291 = vmatprep.subr.mxu0 0.0
      %6292 = vmatpush1.msra.mxu0 0.0
      %6293 = vmatprep.subr.mxu0 0.0
      %6294 = vmatpush1.msra.mxu0 0.0
      %6295 = vmatprep.subr.mxu0 0.0
      %6296 = vmatpush1.msra.mxu0 0.0
      %6297 = vmatprep.subr.mxu0 0.0
      %6298 = vmatpush1.msra.mxu0 0.0
      %6299 = vmatprep.subr.mxu0 0.0
      %6300 = vmatpush1.msra.mxu0 0.0
      %6301 = vmatprep.subr.mxu0 0.0
      %6302 = vmatpush1.msra.mxu0 0.0
      %6303 = vmatprep.subr.mxu0 0.0
      %6304 = vmatpush1.msra.mxu0 0.0
      %6305 = vmatprep.subr.mxu0 0.0
      %6306 = vmatpush1.msra.mxu0 0.0
      %6307 = vmatprep.subr.mxu0 0.0
      %6308 = vmatpush1.msra.mxu0 0.0
      %6309 = vmatprep.subr.mxu0 0.0
      %6310 = vmatpush1.msra.mxu0 0.0
      %6311 = vmatprep.subr.mxu0 0.0
      %6312 = vmatpush1.msra.mxu0 0.0
      %6313 = vmatprep.subr.mxu0 0.0
      %6314 = vmatpush1.msra.mxu0 0.0
      %6315 = vmatprep.subr.mxu0 0.0
      %6316 = vmatpush1.msra.mxu0 0.0
      %6317 = vmatprep.mubr.f32.mxu0 0.0
      %6318 = vmatmul.mubr.f32.gmra.mrb[0].mxu0 %v6239
      %v6319 = vpop.f32.mrb[0].mxu0
      %v6320 = vadd.f32 0.0, %v6319
      %v6321 = vpop.f32.mrb[0].mxu0
      %6322 = vmatprep.mubr.f32.mxu0 0.0
      %6323 = vmatmul.mubr.f32.gmra.mrb[0].mxu0 %v6242
      %v6324 = vpop.f32.mrb[0].mxu0
      %v6325 = vadd.f32 0.0, %v6324
      %v6326 = vpop.f32.mrb[0].mxu0
      %6327 = vmatprep.mubr.f32.mxu0 0.0
      %6328 = vmatmul.mubr.f32.gmra.mrb[0].mxu0 %v6245
      %v6329 = vpop.f32.mrb[0].mxu0
      %v6330 = vadd.f32 0.0, %v6329
      %v6331 = vpop.f32.mrb[0].mxu0
      %6332 = vmatprep.mubr.f32.mxu0 0.0
      %6333 = vmatmul.mubr.f32.gmra.mrb[0].mxu0 %v6248
      %v6334 = vpop.f32.mrb[0].mxu0
      %v6335 = vadd.f32 0.0, %v6334
      %v6336 = vpop.f32.mrb[0].mxu0
      %6337 = vdwg.mxu0
      %v6338 = vld [vmem:[%s14] sm:$0xff]
      %v6339 = vld [vmem:[%s14 + $0x8] sm:$0xff]
      %v6340 = vld [vmem:[%s14 + $0x10] sm:$0xff]
      %v6341 = vld [vmem:[%s14 + $0x18] sm:$0xff]
      %6344 = vrot.lane.b32.xlu0 %v5892, 117
      %v6345 = vpop.permute.xlu0 %6344
      %6346 = vrot.lane.b32.xlu0 %v5893, 117
      %v6347 = vpop.permute.xlu0 %6346
      %v6351 = vsel %vm5045, %v6338, 0
      %v6354 = vsel %vm5045, %v6339, 0
      %v6357 = vsel %vm5045, %v6340, 0
      %v6360 = vsel %vm5045, %v6341, 0
      %6362 = vmatprep.subr.mxu0 0.0
      %6363 = vmatpush1.msra.mxu0 %v6345
      %6364 = vmatprep.subr.mxu0 0.0
      %6365 = vmatpush1.msra.mxu0 %v6347
      %6366 = vmatprep.subr.mxu0 0.0
      %6367 = vmatpush1.msra.mxu0 0.0
      %6368 = vmatprep.subr.mxu0 0.0
      %6369 = vmatpush1.msra.mxu0 0.0
      %6370 = vmatprep.subr.mxu0 0.0
      %6371 = vmatpush1.msra.mxu0 0.0
      %6372 = vmatprep.subr.mxu0 0.0
      %6373 = vmatpush1.msra.mxu0 0.0
      %6374 = vmatprep.subr.mxu0 0.0
      %6375 = vmatpush1.msra.mxu0 0.0
      %6376 = vmatprep.subr.mxu0 0.0
      %6377 = vmatpush1.msra.mxu0 0.0
      %6378 = vmatprep.subr.mxu0 0.0
      %6379 = vmatpush1.msra.mxu0 0.0
      %6380 = vmatprep.subr.mxu0 0.0
      %6381 = vmatpush1.msra.mxu0 0.0
      %6382 = vmatprep.subr.mxu0 0.0
      %6383 = vmatpush1.msra.mxu0 0.0
      %6384 = vmatprep.subr.mxu0 0.0
      %6385 = vmatpush1.msra.mxu0 0.0
      %6386 = vmatprep.subr.mxu0 0.0
      %6387 = vmatpush1.msra.mxu0 0.0
      %6388 = vmatprep.subr.mxu0 0.0
      %6389 = vmatpush1.msra.mxu0 0.0
      %6390 = vmatprep.subr.mxu0 0.0
      %6391 = vmatpush1.msra.mxu0 0.0
      %6392 = vmatprep.subr.mxu0 0.0
      %6393 = vmatpush1.msra.mxu0 0.0
      %6394 = vmatprep.subr.mxu0 0.0
      %6395 = vmatpush1.msra.mxu0 0.0
      %6396 = vmatprep.subr.mxu0 0.0
      %6397 = vmatpush1.msra.mxu0 0.0
      %6398 = vmatprep.subr.mxu0 0.0
      %6399 = vmatpush1.msra.mxu0 0.0
      %6400 = vmatprep.subr.mxu0 0.0
      %6401 = vmatpush1.msra.mxu0 0.0
      %6402 = vmatprep.subr.mxu0 0.0
      %6403 = vmatpush1.msra.mxu0 0.0
      %6404 = vmatprep.subr.mxu0 0.0
      %6405 = vmatpush1.msra.mxu0 0.0
      %6406 = vmatprep.subr.mxu0 0.0
      %6407 = vmatpush1.msra.mxu0 0.0
      %6408 = vmatprep.subr.mxu0 0.0
      %6409 = vmatpush1.msra.mxu0 0.0
      %6410 = vmatprep.subr.mxu0 0.0
      %6411 = vmatpush1.msra.mxu0 0.0
      %6412 = vmatprep.subr.mxu0 0.0
      %6413 = vmatpush1.msra.mxu0 0.0
      %6414 = vmatprep.subr.mxu0 0.0
      %6415 = vmatpush1.msra.mxu0 0.0
      %6416 = vmatprep.subr.mxu0 0.0
      %6417 = vmatpush1.msra.mxu0 0.0
      %6418 = vmatprep.subr.mxu0 0.0
      %6419 = vmatpush1.msra.mxu0 0.0
      %6420 = vmatprep.subr.mxu0 0.0
      %6421 = vmatpush1.msra.mxu0 0.0
      %6422 = vmatprep.subr.mxu0 0.0
      %6423 = vmatpush1.msra.mxu0 0.0
      %6424 = vmatprep.subr.mxu0 0.0
      %6425 = vmatpush1.msra.mxu0 0.0
      %6426 = vmatprep.mubr.f32.mxu0 0.0
      %6427 = vmatmul.mubr.f32.gmra.mrb[0].mxu0 %v6351
      %v6428 = vpop.f32.mrb[0].mxu0
      %v6429 = vadd.f32 0.0, %v6428
      %v6430 = vpop.f32.mrb[0].mxu0
      %6431 = vmatprep.mubr.f32.mxu0 0.0
      %6432 = vmatmul.mubr.f32.gmra.mrb[0].mxu0 %v6354
      %v6433 = vpop.f32.mrb[0].mxu0
      %v6434 = vadd.f32 0.0, %v6433
      %v6435 = vpop.f32.mrb[0].mxu0
      %6436 = vmatprep.mubr.f32.mxu0 0.0
      %6437 = vmatmul.mubr.f32.gmra.mrb[0].mxu0 %v6357
      %v6438 = vpop.f32.mrb[0].mxu0
      %v6439 = vadd.f32 0.0, %v6438
      %v6440 = vpop.f32.mrb[0].mxu0
      %6441 = vmatprep.mubr.f32.mxu0 0.0
      %6442 = vmatmul.mubr.f32.gmra.mrb[0].mxu0 %v6360
      %v6443 = vpop.f32.mrb[0].mxu0
      %v6444 = vadd.f32 0.0, %v6443
      %v6445 = vpop.f32.mrb[0].mxu0
      %6446 = vdwg.mxu0
      %v6447 = vmul.f32 %v5892, %v5892
      %v6448 = vmul.f32 %v5893, %v5893
      %v6449 = vand.u32 2147483647, %v6429
      %v6450 = vand.u32 2147483647, %v6434
      %v6451 = vand.u32 2147483647, %v6439
      %v6452 = vand.u32 2147483647, %v6444
      %6455 = vrot.lane.b32.xlu0 %v6447, 117
      %v6456 = vpop.permute.xlu0 %6455
      %6457 = vrot.lane.b32.xlu0 %v6448, 117
      %v6458 = vpop.permute.xlu0 %6457
      %6461 = vmatprep.subr.mxu0 0.0
      %6462 = vmatpush1.msra.mxu0 %v6456
      %6463 = vmatprep.subr.mxu0 0.0
      %6464 = vmatpush1.msra.mxu0 %v6458
      %6465 = vmatprep.subr.mxu0 0.0
      %6466 = vmatpush1.msra.mxu0 0.0
      %6467 = vmatprep.subr.mxu0 0.0
      %6468 = vmatpush1.msra.mxu0 0.0
      %6469 = vmatprep.subr.mxu0 0.0
      %6470 = vmatpush1.msra.mxu0 0.0
      %6471 = vmatprep.subr.mxu0 0.0
      %6472 = vmatpush1.msra.mxu0 0.0
      %6473 = vmatprep.subr.mxu0 0.0
      %6474 = vmatpush1.msra.mxu0 0.0
      %6475 = vmatprep.subr.mxu0 0.0
      %6476 = vmatpush1.msra.mxu0 0.0
      %6477 = vmatprep.subr.mxu0 0.0
      %6478 = vmatpush1.msra.mxu0 0.0
      %6479 = vmatprep.subr.mxu0 0.0
      %6480 = vmatpush1.msra.mxu0 0.0
      %6481 = vmatprep.subr.mxu0 0.0
      %6482 = vmatpush1.msra.mxu0 0.0
      %6483 = vmatprep.subr.mxu0 0.0
      %6484 = vmatpush1.msra.mxu0 0.0
      %6485 = vmatprep.subr.mxu0 0.0
      %6486 = vmatpush1.msra.mxu0 0.0
      %6487 = vmatprep.subr.mxu0 0.0
      %6488 = vmatpush1.msra.mxu0 0.0
      %6489 = vmatprep.subr.mxu0 0.0
      %6490 = vmatpush1.msra.mxu0 0.0
      %6491 = vmatprep.subr.mxu0 0.0
      %6492 = vmatpush1.msra.mxu0 0.0
      %6493 = vmatprep.subr.mxu0 0.0
      %6494 = vmatpush1.msra.mxu0 0.0
      %6495 = vmatprep.subr.mxu0 0.0
      %6496 = vmatpush1.msra.mxu0 0.0
      %6497 = vmatprep.subr.mxu0 0.0
      %6498 = vmatpush1.msra.mxu0 0.0
      %6499 = vmatprep.subr.mxu0 0.0
      %6500 = vmatpush1.msra.mxu0 0.0
      %6501 = vmatprep.subr.mxu0 0.0
      %6502 = vmatpush1.msra.mxu0 0.0
      %6503 = vmatprep.subr.mxu0 0.0
      %6504 = vmatpush1.msra.mxu0 0.0
      %6505 = vmatprep.subr.mxu0 0.0
      %6506 = vmatpush1.msra.mxu0 0.0
      %6507 = vmatprep.subr.mxu0 0.0
      %6508 = vmatpush1.msra.mxu0 0.0
      %6509 = vmatprep.subr.mxu0 0.0
      %6510 = vmatpush1.msra.mxu0 0.0
      %6511 = vmatprep.subr.mxu0 0.0
      %6512 = vmatpush1.msra.mxu0 0.0
      %6513 = vmatprep.subr.mxu0 0.0
      %6514 = vmatpush1.msra.mxu0 0.0
      %6515 = vmatprep.subr.mxu0 0.0
      %6516 = vmatpush1.msra.mxu0 0.0
      %6517 = vmatprep.subr.mxu0 0.0
      %6518 = vmatpush1.msra.mxu0 0.0
      %6519 = vmatprep.subr.mxu0 0.0
      %6520 = vmatpush1.msra.mxu0 0.0
      %6521 = vmatprep.subr.mxu0 0.0
      %6522 = vmatpush1.msra.mxu0 0.0
      %6523 = vmatprep.subr.mxu0 0.0
      %6524 = vmatpush1.msra.mxu0 0.0
      %6525 = vmatprep.mubr.f32.mxu0 0.0
      %6526 = vmatmul.mubr.f32.gmra.mrb[0].mxu0 %v5046
      %v6527 = vpop.f32.mrb[0].mxu0
      %v6528 = vadd.f32 1e-06, %v6527
      %v6529 = vpop.f32.mrb[0].mxu0
      %6530 = vdwg.mxu0
      %v6531 = vrsqrt.pop %v6528
      %v6532 = vlaneseq
      %v6533 = vshrl.u32 %v6532, 7
      %v6534 = vsub.s32 0, %v6533
      %v6535 = vrot.slane %v6531, %v6534
      %v6536 = vmul.f32 %v6449, %v6535
      %v6537 = vmul.f32 %v6450, %v6535
      %v6538 = vmul.f32 %v6451, %v6535
      %v6539 = vmul.f32 %v6452, %v6535
      %v6540 = vmul.f32 %v6429, %v6536
      %v6541 = vmul.f32 %v6434, %v6537
      %v6542 = vmul.f32 %v6439, %v6538
      %v6543 = vmul.f32 %v6444, %v6539
      %v6545 = vsel %vm5226, %v6540, 0
      %v6548 = vsel %vm5226, %v6541, 0
      %v6551 = vsel %vm5226, %v6542, 0
      %v6554 = vsel %vm5226, %v6543, 0
      %6556 = vmatprep.subr.mxu0 0.0
      %6557 = vmatpush1.msra.mxu0 %v6228
      %6558 = vmatprep.subr.mxu0 0.0
      %6559 = vmatpush1.msra.mxu0 %v6229
      %6560 = vmatprep.subr.mxu0 0.0
      %6561 = vmatpush1.msra.mxu0 %v6230
      %6562 = vmatprep.subr.mxu0 0.0
      %6563 = vmatpush1.msra.mxu0 %v6231
      %6564 = vmatprep.subr.mxu0 0.0
      %6565 = vmatpush1.msra.mxu0 %v6232
      %6566 = vmatprep.subr.mxu0 0.0
      %6567 = vmatpush1.msra.mxu0 %v6233
      %6568 = vmatprep.subr.mxu0 0.0
      %6569 = vmatpush1.msra.mxu0 %v6234
      %6570 = vmatprep.subr.mxu0 0.0
      %6571 = vmatpush1.msra.mxu0 %v6235
      %6572 = vmatprep.subr.mxu0 0.0
      %6573 = vmatpush1.msra.mxu0 %v6236
      %6574 = vmatprep.subr.mxu0 0.0
      %6575 = vmatpush1.msra.mxu0 %v6251
      %6576 = vmatprep.subr.mxu0 0.0
      %6577 = vmatpush1.msra.mxu0 0.0
      %6578 = vmatprep.subr.mxu0 0.0
      %6579 = vmatpush1.msra.mxu0 0.0
      %6580 = vmatprep.subr.mxu0 0.0
      %6581 = vmatpush1.msra.mxu0 0.0
      %6582 = vmatprep.subr.mxu0 0.0
      %6583 = vmatpush1.msra.mxu0 0.0
      %6584 = vmatprep.subr.mxu0 0.0
      %6585 = vmatpush1.msra.mxu0 0.0
      %6586 = vmatprep.subr.mxu0 0.0
      %6587 = vmatpush1.msra.mxu0 0.0
      %6588 = vmatprep.subr.mxu0 0.0
      %6589 = vmatpush1.msra.mxu0 0.0
      %6590 = vmatprep.subr.mxu0 0.0
      %6591 = vmatpush1.msra.mxu0 0.0
      %6592 = vmatprep.subr.mxu0 0.0
      %6593 = vmatpush1.msra.mxu0 0.0
      %6594 = vmatprep.subr.mxu0 0.0
      %6595 = vmatpush1.msra.mxu0 0.0
      %6596 = vmatprep.subr.mxu0 0.0
      %6597 = vmatpush1.msra.mxu0 0.0
      %6598 = vmatprep.subr.mxu0 0.0
      %6599 = vmatpush1.msra.mxu0 0.0
      %6600 = vmatprep.subr.mxu0 0.0
      %6601 = vmatpush1.msra.mxu0 0.0
      %6602 = vmatprep.subr.mxu0 0.0
      %6603 = vmatpush1.msra.mxu0 0.0
      %6604 = vmatprep.subr.mxu0 0.0
      %6605 = vmatpush1.msra.mxu0 0.0
      %6606 = vmatprep.subr.mxu0 0.0
      %6607 = vmatpush1.msra.mxu0 0.0
      %6608 = vmatprep.subr.mxu0 0.0
      %6609 = vmatpush1.msra.mxu0 0.0
      %6610 = vmatprep.subr.mxu0 0.0
      %6611 = vmatpush1.msra.mxu0 0.0
      %6612 = vmatprep.subr.mxu0 0.0
      %6613 = vmatpush1.msra.mxu0 0.0
      %6614 = vmatprep.subr.mxu0 0.0
      %6615 = vmatpush1.msra.mxu0 0.0
      %6616 = vmatprep.subr.mxu0 0.0
      %6617 = vmatpush1.msra.mxu0 0.0
      %6618 = vmatprep.subr.mxu0 0.0
      %6619 = vmatpush1.msra.mxu0 0.0
      %6620 = vmatprep.mubr.f32.mxu0 0.0
      %6621 = vmatmul.mubr.f32.gmra.mrb[0].mxu0 %v6545
      %v6622 = vpop.f32.mrb[0].mxu0
      %v6623 = vadd.f32 0.0, %v6622
      %v6624 = vpop.f32.mrb[0].mxu0
      %6625 = vmatprep.mubr.f32.mxu0 0.0
      %6626 = vmatmul.mubr.f32.gmra.mrb[0].mxu0 %v6548
      %v6627 = vpop.f32.mrb[0].mxu0
      %v6628 = vadd.f32 0.0, %v6627
      %v6629 = vpop.f32.mrb[0].mxu0
      %6630 = vmatprep.mubr.f32.mxu0 0.0
      %6631 = vmatmul.mubr.f32.gmra.mrb[0].mxu0 %v6551
      %v6632 = vpop.f32.mrb[0].mxu0
      %v6633 = vadd.f32 0.0, %v6632
      %v6634 = vpop.f32.mrb[0].mxu0
      %6635 = vmatprep.mubr.f32.mxu0 0.0
      %6636 = vmatmul.mubr.f32.gmra.mrb[0].mxu0 %v6554
      %v6637 = vpop.f32.mrb[0].mxu0
      %v6638 = vadd.f32 0.0, %v6637
      %v6639 = vpop.f32.mrb[0].mxu0
      %6640 = vdwg.mxu0
      %v6641 = vld [vmem:[%s15] sm:$0xff]
      %v6642 = vld [vmem:[%s15 + $0x8] sm:$0xff]
      %v6643 = vld [vmem:[%s15 + $0x10] sm:$0xff]
      %v6644 = vld [vmem:[%s15 + $0x18] sm:$0xff]
      %vm6645 = vcmask 261120
      %v6646 = vsel %vm6645, 1.0, 0
      %6648 = vmatprep.subr.mxu0 0.0
      %6649 = vmatpush1.msra.mxu0 %v6320
      %6650 = vmatprep.subr.mxu0 0.0
      %6651 = vmatpush1.msra.mxu0 %v6325
      %6652 = vmatprep.subr.mxu0 0.0
      %6653 = vmatpush1.msra.mxu0 %v6330
      %6654 = vmatprep.subr.mxu0 0.0
      %6655 = vmatpush1.msra.mxu0 %v6335
      %6656 = vmatprep.subr.mxu0 0.0
      %6657 = vmatpush1.msra.mxu0 0.0
      %6658 = vmatprep.subr.mxu0 0.0
      %6659 = vmatpush1.msra.mxu0 0.0
      %6660 = vmatprep.subr.mxu0 0.0
      %6661 = vmatpush1.msra.mxu0 0.0
      %6662 = vmatprep.subr.mxu0 0.0
      %6663 = vmatpush1.msra.mxu0 0.0
      %6664 = vmatprep.subr.mxu0 0.0
      %6665 = vmatpush1.msra.mxu0 0.0
      %6666 = vmatprep.subr.mxu0 0.0
      %6667 = vmatpush1.msra.mxu0 0.0
      %6668 = vmatprep.subr.mxu0 0.0
      %6669 = vmatpush1.msra.mxu0 0.0
      %6670 = vmatprep.subr.mxu0 0.0
      %6671 = vmatpush1.msra.mxu0 0.0
      %6672 = vmatprep.subr.mxu0 0.0
      %6673 = vmatpush1.msra.mxu0 0.0
      %6674 = vmatprep.subr.mxu0 0.0
      %6675 = vmatpush1.msra.mxu0 0.0
      %6676 = vmatprep.subr.mxu0 0.0
      %6677 = vmatpush1.msra.mxu0 0.0
      %6678 = vmatprep.subr.mxu0 0.0
      %6679 = vmatpush1.msra.mxu0 0.0
      %6680 = vmatprep.subr.mxu0 0.0
      %6681 = vmatpush1.msra.mxu0 0.0
      %6682 = vmatprep.subr.mxu0 0.0
      %6683 = vmatpush1.msra.mxu0 0.0
      %6684 = vmatprep.subr.mxu0 0.0
      %6685 = vmatpush1.msra.mxu0 0.0
      %6686 = vmatprep.subr.mxu0 0.0
      %6687 = vmatpush1.msra.mxu0 0.0
      %6688 = vmatprep.subr.mxu0 0.0
      %6689 = vmatpush1.msra.mxu0 0.0
      %6690 = vmatprep.subr.mxu0 0.0
      %6691 = vmatpush1.msra.mxu0 0.0
      %6692 = vmatprep.subr.mxu0 0.0
      %6693 = vmatpush1.msra.mxu0 0.0
      %6694 = vmatprep.subr.mxu0 0.0
      %6695 = vmatpush1.msra.mxu0 0.0
      %6696 = vmatprep.subr.mxu0 0.0
      %6697 = vmatpush1.msra.mxu0 0.0
      %6698 = vmatprep.subr.mxu0 0.0
      %6699 = vmatpush1.msra.mxu0 0.0
      %6700 = vmatprep.subr.mxu0 0.0
      %6701 = vmatpush1.msra.mxu0 0.0
      %6702 = vmatprep.subr.mxu0 0.0
      %6703 = vmatpush1.msra.mxu0 0.0
      %6704 = vmatprep.subr.mxu0 0.0
      %6705 = vmatpush1.msra.mxu0 0.0
      %6706 = vmatprep.subr.mxu0 0.0
      %6707 = vmatpush1.msra.mxu0 0.0
      %6708 = vmatprep.subr.mxu0 0.0
      %6709 = vmatpush1.msra.mxu0 0.0
      %6710 = vmatprep.subr.mxu0 0.0
      %6711 = vmatpush1.msra.mxu0 0.0
      %6712 = vmatprep.mubr.f32.mxu0 0.0
      %6713 = vmatmul.mubr.f32.gmra.mrb[0].mxu0 %v6646
      %v6714 = vpop.f32.mrb[0].mxu0
      %v6715 = vadd.f32 0.0, %v6714
      %v6716 = vpop.f32.mrb[0].mxu0
      %6717 = vdwg.mxu0
      %v6718 = vmul.f32 %v6715, 0.03125
      %v6719 = vmul.f32 %v6320, %v6320
      %v6720 = vmul.f32 %v6325, %v6325
      %v6721 = vmul.f32 %v6330, %v6330
      %v6722 = vmul.f32 %v6335, %v6335
      %6723 = vmatprep.subr.mxu0 0.0
      %6724 = vmatpush1.msra.mxu0 %v6719
      %6725 = vmatprep.subr.mxu0 0.0
      %6726 = vmatpush1.msra.mxu0 %v6720
      %6727 = vmatprep.subr.mxu0 0.0
      %6728 = vmatpush1.msra.mxu0 %v6721
      %6729 = vmatprep.subr.mxu0 0.0
      %6730 = vmatpush1.msra.mxu0 %v6722
      %6731 = vmatprep.subr.mxu0 0.0
      %6732 = vmatpush1.msra.mxu0 0.0
      %6733 = vmatprep.subr.mxu0 0.0
      %6734 = vmatpush1.msra.mxu0 0.0
      %6735 = vmatprep.subr.mxu0 0.0
      %6736 = vmatpush1.msra.mxu0 0.0
      %6737 = vmatprep.subr.mxu0 0.0
      %6738 = vmatpush1.msra.mxu0 0.0
      %6739 = vmatprep.subr.mxu0 0.0
      %6740 = vmatpush1.msra.mxu0 0.0
      %6741 = vmatprep.subr.mxu0 0.0
      %6742 = vmatpush1.msra.mxu0 0.0
      %6743 = vmatprep.subr.mxu0 0.0
      %6744 = vmatpush1.msra.mxu0 0.0
      %6745 = vmatprep.subr.mxu0 0.0
      %6746 = vmatpush1.msra.mxu0 0.0
      %6747 = vmatprep.subr.mxu0 0.0
      %6748 = vmatpush1.msra.mxu0 0.0
      %6749 = vmatprep.subr.mxu0 0.0
      %6750 = vmatpush1.msra.mxu0 0.0
      %6751 = vmatprep.subr.mxu0 0.0
      %6752 = vmatpush1.msra.mxu0 0.0
      %6753 = vmatprep.subr.mxu0 0.0
      %6754 = vmatpush1.msra.mxu0 0.0
      %6755 = vmatprep.subr.mxu0 0.0
      %6756 = vmatpush1.msra.mxu0 0.0
      %6757 = vmatprep.subr.mxu0 0.0
      %6758 = vmatpush1.msra.mxu0 0.0
      %6759 = vmatprep.subr.mxu0 0.0
      %6760 = vmatpush1.msra.mxu0 0.0
      %6761 = vmatprep.subr.mxu0 0.0
      %6762 = vmatpush1.msra.mxu0 0.0
      %6763 = vmatprep.subr.mxu0 0.0
      %6764 = vmatpush1.msra.mxu0 0.0
      %6765 = vmatprep.subr.mxu0 0.0
      %6766 = vmatpush1.msra.mxu0 0.0
      %6767 = vmatprep.subr.mxu0 0.0
      %6768 = vmatpush1.msra.mxu0 0.0
      %6769 = vmatprep.subr.mxu0 0.0
      %6770 = vmatpush1.msra.mxu0 0.0
      %6771 = vmatprep.subr.mxu0 0.0
      %6772 = vmatpush1.msra.mxu0 0.0
      %6773 = vmatprep.subr.mxu0 0.0
      %6774 = vmatpush1.msra.mxu0 0.0
      %6775 = vmatprep.subr.mxu0 0.0
      %6776 = vmatpush1.msra.mxu0 0.0
      %6777 = vmatprep.subr.mxu0 0.0
      %6778 = vmatpush1.msra.mxu0 0.0
      %6779 = vmatprep.subr.mxu0 0.0
      %6780 = vmatpush1.msra.mxu0 0.0
      %6781 = vmatprep.subr.mxu0 0.0
      %6782 = vmatpush1.msra.mxu0 0.0
      %6783 = vmatprep.subr.mxu0 0.0
      %6784 = vmatpush1.msra.mxu0 0.0
      %6785 = vmatprep.subr.mxu0 0.0
      %6786 = vmatpush1.msra.mxu0 0.0
      %6787 = vmatprep.mubr.f32.mxu0 0.0
      %6788 = vmatmul.mubr.f32.gmra.mrb[0].mxu0 %v6646
      %v6789 = vpop.f32.mrb[0].mxu0
      %v6790 = vadd.f32 0.0, %v6789
      %v6791 = vpop.f32.mrb[0].mxu0
      %6792 = vdwg.mxu0
      %v6793 = vmul.f32 %v6790, 0.03125
      %v6794 = vmul.f32 %v6718, %v6718
      %v6795 = vsub.f32 %v6793, %v6794
      %v6796 = vmax.f32 %v6795, 0.0
      %v6797 = vlaneseq
      %v6798 = vshrl.u32 %v6797, 7
      %v6799 = vsub.s32 0, %v6798
      %v6800 = vrot.slane %v6718, %v6799
      %v6801 = vsub.f32 %v6320, %v6800
      %v6802 = vsub.f32 %v6325, %v6800
      %v6803 = vsub.f32 %v6330, %v6800
      %v6804 = vsub.f32 %v6335, %v6800
      %v6805 = vadd.f32 %v6796, 1e-05
      %v6806 = vrsqrt.pop %v6805
      %v6807 = vlaneseq
      %v6808 = vshrl.u32 %v6807, 7
      %v6809 = vsub.s32 0, %v6808
      %v6810 = vrot.slane %v6806, %v6809
      %v6811 = vmul.f32 %v6801, %v6810
      %v6812 = vmul.f32 %v6802, %v6810
      %v6813 = vmul.f32 %v6803, %v6810
      %v6814 = vmul.f32 %v6804, %v6810
      %6816 = vset.pattern.permute.xlu0 0
      %6817 = vperm.xlu0 %6816, %v6641
      %v6818 = vpop.permute.xlu0 %6817
      %6821 = vset.pattern.permute.xlu0 0
      %6822 = vperm.xlu0 %6821, %v6642
      %v6823 = vpop.permute.xlu0 %6822
      %6826 = vset.pattern.permute.xlu0 0
      %6827 = vperm.xlu0 %6826, %v6643
      %v6828 = vpop.permute.xlu0 %6827
      %6831 = vset.pattern.permute.xlu0 0
      %6832 = vperm.xlu0 %6831, %v6644
      %v6833 = vpop.permute.xlu0 %6832
      %v6835 = vmul.f32 %v6811, %v6818
      %v6836 = vmul.f32 %v6812, %v6823
      %v6837 = vmul.f32 %v6813, %v6828
      %v6838 = vmul.f32 %v6814, %v6833
      %vm6839 = vcmask 293888
      %6840 = vst.msk [vmem:[#allocation10] sm:$0xff] %vm6839, %v6835
      %6841 = vst.msk [vmem:[#allocation10 + $0x8] sm:$0xff] %vm6839, %v6836
      %6842 = vst.msk [vmem:[#allocation10 + $0x10] sm:$0xff] %vm6839, %v6837
      %6843 = vst.msk [vmem:[#allocation10 + $0x18] sm:$0xff] %vm6839, %v6838
      %v6844 = vld [vmem:[#allocation10] sm:$0xff]
      %v6845 = vld [vmem:[#allocation10 + $0x8] sm:$0xff]
      %v6846 = vld [vmem:[#allocation10 + $0x10] sm:$0xff]
      %v6847 = vld [vmem:[#allocation10 + $0x18] sm:$0xff]
      %vm6848 = vcmask 179200
      %6849 = vst.msk [vmem:[#allocation11] sm:$0xff] %vm6848, %v6844
      %6850 = vst.msk [vmem:[#allocation11 + $0x8] sm:$0xff] %vm6848, %v6845
      %6851 = vst.msk [vmem:[#allocation11 + $0x10] sm:$0xff] %vm6848, %v6846
      %6852 = vst.msk [vmem:[#allocation11 + $0x18] sm:$0xff] %vm6848, %v6847
      %v6853 = vld [vmem:[#allocation10] sm:$0xff]
      %v6854 = vld [vmem:[#allocation10 + $0x8] sm:$0xff]
      %v6855 = vld [vmem:[#allocation10 + $0x10] sm:$0xff]
      %v6856 = vld [vmem:[#allocation10 + $0x18] sm:$0xff]
      %6861 = vrot.lane.b32.xlu0 %v6853, 127
      %v6862 = vpop.permute.xlu0 %6861
      %6863 = vrot.lane.b32.xlu0 %v6854, 127
      %v6864 = vpop.permute.xlu0 %6863
      %6865 = vrot.lane.b32.xlu0 %v6855, 127
      %v6866 = vpop.permute.xlu0 %6865
      %6867 = vrot.lane.b32.xlu0 %v6856, 127
      %v6868 = vpop.permute.xlu0 %6867
      %6873 = vst.msk [vmem:[#allocation11 + $0x20] sm:$0xff] %vm6848, %v6862
      %6874 = vst.msk [vmem:[#allocation11 + $0x28] sm:$0xff] %vm6848, %v6864
      %6875 = vst.msk [vmem:[#allocation11 + $0x30] sm:$0xff] %vm6848, %v6866
      %6876 = vst.msk [vmem:[#allocation11 + $0x38] sm:$0xff] %vm6848, %v6868
      %v6877 = vld [vmem:[#allocation10] sm:$0xff]
      %v6878 = vld [vmem:[#allocation10 + $0x8] sm:$0xff]
      %v6879 = vld [vmem:[#allocation10 + $0x10] sm:$0xff]
      %v6880 = vld [vmem:[#allocation10 + $0x18] sm:$0xff]
      %6885 = vrot.lane.b32.xlu0 %v6877, 126
      %v6886 = vpop.permute.xlu0 %6885
      %6887 = vrot.lane.b32.xlu0 %v6878, 126
      %v6888 = vpop.permute.xlu0 %6887
      %6889 = vrot.lane.b32.xlu0 %v6879, 126
      %v6890 = vpop.permute.xlu0 %6889
      %6891 = vrot.lane.b32.xlu0 %v6880, 126
      %v6892 = vpop.permute.xlu0 %6891
      %6897 = vst.msk [vmem:[#allocation11 + $0x40] sm:$0xff] %vm6848, %v6886
      %6898 = vst.msk [vmem:[#allocation11 + $0x48] sm:$0xff] %vm6848, %v6888
      %6899 = vst.msk [vmem:[#allocation11 + $0x50] sm:$0xff] %vm6848, %v6890
      %6900 = vst.msk [vmem:[#allocation11 + $0x58] sm:$0xff] %vm6848, %v6892
      %v6901 = vld [vmem:[#allocation10] sm:$0xff]
      %v6902 = vld [vmem:[#allocation10 + $0x8] sm:$0xff]
      %v6903 = vld [vmem:[#allocation10 + $0x10] sm:$0xff]
      %v6904 = vld [vmem:[#allocation10 + $0x18] sm:$0xff]
      %6909 = vrot.lane.b32.xlu0 %v6901, 122
      %v6910 = vpop.permute.xlu0 %6909
      %6911 = vrot.lane.b32.xlu0 %v6902, 122
      %v6912 = vpop.permute.xlu0 %6911
      %6913 = vrot.lane.b32.xlu0 %v6903, 122
      %v6914 = vpop.permute.xlu0 %6913
      %6915 = vrot.lane.b32.xlu0 %v6904, 122
      %v6916 = vpop.permute.xlu0 %6915
      %6921 = vst.msk [vmem:[#allocation11 + $0x60] sm:$0xff] %vm6848, %v6910
      %6922 = vst.msk [vmem:[#allocation11 + $0x68] sm:$0xff] %vm6848, %v6912
      %6923 = vst.msk [vmem:[#allocation11 + $0x70] sm:$0xff] %vm6848, %v6914
      %6924 = vst.msk [vmem:[#allocation11 + $0x78] sm:$0xff] %vm6848, %v6916
      %v6925 = vld [vmem:[#allocation10] sm:$0xff]
      %v6926 = vld [vmem:[#allocation10 + $0x8] sm:$0xff]
      %v6927 = vld [vmem:[#allocation10 + $0x10] sm:$0xff]
      %v6928 = vld [vmem:[#allocation10 + $0x18] sm:$0xff]
      %6933 = vrot.lane.b32.xlu0 %v6925, 121
      %v6934 = vpop.permute.xlu0 %6933
      %6935 = vrot.lane.b32.xlu0 %v6926, 121
      %v6936 = vpop.permute.xlu0 %6935
      %6937 = vrot.lane.b32.xlu0 %v6927, 121
      %v6938 = vpop.permute.xlu0 %6937
      %6939 = vrot.lane.b32.xlu0 %v6928, 121
      %v6940 = vpop.permute.xlu0 %6939
      %6945 = vst.msk [vmem:[#allocation11 + $0x80] sm:$0xff] %vm6848, %v6934
      %6946 = vst.msk [vmem:[#allocation11 + $0x88] sm:$0xff] %vm6848, %v6936
      %6947 = vst.msk [vmem:[#allocation11 + $0x90] sm:$0xff] %vm6848, %v6938
      %6948 = vst.msk [vmem:[#allocation11 + $0x98] sm:$0xff] %vm6848, %v6940
      %v6949 = vld [vmem:[#allocation10] sm:$0xff]
      %v6950 = vld [vmem:[#allocation10 + $0x8] sm:$0xff]
      %v6951 = vld [vmem:[#allocation10 + $0x10] sm:$0xff]
      %v6952 = vld [vmem:[#allocation10 + $0x18] sm:$0xff]
      %6957 = vrot.lane.b32.xlu0 %v6949, 120
      %v6958 = vpop.permute.xlu0 %6957
      %6959 = vrot.lane.b32.xlu0 %v6950, 120
      %v6960 = vpop.permute.xlu0 %6959
      %6961 = vrot.lane.b32.xlu0 %v6951, 120
      %v6962 = vpop.permute.xlu0 %6961
      %6963 = vrot.lane.b32.xlu0 %v6952, 120
      %v6964 = vpop.permute.xlu0 %6963
      %6969 = vst.msk [vmem:[#allocation11 + $0xa0] sm:$0xff] %vm6848, %v6958
      %6970 = vst.msk [vmem:[#allocation11 + $0xa8] sm:$0xff] %vm6848, %v6960
      %6971 = vst.msk [vmem:[#allocation11 + $0xb0] sm:$0xff] %vm6848, %v6962
      %6972 = vst.msk [vmem:[#allocation11 + $0xb8] sm:$0xff] %vm6848, %v6964
      %v6973 = vld [vmem:[#allocation10] sm:$0xff]
      %v6974 = vld [vmem:[#allocation10 + $0x8] sm:$0xff]
      %v6975 = vld [vmem:[#allocation10 + $0x10] sm:$0xff]
      %v6976 = vld [vmem:[#allocation10 + $0x18] sm:$0xff]
      %6981 = vrot.lane.b32.xlu0 %v6973, 116
      %v6982 = vpop.permute.xlu0 %6981
      %6983 = vrot.lane.b32.xlu0 %v6974, 116
      %v6984 = vpop.permute.xlu0 %6983
      %6985 = vrot.lane.b32.xlu0 %v6975, 116
      %v6986 = vpop.permute.xlu0 %6985
      %6987 = vrot.lane.b32.xlu0 %v6976, 116
      %v6988 = vpop.permute.xlu0 %6987
      %6993 = vst.msk [vmem:[#allocation11 + $0xc0] sm:$0xff] %vm6848, %v6982
      %6994 = vst.msk [vmem:[#allocation11 + $0xc8] sm:$0xff] %vm6848, %v6984
      %6995 = vst.msk [vmem:[#allocation11 + $0xd0] sm:$0xff] %vm6848, %v6986
      %6996 = vst.msk [vmem:[#allocation11 + $0xd8] sm:$0xff] %vm6848, %v6988
      %v6997 = vld [vmem:[#allocation10] sm:$0xff]
      %v6998 = vld [vmem:[#allocation10 + $0x8] sm:$0xff]
      %v6999 = vld [vmem:[#allocation10 + $0x10] sm:$0xff]
      %v7000 = vld [vmem:[#allocation10 + $0x18] sm:$0xff]
      %7005 = vrot.lane.b32.xlu0 %v6997, 115
      %v7006 = vpop.permute.xlu0 %7005
      %7007 = vrot.lane.b32.xlu0 %v6998, 115
      %v7008 = vpop.permute.xlu0 %7007
      %7009 = vrot.lane.b32.xlu0 %v6999, 115
      %v7010 = vpop.permute.xlu0 %7009
      %7011 = vrot.lane.b32.xlu0 %v7000, 115
      %v7012 = vpop.permute.xlu0 %7011
      %7017 = vst.msk [vmem:[#allocation11 + $0xe0] sm:$0xff] %vm6848, %v7006
      %7018 = vst.msk [vmem:[#allocation11 + $0xe8] sm:$0xff] %vm6848, %v7008
      %7019 = vst.msk [vmem:[#allocation11 + $0xf0] sm:$0xff] %vm6848, %v7010
      %7020 = vst.msk [vmem:[#allocation11 + $0xf8] sm:$0xff] %vm6848, %v7012
      %v7021 = vld [vmem:[#allocation10] sm:$0xff]
      %v7022 = vld [vmem:[#allocation10 + $0x8] sm:$0xff]
      %v7023 = vld [vmem:[#allocation10 + $0x10] sm:$0xff]
      %v7024 = vld [vmem:[#allocation10 + $0x18] sm:$0xff]
      %7029 = vrot.lane.b32.xlu0 %v7021, 114
      %v7030 = vpop.permute.xlu0 %7029
      %7031 = vrot.lane.b32.xlu0 %v7022, 114
      %v7032 = vpop.permute.xlu0 %7031
      %7033 = vrot.lane.b32.xlu0 %v7023, 114
      %v7034 = vpop.permute.xlu0 %7033
      %7035 = vrot.lane.b32.xlu0 %v7024, 114
      %v7036 = vpop.permute.xlu0 %7035
      %7041 = vst.msk [vmem:[#allocation11 + $0x100] sm:$0xff] %vm6848, %v7030
      %7042 = vst.msk [vmem:[#allocation11 + $0x108] sm:$0xff] %vm6848, %v7032
      %7043 = vst.msk [vmem:[#allocation11 + $0x110] sm:$0xff] %vm6848, %v7034
      %7044 = vst.msk [vmem:[#allocation11 + $0x118] sm:$0xff] %vm6848, %v7036
      %v7045 = vld [vmem:[%s16] sm:$0xff]
      %v7046 = vld [vmem:[%s16 + $0x8] sm:$0xf]
      %v7047 = vld [vmem:[%s16 + $0xc] sm:$0xff]
      %v7048 = vld [vmem:[%s16 + $0x14] sm:$0xf]
      %v7049 = vld [vmem:[%s16 + $0x18] sm:$0xff]
      %v7050 = vld [vmem:[%s16 + $0x20] sm:$0xf]
      %v7051 = vld [vmem:[%s16 + $0x24] sm:$0xff]
      %v7052 = vld [vmem:[%s16 + $0x2c] sm:$0xf]
      %v7053 = vld [vmem:[#allocation11] sm:$0xff]
      %v7054 = vld [vmem:[#allocation11 + $0x8] sm:$0xff]
      %v7055 = vld [vmem:[#allocation11 + $0x10] sm:$0xff]
      %v7056 = vld [vmem:[#allocation11 + $0x18] sm:$0xff]
      %v7057 = vld [vmem:[#allocation11 + $0x20] sm:$0xff]
      %v7058 = vld [vmem:[#allocation11 + $0x28] sm:$0xff]
      %v7059 = vld [vmem:[#allocation11 + $0x30] sm:$0xff]
      %v7060 = vld [vmem:[#allocation11 + $0x38] sm:$0xff]
      %v7061 = vld [vmem:[#allocation11 + $0x40] sm:$0xff]
      %v7062 = vld [vmem:[#allocation11 + $0x48] sm:$0xff]
      %v7063 = vld [vmem:[#allocation11 + $0x50] sm:$0xff]
      %v7064 = vld [vmem:[#allocation11 + $0x58] sm:$0xff]
      %v7065 = vld [vmem:[#allocation11 + $0x60] sm:$0xff]
      %v7066 = vld [vmem:[#allocation11 + $0x68] sm:$0xff]
      %v7067 = vld [vmem:[#allocation11 + $0x70] sm:$0xff]
      %v7068 = vld [vmem:[#allocation11 + $0x78] sm:$0xff]
      %v7069 = vld [vmem:[#allocation11 + $0x80] sm:$0xff]
      %v7070 = vld [vmem:[#allocation11 + $0x88] sm:$0xff]
      %v7071 = vld [vmem:[#allocation11 + $0x90] sm:$0xff]
      %v7072 = vld [vmem:[#allocation11 + $0x98] sm:$0xff]
      %v7073 = vld [vmem:[#allocation11 + $0xa0] sm:$0xff]
      %v7074 = vld [vmem:[#allocation11 + $0xa8] sm:$0xff]
      %v7075 = vld [vmem:[#allocation11 + $0xb0] sm:$0xff]
      %v7076 = vld [vmem:[#allocation11 + $0xb8] sm:$0xff]
      %v7077 = vld [vmem:[#allocation11 + $0xc0] sm:$0xff]
      %v7078 = vld [vmem:[#allocation11 + $0xc8] sm:$0xff]
      %v7079 = vld [vmem:[#allocation11 + $0xd0] sm:$0xff]
      %v7080 = vld [vmem:[#allocation11 + $0xd8] sm:$0xff]
      %v7081 = vld [vmem:[#allocation11 + $0xe0] sm:$0xff]
      %v7082 = vld [vmem:[#allocation11 + $0xe8] sm:$0xff]
      %v7083 = vld [vmem:[#allocation11 + $0xf0] sm:$0xff]
      %v7084 = vld [vmem:[#allocation11 + $0xf8] sm:$0xff]
      %v7085 = vld [vmem:[#allocation11 + $0x100] sm:$0xff]
      %v7086 = vld [vmem:[#allocation11 + $0x108] sm:$0xff]
      %v7087 = vld [vmem:[#allocation11 + $0x110] sm:$0xff]
      %v7088 = vld [vmem:[#allocation11 + $0x118] sm:$0xff]
      %v7089 = vpack.c.bf16 %v7054, %v7053
      %v7090 = vpack.c.bf16 %v7056, %v7055
      %v7091 = vpack.c.bf16 %v7058, %v7057
      %v7092 = vpack.c.bf16 %v7060, %v7059
      %v7093 = vpack.c.bf16 %v7062, %v7061
      %v7094 = vpack.c.bf16 %v7064, %v7063
      %v7095 = vpack.c.bf16 %v7066, %v7065
      %v7096 = vpack.c.bf16 %v7068, %v7067
      %v7097 = vpack.c.bf16 %v7070, %v7069
      %v7098 = vpack.c.bf16 %v7072, %v7071
      %v7099 = vpack.c.bf16 %v7074, %v7073
      %v7100 = vpack.c.bf16 %v7076, %v7075
      %v7101 = vpack.c.bf16 %v7078, %v7077
      %v7102 = vpack.c.bf16 %v7080, %v7079
      %v7103 = vpack.c.bf16 %v7082, %v7081
      %v7104 = vpack.c.bf16 %v7084, %v7083
      %v7105 = vpack.c.bf16 %v7086, %v7085
      %v7106 = vpack.c.bf16 %v7088, %v7087
      %v7115 = vunpack.c.l.b16 %v7045
      %v7116 = vunpack.c.h.b16 %v7045
      %v7117 = vunpack.c.l.b16 %v7046
      %v7118 = vunpack.c.l.b16 %v7047
      %v7119 = vunpack.c.h.b16 %v7047
      %v7120 = vunpack.c.l.b16 %v7048
      %v7121 = vunpack.c.l.b16 %v7049
      %v7122 = vunpack.c.h.b16 %v7049
      %v7123 = vunpack.c.l.b16 %v7050
      %v7124 = vunpack.c.l.b16 %v7051
      %v7125 = vunpack.c.h.b16 %v7051
      %v7126 = vunpack.c.l.b16 %v7052
      %v7127 = vpack.c.b16 %v7118, %v7115
      %v7128 = vpack.c.b16 %v7119, %v7116
      %v7129 = vpack.c.b16 %v7120, %v7117
      %v7130 = vpack.c.b16 %v7124, %v7121
      %v7131 = vpack.c.b16 %v7125, %v7122
      %v7132 = vpack.c.b16 %v7126, %v7123
      %v7138 = vsel %vm6645, %v7129, 0
      %v7141 = vsel %vm6645, %v7132, 0
      %7143 = vmatprep.subr.bf16.mxu0 0
      %7144 = vmatpush1.bf16.msra.mxu0 %v7089
      %7145 = vmatprep.subr.bf16.mxu0 0
      %7146 = vmatpush1.bf16.msra.mxu0 %v7090
      %7147 = vmatprep.subr.bf16.mxu0 0
      %7148 = vmatpush1.bf16.msra.mxu0 %v7091
      %7149 = vmatprep.subr.bf16.mxu0 0
      %7150 = vmatpush1.bf16.msra.mxu0 %v7092
      %7151 = vmatprep.subr.bf16.mxu0 0
      %7152 = vmatpush1.bf16.msra.mxu0 %v7093
      %7153 = vmatprep.subr.bf16.mxu0 0
      %7154 = vmatpush1.bf16.msra.mxu0 %v7094
      %7155 = vmatprep.subr.bf16.mxu0 0
      %7156 = vmatpush1.bf16.msra.mxu0 %v7095
      %7157 = vmatprep.subr.bf16.mxu0 0
      %7158 = vmatpush1.bf16.msra.mxu0 %v7096
      %7159 = vmatprep.subr.bf16.mxu0 0
      %7160 = vmatpush1.bf16.msra.mxu0 %v7097
      %7161 = vmatprep.subr.bf16.mxu0 0
      %7162 = vmatpush1.bf16.msra.mxu0 %v7098
      %7163 = vmatprep.subr.bf16.mxu0 0
      %7164 = vmatpush1.bf16.msra.mxu0 %v7099
      %7165 = vmatprep.subr.bf16.mxu0 0
      %7166 = vmatpush1.bf16.msra.mxu0 %v7100
      %7167 = vmatprep.subr.bf16.mxu0 0
      %7168 = vmatpush1.bf16.msra.mxu0 %v7101
      %7169 = vmatprep.subr.bf16.mxu0 0
      %7170 = vmatpush1.bf16.msra.mxu0 %v7102
      %7171 = vmatprep.subr.bf16.mxu0 0
      %7172 = vmatpush1.bf16.msra.mxu0 %v7103
      %7173 = vmatprep.subr.bf16.mxu0 0
      %7174 = vmatpush1.bf16.msra.mxu0 %v7104
      %7175 = vmatprep.mubr.bf16.mxu0 %v7128
      %7176 = vmatmul.mubr.bf16.gmra.mrb[0].mxu0 %v7127
      %v7177 = vpop.f32.mrb[0].mxu0
      %v7178 = vadd.f32 0.0, %v7177
      %v7179 = vpop.f32.mrb[0].mxu0
      %v7180 = vpop.f32.mrb[0].mxu0
      %v7181 = vadd.f32 0.0, %v7180
      %v7182 = vpop.f32.mrb[0].mxu0
      %7183 = vmatprep.mubr.bf16.mxu0 %v7131
      %7184 = vmatmul.mubr.bf16.gmra.mrb[0].mxu0 %v7130
      %v7185 = vpop.f32.mrb[0].mxu0
      %v7186 = vadd.f32 0.0, %v7185
      %v7187 = vpop.f32.mrb[0].mxu0
      %v7188 = vpop.f32.mrb[0].mxu0
      %v7189 = vadd.f32 0.0, %v7188
      %v7190 = vpop.f32.mrb[0].mxu0
      %7191 = vdwg.mxu0
      %7192 = vmatprep.subr.bf16.mxu0 0
      %7193 = vmatpush1.bf16.msra.mxu0 %v7105
      %7194 = vmatprep.subr.bf16.mxu0 0
      %7195 = vmatpush1.bf16.msra.mxu0 %v7106
      %7196 = vmatprep.subr.bf16.mxu0 0
      %7197 = vmatpush1.bf16.msra.mxu0 0
      %7198 = vmatprep.subr.bf16.mxu0 0
      %7199 = vmatpush1.bf16.msra.mxu0 0
      %7200 = vmatprep.subr.bf16.mxu0 0
      %7201 = vmatpush1.bf16.msra.mxu0 0
      %7202 = vmatprep.subr.bf16.mxu0 0
      %7203 = vmatpush1.bf16.msra.mxu0 0
      %7204 = vmatprep.subr.bf16.mxu0 0
      %7205 = vmatpush1.bf16.msra.mxu0 0
      %7206 = vmatprep.subr.bf16.mxu0 0
      %7207 = vmatpush1.bf16.msra.mxu0 0
      %7208 = vmatprep.subr.bf16.mxu0 0
      %7209 = vmatpush1.bf16.msra.mxu0 0
      %7210 = vmatprep.subr.bf16.mxu0 0
      %7211 = vmatpush1.bf16.msra.mxu0 0
      %7212 = vmatprep.subr.bf16.mxu0 0
      %7213 = vmatpush1.bf16.msra.mxu0 0
      %7214 = vmatprep.subr.bf16.mxu0 0
      %7215 = vmatpush1.bf16.msra.mxu0 0
      %7216 = vmatprep.subr.bf16.mxu0 0
      %7217 = vmatpush1.bf16.msra.mxu0 0
      %7218 = vmatprep.subr.bf16.mxu0 0
      %7219 = vmatpush1.bf16.msra.mxu0 0
      %7220 = vmatprep.subr.bf16.mxu0 0
      %7221 = vmatpush1.bf16.msra.mxu0 0
      %7222 = vmatprep.subr.bf16.mxu0 0
      %7223 = vmatpush1.bf16.msra.mxu0 0
      %7224 = vmatprep.mubr.bf16.mxu0 0
      %7225 = vmatmul.mubr.bf16.gmra.mrb[0].mxu0 %v7138
      %v7226 = vpop.f32.mrb[0].mxu0
      %v7227 = vadd.f32 %v7178, %v7226
      %v7228 = vpop.f32.mrb[0].mxu0
      %v7229 = vpop.f32.mrb[0].mxu0
      %v7230 = vadd.f32 %v7181, %v7229
      %v7231 = vpop.f32.mrb[0].mxu0
      %7232 = vmatprep.mubr.bf16.mxu0 0
      %7233 = vmatmul.mubr.bf16.gmra.mrb[0].mxu0 %v7141
      %v7234 = vpop.f32.mrb[0].mxu0
      %v7235 = vadd.f32 %v7186, %v7234
      %v7236 = vpop.f32.mrb[0].mxu0
      %v7237 = vpop.f32.mrb[0].mxu0
      %v7238 = vadd.f32 %v7189, %v7237
      %v7239 = vpop.f32.mrb[0].mxu0
      %7240 = vdwg.mxu0
      %v7241 = vld [vmem:[#allocation10] sm:$0xff]
      %v7242 = vld [vmem:[#allocation10 + $0x8] sm:$0xff]
      %v7243 = vld [vmem:[#allocation10 + $0x10] sm:$0xff]
      %v7244 = vld [vmem:[#allocation10 + $0x18] sm:$0xff]
      %v7245 = vmul.f32 %v7241, %v7241
      %v7246 = vmul.f32 %v7242, %v7242
      %v7247 = vmul.f32 %v7243, %v7243
      %v7248 = vmul.f32 %v7244, %v7244
      %7249 = vmatprep.subr.mxu0 0.0
      %7250 = vmatpush1.msra.mxu0 %v7245
      %7251 = vmatprep.subr.mxu0 0.0
      %7252 = vmatpush1.msra.mxu0 %v7246
      %7253 = vmatprep.subr.mxu0 0.0
      %7254 = vmatpush1.msra.mxu0 %v7247
      %7255 = vmatprep.subr.mxu0 0.0
      %7256 = vmatpush1.msra.mxu0 %v7248
      %7257 = vmatprep.subr.mxu0 0.0
      %7258 = vmatpush1.msra.mxu0 0.0
      %7259 = vmatprep.subr.mxu0 0.0
      %7260 = vmatpush1.msra.mxu0 0.0
      %7261 = vmatprep.subr.mxu0 0.0
      %7262 = vmatpush1.msra.mxu0 0.0
      %7263 = vmatprep.subr.mxu0 0.0
      %7264 = vmatpush1.msra.mxu0 0.0
      %7265 = vmatprep.subr.mxu0 0.0
      %7266 = vmatpush1.msra.mxu0 0.0
      %7267 = vmatprep.subr.mxu0 0.0
      %7268 = vmatpush1.msra.mxu0 0.0
      %7269 = vmatprep.subr.mxu0 0.0
      %7270 = vmatpush1.msra.mxu0 0.0
      %7271 = vmatprep.subr.mxu0 0.0
      %7272 = vmatpush1.msra.mxu0 0.0
      %7273 = vmatprep.subr.mxu0 0.0
      %7274 = vmatpush1.msra.mxu0 0.0
      %7275 = vmatprep.subr.mxu0 0.0
      %7276 = vmatpush1.msra.mxu0 0.0
      %7277 = vmatprep.subr.mxu0 0.0
      %7278 = vmatpush1.msra.mxu0 0.0
      %7279 = vmatprep.subr.mxu0 0.0
      %7280 = vmatpush1.msra.mxu0 0.0
      %7281 = vmatprep.subr.mxu0 0.0
      %7282 = vmatpush1.msra.mxu0 0.0
      %7283 = vmatprep.subr.mxu0 0.0
      %7284 = vmatpush1.msra.mxu0 0.0
      %7285 = vmatprep.subr.mxu0 0.0
      %7286 = vmatpush1.msra.mxu0 0.0
      %7287 = vmatprep.subr.mxu0 0.0
      %7288 = vmatpush1.msra.mxu0 0.0
      %7289 = vmatprep.subr.mxu0 0.0
      %7290 = vmatpush1.msra.mxu0 0.0
      %7291 = vmatprep.subr.mxu0 0.0
      %7292 = vmatpush1.msra.mxu0 0.0
      %7293 = vmatprep.subr.mxu0 0.0
      %7294 = vmatpush1.msra.mxu0 0.0
      %7295 = vmatprep.subr.mxu0 0.0
      %7296 = vmatpush1.msra.mxu0 0.0
      %7297 = vmatprep.subr.mxu0 0.0
      %7298 = vmatpush1.msra.mxu0 0.0
      %7299 = vmatprep.subr.mxu0 0.0
      %7300 = vmatpush1.msra.mxu0 0.0
      %7301 = vmatprep.subr.mxu0 0.0
      %7302 = vmatpush1.msra.mxu0 0.0
      %7303 = vmatprep.subr.mxu0 0.0
      %7304 = vmatpush1.msra.mxu0 0.0
      %7305 = vmatprep.subr.mxu0 0.0
      %7306 = vmatpush1.msra.mxu0 0.0
      %7307 = vmatprep.subr.mxu0 0.0
      %7308 = vmatpush1.msra.mxu0 0.0
      %7309 = vmatprep.subr.mxu0 0.0
      %7310 = vmatpush1.msra.mxu0 0.0
      %7311 = vmatprep.subr.mxu0 0.0
      %7312 = vmatpush1.msra.mxu0 0.0
      %7313 = vmatprep.mubr.f32.mxu0 0.0
      %7314 = vmatmul.mubr.f32.gmra.mrb[0].mxu0 %v6646
      %v7315 = vpop.f32.mrb[0].mxu0
      %v7316 = vadd.f32 0.0, %v7315
      %v7317 = vpop.f32.mrb[0].mxu0
      %7318 = vdwg.mxu0
      %7320 = vrot.lane.b32.xlu0 %v7316, 127
      %v7321 = vpop.permute.xlu0 %7320
      %v7323 = vadd.f32 %v7316, %v7321
      %7324 = vrot.lane.b32.xlu0 %v7316, 126
      %v7325 = vpop.permute.xlu0 %7324
      %v7327 = vadd.f32 %v7323, %v7325
      %7328 = vrot.lane.b32.xlu0 %v7316, 122
      %v7329 = vpop.permute.xlu0 %7328
      %v7331 = vadd.f32 %v7327, %v7329
      %7332 = vrot.lane.b32.xlu0 %v7316, 121
      %v7333 = vpop.permute.xlu0 %7332
      %v7335 = vadd.f32 %v7331, %v7333
      %7336 = vrot.lane.b32.xlu0 %v7316, 120
      %v7337 = vpop.permute.xlu0 %7336
      %v7339 = vadd.f32 %v7335, %v7337
      %7340 = vrot.lane.b32.xlu0 %v7316, 116
      %v7341 = vpop.permute.xlu0 %7340
      %v7343 = vadd.f32 %v7339, %v7341
      %7344 = vrot.lane.b32.xlu0 %v7316, 115
      %v7345 = vpop.permute.xlu0 %7344
      %v7347 = vadd.f32 %v7343, %v7345
      %7348 = vrot.lane.b32.xlu0 %v7316, 114
      %v7349 = vpop.permute.xlu0 %7348
      %v7351 = vadd.f32 %v7347, %v7349
      %v7352 = vand.u32 2147483647, %v7227
      %v7353 = vand.u32 2147483647, %v7230
      %v7354 = vand.u32 2147483647, %v7235
      %v7355 = vand.u32 2147483647, %v7238
      %v7356 = vadd.f32 %v7351, 1e-06
      %v7357 = vrsqrt.pop %v7356
      %v7358 = vlaneseq
      %v7359 = vshrl.u32 %v7358, 7
      %v7360 = vsub.s32 0, %v7359
      %v7361 = vrot.slane %v7357, %v7360
      %v7362 = vmul.f32 %v7352, %v7361
      %v7363 = vmul.f32 %v7353, %v7361
      %v7364 = vmul.f32 %v7354, %v7361
      %v7365 = vmul.f32 %v7355, %v7361
      %v7366 = vmul.f32 %v7227, %v7362
      %v7367 = vmul.f32 %v7230, %v7363
      %v7368 = vmul.f32 %v7235, %v7364
      %v7369 = vmul.f32 %v7238, %v7365
      %v7370 = vld [vmem:[%s17] sm:$0xff]
      %v7371 = vld [vmem:[%s17 + $0x8] sm:$0xff]
      %v7372 = vld [vmem:[%s17 + $0x10] sm:$0xff]
      %v7373 = vld [vmem:[%s17 + $0x18] sm:$0xff]
      %7374 = vmatprep.subr.mxu0 0.0
      %7375 = vmatpush1.msra.mxu0 %v7366
      %7376 = vmatprep.subr.mxu0 0.0
      %7377 = vmatpush1.msra.mxu0 %v7367
      %7378 = vmatprep.subr.mxu0 0.0
      %7379 = vmatpush1.msra.mxu0 %v7368
      %7380 = vmatprep.subr.mxu0 0.0
      %7381 = vmatpush1.msra.mxu0 %v7369
      %7382 = vmatprep.subr.mxu0 0.0
      %7383 = vmatpush1.msra.mxu0 0.0
      %7384 = vmatprep.subr.mxu0 0.0
      %7385 = vmatpush1.msra.mxu0 0.0
      %7386 = vmatprep.subr.mxu0 0.0
      %7387 = vmatpush1.msra.mxu0 0.0
      %7388 = vmatprep.subr.mxu0 0.0
      %7389 = vmatpush1.msra.mxu0 0.0
      %7390 = vmatprep.subr.mxu0 0.0
      %7391 = vmatpush1.msra.mxu0 0.0
      %7392 = vmatprep.subr.mxu0 0.0
      %7393 = vmatpush1.msra.mxu0 0.0
      %7394 = vmatprep.subr.mxu0 0.0
      %7395 = vmatpush1.msra.mxu0 0.0
      %7396 = vmatprep.subr.mxu0 0.0
      %7397 = vmatpush1.msra.mxu0 0.0
      %7398 = vmatprep.subr.mxu0 0.0
      %7399 = vmatpush1.msra.mxu0 0.0
      %7400 = vmatprep.subr.mxu0 0.0
      %7401 = vmatpush1.msra.mxu0 0.0
      %7402 = vmatprep.subr.mxu0 0.0
      %7403 = vmatpush1.msra.mxu0 0.0
      %7404 = vmatprep.subr.mxu0 0.0
      %7405 = vmatpush1.msra.mxu0 0.0
      %7406 = vmatprep.subr.mxu0 0.0
      %7407 = vmatpush1.msra.mxu0 0.0
      %7408 = vmatprep.subr.mxu0 0.0
      %7409 = vmatpush1.msra.mxu0 0.0
      %7410 = vmatprep.subr.mxu0 0.0
      %7411 = vmatpush1.msra.mxu0 0.0
      %7412 = vmatprep.subr.mxu0 0.0
      %7413 = vmatpush1.msra.mxu0 0.0
      %7414 = vmatprep.subr.mxu0 0.0
      %7415 = vmatpush1.msra.mxu0 0.0
      %7416 = vmatprep.subr.mxu0 0.0
      %7417 = vmatpush1.msra.mxu0 0.0
      %7418 = vmatprep.subr.mxu0 0.0
      %7419 = vmatpush1.msra.mxu0 0.0
      %7420 = vmatprep.subr.mxu0 0.0
      %7421 = vmatpush1.msra.mxu0 0.0
      %7422 = vmatprep.subr.mxu0 0.0
      %7423 = vmatpush1.msra.mxu0 0.0
      %7424 = vmatprep.subr.mxu0 0.0
      %7425 = vmatpush1.msra.mxu0 0.0
      %7426 = vmatprep.subr.mxu0 0.0
      %7427 = vmatpush1.msra.mxu0 0.0
      %7428 = vmatprep.subr.mxu0 0.0
      %7429 = vmatpush1.msra.mxu0 0.0
      %7430 = vmatprep.subr.mxu0 0.0
      %7431 = vmatpush1.msra.mxu0 0.0
      %7432 = vmatprep.subr.mxu0 0.0
      %7433 = vmatpush1.msra.mxu0 0.0
      %7434 = vmatprep.subr.mxu0 0.0
      %7435 = vmatpush1.msra.mxu0 0.0
      %7436 = vmatprep.subr.mxu0 0.0
      %7437 = vmatpush1.msra.mxu0 0.0
      %7438 = vmatprep.mubr.f32.mxu0 0.0
      %7439 = vmatmul.mubr.f32.gmra.mrb[0].mxu0 %v6646
      %v7440 = vpop.f32.mrb[0].mxu0
      %v7441 = vadd.f32 0.0, %v7440
      %v7442 = vpop.f32.mrb[0].mxu0
      %7443 = vdwg.mxu0
      %v7444 = vmul.f32 %v7441, 0.03125
      %v7445 = vmul.f32 %v7366, %v7366
      %v7446 = vmul.f32 %v7367, %v7367
      %v7447 = vmul.f32 %v7368, %v7368
      %v7448 = vmul.f32 %v7369, %v7369
      %7449 = vmatprep.subr.mxu0 0.0
      %7450 = vmatpush1.msra.mxu0 %v7445
      %7451 = vmatprep.subr.mxu0 0.0
      %7452 = vmatpush1.msra.mxu0 %v7446
      %7453 = vmatprep.subr.mxu0 0.0
      %7454 = vmatpush1.msra.mxu0 %v7447
      %7455 = vmatprep.subr.mxu0 0.0
      %7456 = vmatpush1.msra.mxu0 %v7448
      %7457 = vmatprep.subr.mxu0 0.0
      %7458 = vmatpush1.msra.mxu0 0.0
      %7459 = vmatprep.subr.mxu0 0.0
      %7460 = vmatpush1.msra.mxu0 0.0
      %7461 = vmatprep.subr.mxu0 0.0
      %7462 = vmatpush1.msra.mxu0 0.0
      %7463 = vmatprep.subr.mxu0 0.0
      %7464 = vmatpush1.msra.mxu0 0.0
      %7465 = vmatprep.subr.mxu0 0.0
      %7466 = vmatpush1.msra.mxu0 0.0
      %7467 = vmatprep.subr.mxu0 0.0
      %7468 = vmatpush1.msra.mxu0 0.0
      %7469 = vmatprep.subr.mxu0 0.0
      %7470 = vmatpush1.msra.mxu0 0.0
      %7471 = vmatprep.subr.mxu0 0.0
      %7472 = vmatpush1.msra.mxu0 0.0
      %7473 = vmatprep.subr.mxu0 0.0
      %7474 = vmatpush1.msra.mxu0 0.0
      %7475 = vmatprep.subr.mxu0 0.0
      %7476 = vmatpush1.msra.mxu0 0.0
      %7477 = vmatprep.subr.mxu0 0.0
      %7478 = vmatpush1.msra.mxu0 0.0
      %7479 = vmatprep.subr.mxu0 0.0
      %7480 = vmatpush1.msra.mxu0 0.0
      %7481 = vmatprep.subr.mxu0 0.0
      %7482 = vmatpush1.msra.mxu0 0.0
      %7483 = vmatprep.subr.mxu0 0.0
      %7484 = vmatpush1.msra.mxu0 0.0
      %7485 = vmatprep.subr.mxu0 0.0
      %7486 = vmatpush1.msra.mxu0 0.0
      %7487 = vmatprep.subr.mxu0 0.0
      %7488 = vmatpush1.msra.mxu0 0.0
      %7489 = vmatprep.subr.mxu0 0.0
      %7490 = vmatpush1.msra.mxu0 0.0
      %7491 = vmatprep.subr.mxu0 0.0
      %7492 = vmatpush1.msra.mxu0 0.0
      %7493 = vmatprep.subr.mxu0 0.0
      %7494 = vmatpush1.msra.mxu0 0.0
      %7495 = vmatprep.subr.mxu0 0.0
      %7496 = vmatpush1.msra.mxu0 0.0
      %7497 = vmatprep.subr.mxu0 0.0
      %7498 = vmatpush1.msra.mxu0 0.0
      %7499 = vmatprep.subr.mxu0 0.0
      %7500 = vmatpush1.msra.mxu0 0.0
      %7501 = vmatprep.subr.mxu0 0.0
      %7502 = vmatpush1.msra.mxu0 0.0
      %7503 = vmatprep.subr.mxu0 0.0
      %7504 = vmatpush1.msra.mxu0 0.0
      %7505 = vmatprep.subr.mxu0 0.0
      %7506 = vmatpush1.msra.mxu0 0.0
      %7507 = vmatprep.subr.mxu0 0.0
      %7508 = vmatpush1.msra.mxu0 0.0
      %7509 = vmatprep.subr.mxu0 0.0
      %7510 = vmatpush1.msra.mxu0 0.0
      %7511 = vmatprep.subr.mxu0 0.0
      %7512 = vmatpush1.msra.mxu0 0.0
      %7513 = vmatprep.mubr.f32.mxu0 0.0
      %7514 = vmatmul.mubr.f32.gmra.mrb[0].mxu0 %v6646
      %v7515 = vpop.f32.mrb[0].mxu0
      %v7516 = vadd.f32 0.0, %v7515
      %v7517 = vpop.f32.mrb[0].mxu0
      %7518 = vdwg.mxu0
      %v7519 = vmul.f32 %v7516, 0.03125
      %v7520 = vmul.f32 %v7444, %v7444
      %v7521 = vsub.f32 %v7519, %v7520
      %v7522 = vmax.f32 %v7521, 0.0
      %v7523 = vlaneseq
      %v7524 = vshrl.u32 %v7523, 7
      %v7525 = vsub.s32 0, %v7524
      %v7526 = vrot.slane %v7444, %v7525
      %v7527 = vsub.f32 %v7366, %v7526
      %v7528 = vsub.f32 %v7367, %v7526
      %v7529 = vsub.f32 %v7368, %v7526
      %v7530 = vsub.f32 %v7369, %v7526
      %v7531 = vadd.f32 %v7522, 1e-05
      %v7532 = vrsqrt.pop %v7531
      %v7533 = vlaneseq
      %v7534 = vshrl.u32 %v7533, 7
      %v7535 = vsub.s32 0, %v7534
      %v7536 = vrot.slane %v7532, %v7535
      %v7537 = vmul.f32 %v7527, %v7536
      %v7538 = vmul.f32 %v7528, %v7536
      %v7539 = vmul.f32 %v7529, %v7536
      %v7540 = vmul.f32 %v7530, %v7536
      %7542 = vset.pattern.permute.xlu0 0
      %7543 = vperm.xlu0 %7542, %v7370
      %v7544 = vpop.permute.xlu0 %7543
      %7547 = vset.pattern.permute.xlu0 0
      %7548 = vperm.xlu0 %7547, %v7371
      %v7549 = vpop.permute.xlu0 %7548
      %7552 = vset.pattern.permute.xlu0 0
      %7553 = vperm.xlu0 %7552, %v7372
      %v7554 = vpop.permute.xlu0 %7553
      %7557 = vset.pattern.permute.xlu0 0
      %7558 = vperm.xlu0 %7557, %v7373
      %v7559 = vpop.permute.xlu0 %7558
      %v7561 = vmul.f32 %v7537, %v7544
      %v7562 = vmul.f32 %v7538, %v7549
      %v7563 = vmul.f32 %v7539, %v7554
      %v7564 = vmul.f32 %v7540, %v7559
      %v7565 = vld [vmem:[%s18] sm:$0xff]
      %v7566 = vld [vmem:[%s18 + $0x8] sm:$0xff]
      %v7567 = vld [vmem:[%s18 + $0x10] sm:$0xff]
      %v7568 = vld [vmem:[%s18 + $0x18] sm:$0xff]
      %7573 = vrot.lane.b32.xlu0 %v6623, 121
      %v7574 = vpop.permute.xlu0 %7573
      %7575 = vrot.lane.b32.xlu0 %v6628, 121
      %v7576 = vpop.permute.xlu0 %7575
      %7577 = vrot.lane.b32.xlu0 %v6633, 121
      %v7578 = vpop.permute.xlu0 %7577
      %7579 = vrot.lane.b32.xlu0 %v6638, 121
      %v7580 = vpop.permute.xlu0 %7579
      %7585 = vmatprep.subr.mxu0 0.0
      %7586 = vmatpush1.msra.mxu0 %v7574
      %7587 = vmatprep.subr.mxu0 0.0
      %7588 = vmatpush1.msra.mxu0 %v7576
      %7589 = vmatprep.subr.mxu0 0.0
      %7590 = vmatpush1.msra.mxu0 %v7578
      %7591 = vmatprep.subr.mxu0 0.0
      %7592 = vmatpush1.msra.mxu0 %v7580
      %7593 = vmatprep.subr.mxu0 0.0
      %7594 = vmatpush1.msra.mxu0 0.0
      %7595 = vmatprep.subr.mxu0 0.0
      %7596 = vmatpush1.msra.mxu0 0.0
      %7597 = vmatprep.subr.mxu0 0.0
      %7598 = vmatpush1.msra.mxu0 0.0
      %7599 = vmatprep.subr.mxu0 0.0
      %7600 = vmatpush1.msra.mxu0 0.0
      %7601 = vmatprep.subr.mxu0 0.0
      %7602 = vmatpush1.msra.mxu0 0.0
      %7603 = vmatprep.subr.mxu0 0.0
      %7604 = vmatpush1.msra.mxu0 0.0
      %7605 = vmatprep.subr.mxu0 0.0
      %7606 = vmatpush1.msra.mxu0 0.0
      %7607 = vmatprep.subr.mxu0 0.0
      %7608 = vmatpush1.msra.mxu0 0.0
      %7609 = vmatprep.subr.mxu0 0.0
      %7610 = vmatpush1.msra.mxu0 0.0
      %7611 = vmatprep.subr.mxu0 0.0
      %7612 = vmatpush1.msra.mxu0 0.0
      %7613 = vmatprep.subr.mxu0 0.0
      %7614 = vmatpush1.msra.mxu0 0.0
      %7615 = vmatprep.subr.mxu0 0.0
      %7616 = vmatpush1.msra.mxu0 0.0
      %7617 = vmatprep.subr.mxu0 0.0
      %7618 = vmatpush1.msra.mxu0 0.0
      %7619 = vmatprep.subr.mxu0 0.0
      %7620 = vmatpush1.msra.mxu0 0.0
      %7621 = vmatprep.subr.mxu0 0.0
      %7622 = vmatpush1.msra.mxu0 0.0
      %7623 = vmatprep.subr.mxu0 0.0
      %7624 = vmatpush1.msra.mxu0 0.0
      %7625 = vmatprep.subr.mxu0 0.0
      %7626 = vmatpush1.msra.mxu0 0.0
      %7627 = vmatprep.subr.mxu0 0.0
      %7628 = vmatpush1.msra.mxu0 0.0
      %7629 = vmatprep.subr.mxu0 0.0
      %7630 = vmatpush1.msra.mxu0 0.0
      %7631 = vmatprep.subr.mxu0 0.0
      %7632 = vmatpush1.msra.mxu0 0.0
      %7633 = vmatprep.subr.mxu0 0.0
      %7634 = vmatpush1.msra.mxu0 0.0
      %7635 = vmatprep.subr.mxu0 0.0
      %7636 = vmatpush1.msra.mxu0 0.0
      %7637 = vmatprep.subr.mxu0 0.0
      %7638 = vmatpush1.msra.mxu0 0.0
      %7639 = vmatprep.subr.mxu0 0.0
      %7640 = vmatpush1.msra.mxu0 0.0
      %7641 = vmatprep.subr.mxu0 0.0
      %7642 = vmatpush1.msra.mxu0 0.0
      %7643 = vmatprep.subr.mxu0 0.0
      %7644 = vmatpush1.msra.mxu0 0.0
      %7645 = vmatprep.subr.mxu0 0.0
      %7646 = vmatpush1.msra.mxu0 0.0
      %7647 = vmatprep.subr.mxu0 0.0
      %7648 = vmatpush1.msra.mxu0 0.0
      %7649 = vmatprep.mubr.f32.mxu0 0.0
      %7650 = vmatmul.mubr.f32.gmra.mrb[0].mxu0 %v6646
      %v7651 = vpop.f32.mrb[0].mxu0
      %v7652 = vadd.f32 0.0, %v7651
      %v7653 = vpop.f32.mrb[0].mxu0
      %7654 = vdwg.mxu0
      %v7655 = vmul.f32 %v7652, 0.03125
      %v7656 = vmul.f32 %v6623, %v6623
      %v7657 = vmul.f32 %v6628, %v6628
      %v7658 = vmul.f32 %v6633, %v6633
      %v7659 = vmul.f32 %v6638, %v6638
      %7664 = vrot.lane.b32.xlu0 %v7656, 121
      %v7665 = vpop.permute.xlu0 %7664
      %7666 = vrot.lane.b32.xlu0 %v7657, 121
      %v7667 = vpop.permute.xlu0 %7666
      %7668 = vrot.lane.b32.xlu0 %v7658, 121
      %v7669 = vpop.permute.xlu0 %7668
      %7670 = vrot.lane.b32.xlu0 %v7659, 121
      %v7671 = vpop.permute.xlu0 %7670
      %7676 = vmatprep.subr.mxu0 0.0
      %7677 = vmatpush1.msra.mxu0 %v7665
      %7678 = vmatprep.subr.mxu0 0.0
      %7679 = vmatpush1.msra.mxu0 %v7667
      %7680 = vmatprep.subr.mxu0 0.0
      %7681 = vmatpush1.msra.mxu0 %v7669
      %7682 = vmatprep.subr.mxu0 0.0
      %7683 = vmatpush1.msra.mxu0 %v7671
      %7684 = vmatprep.subr.mxu0 0.0
      %7685 = vmatpush1.msra.mxu0 0.0
      %7686 = vmatprep.subr.mxu0 0.0
      %7687 = vmatpush1.msra.mxu0 0.0
      %7688 = vmatprep.subr.mxu0 0.0
      %7689 = vmatpush1.msra.mxu0 0.0
      %7690 = vmatprep.subr.mxu0 0.0
      %7691 = vmatpush1.msra.mxu0 0.0
      %7692 = vmatprep.subr.mxu0 0.0
      %7693 = vmatpush1.msra.mxu0 0.0
      %7694 = vmatprep.subr.mxu0 0.0
      %7695 = vmatpush1.msra.mxu0 0.0
      %7696 = vmatprep.subr.mxu0 0.0
      %7697 = vmatpush1.msra.mxu0 0.0
      %7698 = vmatprep.subr.mxu0 0.0
      %7699 = vmatpush1.msra.mxu0 0.0
      %7700 = vmatprep.subr.mxu0 0.0
      %7701 = vmatpush1.msra.mxu0 0.0
      %7702 = vmatprep.subr.mxu0 0.0
      %7703 = vmatpush1.msra.mxu0 0.0
      %7704 = vmatprep.subr.mxu0 0.0
      %7705 = vmatpush1.msra.mxu0 0.0
      %7706 = vmatprep.subr.mxu0 0.0
      %7707 = vmatpush1.msra.mxu0 0.0
      %7708 = vmatprep.subr.mxu0 0.0
      %7709 = vmatpush1.msra.mxu0 0.0
      %7710 = vmatprep.subr.mxu0 0.0
      %7711 = vmatpush1.msra.mxu0 0.0
      %7712 = vmatprep.subr.mxu0 0.0
      %7713 = vmatpush1.msra.mxu0 0.0
      %7714 = vmatprep.subr.mxu0 0.0
      %7715 = vmatpush1.msra.mxu0 0.0
      %7716 = vmatprep.subr.mxu0 0.0
      %7717 = vmatpush1.msra.mxu0 0.0
      %7718 = vmatprep.subr.mxu0 0.0
      %7719 = vmatpush1.msra.mxu0 0.0
      %7720 = vmatprep.subr.mxu0 0.0
      %7721 = vmatpush1.msra.mxu0 0.0
      %7722 = vmatprep.subr.mxu0 0.0
      %7723 = vmatpush1.msra.mxu0 0.0
      %7724 = vmatprep.subr.mxu0 0.0
      %7725 = vmatpush1.msra.mxu0 0.0
      %7726 = vmatprep.subr.mxu0 0.0
      %7727 = vmatpush1.msra.mxu0 0.0
      %7728 = vmatprep.subr.mxu0 0.0
      %7729 = vmatpush1.msra.mxu0 0.0
      %7730 = vmatprep.subr.mxu0 0.0
      %7731 = vmatpush1.msra.mxu0 0.0
      %7732 = vmatprep.subr.mxu0 0.0
      %7733 = vmatpush1.msra.mxu0 0.0
      %7734 = vmatprep.subr.mxu0 0.0
      %7735 = vmatpush1.msra.mxu0 0.0
      %7736 = vmatprep.subr.mxu0 0.0
      %7737 = vmatpush1.msra.mxu0 0.0
      %7738 = vmatprep.subr.mxu0 0.0
      %7739 = vmatpush1.msra.mxu0 0.0
      %7740 = vmatprep.mubr.f32.mxu0 0.0
      %7741 = vmatmul.mubr.f32.gmra.mrb[0].mxu0 %v6646
      %v7742 = vpop.f32.mrb[0].mxu0
      %v7743 = vadd.f32 0.0, %v7742
      %v7744 = vpop.f32.mrb[0].mxu0
      %7745 = vdwg.mxu0
      %v7746 = vmul.f32 %v7743, 0.03125
      %v7747 = vmul.f32 %v7655, %v7655
      %v7748 = vsub.f32 %v7746, %v7747
      %v7749 = vmax.f32 %v7748, 0.0
      %v7750 = vlaneseq
      %v7751 = vshrl.u32 %v7750, 7
      %v7752 = vsub.s32 0, %v7751
      %v7753 = vrot.slane %v7655, %v7752
      %7755 = vrot.lane.b32.xlu0 %v7753, 7
      %v7756 = vpop.permute.xlu0 %7755
      %v7758 = vsub.f32 %v6623, %v7756
      %v7759 = vsub.f32 %v6628, %v7756
      %v7760 = vsub.f32 %v6633, %v7756
      %v7761 = vsub.f32 %v6638, %v7756
      %v7762 = vadd.f32 %v7749, 1e-05
      %v7763 = vrsqrt.pop %v7762
      %v7764 = vlaneseq
      %v7765 = vshrl.u32 %v7764, 7
      %v7766 = vsub.s32 0, %v7765
      %v7767 = vrot.slane %v7763, %v7766
      %7769 = vrot.lane.b32.xlu0 %v7767, 7
      %v7770 = vpop.permute.xlu0 %7769
      %v7772 = vmul.f32 %v7758, %v7770
      %v7773 = vmul.f32 %v7759, %v7770
      %v7774 = vmul.f32 %v7760, %v7770
      %v7775 = vmul.f32 %v7761, %v7770
      %7777 = vset.pattern.permute.xlu0 0
      %7778 = vperm.xlu0 %7777, %v7565
      %v7779 = vpop.permute.xlu0 %7778
      %7782 = vset.pattern.permute.xlu0 0
      %7783 = vperm.xlu0 %7782, %v7566
      %v7784 = vpop.permute.xlu0 %7783
      %7787 = vset.pattern.permute.xlu0 0
      %7788 = vperm.xlu0 %7787, %v7567
      %v7789 = vpop.permute.xlu0 %7788
      %7792 = vset.pattern.permute.xlu0 0
      %7793 = vperm.xlu0 %7792, %v7568
      %v7794 = vpop.permute.xlu0 %7793
      %v7796 = vmul.f32 %v7772, %v7779
      %v7797 = vmul.f32 %v7773, %v7784
      %v7798 = vmul.f32 %v7774, %v7789
      %v7799 = vmul.f32 %v7775, %v7794
      %7804 = vrot.lane.b32.xlu0 %v7796, 121
      %v7805 = vpop.permute.xlu0 %7804
      %7806 = vrot.lane.b32.xlu0 %v7797, 121
      %v7807 = vpop.permute.xlu0 %7806
      %7808 = vrot.lane.b32.xlu0 %v7798, 121
      %v7809 = vpop.permute.xlu0 %7808
      %7810 = vrot.lane.b32.xlu0 %v7799, 121
      %v7811 = vpop.permute.xlu0 %7810
      %v7816 = vadd.f32 %v7561, %v7805
      %v7817 = vadd.f32 %v7562, %v7807
      %v7818 = vadd.f32 %v7563, %v7809
      %v7819 = vadd.f32 %v7564, %v7811
      %v7820 = vld [vmem:[%s19] sm:$0xf]
      %v7822 = vsel %vm6645, %v7820, 0
      %7824 = vmatprep.subr.mxu0 0.0
      %7825 = vmatpush1.msra.mxu0 %v7816
      %7826 = vmatprep.subr.mxu0 0.0
      %7827 = vmatpush1.msra.mxu0 %v7817
      %7828 = vmatprep.subr.mxu0 0.0
      %7829 = vmatpush1.msra.mxu0 %v7818
      %7830 = vmatprep.subr.mxu0 0.0
      %7831 = vmatpush1.msra.mxu0 %v7819
      %7832 = vmatprep.subr.mxu0 0.0
      %7833 = vmatpush1.msra.mxu0 0.0
      %7834 = vmatprep.subr.mxu0 0.0
      %7835 = vmatpush1.msra.mxu0 0.0
      %7836 = vmatprep.subr.mxu0 0.0
      %7837 = vmatpush1.msra.mxu0 0.0
      %7838 = vmatprep.subr.mxu0 0.0
      %7839 = vmatpush1.msra.mxu0 0.0
      %7840 = vmatprep.subr.mxu0 0.0
      %7841 = vmatpush1.msra.mxu0 0.0
      %7842 = vmatprep.subr.mxu0 0.0
      %7843 = vmatpush1.msra.mxu0 0.0
      %7844 = vmatprep.subr.mxu0 0.0
      %7845 = vmatpush1.msra.mxu0 0.0
      %7846 = vmatprep.subr.mxu0 0.0
      %7847 = vmatpush1.msra.mxu0 0.0
      %7848 = vmatprep.subr.mxu0 0.0
      %7849 = vmatpush1.msra.mxu0 0.0
      %7850 = vmatprep.subr.mxu0 0.0
      %7851 = vmatpush1.msra.mxu0 0.0
      %7852 = vmatprep.subr.mxu0 0.0
      %7853 = vmatpush1.msra.mxu0 0.0
      %7854 = vmatprep.subr.mxu0 0.0
      %7855 = vmatpush1.msra.mxu0 0.0
      %7856 = vmatprep.subr.mxu0 0.0
      %7857 = vmatpush1.msra.mxu0 0.0
      %7858 = vmatprep.subr.mxu0 0.0
      %7859 = vmatpush1.msra.mxu0 0.0
      %7860 = vmatprep.subr.mxu0 0.0
      %7861 = vmatpush1.msra.mxu0 0.0
      %7862 = vmatprep.subr.mxu0 0.0
      %7863 = vmatpush1.msra.mxu0 0.0
      %7864 = vmatprep.subr.mxu0 0.0
      %7865 = vmatpush1.msra.mxu0 0.0
      %7866 = vmatprep.subr.mxu0 0.0
      %7867 = vmatpush1.msra.mxu0 0.0
      %7868 = vmatprep.subr.mxu0 0.0
      %7869 = vmatpush1.msra.mxu0 0.0
      %7870 = vmatprep.subr.mxu0 0.0
      %7871 = vmatpush1.msra.mxu0 0.0
      %7872 = vmatprep.subr.mxu0 0.0
      %7873 = vmatpush1.msra.mxu0 0.0
      %7874 = vmatprep.subr.mxu0 0.0
      %7875 = vmatpush1.msra.mxu0 0.0
      %7876 = vmatprep.subr.mxu0 0.0
      %7877 = vmatpush1.msra.mxu0 0.0
      %7878 = vmatprep.subr.mxu0 0.0
      %7879 = vmatpush1.msra.mxu0 0.0
      %7880 = vmatprep.subr.mxu0 0.0
      %7881 = vmatpush1.msra.mxu0 0.0
      %7882 = vmatprep.subr.mxu0 0.0
      %7883 = vmatpush1.msra.mxu0 0.0
      %7884 = vmatprep.subr.mxu0 0.0
      %7885 = vmatpush1.msra.mxu0 0.0
      %7886 = vmatprep.subr.mxu0 0.0
      %7887 = vmatpush1.msra.mxu0 0.0
      %7888 = vmatprep.mubr.f32.mxu0 0.0
      %7889 = vmatmul.mubr.f32.gmra.mrb[0].mxu0 %v7822
      %v7890 = vpop.f32.mrb[0].mxu0
      %v7891 = vadd.f32 0.0, %v7890
      %v7892 = vpop.f32.mrb[0].mxu0
      %7893 = vdwg.mxu0
      %v7894 = vmul.f32 %v7816, %v7816
      %v7895 = vmul.f32 %v7817, %v7817
      %v7896 = vmul.f32 %v7818, %v7818
      %v7897 = vmul.f32 %v7819, %v7819
      %v7898 = vand.u32 2147483647, %v7891
      %7899 = vmatprep.subr.mxu0 0.0
      %7900 = vmatpush1.msra.mxu0 %v7894
      %7901 = vmatprep.subr.mxu0 0.0
      %7902 = vmatpush1.msra.mxu0 %v7895
      %7903 = vmatprep.subr.mxu0 0.0
      %7904 = vmatpush1.msra.mxu0 %v7896
      %7905 = vmatprep.subr.mxu0 0.0
      %7906 = vmatpush1.msra.mxu0 %v7897
      %7907 = vmatprep.subr.mxu0 0.0
      %7908 = vmatpush1.msra.mxu0 0.0
      %7909 = vmatprep.subr.mxu0 0.0
      %7910 = vmatpush1.msra.mxu0 0.0
      %7911 = vmatprep.subr.mxu0 0.0
      %7912 = vmatpush1.msra.mxu0 0.0
      %7913 = vmatprep.subr.mxu0 0.0
      %7914 = vmatpush1.msra.mxu0 0.0
      %7915 = vmatprep.subr.mxu0 0.0
      %7916 = vmatpush1.msra.mxu0 0.0
      %7917 = vmatprep.subr.mxu0 0.0
      %7918 = vmatpush1.msra.mxu0 0.0
      %7919 = vmatprep.subr.mxu0 0.0
      %7920 = vmatpush1.msra.mxu0 0.0
      %7921 = vmatprep.subr.mxu0 0.0
      %7922 = vmatpush1.msra.mxu0 0.0
      %7923 = vmatprep.subr.mxu0 0.0
      %7924 = vmatpush1.msra.mxu0 0.0
      %7925 = vmatprep.subr.mxu0 0.0
      %7926 = vmatpush1.msra.mxu0 0.0
      %7927 = vmatprep.subr.mxu0 0.0
      %7928 = vmatpush1.msra.mxu0 0.0
      %7929 = vmatprep.subr.mxu0 0.0
      %7930 = vmatpush1.msra.mxu0 0.0
      %7931 = vmatprep.subr.mxu0 0.0
      %7932 = vmatpush1.msra.mxu0 0.0
      %7933 = vmatprep.subr.mxu0 0.0
      %7934 = vmatpush1.msra.mxu0 0.0
      %7935 = vmatprep.subr.mxu0 0.0
      %7936 = vmatpush1.msra.mxu0 0.0
      %7937 = vmatprep.subr.mxu0 0.0
      %7938 = vmatpush1.msra.mxu0 0.0
      %7939 = vmatprep.subr.mxu0 0.0
      %7940 = vmatpush1.msra.mxu0 0.0
      %7941 = vmatprep.subr.mxu0 0.0
      %7942 = vmatpush1.msra.mxu0 0.0
      %7943 = vmatprep.subr.mxu0 0.0
      %7944 = vmatpush1.msra.mxu0 0.0
      %7945 = vmatprep.subr.mxu0 0.0
      %7946 = vmatpush1.msra.mxu0 0.0
      %7947 = vmatprep.subr.mxu0 0.0
      %7948 = vmatpush1.msra.mxu0 0.0
      %7949 = vmatprep.subr.mxu0 0.0
      %7950 = vmatpush1.msra.mxu0 0.0
      %7951 = vmatprep.subr.mxu0 0.0
      %7952 = vmatpush1.msra.mxu0 0.0
      %7953 = vmatprep.subr.mxu0 0.0
      %7954 = vmatpush1.msra.mxu0 0.0
      %7955 = vmatprep.subr.mxu0 0.0
      %7956 = vmatpush1.msra.mxu0 0.0
      %7957 = vmatprep.subr.mxu0 0.0
      %7958 = vmatpush1.msra.mxu0 0.0
      %7959 = vmatprep.subr.mxu0 0.0
      %7960 = vmatpush1.msra.mxu0 0.0
      %7961 = vmatprep.subr.mxu0 0.0
      %7962 = vmatpush1.msra.mxu0 0.0
      %7963 = vmatprep.mubr.f32.mxu0 0.0
      %7964 = vmatmul.mubr.f32.gmra.mrb[0].mxu0 %v6646
      %v7965 = vpop.f32.mrb[0].mxu0
      %v7966 = vadd.f32 1e-06, %v7965
      %v7967 = vpop.f32.mrb[0].mxu0
      %7968 = vdwg.mxu0
      %v7969 = vrsqrt.pop %v7966
      %v7970 = vlaneseq
      %v7971 = vshrl.u32 %v7970, 7
      %v7972 = vsub.s32 0, %v7971
      %v7973 = vrot.slane %v7969, %v7972
      %v7974 = vmul.f32 %v7898, %v7973
      %v7975 = vmul.f32 %v7891, %v7974
      %v7976 = vld [vmem:[%s22] sm:$0xff]
      %v7977 = vld [vmem:[%s22 + $0x8] sm:$0xff]
      %v7978 = vld [vmem:[%s22 + $0x10] sm:$0x3f]
      %v7980 = vsel %vm6848, %v7975, 0
      %v7983 = vsel %vm1134, %v7978, 0
      %7985 = vmatprep.subr.mxu0 0.0
      %7986 = vmatpush1.msra.mxu0 %v7976
      %7987 = vmatprep.subr.mxu0 0.0
      %7988 = vmatpush1.msra.mxu0 %v7977
      %7989 = vmatprep.subr.mxu0 0.0
      %7990 = vmatpush1.msra.mxu0 %v7983
      %7991 = vmatprep.subr.mxu0 0.0
      %7992 = vmatpush1.msra.mxu0 0.0
      %7993 = vmatprep.subr.mxu0 0.0
      %7994 = vmatpush1.msra.mxu0 0.0
      %7995 = vmatprep.subr.mxu0 0.0
      %7996 = vmatpush1.msra.mxu0 0.0
      %7997 = vmatprep.subr.mxu0 0.0
      %7998 = vmatpush1.msra.mxu0 0.0
      %7999 = vmatprep.subr.mxu0 0.0
      %8000 = vmatpush1.msra.mxu0 0.0
      %8001 = vmatprep.subr.mxu0 0.0
      %8002 = vmatpush1.msra.mxu0 0.0
      %8003 = vmatprep.subr.mxu0 0.0
      %8004 = vmatpush1.msra.mxu0 0.0
      %8005 = vmatprep.subr.mxu0 0.0
      %8006 = vmatpush1.msra.mxu0 0.0
      %8007 = vmatprep.subr.mxu0 0.0
      %8008 = vmatpush1.msra.mxu0 0.0
      %8009 = vmatprep.subr.mxu0 0.0
      %8010 = vmatpush1.msra.mxu0 0.0
      %8011 = vmatprep.subr.mxu0 0.0
      %8012 = vmatpush1.msra.mxu0 0.0
      %8013 = vmatprep.subr.mxu0 0.0
      %8014 = vmatpush1.msra.mxu0 0.0
      %8015 = vmatprep.subr.mxu0 0.0
      %8016 = vmatpush1.msra.mxu0 0.0
      %8017 = vmatprep.subr.mxu0 0.0
      %8018 = vmatpush1.msra.mxu0 0.0
      %8019 = vmatprep.subr.mxu0 0.0
      %8020 = vmatpush1.msra.mxu0 0.0
      %8021 = vmatprep.subr.mxu0 0.0
      %8022 = vmatpush1.msra.mxu0 0.0
      %8023 = vmatprep.subr.mxu0 0.0
      %8024 = vmatpush1.msra.mxu0 0.0
      %8025 = vmatprep.subr.mxu0 0.0
      %8026 = vmatpush1.msra.mxu0 0.0
      %8027 = vmatprep.subr.mxu0 0.0
      %8028 = vmatpush1.msra.mxu0 0.0
      %8029 = vmatprep.subr.mxu0 0.0
      %8030 = vmatpush1.msra.mxu0 0.0
      %8031 = vmatprep.subr.mxu0 0.0
      %8032 = vmatpush1.msra.mxu0 0.0
      %8033 = vmatprep.subr.mxu0 0.0
      %8034 = vmatpush1.msra.mxu0 0.0
      %8035 = vmatprep.subr.mxu0 0.0
      %8036 = vmatpush1.msra.mxu0 0.0
      %8037 = vmatprep.subr.mxu0 0.0
      %8038 = vmatpush1.msra.mxu0 0.0
      %8039 = vmatprep.subr.mxu0 0.0
      %8040 = vmatpush1.msra.mxu0 0.0
      %8041 = vmatprep.subr.mxu0 0.0
      %8042 = vmatpush1.msra.mxu0 0.0
      %8043 = vmatprep.subr.mxu0 0.0
      %8044 = vmatpush1.msra.mxu0 0.0
      %8045 = vmatprep.subr.mxu0 0.0
      %8046 = vmatpush1.msra.mxu0 0.0
      %8047 = vmatprep.subr.mxu0 0.0
      %8048 = vmatpush1.msra.mxu0 0.0
      %8049 = vmatprep.mubr.f32.mxu0 0.0
      %8050 = vmatmul.mubr.f32.gmra.mrb[0].mxu0 %v7980
      %v8051 = vpop.f32.mrb[0].mxu0
      %v8052 = vadd.f32 -1.0986123, %v8051
      %v8053 = vpop.f32.mrb[0].mxu0
      %8054 = vdwg.mxu0
      %vm8055 = vcmask 3072
      %8056 = vst.msk [vmem:[%s762] sm:$0xf] %vm8055, %v8052
      %p8057 = scmp.lt.s32.totalorder %s36, 1
      %s8058 = scalar_select %p8057, %s36, 1
      %s8059 = smul.addr %s8058, 4
      %s8060 = scalar_lea.vmem %s25, %s8059
      // Predicated region
      $region121: #{bcos_resnet_forward.1} parent=119 // pred_check
        %p8061 = pneg %p584
      $region122: #{bcos_resnet_forward.1} parent=119 // pred_check_branch
        %8063 = sbr.rel (%p8061) target = $region124
      $region123: #{bcos_resnet_forward.1} parent=119 // pred_region
        _
      $region124: #{bcos_resnet_forward.1} parent=119 // pred_fallthru
        _
    $region120: #{bcos_resnet_forward.1} parent=5 // pred_fallthru
      _
    %p8064 = scmp.le.s32.totalorder 2, %s31
    // Predicated region
    $region125: #{bcos_resnet_forward.1} parent=5 // pred_check
      %p8065 = pneg %p8064
    $region126: #{bcos_resnet_forward.1} parent=5 // pred_check_branch
      %8067 = sbr.rel (%p8065) target = $region128
    $region127: #{bcos_resnet_forward.1} parent=5 // pred_region
      %s8068 = ssub.s32 %s31, 2
      // Predicated region
      $region129: #{bcos_resnet_forward.1} parent=127 // pred_check
        %p8069 = pneg %p590
      $region130: #{bcos_resnet_forward.1} parent=127 // pred_check_branch
        %8071 = sbr.rel (%p8069) target = $region132
      $region131: #{bcos_resnet_forward.1} parent=127 // pred_region
        %p8072 = scmp.lt.s32.totalorder %s37, 1
        %s8073 = scalar_select %p8072, %s37, 1
        %s8074 = smul.addr %s8073, 4
        %s8075 = scalar_lea.vmem %s25, %s8074
      $region132: #{bcos_resnet_forward.1} parent=127 // pred_fallthru
        _
    $region128: #{bcos_resnet_forward.1} parent=5 // pred_fallthru
      _
  $region6: #{bcos_resnet_forward.1} parent=0 // loop_footer
    %s35 = sadd.s32 1, %s31
  $region7: #{bcos_resnet_forward.1} parent=0 // loop_footer_branch
    %30 = sbr.rel target = $region3
  $region8: #{bcos_resnet_forward.1} parent=0 // loop_exit
    _

</llo_original>
